<compile_context>
chip_gen: v7x
topology: tpu7x:2x2x1
jax: 0.10.0
libtpu: 0.0.40
codegen_flags: <defaults>
</compile_context>

<pallas_src>
import functools

import jax
import jax.numpy as jnp
from jax import lax
from jax.experimental import pallas as pl
from jax.experimental.pallas import tpu as pltpu


# ------------------------------- tile helpers ------------------------------- #

def _pick_tile(dim, target, granule):
    """Largest multiple of `granule` <= target that divides `dim`, else the full dim."""
    c = min(dim, target)
    c -= c % granule
    while c >= granule:
        if dim % c == 0:
            return c
        c -= granule
    return dim


# ----------------------- matmul (+bias, +relu) kernels ---------------------- #

def _mm_bias_k1_kernel(x_ref, w_ref, b_ref, o_ref, *, relu):
    """Single-K-block matmul: write bias(+relu)+cast epilogue straight to the output."""
    r = jnp.dot(x_ref[...], w_ref[...], preferred_element_type=jnp.float32) + b_ref[...]
    if relu:
        r = jnp.maximum(r, 0.0)
    o_ref[...] = r.astype(o_ref.dtype)


def _mm_bias_kernel(x_ref, w_ref, b_ref, o_ref, acc_ref, *, relu):
    """General tiled matmul with f32 accumulator over the K grid axis."""
    @pl.when(pl.program_id(2) == 0)
    def _():
        acc_ref[...] = jnp.zeros_like(acc_ref)

    acc_ref[...] += jnp.dot(x_ref[...], w_ref[...],
                            preferred_element_type=jnp.float32)

    @pl.when(pl.program_id(2) == pl.num_programs(2) - 1)
    def _():
        r = acc_ref[...] + b_ref[...]
        if relu:
            r = jnp.maximum(r, 0.0)
        o_ref[...] = r.astype(o_ref.dtype)


def matmul_bias(x, w, b, relu=False, out_dtype=jnp.float32,
                tm_target=256, tn_target=512, tk_target=512):
    """x:(M,K) @ w:(K,N) + b:(N,) via a tiled, pipelined Pallas matmul (bf16 operands)."""
    M, K = x.shape
    K2, N = w.shape
    assert K == K2
    tm = _pick_tile(M, tm_target, 8)
    tn = _pick_tile(N, tn_target, 128)
    tk = _pick_tile(K, tk_target, 128)
    b2 = b.reshape(1, N).astype(jnp.float32)

    if K // tk == 1:
        # No K reduction (true for both LSTM input projections): skip scratch / pl.when.
        return pl.pallas_call(
            functools.partial(_mm_bias_k1_kernel, relu=relu),
            out_shape=jax.ShapeDtypeStruct((M, N), out_dtype),
            grid=(M // tm, N // tn),
            in_specs=[
                pl.BlockSpec((tm, K), lambda i, j: (i, 0)),
                pl.BlockSpec((K, tn), lambda i, j: (0, j)),
                pl.BlockSpec((1, tn), lambda i, j: (0, j)),
            ],
            out_specs=pl.BlockSpec((tm, tn), lambda i, j: (i, j)),
            compiler_params=pltpu.CompilerParams(
                dimension_semantics=("parallel", "parallel"),
                vmem_limit_bytes=32 * 1024 * 1024),
        )(x, w, b2)

    return pl.pallas_call(
        functools.partial(_mm_bias_kernel, relu=relu),
        out_shape=jax.ShapeDtypeStruct((M, N), out_dtype),
        grid=(M // tm, N // tn, K // tk),
        in_specs=[
            pl.BlockSpec((tm, tk), lambda i, j, k: (i, k)),
            pl.BlockSpec((tk, tn), lambda i, j, k: (k, j)),
            pl.BlockSpec((1, tn), lambda i, j, k: (0, j)),
        ],
        out_specs=pl.BlockSpec((tm, tn), lambda i, j, k: (i, j)),
        scratch_shapes=[pltpu.VMEM((tm, tn), jnp.float32)],
        compiler_params=pltpu.CompilerParams(
            dimension_semantics=("parallel", "parallel", "arbitrary"),
            vmem_limit_bytes=32 * 1024 * 1024),
    )(x, w, b2)


# ------------------------- fused Conv1d + BN + ReLU ------------------------- #

def _conv_tap_kernel(x_ref, w_ref, b_ref, o_ref, acc_ref, *, K, tm):
    """Fused Conv1d(k=K) + folded-BN bias + ReLU for one (batch, Cout-tile, time-tile).

    x_ref  : (1, T_pad, Cin)  bf16 -- full padded time axis of one batch element
    w_ref  : (K, Cin, tn)     bf16 -- tap-major folded conv weight
    b_ref  : (1, tn)          f32
    o_ref  : (1, tm, tn)      bf16
    acc_ref: (tm, tn)         f32 VMEM scratch (accumulating matmuls, no big live acc)
    """
    base = pl.program_id(2) * tm
    if tm % 8 == 0:                                        # only emit hint when true
        base = pl.multiple_of(base, 8)
    halo = x_ref[0, pl.ds(base, tm + K - 1), :]            # (tm+K-1, Cin), read once
    acc_ref[...] = jnp.dot(halo[0:tm], w_ref[0],
                           preferred_element_type=jnp.float32)
    for k in range(1, K):                                  # shifted accumulating matmuls
        acc_ref[...] += jnp.dot(halo[k:k + tm], w_ref[k],
                                preferred_element_type=jnp.float32)
    o_ref[0] = jnp.maximum(acc_ref[...] + b_ref[...], 0.0).astype(o_ref.dtype)


def conv1d_bn_relu(x_btc, w_k, b2):
    """Conv1d(k=5, stride=1, pad=2) + folded BN + ReLU, channel-last.

    x_btc: (B, T, Cin), w_k: (K, Cin, Cout) bf16, b2: (1, Cout) f32 -> (B, T, Cout) bf16.
    """
    B, T, Cin = x_btc.shape
    K, _, Cout = w_k.shape
    pad = (K - 1) // 2
    # TODO(synk): for very long crops on v7x (64 MiB VMEM) the full-Tp residency below
    #             should become a haloed time-tile BlockSpec; fine for AutoVC crop sizes.
    x_pad = jnp.pad(x_btc.astype(jnp.bfloat16), ((0, 0), (pad, pad), (0, 0)))
    Tp = T + 2 * pad
    tm = _pick_tile(T, 128, 8)
    tn = _pick_tile(Cout, 256, 128)
    grid = (B, Cout // tn, T // tm)
    return pl.pallas_call(
        functools.partial(_conv_tap_kernel, K=K, tm=tm),
        out_shape=jax.ShapeDtypeStruct((B, T, Cout), jnp.bfloat16),
        grid=grid,
        in_specs=[
            pl.BlockSpec((1, Tp, Cin), lambda b, n, j: (b, 0, 0)),   # fetched once per b
            pl.BlockSpec((K, Cin, tn), lambda b, n, j: (0, 0, n)),
            pl.BlockSpec((1, tn), lambda b, n, j: (0, n)),
        ],
        out_specs=pl.BlockSpec((1, tm, tn), lambda b, n, j: (b, j, n)),
        scratch_shapes=[pltpu.VMEM((tm, tn), jnp.float32)],
        compiler_params=pltpu.CompilerParams(
            dimension_semantics=("parallel", "parallel", "parallel"),
            vmem_limit_bytes=32 * 1024 * 1024),
    )(x_pad, w_k, b2)


# --------------------- fused bidirectional LSTM recurrence ------------------- #

def _bilstm_kernel(xpf_ref, xpb_ref, whh_ref, of_ref, ob_ref, h_ref, c_ref,
                   *, H, Tc, unroll):
    """Fused bidirectional LSTM recurrence over one time chunk.

    xpf_ref: (Tc, B, 8H) f32 -- input projections + biases, forward chunk order.
    xpb_ref: (Tc, B, 8H) f32 -- same array, chunk index reversed by BlockSpec.
    whh_ref: (2H, 8H) bf16 block-diagonal recurrent weight, rows = [h_fwd | h_bwd],
             columns = [i | f | o | g], each gate = [fwd H cols | bwd H cols].
    of_ref : (Tc, B, H) f32 fwd hidden states (real time order).
    ob_ref : (Tc, B, H) f32 bwd hidden states (real time order, reversed out index_map).
    h_ref/c_ref: (B, 2H) f32 VMEM carries [fwd | bwd], persistent across time chunks.
    """
    H2, H4, H6, H8 = 2 * H, 4 * H, 6 * H, 8 * H

    @pl.when(pl.program_id(0) == 0)
    def _():
        h_ref[...] = jnp.zeros_like(h_ref)
        c_ref[...] = jnp.zeros_like(c_ref)

    whh = whh_ref[...]                                      # (2H, 8H) bf16
    B = h_ref.shape[0]
    col = lax.broadcasted_iota(jnp.int32, (B, H8), 1)
    fwd_col = (col % H2) < H                                # fwd half of each 2H group

    def body(t, carry):
        h, c = carry                                        # (B, 2H) f32
        # forward direction consumes time t of this chunk; backward direction consumes
        # the time-reversed chunk at index Tc-1-t  =>  real time T-1-step, no XLA flip.
        x_t = jnp.where(fwd_col, xpf_ref[t], xpb_ref[Tc - 1 - t])      # (B, 8H)
        gates = x_t + jnp.dot(h.astype(jnp.bfloat16), whh,
                              preferred_element_type=jnp.float32)
        sig = jax.nn.sigmoid(gates[:, :H6])                 # i|f|o: one lane-dense call
        i_g = sig[:, 0:H2]
        f_g = sig[:, H2:H4]
        o_g = sig[:, H4:H6]
        g_g = jnp.tanh(gates[:, H6:H8])
        c_new = f_g * c + i_g * g_g
        h_new = o_g * jnp.tanh(c_new)
        of_ref[t] = h_new[:, :H]                            # fwd hidden, real time t
        ob_ref[Tc - 1 - t] = h_new[:, H:]                   # bwd hidden, real time order
        return (h_new, c_new)

    h_last, c_last = lax.fori_loop(0, Tc, body, (h_ref[...], c_ref[...]),
                                   unroll=unroll)
    h_ref[...] = h_last
    c_ref[...] = c_last


def bilstm_recurrence(xp, whh_fused, H):
    """xp: (T, B, 8H) f32 (unflipped), whh_fused: (2H, 8H) bf16
    -> (out_f, out_b): each (T, B, H) f32, both in real time order."""
    T, B, G8 = xp.shape
    H2 = 2 * H
    tchunk = _pick_tile(T, 128, 1)
    nchunks = T // tchunk
    unroll = max(1, min(8, tchunk))
    out_f, out_b = pl.pallas_call(
        functools.partial(_bilstm_kernel, H=H, Tc=tchunk, unroll=unroll),
        out_shape=(jax.ShapeDtypeStruct((T, B, H), jnp.float32),
                   jax.ShapeDtypeStruct((T, B, H), jnp.float32)),
        grid=(nchunks,),
        in_specs=[
            pl.BlockSpec((tchunk, B, G8), lambda j: (j, 0, 0)),               # fwd view
            pl.BlockSpec((tchunk, B, G8), lambda j: (nchunks - 1 - j, 0, 0)), # bwd view
            pl.BlockSpec((H2, G8), lambda j: (0, 0)),
        ],
        out_specs=(pl.BlockSpec((tchunk, B, H), lambda j: (j, 0, 0)),
                   pl.BlockSpec((tchunk, B, H), lambda j: (nchunks - 1 - j, 0, 0))),
        scratch_shapes=[pltpu.VMEM((B, H2), jnp.float32),
                        pltpu.VMEM((B, H2), jnp.float32)],
        compiler_params=pltpu.CompilerParams(
            dimension_semantics=("arbitrary",)),   # sequential: carry across chunks
    )(xp, xp, whh_fused)
    return out_f, out_b


# ------------------------------- glue layers ------------------------------- #

def fold_bn(w, b, gamma, beta, mean, var, eps=1e-5):
    """Fold eval-mode BatchNorm1d into Conv1d weights/bias."""
    scale = gamma / jnp.sqrt(var + eps)
    w_f = w * scale[:, None, None]
    b_f = (b - mean) * scale + beta
    return w_f, b_f


def bilstm_layer(x_tbc, p, H):
    """One fused bidirectional LSTM layer. x_tbc: (T, B, In) -> (T, B, 2H) f32."""
    T, B, In = x_tbc.shape
    # Fused input projection for both directions (no K reduction -> specialised kernel).
    xp = matmul_bias(x_tbc.reshape(T * B, In).astype(jnp.bfloat16),
                     p["wih_fused"], p["b_fused"], relu=False,
                     out_dtype=jnp.float32)
    xp = xp.reshape(T, B, 8 * H)                      # unflipped; flips live in BlockSpecs
    out_f, out_b = bilstm_recurrence(xp, p["whh_fused"], H)
    return jnp.concatenate([out_f, out_b], axis=-1)   # (T, B, 2H), PyTorch layout


# ------------------------------ parameter init ----------------------------- #

def _fuse_bidirectional(fwd, bwd, H):
    """Fused gate-major weights for one bidirectional LSTM layer.

    Column layout: gates ordered [i | f | o | g] (sigmoid gates contiguous), and inside
    each gate the fwd H columns come before the bwd H columns.  whh is block-diagonal
    over the [h_fwd | h_bwd] rows and stored in bf16 for the MXU recurrence matmul.
    """
    wih_f, whh_f, b_f = fwd                       # (4H, In), (4H, H), (4H,)
    wih_b, whh_b, b_b = bwd
    zH = jnp.zeros((H, H), jnp.float32)
    gate_order = (0, 1, 3, 2)                     # PyTorch (i, f, g, o) -> (i, f, o, g)
    wih_cols, whh_cols, b_cols = [], [], []
    for g in gate_order:
        sl = slice(g * H, (g + 1) * H)
        wih_cols += [wih_f[sl].T, wih_b[sl].T]                        # (In, H) each
        top = jnp.concatenate([whh_f[sl].T, zH], axis=1)              # rows from h_fwd
        bot = jnp.concatenate([zH, whh_b[sl].T], axis=1)              # rows from h_bwd
        whh_cols.append(jnp.concatenate([top, bot], axis=0))          # (2H, 2H) block
        b_cols += [b_f[sl], b_b[sl]]
    return {
        "wih_fused": jnp.concatenate(wih_cols, axis=1).astype(jnp.bfloat16),  # (In, 8H)
        "whh_fused": jnp.concatenate(whh_cols, axis=1).astype(jnp.bfloat16),  # (2H, 8H)
        "b_fused": jnp.concatenate(b_cols, axis=0).astype(jnp.float32),       # (8H,)
    }


def init_encoder_params(key, dim_neck, dim_emb, num_spec_feats):
    keys = jax.random.split(key, 64)
    ki = iter(keys)
    cins = [num_spec_feats + dim_emb, 512, 512]

    convs = []
    for i in range(3):
        cin = cins[i]
        w = jax.random.normal(next(ki), (512, cin, 5), jnp.float32) * (2.0 / (cin * 5)) ** 0.5
        b = 0.01 * jax.random.normal(next(ki), (512,), jnp.float32)
        gamma = 1.0 + 0.1 * jax.random.normal(next(ki), (512,), jnp.float32)
        beta = 0.1 * jax.random.normal(next(ki), (512,), jnp.float32)
        mean = 0.1 * jax.random.normal(next(ki), (512,), jnp.float32)
        var = jnp.abs(1.0 + 0.1 * jax.random.normal(next(ki), (512,), jnp.float32))
        w_f, b_f = fold_bn(w, b, gamma, beta, mean, var)
        # pre-transpose to (K, Cin, Cout) and pre-cast to bf16 once, at init
        convs.append((jnp.transpose(w_f, (2, 1, 0)).astype(jnp.bfloat16),
                      b_f.reshape(1, 512).astype(jnp.float32)))

    H = dim_neck
    in_sizes = [512, 2 * H]
    lstm = []
    for l in range(2):
        per_dir = []
        for _ in range(2):                                   # fwd, bwd
            wih = 0.05 * jax.random.normal(next(ki), (4 * H, in_sizes[l]), jnp.float32)
            whh = 0.05 * jax.random.normal(next(ki), (4 * H, H), jnp.float32)
            bih = 0.01 * jax.random.normal(next(ki), (4 * H,), jnp.float32)
            bhh = 0.01 * jax.random.normal(next(ki), (4 * H,), jnp.float32)
            per_dir.append((wih, whh, bih + bhh))
        lstm.append(_fuse_bidirectional(per_dir[0], per_dir[1], H))

    return {"convs": convs, "lstm": lstm}


# ------------------------------ encoder forward ----------------------------- #

@functools.partial(jax.jit, static_argnames=("dim_neck", "freq"))
def encoder_forward(params, x, c_org, *, dim_neck, freq):
    """Matches Encoder.forward.

    x     : (B, 1, T, num_spec_feats)
    c_org : (B, dim_emb)
    returns (codes, saved_enc_outs) with saved tensors in PyTorch (B, C, T) layout.
    """
    B = x.shape[0]
    x_sq = jnp.squeeze(x, axis=1)                          # (B, T, F)  channel-last
    T = x_sq.shape[1]
    c_exp = jnp.broadcast_to(c_org[:, None, :], (B, T, c_org.shape[1]))
    x_cat = jnp.concatenate([x_sq, c_exp], axis=-1)        # (B, T, F+E)
    saved_cl = [x_cat]

    # conv stack -- stays channel-last on the hot path
    h = x_cat
    for (w_k, b2) in params["convs"]:
        h = conv1d_bn_relu(h, w_k, b2)                     # (B, T, 512) bf16
        saved_cl.append(h)

    # 2-layer bidirectional LSTM (batch_first in PyTorch -> time-major here)
    layer_in = jnp.transpose(h, (1, 0, 2))                 # (T, B, 512)
    for l in range(2):
        layer_in = bilstm_layer(layer_in, params["lstm"][l], dim_neck)  # (T, B, 2H)

    outputs = jnp.transpose(layer_in, (1, 0, 2))           # (B, T, 2H)
    saved_cl.append(outputs)

    # PyTorch saves channel-first tensors; do all (B,T,C)->(B,C,T) relayouts once, here.
    saved_enc_outs = [jnp.transpose(t, (0, 2, 1)) for t in saved_cl]

    # codes: one reshape + two slices instead of a Python slice/concat loop (T % freq == 0
    # is assumed, as in the PyTorch reference).
    n = T // freq
    of = outputs[:, :n * freq, :dim_neck].reshape(B, n, freq, dim_neck)
    ob = outputs[:, :n * freq, dim_neck:].reshape(B, n, freq, dim_neck)
    codes_arr = jnp.concatenate([of[:, :, freq - 1, :], ob[:, :, 0, :]], axis=-1)
    codes = [codes_arr[:, i] for i in range(n)]
    return codes, saved_enc_outs


# ----------------------------------- main ----------------------------------- #

if __name__ == "__main__":
    B, T = 2, 8
    num_spec_feats, dim_emb, dim_neck, freq = 16, 16, 32, 4

    key = jax.random.PRNGKey(0)
    kx, kc, kp = jax.random.split(key, 3)
    x = jax.random.normal(kx, (B, 1, T, num_spec_feats), jnp.float32)
    c_org = jax.random.normal(kc, (B, dim_emb), jnp.float32)

    params = init_encoder_params(kp, dim_neck, dim_emb, num_spec_feats)

    codes, saved_enc_outs = encoder_forward(params, x, c_org,
                                            dim_neck=dim_neck, freq=freq)
    jax.block_until_ready(codes)
    jax.block_until_ready(saved_enc_outs)

    # light sanity checks on shapes
    assert len(codes) == T // freq and codes[0].shape == (B, 2 * dim_neck)
    assert saved_enc_outs[0].shape == (B, num_spec_feats + dim_emb, T)
    assert saved_enc_outs[1].shape == (B, 512, T)
    assert saved_enc_outs[-1].shape == (B, 2 * dim_neck, T)

    print("KERNEL_OK")
</pallas_src>

<mosaic_0001>
module attributes {stable_mosaic.version = 11 : i64} {
  func.func @_conv_tap_kernel(%arg0: i32, %arg1: i32, %arg2: i32, %arg3: memref<1x12x512xbf16, #tpu.memory_space<vmem>>, %arg4: memref<5x512x256xbf16, #tpu.memory_space<vmem>>, %arg5: memref<1x256xf32, #tpu.memory_space<vmem>>, %arg6: memref<1x8x256xbf16, #tpu.memory_space<vmem>>, %arg7: memref<8x256xf32, #tpu.memory_space<vmem>>) attributes {dimension_semantics = [#tpu.dimension_semantics<parallel>, #tpu.dimension_semantics<parallel>, #tpu.dimension_semantics<parallel>], iteration_bounds = array<i64: 2, 2, 1>, scalar_prefetch = 0 : i64, scratch_operands = 1 : i64, tpu.core_type = #tpu.core_type<tc>, window_params = [{transform_indices = @transform_0, window_bounds = array<i64: 1, 12, 512>}, {transform_indices = @transform_1, window_bounds = array<i64: 5, 512, 256>}, {transform_indices = @transform_2, window_bounds = array<i64: 1, 256>}, {transform_indices = @transform_3, window_bounds = array<i64: 1, 8, 256>}]} {
    %c8_i32 = arith.constant 8 : i32
    %0 = arith.muli %arg2, %c8_i32 : i32
    %1 = tpu.assume_multiple %0, 8 : i32
    %c0 = arith.constant 0 : index
    %2 = arith.index_cast %1 : i32 to index
    %c0_0 = arith.constant 0 : index
    %3 = vector.load %arg3[%c0, %2, %c0_0] : memref<1x12x512xbf16, #tpu.memory_space<vmem>>, vector<1x12x512xbf16>
    %4 = vector.shape_cast %3 : vector<1x12x512xbf16> to vector<12x512xbf16>
    %5 = vector.extract_strided_slice %4 {offsets = [0, 0], sizes = [8, 512], strides = [1, 1]} : vector<12x512xbf16> to vector<8x512xbf16>
    %c0_1 = arith.constant 0 : index
    %c0_2 = arith.constant 0 : index
    %c0_3 = arith.constant 0 : index
    %6 = vector.load %arg4[%c0_1, %c0_2, %c0_3] : memref<5x512x256xbf16, #tpu.memory_space<vmem>>, vector<1x512x256xbf16>
    %7 = vector.shape_cast %6 : vector<1x512x256xbf16> to vector<512x256xbf16>
    %cst = arith.constant dense<0.000000e+00> : vector<8x256xf32>
    %8 = tpu.matmul %5, %7, %cst {dimension_numbers = #tpu.dot_dimension_numbers<[1], [0], [0], [1], [0, 0, 1, 1], [], []>} : vector<8x512xbf16>, vector<512x256xbf16>, vector<8x256xf32> -> vector<8x256xf32>
    %c0_4 = arith.constant 0 : index
    %c0_5 = arith.constant 0 : index
    %9 = vector.load %arg7[%c0_4, %c0_5] : memref<8x256xf32, #tpu.memory_space<vmem>>, vector<8x256xf32>
    tpu.vector_store %arg7[%c0_4, %c0_5], %8 {strides = array<i32>} : memref<8x256xf32, #tpu.memory_space<vmem>>, vector<8x256xf32>,
    %c0_6 = arith.constant 0 : index
    %c0_7 = arith.constant 0 : index
    %10 = vector.load %arg7[%c0_6, %c0_7] : memref<8x256xf32, #tpu.memory_space<vmem>>, vector<8x256xf32>
    %11 = vector.extract_strided_slice %4 {offsets = [1, 0], sizes = [8, 512], strides = [1, 1]} : vector<12x512xbf16> to vector<8x512xbf16>
    %c1 = arith.constant 1 : index
    %c0_8 = arith.constant 0 : index
    %c0_9 = arith.constant 0 : index
    %12 = vector.load %arg4[%c1, %c0_8, %c0_9] : memref<5x512x256xbf16, #tpu.memory_space<vmem>>, vector<1x512x256xbf16>
    %13 = vector.shape_cast %12 : vector<1x512x256xbf16> to vector<512x256xbf16>
    %cst_10 = arith.constant dense<0.000000e+00> : vector<8x256xf32>
    %14 = tpu.matmul %11, %13, %cst_10 {dimension_numbers = #tpu.dot_dimension_numbers<[1], [0], [0], [1], [0, 0, 1, 1], [], []>} : vector<8x512xbf16>, vector<512x256xbf16>, vector<8x256xf32> -> vector<8x256xf32>
    %15 = arith.addf %10, %14 : vector<8x256xf32>
    %c0_11 = arith.constant 0 : index
    %c0_12 = arith.constant 0 : index
    %16 = vector.load %arg7[%c0_11, %c0_12] : memref<8x256xf32, #tpu.memory_space<vmem>>, vector<8x256xf32>
    tpu.vector_store %arg7[%c0_11, %c0_12], %15 {strides = array<i32>} : memref<8x256xf32, #tpu.memory_space<vmem>>, vector<8x256xf32>,
    %c0_13 = arith.constant 0 : index
    %c0_14 = arith.constant 0 : index
    %17 = vector.load %arg7[%c0_13, %c0_14] : memref<8x256xf32, #tpu.memory_space<vmem>>, vector<8x256xf32>
    %18 = vector.extract_strided_slice %4 {offsets = [2, 0], sizes = [8, 512], strides = [1, 1]} : vector<12x512xbf16> to vector<8x512xbf16>
    %c2 = arith.constant 2 : index
    %c0_15 = arith.constant 0 : index
    %c0_16 = arith.constant 0 : index
    %19 = vector.load %arg4[%c2, %c0_15, %c0_16] : memref<5x512x256xbf16, #tpu.memory_space<vmem>>, vector<1x512x256xbf16>
    %20 = vector.shape_cast %19 : vector<1x512x256xbf16> to vector<512x256xbf16>
    %cst_17 = arith.constant dense<0.000000e+00> : vector<8x256xf32>
    %21 = tpu.matmul %18, %20, %cst_17 {dimension_numbers = #tpu.dot_dimension_numbers<[1], [0], [0], [1], [0, 0, 1, 1], [], []>} : vector<8x512xbf16>, vector<512x256xbf16>, vector<8x256xf32> -> vector<8x256xf32>
    %22 = arith.addf %17, %21 : vector<8x256xf32>
    %c0_18 = arith.constant 0 : index
    %c0_19 = arith.constant 0 : index
    %23 = vector.load %arg7[%c0_18, %c0_19] : memref<8x256xf32, #tpu.memory_space<vmem>>, vector<8x256xf32>
    tpu.vector_store %arg7[%c0_18, %c0_19], %22 {strides = array<i32>} : memref<8x256xf32, #tpu.memory_space<vmem>>, vector<8x256xf32>,
    %c0_20 = arith.constant 0 : index
    %c0_21 = arith.constant 0 : index
    %24 = vector.load %arg7[%c0_20, %c0_21] : memref<8x256xf32, #tpu.memory_space<vmem>>, vector<8x256xf32>
    %25 = vector.extract_strided_slice %4 {offsets = [3, 0], sizes = [8, 512], strides = [1, 1]} : vector<12x512xbf16> to vector<8x512xbf16>
    %c3 = arith.constant 3 : index
    %c0_22 = arith.constant 0 : index
    %c0_23 = arith.constant 0 : index
    %26 = vector.load %arg4[%c3, %c0_22, %c0_23] : memref<5x512x256xbf16, #tpu.memory_space<vmem>>, vector<1x512x256xbf16>
    %27 = vector.shape_cast %26 : vector<1x512x256xbf16> to vector<512x256xbf16>
    %cst_24 = arith.constant dense<0.000000e+00> : vector<8x256xf32>
    %28 = tpu.matmul %25, %27, %cst_24 {dimension_numbers = #tpu.dot_dimension_numbers<[1], [0], [0], [1], [0, 0, 1, 1], [], []>} : vector<8x512xbf16>, vector<512x256xbf16>, vector<8x256xf32> -> vector<8x256xf32>
    %29 = arith.addf %24, %28 : vector<8x256xf32>
    %c0_25 = arith.constant 0 : index
    %c0_26 = arith.constant 0 : index
    %30 = vector.load %arg7[%c0_25, %c0_26] : memref<8x256xf32, #tpu.memory_space<vmem>>, vector<8x256xf32>
    tpu.vector_store %arg7[%c0_25, %c0_26], %29 {strides = array<i32>} : memref<8x256xf32, #tpu.memory_space<vmem>>, vector<8x256xf32>,
    %c0_27 = arith.constant 0 : index
    %c0_28 = arith.constant 0 : index
    %31 = vector.load %arg7[%c0_27, %c0_28] : memref<8x256xf32, #tpu.memory_space<vmem>>, vector<8x256xf32>
    %32 = vector.extract_strided_slice %4 {offsets = [4, 0], sizes = [8, 512], strides = [1, 1]} : vector<12x512xbf16> to vector<8x512xbf16>
    %c4 = arith.constant 4 : index
    %c0_29 = arith.constant 0 : index
    %c0_30 = arith.constant 0 : index
    %33 = vector.load %arg4[%c4, %c0_29, %c0_30] : memref<5x512x256xbf16, #tpu.memory_space<vmem>>, vector<1x512x256xbf16>
    %34 = vector.shape_cast %33 : vector<1x512x256xbf16> to vector<512x256xbf16>
    %cst_31 = arith.constant dense<0.000000e+00> : vector<8x256xf32>
    %35 = tpu.matmul %32, %34, %cst_31 {dimension_numbers = #tpu.dot_dimension_numbers<[1], [0], [0], [1], [0, 0, 1, 1], [], []>} : vector<8x512xbf16>, vector<512x256xbf16>, vector<8x256xf32> -> vector<8x256xf32>
    %36 = arith.addf %31, %35 : vector<8x256xf32>
    %c0_32 = arith.constant 0 : index
    %c0_33 = arith.constant 0 : index
    %37 = vector.load %arg7[%c0_32, %c0_33] : memref<8x256xf32, #tpu.memory_space<vmem>>, vector<8x256xf32>
    tpu.vector_store %arg7[%c0_32, %c0_33], %36 {strides = array<i32>} : memref<8x256xf32, #tpu.memory_space<vmem>>, vector<8x256xf32>,
    %c0_34 = arith.constant 0 : index
    %c0_35 = arith.constant 0 : index
    %38 = vector.load %arg7[%c0_34, %c0_35] : memref<8x256xf32, #tpu.memory_space<vmem>>, vector<8x256xf32>
    %c0_36 = arith.constant 0 : index
    %c0_37 = arith.constant 0 : index
    %39 = vector.load %arg5[%c0_36, %c0_37] : memref<1x256xf32, #tpu.memory_space<vmem>>, vector<1x256xf32>
    %40 = vector.broadcast %39 : vector<1x256xf32> to vector<8x256xf32>
    %41 = arith.addf %38, %40 : vector<8x256xf32>
    %cst_38 = arith.constant 0.000000e+00 : f32
    %42 = vector.broadcast %cst_38 : f32 to vector<8x256xf32>
    %43 = arith.maximumf %41, %42 : vector<8x256xf32>
    %44 = arith.truncf %43 : vector<8x256xf32> to vector<8x256xbf16>
    %c0_39 = arith.constant 0 : index
    %c0_40 = arith.constant 0 : index
    %c0_41 = arith.constant 0 : index
    %45 = vector.load %arg6[%c0_39, %c0_40, %c0_41] : memref<1x8x256xbf16, #tpu.memory_space<vmem>>, vector<1x8x256xbf16>
    %46 = vector.shape_cast %45 : vector<1x8x256xbf16> to vector<8x256xbf16>
    %47 = vector.shape_cast %44 : vector<8x256xbf16> to vector<1x8x256xbf16>
    tpu.vector_store %arg6[%c0_39, %c0_40, %c0_41], %47 {strides = array<i32>} : memref<1x8x256xbf16, #tpu.memory_space<vmem>>, vector<1x8x256xbf16>,
    return
  }
  func.func @transform_0(%arg0: i32, %arg1: i32, %arg2: i32) -> (i32, i32, i32) {
    %c0_i32 = arith.constant 0 : i32
    %c0_i32_0 = arith.constant 0 : i32
    %c0_i32_1 = arith.constant 0 : i32
    return %arg0, %c0_i32, %c0_i32_0 : i32, i32, i32
  }
  func.func @transform_1(%arg0: i32, %arg1: i32, %arg2: i32) -> (i32, i32, i32) {
    %c0_i32 = arith.constant 0 : i32
    %c0_i32_0 = arith.constant 0 : i32
    %c0_i32_1 = arith.constant 0 : i32
    return %c0_i32, %c0_i32_0, %arg1 : i32, i32, i32
  }
  func.func @transform_2(%arg0: i32, %arg1: i32, %arg2: i32) -> (i32, i32) {
    %c0_i32 = arith.constant 0 : i32
    %c0_i32_0 = arith.constant 0 : i32
    return %c0_i32, %arg1 : i32, i32
  }
  func.func @transform_3(%arg0: i32, %arg1: i32, %arg2: i32) -> (i32, i32, i32) {
    %c0_i32 = arith.constant 0 : i32
    return %arg0, %arg2, %arg1 : i32, i32, i32
  }
}

module attributes {stable_mosaic.version = 11 : i64} {
  func.func @_conv_tap_kernel(%arg0: i32, %arg1: i32, %arg2: i32, %arg3: memref<1x12x32xbf16, #tpu.memory_space<vmem>>, %arg4: memref<5x32x256xbf16, #tpu.memory_space<vmem>>, %arg5: memref<1x256xf32, #tpu.memory_space<vmem>>, %arg6: memref<1x8x256xbf16, #tpu.memory_space<vmem>>, %arg7: memref<8x256xf32, #tpu.memory_space<vmem>>) attributes {dimension_semantics = [#tpu.dimension_semantics<parallel>, #tpu.dimension_semantics<parallel>, #tpu.dimension_semantics<parallel>], iteration_bounds = array<i64: 2, 2, 1>, scalar_prefetch = 0 : i64, scratch_operands = 1 : i64, tpu.core_type = #tpu.core_type<tc>, window_params = [{transform_indices = @transform_0, window_bounds = array<i64: 1, 12, 32>}, {transform_indices = @transform_1, window_bounds = array<i64: 5, 32, 256>}, {transform_indices = @transform_2, window_bounds = array<i64: 1, 256>}, {transform_indices = @transform_3, window_bounds = array<i64: 1, 8, 256>}]} {
    %c8_i32 = arith.constant 8 : i32
    %0 = arith.muli %arg2, %c8_i32 : i32
    %1 = tpu.assume_multiple %0, 8 : i32
    %c0 = arith.constant 0 : index
    %2 = arith.index_cast %1 : i32 to index
    %c0_0 = arith.constant 0 : index
    %3 = vector.load %arg3[%c0, %2, %c0_0] : memref<1x12x32xbf16, #tpu.memory_space<vmem>>, vector<1x12x32xbf16>
    %4 = vector.shape_cast %3 : vector<1x12x32xbf16> to vector<12x32xbf16>
    %5 = vector.extract_strided_slice %4 {offsets = [0, 0], sizes = [8, 32], strides = [1, 1]} : vector<12x32xbf16> to vector<8x32xbf16>
    %c0_1 = arith.constant 0 : index
    %c0_2 = arith.constant 0 : index
    %c0_3 = arith.constant 0 : index
    %6 = vector.load %arg4[%c0_1, %c0_2, %c0_3] : memref<5x32x256xbf16, #tpu.memory_space<vmem>>, vector<1x32x256xbf16>
    %7 = vector.shape_cast %6 : vector<1x32x256xbf16> to vector<32x256xbf16>
    %cst = arith.constant dense<0.000000e+00> : vector<8x256xf32>
    %8 = tpu.matmul %5, %7, %cst {dimension_numbers = #tpu.dot_dimension_numbers<[1], [0], [0], [1], [0, 0, 1, 1], [], []>} : vector<8x32xbf16>, vector<32x256xbf16>, vector<8x256xf32> -> vector<8x256xf32>
    %c0_4 = arith.constant 0 : index
    %c0_5 = arith.constant 0 : index
    %9 = vector.load %arg7[%c0_4, %c0_5] : memref<8x256xf32, #tpu.memory_space<vmem>>, vector<8x256xf32>
    tpu.vector_store %arg7[%c0_4, %c0_5], %8 {strides = array<i32>} : memref<8x256xf32, #tpu.memory_space<vmem>>, vector<8x256xf32>,
    %c0_6 = arith.constant 0 : index
    %c0_7 = arith.constant 0 : index
    %10 = vector.load %arg7[%c0_6, %c0_7] : memref<8x256xf32, #tpu.memory_space<vmem>>, vector<8x256xf32>
    %11 = vector.extract_strided_slice %4 {offsets = [1, 0], sizes = [8, 32], strides = [1, 1]} : vector<12x32xbf16> to vector<8x32xbf16>
    %c1 = arith.constant 1 : index
    %c0_8 = arith.constant 0 : index
    %c0_9 = arith.constant 0 : index
    %12 = vector.load %arg4[%c1, %c0_8, %c0_9] : memref<5x32x256xbf16, #tpu.memory_space<vmem>>, vector<1x32x256xbf16>
    %13 = vector.shape_cast %12 : vector<1x32x256xbf16> to vector<32x256xbf16>
    %cst_10 = arith.constant dense<0.000000e+00> : vector<8x256xf32>
    %14 = tpu.matmul %11, %13, %cst_10 {dimension_numbers = #tpu.dot_dimension_numbers<[1], [0], [0], [1], [0, 0, 1, 1], [], []>} : vector<8x32xbf16>, vector<32x256xbf16>, vector<8x256xf32> -> vector<8x256xf32>
    %15 = arith.addf %10, %14 : vector<8x256xf32>
    %c0_11 = arith.constant 0 : index
    %c0_12 = arith.constant 0 : index
    %16 = vector.load %arg7[%c0_11, %c0_12] : memref<8x256xf32, #tpu.memory_space<vmem>>, vector<8x256xf32>
    tpu.vector_store %arg7[%c0_11, %c0_12], %15 {strides = array<i32>} : memref<8x256xf32, #tpu.memory_space<vmem>>, vector<8x256xf32>,
    %c0_13 = arith.constant 0 : index
    %c0_14 = arith.constant 0 : index
    %17 = vector.load %arg7[%c0_13, %c0_14] : memref<8x256xf32, #tpu.memory_space<vmem>>, vector<8x256xf32>
    %18 = vector.extract_strided_slice %4 {offsets = [2, 0], sizes = [8, 32], strides = [1, 1]} : vector<12x32xbf16> to vector<8x32xbf16>
    %c2 = arith.constant 2 : index
    %c0_15 = arith.constant 0 : index
    %c0_16 = arith.constant 0 : index
    %19 = vector.load %arg4[%c2, %c0_15, %c0_16] : memref<5x32x256xbf16, #tpu.memory_space<vmem>>, vector<1x32x256xbf16>
    %20 = vector.shape_cast %19 : vector<1x32x256xbf16> to vector<32x256xbf16>
    %cst_17 = arith.constant dense<0.000000e+00> : vector<8x256xf32>
    %21 = tpu.matmul %18, %20, %cst_17 {dimension_numbers = #tpu.dot_dimension_numbers<[1], [0], [0], [1], [0, 0, 1, 1], [], []>} : vector<8x32xbf16>, vector<32x256xbf16>, vector<8x256xf32> -> vector<8x256xf32>
    %22 = arith.addf %17, %21 : vector<8x256xf32>
    %c0_18 = arith.constant 0 : index
    %c0_19 = arith.constant 0 : index
    %23 = vector.load %arg7[%c0_18, %c0_19] : memref<8x256xf32, #tpu.memory_space<vmem>>, vector<8x256xf32>
    tpu.vector_store %arg7[%c0_18, %c0_19], %22 {strides = array<i32>} : memref<8x256xf32, #tpu.memory_space<vmem>>, vector<8x256xf32>,
    %c0_20 = arith.constant 0 : index
    %c0_21 = arith.constant 0 : index
    %24 = vector.load %arg7[%c0_20, %c0_21] : memref<8x256xf32, #tpu.memory_space<vmem>>, vector<8x256xf32>
    %25 = vector.extract_strided_slice %4 {offsets = [3, 0], sizes = [8, 32], strides = [1, 1]} : vector<12x32xbf16> to vector<8x32xbf16>
    %c3 = arith.constant 3 : index
    %c0_22 = arith.constant 0 : index
    %c0_23 = arith.constant 0 : index
    %26 = vector.load %arg4[%c3, %c0_22, %c0_23] : memref<5x32x256xbf16, #tpu.memory_space<vmem>>, vector<1x32x256xbf16>
    %27 = vector.shape_cast %26 : vector<1x32x256xbf16> to vector<32x256xbf16>
    %cst_24 = arith.constant dense<0.000000e+00> : vector<8x256xf32>
    %28 = tpu.matmul %25, %27, %cst_24 {dimension_numbers = #tpu.dot_dimension_numbers<[1], [0], [0], [1], [0, 0, 1, 1], [], []>} : vector<8x32xbf16>, vector<32x256xbf16>, vector<8x256xf32> -> vector<8x256xf32>
    %29 = arith.addf %24, %28 : vector<8x256xf32>
    %c0_25 = arith.constant 0 : index
    %c0_26 = arith.constant 0 : index
    %30 = vector.load %arg7[%c0_25, %c0_26] : memref<8x256xf32, #tpu.memory_space<vmem>>, vector<8x256xf32>
    tpu.vector_store %arg7[%c0_25, %c0_26], %29 {strides = array<i32>} : memref<8x256xf32, #tpu.memory_space<vmem>>, vector<8x256xf32>,
    %c0_27 = arith.constant 0 : index
    %c0_28 = arith.constant 0 : index
    %31 = vector.load %arg7[%c0_27, %c0_28] : memref<8x256xf32, #tpu.memory_space<vmem>>, vector<8x256xf32>
    %32 = vector.extract_strided_slice %4 {offsets = [4, 0], sizes = [8, 32], strides = [1, 1]} : vector<12x32xbf16> to vector<8x32xbf16>
    %c4 = arith.constant 4 : index
    %c0_29 = arith.constant 0 : index
    %c0_30 = arith.constant 0 : index
    %33 = vector.load %arg4[%c4, %c0_29, %c0_30] : memref<5x32x256xbf16, #tpu.memory_space<vmem>>, vector<1x32x256xbf16>
    %34 = vector.shape_cast %33 : vector<1x32x256xbf16> to vector<32x256xbf16>
    %cst_31 = arith.constant dense<0.000000e+00> : vector<8x256xf32>
    %35 = tpu.matmul %32, %34, %cst_31 {dimension_numbers = #tpu.dot_dimension_numbers<[1], [0], [0], [1], [0, 0, 1, 1], [], []>} : vector<8x32xbf16>, vector<32x256xbf16>, vector<8x256xf32> -> vector<8x256xf32>
    %36 = arith.addf %31, %35 : vector<8x256xf32>
    %c0_32 = arith.constant 0 : index
    %c0_33 = arith.constant 0 : index
    %37 = vector.load %arg7[%c0_32, %c0_33] : memref<8x256xf32, #tpu.memory_space<vmem>>, vector<8x256xf32>
    tpu.vector_store %arg7[%c0_32, %c0_33], %36 {strides = array<i32>} : memref<8x256xf32, #tpu.memory_space<vmem>>, vector<8x256xf32>,
    %c0_34 = arith.constant 0 : index
    %c0_35 = arith.constant 0 : index
    %38 = vector.load %arg7[%c0_34, %c0_35] : memref<8x256xf32, #tpu.memory_space<vmem>>, vector<8x256xf32>
    %c0_36 = arith.constant 0 : index
    %c0_37 = arith.constant 0 : index
    %39 = vector.load %arg5[%c0_36, %c0_37] : memref<1x256xf32, #tpu.memory_space<vmem>>, vector<1x256xf32>
    %40 = vector.broadcast %39 : vector<1x256xf32> to vector<8x256xf32>
    %41 = arith.addf %38, %40 : vector<8x256xf32>
    %cst_38 = arith.constant 0.000000e+00 : f32
    %42 = vector.broadcast %cst_38 : f32 to vector<8x256xf32>
    %43 = arith.maximumf %41, %42 : vector<8x256xf32>
    %44 = arith.truncf %43 : vector<8x256xf32> to vector<8x256xbf16>
    %c0_39 = arith.constant 0 : index
    %c0_40 = arith.constant 0 : index
    %c0_41 = arith.constant 0 : index
    %45 = vector.load %arg6[%c0_39, %c0_40, %c0_41] : memref<1x8x256xbf16, #tpu.memory_space<vmem>>, vector<1x8x256xbf16>
    %46 = vector.shape_cast %45 : vector<1x8x256xbf16> to vector<8x256xbf16>
    %47 = vector.shape_cast %44 : vector<8x256xbf16> to vector<1x8x256xbf16>
    tpu.vector_store %arg6[%c0_39, %c0_40, %c0_41], %47 {strides = array<i32>} : memref<1x8x256xbf16, #tpu.memory_space<vmem>>, vector<1x8x256xbf16>,
    return
  }
  func.func @transform_0(%arg0: i32, %arg1: i32, %arg2: i32) -> (i32, i32, i32) {
    %c0_i32 = arith.constant 0 : i32
    %c0_i32_0 = arith.constant 0 : i32
    %c0_i32_1 = arith.constant 0 : i32
    return %arg0, %c0_i32, %c0_i32_0 : i32, i32, i32
  }
  func.func @transform_1(%arg0: i32, %arg1: i32, %arg2: i32) -> (i32, i32, i32) {
    %c0_i32 = arith.constant 0 : i32
    %c0_i32_0 = arith.constant 0 : i32
    %c0_i32_1 = arith.constant 0 : i32
    return %c0_i32, %c0_i32_0, %arg1 : i32, i32, i32
  }
  func.func @transform_2(%arg0: i32, %arg1: i32, %arg2: i32) -> (i32, i32) {
    %c0_i32 = arith.constant 0 : i32
    %c0_i32_0 = arith.constant 0 : i32
    return %c0_i32, %arg1 : i32, i32
  }
  func.func @transform_3(%arg0: i32, %arg1: i32, %arg2: i32) -> (i32, i32, i32) {
    %c0_i32 = arith.constant 0 : i32
    return %arg0, %arg2, %arg1 : i32, i32, i32
  }
}

module attributes {stable_mosaic.version = 11 : i64} {
  func.func @_conv_tap_kernel(%arg0: i32, %arg1: i32, %arg2: i32, %arg3: memref<1x12x512xbf16, #tpu.memory_space<vmem>>, %arg4: memref<5x512x256xbf16, #tpu.memory_space<vmem>>, %arg5: memref<1x256xf32, #tpu.memory_space<vmem>>, %arg6: memref<1x8x256xbf16, #tpu.memory_space<vmem>>, %arg7: memref<8x256xf32, #tpu.memory_space<vmem>>) attributes {dimension_semantics = [#tpu.dimension_semantics<parallel>, #tpu.dimension_semantics<parallel>, #tpu.dimension_semantics<parallel>], iteration_bounds = array<i64: 2, 2, 1>, scalar_prefetch = 0 : i64, scratch_operands = 1 : i64, tpu.core_type = #tpu.core_type<tc>, window_params = [{transform_indices = @transform_0, window_bounds = array<i64: 1, 12, 512>}, {transform_indices = @transform_1, window_bounds = array<i64: 5, 512, 256>}, {transform_indices = @transform_2, window_bounds = array<i64: 1, 256>}, {transform_indices = @transform_3, window_bounds = array<i64: 1, 8, 256>}]} {
    %c8_i32 = arith.constant 8 : i32
    %0 = arith.muli %arg2, %c8_i32 : i32
    %1 = tpu.assume_multiple %0, 8 : i32
    %c0 = arith.constant 0 : index
    %2 = arith.index_cast %1 : i32 to index
    %c0_0 = arith.constant 0 : index
    %3 = vector.load %arg3[%c0, %2, %c0_0] : memref<1x12x512xbf16, #tpu.memory_space<vmem>>, vector<1x12x512xbf16>
    %4 = vector.shape_cast %3 : vector<1x12x512xbf16> to vector<12x512xbf16>
    %5 = vector.extract_strided_slice %4 {offsets = [0, 0], sizes = [8, 512], strides = [1, 1]} : vector<12x512xbf16> to vector<8x512xbf16>
    %c0_1 = arith.constant 0 : index
    %c0_2 = arith.constant 0 : index
    %c0_3 = arith.constant 0 : index
    %6 = vector.load %arg4[%c0_1, %c0_2, %c0_3] : memref<5x512x256xbf16, #tpu.memory_space<vmem>>, vector<1x512x256xbf16>
    %7 = vector.shape_cast %6 : vector<1x512x256xbf16> to vector<512x256xbf16>
    %cst = arith.constant dense<0.000000e+00> : vector<8x256xf32>
    %8 = tpu.matmul %5, %7, %cst {dimension_numbers = #tpu.dot_dimension_numbers<[1], [0], [0], [1], [0, 0, 1, 1], [], []>} : vector<8x512xbf16>, vector<512x256xbf16>, vector<8x256xf32> -> vector<8x256xf32>
    %c0_4 = arith.constant 0 : index
    %c0_5 = arith.constant 0 : index
    %9 = vector.load %arg7[%c0_4, %c0_5] : memref<8x256xf32, #tpu.memory_space<vmem>>, vector<8x256xf32>
    tpu.vector_store %arg7[%c0_4, %c0_5], %8 {strides = array<i32>} : memref<8x256xf32, #tpu.memory_space<vmem>>, vector<8x256xf32>,
    %c0_6 = arith.constant 0 : index
    %c0_7 = arith.constant 0 : index
    %10 = vector.load %arg7[%c0_6, %c0_7] : memref<8x256xf32, #tpu.memory_space<vmem>>, vector<8x256xf32>
    %11 = vector.extract_strided_slice %4 {offsets = [1, 0], sizes = [8, 512], strides = [1, 1]} : vector<12x512xbf16> to vector<8x512xbf16>
    %c1 = arith.constant 1 : index
    %c0_8 = arith.constant 0 : index
    %c0_9 = arith.constant 0 : index
    %12 = vector.load %arg4[%c1, %c0_8, %c0_9] : memref<5x512x256xbf16, #tpu.memory_space<vmem>>, vector<1x512x256xbf16>
    %13 = vector.shape_cast %12 : vector<1x512x256xbf16> to vector<512x256xbf16>
    %cst_10 = arith.constant dense<0.000000e+00> : vector<8x256xf32>
    %14 = tpu.matmul %11, %13, %cst_10 {dimension_numbers = #tpu.dot_dimension_numbers<[1], [0], [0], [1], [0, 0, 1, 1], [], []>} : vector<8x512xbf16>, vector<512x256xbf16>, vector<8x256xf32> -> vector<8x256xf32>
    %15 = arith.addf %10, %14 : vector<8x256xf32>
    %c0_11 = arith.constant 0 : index
    %c0_12 = arith.constant 0 : index
    %16 = vector.load %arg7[%c0_11, %c0_12] : memref<8x256xf32, #tpu.memory_space<vmem>>, vector<8x256xf32>
    tpu.vector_store %arg7[%c0_11, %c0_12], %15 {strides = array<i32>} : memref<8x256xf32, #tpu.memory_space<vmem>>, vector<8x256xf32>,
    %c0_13 = arith.constant 0 : index
    %c0_14 = arith.constant 0 : index
    %17 = vector.load %arg7[%c0_13, %c0_14] : memref<8x256xf32, #tpu.memory_space<vmem>>, vector<8x256xf32>
    %18 = vector.extract_strided_slice %4 {offsets = [2, 0], sizes = [8, 512], strides = [1, 1]} : vector<12x512xbf16> to vector<8x512xbf16>
    %c2 = arith.constant 2 : index
    %c0_15 = arith.constant 0 : index
    %c0_16 = arith.constant 0 : index
    %19 = vector.load %arg4[%c2, %c0_15, %c0_16] : memref<5x512x256xbf16, #tpu.memory_space<vmem>>, vector<1x512x256xbf16>
    %20 = vector.shape_cast %19 : vector<1x512x256xbf16> to vector<512x256xbf16>
    %cst_17 = arith.constant dense<0.000000e+00> : vector<8x256xf32>
    %21 = tpu.matmul %18, %20, %cst_17 {dimension_numbers = #tpu.dot_dimension_numbers<[1], [0], [0], [1], [0, 0, 1, 1], [], []>} : vector<8x512xbf16>, vector<512x256xbf16>, vector<8x256xf32> -> vector<8x256xf32>
    %22 = arith.addf %17, %21 : vector<8x256xf32>
    %c0_18 = arith.constant 0 : index
    %c0_19 = arith.constant 0 : index
    %23 = vector.load %arg7[%c0_18, %c0_19] : memref<8x256xf32, #tpu.memory_space<vmem>>, vector<8x256xf32>
    tpu.vector_store %arg7[%c0_18, %c0_19], %22 {strides = array<i32>} : memref<8x256xf32, #tpu.memory_space<vmem>>, vector<8x256xf32>,
    %c0_20 = arith.constant 0 : index
    %c0_21 = arith.constant 0 : index
    %24 = vector.load %arg7[%c0_20, %c0_21] : memref<8x256xf32, #tpu.memory_space<vmem>>, vector<8x256xf32>
    %25 = vector.extract_strided_slice %4 {offsets = [3, 0], sizes = [8, 512], strides = [1, 1]} : vector<12x512xbf16> to vector<8x512xbf16>
    %c3 = arith.constant 3 : index
    %c0_22 = arith.constant 0 : index
    %c0_23 = arith.constant 0 : index
    %26 = vector.load %arg4[%c3, %c0_22, %c0_23] : memref<5x512x256xbf16, #tpu.memory_space<vmem>>, vector<1x512x256xbf16>
    %27 = vector.shape_cast %26 : vector<1x512x256xbf16> to vector<512x256xbf16>
    %cst_24 = arith.constant dense<0.000000e+00> : vector<8x256xf32>
    %28 = tpu.matmul %25, %27, %cst_24 {dimension_numbers = #tpu.dot_dimension_numbers<[1], [0], [0], [1], [0, 0, 1, 1], [], []>} : vector<8x512xbf16>, vector<512x256xbf16>, vector<8x256xf32> -> vector<8x256xf32>
    %29 = arith.addf %24, %28 : vector<8x256xf32>
    %c0_25 = arith.constant 0 : index
    %c0_26 = arith.constant 0 : index
    %30 = vector.load %arg7[%c0_25, %c0_26] : memref<8x256xf32, #tpu.memory_space<vmem>>, vector<8x256xf32>
    tpu.vector_store %arg7[%c0_25, %c0_26], %29 {strides = array<i32>} : memref<8x256xf32, #tpu.memory_space<vmem>>, vector<8x256xf32>,
    %c0_27 = arith.constant 0 : index
    %c0_28 = arith.constant 0 : index
    %31 = vector.load %arg7[%c0_27, %c0_28] : memref<8x256xf32, #tpu.memory_space<vmem>>, vector<8x256xf32>
    %32 = vector.extract_strided_slice %4 {offsets = [4, 0], sizes = [8, 512], strides = [1, 1]} : vector<12x512xbf16> to vector<8x512xbf16>
    %c4 = arith.constant 4 : index
    %c0_29 = arith.constant 0 : index
    %c0_30 = arith.constant 0 : index
    %33 = vector.load %arg4[%c4, %c0_29, %c0_30] : memref<5x512x256xbf16, #tpu.memory_space<vmem>>, vector<1x512x256xbf16>
    %34 = vector.shape_cast %33 : vector<1x512x256xbf16> to vector<512x256xbf16>
    %cst_31 = arith.constant dense<0.000000e+00> : vector<8x256xf32>
    %35 = tpu.matmul %32, %34, %cst_31 {dimension_numbers = #tpu.dot_dimension_numbers<[1], [0], [0], [1], [0, 0, 1, 1], [], []>} : vector<8x512xbf16>, vector<512x256xbf16>, vector<8x256xf32> -> vector<8x256xf32>
    %36 = arith.addf %31, %35 : vector<8x256xf32>
    %c0_32 = arith.constant 0 : index
    %c0_33 = arith.constant 0 : index
    %37 = vector.load %arg7[%c0_32, %c0_33] : memref<8x256xf32, #tpu.memory_space<vmem>>, vector<8x256xf32>
    tpu.vector_store %arg7[%c0_32, %c0_33], %36 {strides = array<i32>} : memref<8x256xf32, #tpu.memory_space<vmem>>, vector<8x256xf32>,
    %c0_34 = arith.constant 0 : index
    %c0_35 = arith.constant 0 : index
    %38 = vector.load %arg7[%c0_34, %c0_35] : memref<8x256xf32, #tpu.memory_space<vmem>>, vector<8x256xf32>
    %c0_36 = arith.constant 0 : index
    %c0_37 = arith.constant 0 : index
    %39 = vector.load %arg5[%c0_36, %c0_37] : memref<1x256xf32, #tpu.memory_space<vmem>>, vector<1x256xf32>
    %40 = vector.broadcast %39 : vector<1x256xf32> to vector<8x256xf32>
    %41 = arith.addf %38, %40 : vector<8x256xf32>
    %cst_38 = arith.constant 0.000000e+00 : f32
    %42 = vector.broadcast %cst_38 : f32 to vector<8x256xf32>
    %43 = arith.maximumf %41, %42 : vector<8x256xf32>
    %44 = arith.truncf %43 : vector<8x256xf32> to vector<8x256xbf16>
    %c0_39 = arith.constant 0 : index
    %c0_40 = arith.constant 0 : index
    %c0_41 = arith.constant 0 : index
    %45 = vector.load %arg6[%c0_39, %c0_40, %c0_41] : memref<1x8x256xbf16, #tpu.memory_space<vmem>>, vector<1x8x256xbf16>
    %46 = vector.shape_cast %45 : vector<1x8x256xbf16> to vector<8x256xbf16>
    %47 = vector.shape_cast %44 : vector<8x256xbf16> to vector<1x8x256xbf16>
    tpu.vector_store %arg6[%c0_39, %c0_40, %c0_41], %47 {strides = array<i32>} : memref<1x8x256xbf16, #tpu.memory_space<vmem>>, vector<1x8x256xbf16>,
    return
  }
  func.func @transform_0(%arg0: i32, %arg1: i32, %arg2: i32) -> (i32, i32, i32) {
    %c0_i32 = arith.constant 0 : i32
    %c0_i32_0 = arith.constant 0 : i32
    %c0_i32_1 = arith.constant 0 : i32
    return %arg0, %c0_i32, %c0_i32_0 : i32, i32, i32
  }
  func.func @transform_1(%arg0: i32, %arg1: i32, %arg2: i32) -> (i32, i32, i32) {
    %c0_i32 = arith.constant 0 : i32
    %c0_i32_0 = arith.constant 0 : i32
    %c0_i32_1 = arith.constant 0 : i32
    return %c0_i32, %c0_i32_0, %arg1 : i32, i32, i32
  }
  func.func @transform_2(%arg0: i32, %arg1: i32, %arg2: i32) -> (i32, i32) {
    %c0_i32 = arith.constant 0 : i32
    %c0_i32_0 = arith.constant 0 : i32
    return %c0_i32, %arg1 : i32, i32
  }
  func.func @transform_3(%arg0: i32, %arg1: i32, %arg2: i32) -> (i32, i32, i32) {
    %c0_i32 = arith.constant 0 : i32
    return %arg0, %arg2, %arg1 : i32, i32, i32
  }
}

module attributes {stable_mosaic.version = 11 : i64} {
  func.func @_mm_bias_k1_kernel(%arg0: i32, %arg1: i32, %arg2: memref<16x512xbf16, #tpu.memory_space<vmem>>, %arg3: memref<512x256xbf16, #tpu.memory_space<vmem>>, %arg4: memref<1x256xf32, #tpu.memory_space<vmem>>, %arg5: memref<16x256xf32, #tpu.memory_space<vmem>>) attributes {dimension_semantics = [#tpu.dimension_semantics<parallel>, #tpu.dimension_semantics<parallel>], iteration_bounds = array<i64: 1, 1>, scalar_prefetch = 0 : i64, scratch_operands = 0 : i64, tpu.core_type = #tpu.core_type<tc>, window_params = [{transform_indices = @transform_0, window_bounds = array<i64: 16, 512>}, {transform_indices = @transform_1, window_bounds = array<i64: 512, 256>}, {transform_indices = @transform_2, window_bounds = array<i64: 1, 256>}, {transform_indices = @transform_3, window_bounds = array<i64: 16, 256>}]} {
    %c0 = arith.constant 0 : index
    %c0_0 = arith.constant 0 : index
    %0 = vector.load %arg2[%c0, %c0_0] : memref<16x512xbf16, #tpu.memory_space<vmem>>, vector<16x512xbf16>
    %c0_1 = arith.constant 0 : index
    %c0_2 = arith.constant 0 : index
    %1 = vector.load %arg3[%c0_1, %c0_2] : memref<512x256xbf16, #tpu.memory_space<vmem>>, vector<512x256xbf16>
    %cst = arith.constant dense<0.000000e+00> : vector<16x256xf32>
    %2 = tpu.matmul %0, %1, %cst {dimension_numbers = #tpu.dot_dimension_numbers<[1], [0], [0], [1], [0, 0, 1, 1], [], []>} : vector<16x512xbf16>, vector<512x256xbf16>, vector<16x256xf32> -> vector<16x256xf32>
    %c0_3 = arith.constant 0 : index
    %c0_4 = arith.constant 0 : index
    %3 = vector.load %arg4[%c0_3, %c0_4] : memref<1x256xf32, #tpu.memory_space<vmem>>, vector<1x256xf32>
    %4 = vector.broadcast %3 : vector<1x256xf32> to vector<16x256xf32>
    %5 = arith.addf %2, %4 : vector<16x256xf32>
    %c0_5 = arith.constant 0 : index
    %c0_6 = arith.constant 0 : index
    %6 = vector.load %arg5[%c0_5, %c0_6] : memref<16x256xf32, #tpu.memory_space<vmem>>, vector<16x256xf32>
    tpu.vector_store %arg5[%c0_5, %c0_6], %5 {strides = array<i32>} : memref<16x256xf32, #tpu.memory_space<vmem>>, vector<16x256xf32>,
    return
  }
  func.func @transform_0(%arg0: i32, %arg1: i32) -> (i32, i32) {
    %c0_i32 = arith.constant 0 : i32
    %c0_i32_0 = arith.constant 0 : i32
    return %arg0, %c0_i32 : i32, i32
  }
  func.func @transform_1(%arg0: i32, %arg1: i32) -> (i32, i32) {
    %c0_i32 = arith.constant 0 : i32
    %c0_i32_0 = arith.constant 0 : i32
    return %c0_i32, %arg1 : i32, i32
  }
  func.func @transform_2(%arg0: i32, %arg1: i32) -> (i32, i32) {
    %c0_i32 = arith.constant 0 : i32
    %c0_i32_0 = arith.constant 0 : i32
    return %c0_i32, %arg1 : i32, i32
  }
  func.func @transform_3(%arg0: i32, %arg1: i32) -> (i32, i32) {
    %c0_i32 = arith.constant 0 : i32
    return %arg0, %arg1 : i32, i32
  }
}

module attributes {stable_mosaic.version = 11 : i64} {
  func.func @_mm_bias_k1_kernel(%arg0: i32, %arg1: i32, %arg2: memref<16x64xbf16, #tpu.memory_space<vmem>>, %arg3: memref<64x256xbf16, #tpu.memory_space<vmem>>, %arg4: memref<1x256xf32, #tpu.memory_space<vmem>>, %arg5: memref<16x256xf32, #tpu.memory_space<vmem>>) attributes {dimension_semantics = [#tpu.dimension_semantics<parallel>, #tpu.dimension_semantics<parallel>], iteration_bounds = array<i64: 1, 1>, scalar_prefetch = 0 : i64, scratch_operands = 0 : i64, tpu.core_type = #tpu.core_type<tc>, window_params = [{transform_indices = @transform_0, window_bounds = array<i64: 16, 64>}, {transform_indices = @transform_1, window_bounds = array<i64: 64, 256>}, {transform_indices = @transform_2, window_bounds = array<i64: 1, 256>}, {transform_indices = @transform_3, window_bounds = array<i64: 16, 256>}]} {
    %c0 = arith.constant 0 : index
    %c0_0 = arith.constant 0 : index
    %0 = vector.load %arg2[%c0, %c0_0] : memref<16x64xbf16, #tpu.memory_space<vmem>>, vector<16x64xbf16>
    %c0_1 = arith.constant 0 : index
    %c0_2 = arith.constant 0 : index
    %1 = vector.load %arg3[%c0_1, %c0_2] : memref<64x256xbf16, #tpu.memory_space<vmem>>, vector<64x256xbf16>
    %cst = arith.constant dense<0.000000e+00> : vector<16x256xf32>
    %2 = tpu.matmul %0, %1, %cst {dimension_numbers = #tpu.dot_dimension_numbers<[1], [0], [0], [1], [0, 0, 1, 1], [], []>} : vector<16x64xbf16>, vector<64x256xbf16>, vector<16x256xf32> -> vector<16x256xf32>
    %c0_3 = arith.constant 0 : index
    %c0_4 = arith.constant 0 : index
    %3 = vector.load %arg4[%c0_3, %c0_4] : memref<1x256xf32, #tpu.memory_space<vmem>>, vector<1x256xf32>
    %4 = vector.broadcast %3 : vector<1x256xf32> to vector<16x256xf32>
    %5 = arith.addf %2, %4 : vector<16x256xf32>
    %c0_5 = arith.constant 0 : index
    %c0_6 = arith.constant 0 : index
    %6 = vector.load %arg5[%c0_5, %c0_6] : memref<16x256xf32, #tpu.memory_space<vmem>>, vector<16x256xf32>
    tpu.vector_store %arg5[%c0_5, %c0_6], %5 {strides = array<i32>} : memref<16x256xf32, #tpu.memory_space<vmem>>, vector<16x256xf32>,
    return
  }
  func.func @transform_0(%arg0: i32, %arg1: i32) -> (i32, i32) {
    %c0_i32 = arith.constant 0 : i32
    %c0_i32_0 = arith.constant 0 : i32
    return %arg0, %c0_i32 : i32, i32
  }
  func.func @transform_1(%arg0: i32, %arg1: i32) -> (i32, i32) {
    %c0_i32 = arith.constant 0 : i32
    %c0_i32_0 = arith.constant 0 : i32
    return %c0_i32, %arg1 : i32, i32
  }
  func.func @transform_2(%arg0: i32, %arg1: i32) -> (i32, i32) {
    %c0_i32 = arith.constant 0 : i32
    %c0_i32_0 = arith.constant 0 : i32
    return %c0_i32, %arg1 : i32, i32
  }
  func.func @transform_3(%arg0: i32, %arg1: i32) -> (i32, i32) {
    %c0_i32 = arith.constant 0 : i32
    return %arg0, %arg1 : i32, i32
  }
}

module attributes {stable_mosaic.version = 11 : i64} {
  func.func @_bilstm_kernel(%arg0: i32, %arg1: memref<8x2x256xf32, #tpu.memory_space<vmem>>, %arg2: memref<8x2x256xf32, #tpu.memory_space<vmem>>, %arg3: memref<64x256xbf16, #tpu.memory_space<vmem>>, %arg4: memref<8x2x32xf32, #tpu.memory_space<vmem>>, %arg5: memref<8x2x32xf32, #tpu.memory_space<vmem>>, %arg6: memref<2x64xf32, #tpu.memory_space<vmem>>, %arg7: memref<2x64xf32, #tpu.memory_space<vmem>>) attributes {dimension_semantics = [#tpu.dimension_semantics<arbitrary>], iteration_bounds = array<i64: 1>, scalar_prefetch = 0 : i64, scratch_operands = 2 : i64, tpu.core_type = #tpu.core_type<tc>, window_params = [{transform_indices = @transform_0, window_bounds = array<i64: 8, 2, 256>}, {transform_indices = @transform_1, window_bounds = array<i64: 8, 2, 256>}, {pipeline_mode = #tpu.pipeline_mode<synchronous>, transform_indices = @transform_2, window_bounds = array<i64: 64, 256>}, {transform_indices = @transform_3, window_bounds = array<i64: 8, 2, 32>}, {transform_indices = @transform_4, window_bounds = array<i64: 8, 2, 32>}]} {
    %c0_i32 = arith.constant 0 : i32
    %0 = arith.cmpi eq, %arg0, %c0_i32 : i32
    %1 = arith.extui %0 : i1 to i32
    %c0_i32_0 = arith.constant 0 : i32
    %2 = arith.cmpi ne, %1, %c0_i32_0 : i32
    scf.if %2 {
      %cst_111 = arith.constant 0.000000e+00 : f32
      %331 = vector.broadcast %cst_111 : f32 to vector<2x64xf32>
      %c0_112 = arith.constant 0 : index
      %c0_113 = arith.constant 0 : index
      %332 = vector.load %arg6[%c0_112, %c0_113] : memref<2x64xf32, #tpu.memory_space<vmem>>, vector<2x64xf32>
      tpu.vector_store %arg6[%c0_112, %c0_113], %331 {strides = array<i32>} : memref<2x64xf32, #tpu.memory_space<vmem>>, vector<2x64xf32>,
      %cst_114 = arith.constant 0.000000e+00 : f32
      %333 = vector.broadcast %cst_114 : f32 to vector<2x64xf32>
      %c0_115 = arith.constant 0 : index
      %c0_116 = arith.constant 0 : index
      %334 = vector.load %arg7[%c0_115, %c0_116] : memref<2x64xf32, #tpu.memory_space<vmem>>, vector<2x64xf32>
      tpu.vector_store %arg7[%c0_115, %c0_116], %333 {strides = array<i32>} : memref<2x64xf32, #tpu.memory_space<vmem>>, vector<2x64xf32>,
    } else {
    }
    %c0 = arith.constant 0 : index
    %c0_1 = arith.constant 0 : index
    %3 = vector.load %arg3[%c0, %c0_1] : memref<64x256xbf16, #tpu.memory_space<vmem>>, vector<64x256xbf16>
    %4 = tpu.iota {dimensions = array<i32: 1>} : vector<2x256xi32>
    %c64_i32 = arith.constant 64 : i32
    %c0_i32_2 = arith.constant 0 : i32
    %5 = arith.cmpi eq, %c64_i32, %c0_i32_2 : i32
    %c1_i32 = arith.constant 1 : i32
    %6 = arith.select %5, %c1_i32, %c64_i32 : i32
    %7 = vector.broadcast %6 : i32 to vector<2x256xi32>
    %8 = arith.remsi %4, %7 : vector<2x256xi32>
    %c0_i32_3 = arith.constant 0 : i32
    %9 = vector.broadcast %c0_i32_3 : i32 to vector<2x256xi32>
    %10 = arith.cmpi ne, %8, %9 : vector<2x256xi32>
    %c0_i32_4 = arith.constant 0 : i32
    %11 = vector.broadcast %c0_i32_4 : i32 to vector<2x256xi32>
    %12 = arith.cmpi slt, %8, %11 : vector<2x256xi32>
    %c0_i32_5 = arith.constant 0 : i32
    %13 = arith.cmpi slt, %6, %c0_i32_5 : i32
    %14 = vector.broadcast %13 : i1 to vector<2x256xi1>
    %15 = vector.broadcast %14 : vector<2x256xi1> to vector<2x256xi1>
    %16 = arith.xori %12, %15 : vector<2x256xi1>
    %17 = arith.andi %16, %10 : vector<2x256xi1>
    %18 = vector.broadcast %6 : i32 to vector<2x256xi32>
    %19 = arith.addi %8, %18 : vector<2x256xi32>
    %20 = arith.select %17, %19, %8 : vector<2x256xi1>, vector<2x256xi32>
    %c32_i32 = arith.constant 32 : i32
    %21 = vector.broadcast %c32_i32 : i32 to vector<2x256xi32>
    %22 = arith.cmpi slt, %20, %21 : vector<2x256xi32>
    %c0_6 = arith.constant 0 : index
    %c0_7 = arith.constant 0 : index
    %23 = vector.load %arg6[%c0_6, %c0_7] : memref<2x64xf32, #tpu.memory_space<vmem>>, vector<2x64xf32>
    %c0_8 = arith.constant 0 : index
    %c0_9 = arith.constant 0 : index
    %24 = vector.load %arg7[%c0_8, %c0_9] : memref<2x64xf32, #tpu.memory_space<vmem>>, vector<2x64xf32>
    %c0_i32_10 = arith.constant 0 : i32
    %25 = arith.index_cast %c0_i32_10 : i32 to index
    %c0_11 = arith.constant 0 : index
    %c0_12 = arith.constant 0 : index
    %26 = vector.load %arg1[%25, %c0_11, %c0_12] : memref<8x2x256xf32, #tpu.memory_space<vmem>>, vector<1x2x256xf32>
    %27 = vector.shape_cast %26 : vector<1x2x256xf32> to vector<2x256xf32>
    %c7_i32 = arith.constant 7 : i32
    %28 = arith.subi %c7_i32, %c0_i32_10 : i32
    %29 = arith.index_cast %28 : i32 to index
    %c0_13 = arith.constant 0 : index
    %c0_14 = arith.constant 0 : index
    %30 = vector.load %arg2[%29, %c0_13, %c0_14] : memref<8x2x256xf32, #tpu.memory_space<vmem>>, vector<1x2x256xf32>
    %31 = vector.shape_cast %30 : vector<1x2x256xf32> to vector<2x256xf32>
    %32 = arith.select %22, %27, %31 : vector<2x256xi1>, vector<2x256xf32>
    %33 = arith.truncf %23 : vector<2x64xf32> to vector<2x64xbf16>
    %cst = arith.constant dense<0.000000e+00> : vector<2x256xf32>
    %34 = tpu.matmul %33, %3, %cst {dimension_numbers = #tpu.dot_dimension_numbers<[1], [0], [0], [1], [0, 0, 1, 1], [], []>} : vector<2x64xbf16>, vector<64x256xbf16>, vector<2x256xf32> -> vector<2x256xf32>
    %35 = arith.addf %32, %34 : vector<2x256xf32>
    %36 = vector.extract_strided_slice %35 {offsets = [0, 0], sizes = [2, 192], strides = [1, 1]} : vector<2x256xf32> to vector<2x192xf32>
    %37 = arith.negf %36 : vector<2x192xf32>
    %38 = math.exp %37 : vector<2x192xf32>
    %cst_15 = arith.constant 1.000000e+00 : f32
    %39 = vector.broadcast %cst_15 : f32 to vector<2x192xf32>
    %40 = arith.addf %39, %38 : vector<2x192xf32>
    %41 = arith.divf %39, %40 : vector<2x192xf32>
    %42 = vector.extract_strided_slice %41 {offsets = [0, 0], sizes = [2, 64], strides = [1, 1]} : vector<2x192xf32> to vector<2x64xf32>
    %43 = vector.extract_strided_slice %41 {offsets = [0, 64], sizes = [2, 64], strides = [1, 1]} : vector<2x192xf32> to vector<2x64xf32>
    %44 = vector.extract_strided_slice %41 {offsets = [0, 128], sizes = [2, 64], strides = [1, 1]} : vector<2x192xf32> to vector<2x64xf32>
    %45 = vector.extract_strided_slice %35 {offsets = [0, 192], sizes = [2, 64], strides = [1, 1]} : vector<2x256xf32> to vector<2x64xf32>
    %46 = math.tanh %45 : vector<2x64xf32>
    %47 = arith.mulf %43, %24 : vector<2x64xf32>
    %48 = arith.mulf %42, %46 : vector<2x64xf32>
    %49 = arith.addf %47, %48 : vector<2x64xf32>
    %50 = math.tanh %49 : vector<2x64xf32>
    %51 = arith.mulf %44, %50 : vector<2x64xf32>
    %52 = vector.extract_strided_slice %51 {offsets = [0, 0], sizes = [2, 32], strides = [1, 1]} : vector<2x64xf32> to vector<2x32xf32>
    %53 = arith.index_cast %c0_i32_10 : i32 to index
    %c0_16 = arith.constant 0 : index
    %c0_17 = arith.constant 0 : index
    %54 = vector.load %arg4[%53, %c0_16, %c0_17] : memref<8x2x32xf32, #tpu.memory_space<vmem>>, vector<1x2x32xf32>
    %55 = vector.shape_cast %54 : vector<1x2x32xf32> to vector<2x32xf32>
    %56 = vector.shape_cast %52 : vector<2x32xf32> to vector<1x2x32xf32>
    tpu.vector_store %arg4[%53, %c0_16, %c0_17], %56 {strides = array<i32>} : memref<8x2x32xf32, #tpu.memory_space<vmem>>, vector<1x2x32xf32>,
    %57 = vector.extract_strided_slice %51 {offsets = [0, 32], sizes = [2, 32], strides = [1, 1]} : vector<2x64xf32> to vector<2x32xf32>
    %c7_i32_18 = arith.constant 7 : i32
    %58 = arith.subi %c7_i32_18, %c0_i32_10 : i32
    %59 = arith.index_cast %58 : i32 to index
    %c0_19 = arith.constant 0 : index
    %c0_20 = arith.constant 0 : index
    %60 = vector.load %arg5[%59, %c0_19, %c0_20] : memref<8x2x32xf32, #tpu.memory_space<vmem>>, vector<1x2x32xf32>
    %61 = vector.shape_cast %60 : vector<1x2x32xf32> to vector<2x32xf32>
    %62 = vector.shape_cast %57 : vector<2x32xf32> to vector<1x2x32xf32>
    tpu.vector_store %arg5[%59, %c0_19, %c0_20], %62 {strides = array<i32>} : memref<8x2x32xf32, #tpu.memory_space<vmem>>, vector<1x2x32xf32>,
    %c1_i32_21 = arith.constant 1 : i32
    %63 = arith.index_cast %c1_i32_21 : i32 to index
    %c0_22 = arith.constant 0 : index
    %c0_23 = arith.constant 0 : index
    %64 = vector.load %arg1[%63, %c0_22, %c0_23] : memref<8x2x256xf32, #tpu.memory_space<vmem>>, vector<1x2x256xf32>
    %65 = vector.shape_cast %64 : vector<1x2x256xf32> to vector<2x256xf32>
    %c7_i32_24 = arith.constant 7 : i32
    %66 = arith.subi %c7_i32_24, %c1_i32_21 : i32
    %67 = arith.index_cast %66 : i32 to index
    %c0_25 = arith.constant 0 : index
    %c0_26 = arith.constant 0 : index
    %68 = vector.load %arg2[%67, %c0_25, %c0_26] : memref<8x2x256xf32, #tpu.memory_space<vmem>>, vector<1x2x256xf32>
    %69 = vector.shape_cast %68 : vector<1x2x256xf32> to vector<2x256xf32>
    %70 = arith.select %22, %65, %69 : vector<2x256xi1>, vector<2x256xf32>
    %71 = arith.truncf %51 : vector<2x64xf32> to vector<2x64xbf16>
    %cst_27 = arith.constant dense<0.000000e+00> : vector<2x256xf32>
    %72 = tpu.matmul %71, %3, %cst_27 {dimension_numbers = #tpu.dot_dimension_numbers<[1], [0], [0], [1], [0, 0, 1, 1], [], []>} : vector<2x64xbf16>, vector<64x256xbf16>, vector<2x256xf32> -> vector<2x256xf32>
    %73 = arith.addf %70, %72 : vector<2x256xf32>
    %74 = vector.extract_strided_slice %73 {offsets = [0, 0], sizes = [2, 192], strides = [1, 1]} : vector<2x256xf32> to vector<2x192xf32>
    %75 = arith.negf %74 : vector<2x192xf32>
    %76 = math.exp %75 : vector<2x192xf32>
    %cst_28 = arith.constant 1.000000e+00 : f32
    %77 = vector.broadcast %cst_28 : f32 to vector<2x192xf32>
    %78 = arith.addf %77, %76 : vector<2x192xf32>
    %79 = arith.divf %77, %78 : vector<2x192xf32>
    %80 = vector.extract_strided_slice %79 {offsets = [0, 0], sizes = [2, 64], strides = [1, 1]} : vector<2x192xf32> to vector<2x64xf32>
    %81 = vector.extract_strided_slice %79 {offsets = [0, 64], sizes = [2, 64], strides = [1, 1]} : vector<2x192xf32> to vector<2x64xf32>
    %82 = vector.extract_strided_slice %79 {offsets = [0, 128], sizes = [2, 64], strides = [1, 1]} : vector<2x192xf32> to vector<2x64xf32>
    %83 = vector.extract_strided_slice %73 {offsets = [0, 192], sizes = [2, 64], strides = [1, 1]} : vector<2x256xf32> to vector<2x64xf32>
    %84 = math.tanh %83 : vector<2x64xf32>
    %85 = arith.mulf %81, %49 : vector<2x64xf32>
    %86 = arith.mulf %80, %84 : vector<2x64xf32>
    %87 = arith.addf %85, %86 : vector<2x64xf32>
    %88 = math.tanh %87 : vector<2x64xf32>
    %89 = arith.mulf %82, %88 : vector<2x64xf32>
    %90 = vector.extract_strided_slice %89 {offsets = [0, 0], sizes = [2, 32], strides = [1, 1]} : vector<2x64xf32> to vector<2x32xf32>
    %91 = arith.index_cast %c1_i32_21 : i32 to index
    %c0_29 = arith.constant 0 : index
    %c0_30 = arith.constant 0 : index
    %92 = vector.load %arg4[%91, %c0_29, %c0_30] : memref<8x2x32xf32, #tpu.memory_space<vmem>>, vector<1x2x32xf32>
    %93 = vector.shape_cast %92 : vector<1x2x32xf32> to vector<2x32xf32>
    %94 = vector.shape_cast %90 : vector<2x32xf32> to vector<1x2x32xf32>
    tpu.vector_store %arg4[%91, %c0_29, %c0_30], %94 {strides = array<i32>} : memref<8x2x32xf32, #tpu.memory_space<vmem>>, vector<1x2x32xf32>,
    %95 = vector.extract_strided_slice %89 {offsets = [0, 32], sizes = [2, 32], strides = [1, 1]} : vector<2x64xf32> to vector<2x32xf32>
    %c7_i32_31 = arith.constant 7 : i32
    %96 = arith.subi %c7_i32_31, %c1_i32_21 : i32
    %97 = arith.index_cast %96 : i32 to index
    %c0_32 = arith.constant 0 : index
    %c0_33 = arith.constant 0 : index
    %98 = vector.load %arg5[%97, %c0_32, %c0_33] : memref<8x2x32xf32, #tpu.memory_space<vmem>>, vector<1x2x32xf32>
    %99 = vector.shape_cast %98 : vector<1x2x32xf32> to vector<2x32xf32>
    %100 = vector.shape_cast %95 : vector<2x32xf32> to vector<1x2x32xf32>
    tpu.vector_store %arg5[%97, %c0_32, %c0_33], %100 {strides = array<i32>} : memref<8x2x32xf32, #tpu.memory_space<vmem>>, vector<1x2x32xf32>,
    %c2_i32 = arith.constant 2 : i32
    %101 = arith.index_cast %c2_i32 : i32 to index
    %c0_34 = arith.constant 0 : index
    %c0_35 = arith.constant 0 : index
    %102 = vector.load %arg1[%101, %c0_34, %c0_35] : memref<8x2x256xf32, #tpu.memory_space<vmem>>, vector<1x2x256xf32>
    %103 = vector.shape_cast %102 : vector<1x2x256xf32> to vector<2x256xf32>
    %c7_i32_36 = arith.constant 7 : i32
    %104 = arith.subi %c7_i32_36, %c2_i32 : i32
    %105 = arith.index_cast %104 : i32 to index
    %c0_37 = arith.constant 0 : index
    %c0_38 = arith.constant 0 : index
    %106 = vector.load %arg2[%105, %c0_37, %c0_38] : memref<8x2x256xf32, #tpu.memory_space<vmem>>, vector<1x2x256xf32>
    %107 = vector.shape_cast %106 : vector<1x2x256xf32> to vector<2x256xf32>
    %108 = arith.select %22, %103, %107 : vector<2x256xi1>, vector<2x256xf32>
    %109 = arith.truncf %89 : vector<2x64xf32> to vector<2x64xbf16>
    %cst_39 = arith.constant dense<0.000000e+00> : vector<2x256xf32>
    %110 = tpu.matmul %109, %3, %cst_39 {dimension_numbers = #tpu.dot_dimension_numbers<[1], [0], [0], [1], [0, 0, 1, 1], [], []>} : vector<2x64xbf16>, vector<64x256xbf16>, vector<2x256xf32> -> vector<2x256xf32>
    %111 = arith.addf %108, %110 : vector<2x256xf32>
    %112 = vector.extract_strided_slice %111 {offsets = [0, 0], sizes = [2, 192], strides = [1, 1]} : vector<2x256xf32> to vector<2x192xf32>
    %113 = arith.negf %112 : vector<2x192xf32>
    %114 = math.exp %113 : vector<2x192xf32>
    %cst_40 = arith.constant 1.000000e+00 : f32
    %115 = vector.broadcast %cst_40 : f32 to vector<2x192xf32>
    %116 = arith.addf %115, %114 : vector<2x192xf32>
    %117 = arith.divf %115, %116 : vector<2x192xf32>
    %118 = vector.extract_strided_slice %117 {offsets = [0, 0], sizes = [2, 64], strides = [1, 1]} : vector<2x192xf32> to vector<2x64xf32>
    %119 = vector.extract_strided_slice %117 {offsets = [0, 64], sizes = [2, 64], strides = [1, 1]} : vector<2x192xf32> to vector<2x64xf32>
    %120 = vector.extract_strided_slice %117 {offsets = [0, 128], sizes = [2, 64], strides = [1, 1]} : vector<2x192xf32> to vector<2x64xf32>
    %121 = vector.extract_strided_slice %111 {offsets = [0, 192], sizes = [2, 64], strides = [1, 1]} : vector<2x256xf32> to vector<2x64xf32>
    %122 = math.tanh %121 : vector<2x64xf32>
    %123 = arith.mulf %119, %87 : vector<2x64xf32>
    %124 = arith.mulf %118, %122 : vector<2x64xf32>
    %125 = arith.addf %123, %124 : vector<2x64xf32>
    %126 = math.tanh %125 : vector<2x64xf32>
    %127 = arith.mulf %120, %126 : vector<2x64xf32>
    %128 = vector.extract_strided_slice %127 {offsets = [0, 0], sizes = [2, 32], strides = [1, 1]} : vector<2x64xf32> to vector<2x32xf32>
    %129 = arith.index_cast %c2_i32 : i32 to index
    %c0_41 = arith.constant 0 : index
    %c0_42 = arith.constant 0 : index
    %130 = vector.load %arg4[%129, %c0_41, %c0_42] : memref<8x2x32xf32, #tpu.memory_space<vmem>>, vector<1x2x32xf32>
    %131 = vector.shape_cast %130 : vector<1x2x32xf32> to vector<2x32xf32>
    %132 = vector.shape_cast %128 : vector<2x32xf32> to vector<1x2x32xf32>
    tpu.vector_store %arg4[%129, %c0_41, %c0_42], %132 {strides = array<i32>} : memref<8x2x32xf32, #tpu.memory_space<vmem>>, vector<1x2x32xf32>,
    %133 = vector.extract_strided_slice %127 {offsets = [0, 32], sizes = [2, 32], strides = [1, 1]} : vector<2x64xf32> to vector<2x32xf32>
    %c7_i32_43 = arith.constant 7 : i32
    %134 = arith.subi %c7_i32_43, %c2_i32 : i32
    %135 = arith.index_cast %134 : i32 to index
    %c0_44 = arith.constant 0 : index
    %c0_45 = arith.constant 0 : index
    %136 = vector.load %arg5[%135, %c0_44, %c0_45] : memref<8x2x32xf32, #tpu.memory_space<vmem>>, vector<1x2x32xf32>
    %137 = vector.shape_cast %136 : vector<1x2x32xf32> to vector<2x32xf32>
    %138 = vector.shape_cast %133 : vector<2x32xf32> to vector<1x2x32xf32>
    tpu.vector_store %arg5[%135, %c0_44, %c0_45], %138 {strides = array<i32>} : memref<8x2x32xf32, #tpu.memory_space<vmem>>, vector<1x2x32xf32>,
    %c3_i32 = arith.constant 3 : i32
    %139 = arith.index_cast %c3_i32 : i32 to index
    %c0_46 = arith.constant 0 : index
    %c0_47 = arith.constant 0 : index
    %140 = vector.load %arg1[%139, %c0_46, %c0_47] : memref<8x2x256xf32, #tpu.memory_space<vmem>>, vector<1x2x256xf32>
    %141 = vector.shape_cast %140 : vector<1x2x256xf32> to vector<2x256xf32>
    %c7_i32_48 = arith.constant 7 : i32
    %142 = arith.subi %c7_i32_48, %c3_i32 : i32
    %143 = arith.index_cast %142 : i32 to index
    %c0_49 = arith.constant 0 : index
    %c0_50 = arith.constant 0 : index
    %144 = vector.load %arg2[%143, %c0_49, %c0_50] : memref<8x2x256xf32, #tpu.memory_space<vmem>>, vector<1x2x256xf32>
    %145 = vector.shape_cast %144 : vector<1x2x256xf32> to vector<2x256xf32>
    %146 = arith.select %22, %141, %145 : vector<2x256xi1>, vector<2x256xf32>
    %147 = arith.truncf %127 : vector<2x64xf32> to vector<2x64xbf16>
    %cst_51 = arith.constant dense<0.000000e+00> : vector<2x256xf32>
    %148 = tpu.matmul %147, %3, %cst_51 {dimension_numbers = #tpu.dot_dimension_numbers<[1], [0], [0], [1], [0, 0, 1, 1], [], []>} : vector<2x64xbf16>, vector<64x256xbf16>, vector<2x256xf32> -> vector<2x256xf32>
    %149 = arith.addf %146, %148 : vector<2x256xf32>
    %150 = vector.extract_strided_slice %149 {offsets = [0, 0], sizes = [2, 192], strides = [1, 1]} : vector<2x256xf32> to vector<2x192xf32>
    %151 = arith.negf %150 : vector<2x192xf32>
    %152 = math.exp %151 : vector<2x192xf32>
    %cst_52 = arith.constant 1.000000e+00 : f32
    %153 = vector.broadcast %cst_52 : f32 to vector<2x192xf32>
    %154 = arith.addf %153, %152 : vector<2x192xf32>
    %155 = arith.divf %153, %154 : vector<2x192xf32>
    %156 = vector.extract_strided_slice %155 {offsets = [0, 0], sizes = [2, 64], strides = [1, 1]} : vector<2x192xf32> to vector<2x64xf32>
    %157 = vector.extract_strided_slice %155 {offsets = [0, 64], sizes = [2, 64], strides = [1, 1]} : vector<2x192xf32> to vector<2x64xf32>
    %158 = vector.extract_strided_slice %155 {offsets = [0, 128], sizes = [2, 64], strides = [1, 1]} : vector<2x192xf32> to vector<2x64xf32>
    %159 = vector.extract_strided_slice %149 {offsets = [0, 192], sizes = [2, 64], strides = [1, 1]} : vector<2x256xf32> to vector<2x64xf32>
    %160 = math.tanh %159 : vector<2x64xf32>
    %161 = arith.mulf %157, %125 : vector<2x64xf32>
    %162 = arith.mulf %156, %160 : vector<2x64xf32>
    %163 = arith.addf %161, %162 : vector<2x64xf32>
    %164 = math.tanh %163 : vector<2x64xf32>
    %165 = arith.mulf %158, %164 : vector<2x64xf32>
    %166 = vector.extract_strided_slice %165 {offsets = [0, 0], sizes = [2, 32], strides = [1, 1]} : vector<2x64xf32> to vector<2x32xf32>
    %167 = arith.index_cast %c3_i32 : i32 to index
    %c0_53 = arith.constant 0 : index
    %c0_54 = arith.constant 0 : index
    %168 = vector.load %arg4[%167, %c0_53, %c0_54] : memref<8x2x32xf32, #tpu.memory_space<vmem>>, vector<1x2x32xf32>
    %169 = vector.shape_cast %168 : vector<1x2x32xf32> to vector<2x32xf32>
    %170 = vector.shape_cast %166 : vector<2x32xf32> to vector<1x2x32xf32>
    tpu.vector_store %arg4[%167, %c0_53, %c0_54], %170 {strides = array<i32>} : memref<8x2x32xf32, #tpu.memory_space<vmem>>, vector<1x2x32xf32>,
    %171 = vector.extract_strided_slice %165 {offsets = [0, 32], sizes = [2, 32], strides = [1, 1]} : vector<2x64xf32> to vector<2x32xf32>
    %c7_i32_55 = arith.constant 7 : i32
    %172 = arith.subi %c7_i32_55, %c3_i32 : i32
    %173 = arith.index_cast %172 : i32 to index
    %c0_56 = arith.constant 0 : index
    %c0_57 = arith.constant 0 : index
    %174 = vector.load %arg5[%173, %c0_56, %c0_57] : memref<8x2x32xf32, #tpu.memory_space<vmem>>, vector<1x2x32xf32>
    %175 = vector.shape_cast %174 : vector<1x2x32xf32> to vector<2x32xf32>
    %176 = vector.shape_cast %171 : vector<2x32xf32> to vector<1x2x32xf32>
    tpu.vector_store %arg5[%173, %c0_56, %c0_57], %176 {strides = array<i32>} : memref<8x2x32xf32, #tpu.memory_space<vmem>>, vector<1x2x32xf32>,
    %c4_i32 = arith.constant 4 : i32
    %177 = arith.index_cast %c4_i32 : i32 to index
    %c0_58 = arith.constant 0 : index
    %c0_59 = arith.constant 0 : index
    %178 = vector.load %arg1[%177, %c0_58, %c0_59] : memref<8x2x256xf32, #tpu.memory_space<vmem>>, vector<1x2x256xf32>
    %179 = vector.shape_cast %178 : vector<1x2x256xf32> to vector<2x256xf32>
    %c7_i32_60 = arith.constant 7 : i32
    %180 = arith.subi %c7_i32_60, %c4_i32 : i32
    %181 = arith.index_cast %180 : i32 to index
    %c0_61 = arith.constant 0 : index
    %c0_62 = arith.constant 0 : index
    %182 = vector.load %arg2[%181, %c0_61, %c0_62] : memref<8x2x256xf32, #tpu.memory_space<vmem>>, vector<1x2x256xf32>
    %183 = vector.shape_cast %182 : vector<1x2x256xf32> to vector<2x256xf32>
    %184 = arith.select %22, %179, %183 : vector<2x256xi1>, vector<2x256xf32>
    %185 = arith.truncf %165 : vector<2x64xf32> to vector<2x64xbf16>
    %cst_63 = arith.constant dense<0.000000e+00> : vector<2x256xf32>
    %186 = tpu.matmul %185, %3, %cst_63 {dimension_numbers = #tpu.dot_dimension_numbers<[1], [0], [0], [1], [0, 0, 1, 1], [], []>} : vector<2x64xbf16>, vector<64x256xbf16>, vector<2x256xf32> -> vector<2x256xf32>
    %187 = arith.addf %184, %186 : vector<2x256xf32>
    %188 = vector.extract_strided_slice %187 {offsets = [0, 0], sizes = [2, 192], strides = [1, 1]} : vector<2x256xf32> to vector<2x192xf32>
    %189 = arith.negf %188 : vector<2x192xf32>
    %190 = math.exp %189 : vector<2x192xf32>
    %cst_64 = arith.constant 1.000000e+00 : f32
    %191 = vector.broadcast %cst_64 : f32 to vector<2x192xf32>
    %192 = arith.addf %191, %190 : vector<2x192xf32>
    %193 = arith.divf %191, %192 : vector<2x192xf32>
    %194 = vector.extract_strided_slice %193 {offsets = [0, 0], sizes = [2, 64], strides = [1, 1]} : vector<2x192xf32> to vector<2x64xf32>
    %195 = vector.extract_strided_slice %193 {offsets = [0, 64], sizes = [2, 64], strides = [1, 1]} : vector<2x192xf32> to vector<2x64xf32>
    %196 = vector.extract_strided_slice %193 {offsets = [0, 128], sizes = [2, 64], strides = [1, 1]} : vector<2x192xf32> to vector<2x64xf32>
    %197 = vector.extract_strided_slice %187 {offsets = [0, 192], sizes = [2, 64], strides = [1, 1]} : vector<2x256xf32> to vector<2x64xf32>
    %198 = math.tanh %197 : vector<2x64xf32>
    %199 = arith.mulf %195, %163 : vector<2x64xf32>
    %200 = arith.mulf %194, %198 : vector<2x64xf32>
    %201 = arith.addf %199, %200 : vector<2x64xf32>
    %202 = math.tanh %201 : vector<2x64xf32>
    %203 = arith.mulf %196, %202 : vector<2x64xf32>
    %204 = vector.extract_strided_slice %203 {offsets = [0, 0], sizes = [2, 32], strides = [1, 1]} : vector<2x64xf32> to vector<2x32xf32>
    %205 = arith.index_cast %c4_i32 : i32 to index
    %c0_65 = arith.constant 0 : index
    %c0_66 = arith.constant 0 : index
    %206 = vector.load %arg4[%205, %c0_65, %c0_66] : memref<8x2x32xf32, #tpu.memory_space<vmem>>, vector<1x2x32xf32>
    %207 = vector.shape_cast %206 : vector<1x2x32xf32> to vector<2x32xf32>
    %208 = vector.shape_cast %204 : vector<2x32xf32> to vector<1x2x32xf32>
    tpu.vector_store %arg4[%205, %c0_65, %c0_66], %208 {strides = array<i32>} : memref<8x2x32xf32, #tpu.memory_space<vmem>>, vector<1x2x32xf32>,
    %209 = vector.extract_strided_slice %203 {offsets = [0, 32], sizes = [2, 32], strides = [1, 1]} : vector<2x64xf32> to vector<2x32xf32>
    %c7_i32_67 = arith.constant 7 : i32
    %210 = arith.subi %c7_i32_67, %c4_i32 : i32
    %211 = arith.index_cast %210 : i32 to index
    %c0_68 = arith.constant 0 : index
    %c0_69 = arith.constant 0 : index
    %212 = vector.load %arg5[%211, %c0_68, %c0_69] : memref<8x2x32xf32, #tpu.memory_space<vmem>>, vector<1x2x32xf32>
    %213 = vector.shape_cast %212 : vector<1x2x32xf32> to vector<2x32xf32>
    %214 = vector.shape_cast %209 : vector<2x32xf32> to vector<1x2x32xf32>
    tpu.vector_store %arg5[%211, %c0_68, %c0_69], %214 {strides = array<i32>} : memref<8x2x32xf32, #tpu.memory_space<vmem>>, vector<1x2x32xf32>,
    %c5_i32 = arith.constant 5 : i32
    %215 = arith.index_cast %c5_i32 : i32 to index
    %c0_70 = arith.constant 0 : index
    %c0_71 = arith.constant 0 : index
    %216 = vector.load %arg1[%215, %c0_70, %c0_71] : memref<8x2x256xf32, #tpu.memory_space<vmem>>, vector<1x2x256xf32>
    %217 = vector.shape_cast %216 : vector<1x2x256xf32> to vector<2x256xf32>
    %c7_i32_72 = arith.constant 7 : i32
    %218 = arith.subi %c7_i32_72, %c5_i32 : i32
    %219 = arith.index_cast %218 : i32 to index
    %c0_73 = arith.constant 0 : index
    %c0_74 = arith.constant 0 : index
    %220 = vector.load %arg2[%219, %c0_73, %c0_74] : memref<8x2x256xf32, #tpu.memory_space<vmem>>, vector<1x2x256xf32>
    %221 = vector.shape_cast %220 : vector<1x2x256xf32> to vector<2x256xf32>
    %222 = arith.select %22, %217, %221 : vector<2x256xi1>, vector<2x256xf32>
    %223 = arith.truncf %203 : vector<2x64xf32> to vector<2x64xbf16>
    %cst_75 = arith.constant dense<0.000000e+00> : vector<2x256xf32>
    %224 = tpu.matmul %223, %3, %cst_75 {dimension_numbers = #tpu.dot_dimension_numbers<[1], [0], [0], [1], [0, 0, 1, 1], [], []>} : vector<2x64xbf16>, vector<64x256xbf16>, vector<2x256xf32> -> vector<2x256xf32>
    %225 = arith.addf %222, %224 : vector<2x256xf32>
    %226 = vector.extract_strided_slice %225 {offsets = [0, 0], sizes = [2, 192], strides = [1, 1]} : vector<2x256xf32> to vector<2x192xf32>
    %227 = arith.negf %226 : vector<2x192xf32>
    %228 = math.exp %227 : vector<2x192xf32>
    %cst_76 = arith.constant 1.000000e+00 : f32
    %229 = vector.broadcast %cst_76 : f32 to vector<2x192xf32>
    %230 = arith.addf %229, %228 : vector<2x192xf32>
    %231 = arith.divf %229, %230 : vector<2x192xf32>
    %232 = vector.extract_strided_slice %231 {offsets = [0, 0], sizes = [2, 64], strides = [1, 1]} : vector<2x192xf32> to vector<2x64xf32>
    %233 = vector.extract_strided_slice %231 {offsets = [0, 64], sizes = [2, 64], strides = [1, 1]} : vector<2x192xf32> to vector<2x64xf32>
    %234 = vector.extract_strided_slice %231 {offsets = [0, 128], sizes = [2, 64], strides = [1, 1]} : vector<2x192xf32> to vector<2x64xf32>
    %235 = vector.extract_strided_slice %225 {offsets = [0, 192], sizes = [2, 64], strides = [1, 1]} : vector<2x256xf32> to vector<2x64xf32>
    %236 = math.tanh %235 : vector<2x64xf32>
    %237 = arith.mulf %233, %201 : vector<2x64xf32>
    %238 = arith.mulf %232, %236 : vector<2x64xf32>
    %239 = arith.addf %237, %238 : vector<2x64xf32>
    %240 = math.tanh %239 : vector<2x64xf32>
    %241 = arith.mulf %234, %240 : vector<2x64xf32>
    %242 = vector.extract_strided_slice %241 {offsets = [0, 0], sizes = [2, 32], strides = [1, 1]} : vector<2x64xf32> to vector<2x32xf32>
    %243 = arith.index_cast %c5_i32 : i32 to index
    %c0_77 = arith.constant 0 : index
    %c0_78 = arith.constant 0 : index
    %244 = vector.load %arg4[%243, %c0_77, %c0_78] : memref<8x2x32xf32, #tpu.memory_space<vmem>>, vector<1x2x32xf32>
    %245 = vector.shape_cast %244 : vector<1x2x32xf32> to vector<2x32xf32>
    %246 = vector.shape_cast %242 : vector<2x32xf32> to vector<1x2x32xf32>
    tpu.vector_store %arg4[%243, %c0_77, %c0_78], %246 {strides = array<i32>} : memref<8x2x32xf32, #tpu.memory_space<vmem>>, vector<1x2x32xf32>,
    %247 = vector.extract_strided_slice %241 {offsets = [0, 32], sizes = [2, 32], strides = [1, 1]} : vector<2x64xf32> to vector<2x32xf32>
    %c7_i32_79 = arith.constant 7 : i32
    %248 = arith.subi %c7_i32_79, %c5_i32 : i32
    %249 = arith.index_cast %248 : i32 to index
    %c0_80 = arith.constant 0 : index
    %c0_81 = arith.constant 0 : index
    %250 = vector.load %arg5[%249, %c0_80, %c0_81] : memref<8x2x32xf32, #tpu.memory_space<vmem>>, vector<1x2x32xf32>
    %251 = vector.shape_cast %250 : vector<1x2x32xf32> to vector<2x32xf32>
    %252 = vector.shape_cast %247 : vector<2x32xf32> to vector<1x2x32xf32>
    tpu.vector_store %arg5[%249, %c0_80, %c0_81], %252 {strides = array<i32>} : memref<8x2x32xf32, #tpu.memory_space<vmem>>, vector<1x2x32xf32>,
    %c6_i32 = arith.constant 6 : i32
    %253 = arith.index_cast %c6_i32 : i32 to index
    %c0_82 = arith.constant 0 : index
    %c0_83 = arith.constant 0 : index
    %254 = vector.load %arg1[%253, %c0_82, %c0_83] : memref<8x2x256xf32, #tpu.memory_space<vmem>>, vector<1x2x256xf32>
    %255 = vector.shape_cast %254 : vector<1x2x256xf32> to vector<2x256xf32>
    %c7_i32_84 = arith.constant 7 : i32
    %256 = arith.subi %c7_i32_84, %c6_i32 : i32
    %257 = arith.index_cast %256 : i32 to index
    %c0_85 = arith.constant 0 : index
    %c0_86 = arith.constant 0 : index
    %258 = vector.load %arg2[%257, %c0_85, %c0_86] : memref<8x2x256xf32, #tpu.memory_space<vmem>>, vector<1x2x256xf32>
    %259 = vector.shape_cast %258 : vector<1x2x256xf32> to vector<2x256xf32>
    %260 = arith.select %22, %255, %259 : vector<2x256xi1>, vector<2x256xf32>
    %261 = arith.truncf %241 : vector<2x64xf32> to vector<2x64xbf16>
    %cst_87 = arith.constant dense<0.000000e+00> : vector<2x256xf32>
    %262 = tpu.matmul %261, %3, %cst_87 {dimension_numbers = #tpu.dot_dimension_numbers<[1], [0], [0], [1], [0, 0, 1, 1], [], []>} : vector<2x64xbf16>, vector<64x256xbf16>, vector<2x256xf32> -> vector<2x256xf32>
    %263 = arith.addf %260, %262 : vector<2x256xf32>
    %264 = vector.extract_strided_slice %263 {offsets = [0, 0], sizes = [2, 192], strides = [1, 1]} : vector<2x256xf32> to vector<2x192xf32>
    %265 = arith.negf %264 : vector<2x192xf32>
    %266 = math.exp %265 : vector<2x192xf32>
    %cst_88 = arith.constant 1.000000e+00 : f32
    %267 = vector.broadcast %cst_88 : f32 to vector<2x192xf32>
    %268 = arith.addf %267, %266 : vector<2x192xf32>
    %269 = arith.divf %267, %268 : vector<2x192xf32>
    %270 = vector.extract_strided_slice %269 {offsets = [0, 0], sizes = [2, 64], strides = [1, 1]} : vector<2x192xf32> to vector<2x64xf32>
    %271 = vector.extract_strided_slice %269 {offsets = [0, 64], sizes = [2, 64], strides = [1, 1]} : vector<2x192xf32> to vector<2x64xf32>
    %272 = vector.extract_strided_slice %269 {offsets = [0, 128], sizes = [2, 64], strides = [1, 1]} : vector<2x192xf32> to vector<2x64xf32>
    %273 = vector.extract_strided_slice %263 {offsets = [0, 192], sizes = [2, 64], strides = [1, 1]} : vector<2x256xf32> to vector<2x64xf32>
    %274 = math.tanh %273 : vector<2x64xf32>
    %275 = arith.mulf %271, %239 : vector<2x64xf32>
    %276 = arith.mulf %270, %274 : vector<2x64xf32>
    %277 = arith.addf %275, %276 : vector<2x64xf32>
    %278 = math.tanh %277 : vector<2x64xf32>
    %279 = arith.mulf %272, %278 : vector<2x64xf32>
    %280 = vector.extract_strided_slice %279 {offsets = [0, 0], sizes = [2, 32], strides = [1, 1]} : vector<2x64xf32> to vector<2x32xf32>
    %281 = arith.index_cast %c6_i32 : i32 to index
    %c0_89 = arith.constant 0 : index
    %c0_90 = arith.constant 0 : index
    %282 = vector.load %arg4[%281, %c0_89, %c0_90] : memref<8x2x32xf32, #tpu.memory_space<vmem>>, vector<1x2x32xf32>
    %283 = vector.shape_cast %282 : vector<1x2x32xf32> to vector<2x32xf32>
    %284 = vector.shape_cast %280 : vector<2x32xf32> to vector<1x2x32xf32>
    tpu.vector_store %arg4[%281, %c0_89, %c0_90], %284 {strides = array<i32>} : memref<8x2x32xf32, #tpu.memory_space<vmem>>, vector<1x2x32xf32>,
    %285 = vector.extract_strided_slice %279 {offsets = [0, 32], sizes = [2, 32], strides = [1, 1]} : vector<2x64xf32> to vector<2x32xf32>
    %c7_i32_91 = arith.constant 7 : i32
    %286 = arith.subi %c7_i32_91, %c6_i32 : i32
    %287 = arith.index_cast %286 : i32 to index
    %c0_92 = arith.constant 0 : index
    %c0_93 = arith.constant 0 : index
    %288 = vector.load %arg5[%287, %c0_92, %c0_93] : memref<8x2x32xf32, #tpu.memory_space<vmem>>, vector<1x2x32xf32>
    %289 = vector.shape_cast %288 : vector<1x2x32xf32> to vector<2x32xf32>
    %290 = vector.shape_cast %285 : vector<2x32xf32> to vector<1x2x32xf32>
    tpu.vector_store %arg5[%287, %c0_92, %c0_93], %290 {strides = array<i32>} : memref<8x2x32xf32, #tpu.memory_space<vmem>>, vector<1x2x32xf32>,
    %c7_i32_94 = arith.constant 7 : i32
    %291 = arith.index_cast %c7_i32_94 : i32 to index
    %c0_95 = arith.constant 0 : index
    %c0_96 = arith.constant 0 : index
    %292 = vector.load %arg1[%291, %c0_95, %c0_96] : memref<8x2x256xf32, #tpu.memory_space<vmem>>, vector<1x2x256xf32>
    %293 = vector.shape_cast %292 : vector<1x2x256xf32> to vector<2x256xf32>
    %c7_i32_97 = arith.constant 7 : i32
    %294 = arith.subi %c7_i32_97, %c7_i32_94 : i32
    %295 = arith.index_cast %294 : i32 to index
    %c0_98 = arith.constant 0 : index
    %c0_99 = arith.constant 0 : index
    %296 = vector.load %arg2[%295, %c0_98, %c0_99] : memref<8x2x256xf32, #tpu.memory_space<vmem>>, vector<1x2x256xf32>
    %297 = vector.shape_cast %296 : vector<1x2x256xf32> to vector<2x256xf32>
    %298 = arith.select %22, %293, %297 : vector<2x256xi1>, vector<2x256xf32>
    %299 = arith.truncf %279 : vector<2x64xf32> to vector<2x64xbf16>
    %cst_100 = arith.constant dense<0.000000e+00> : vector<2x256xf32>
    %300 = tpu.matmul %299, %3, %cst_100 {dimension_numbers = #tpu.dot_dimension_numbers<[1], [0], [0], [1], [0, 0, 1, 1], [], []>} : vector<2x64xbf16>, vector<64x256xbf16>, vector<2x256xf32> -> vector<2x256xf32>
    %301 = arith.addf %298, %300 : vector<2x256xf32>
    %302 = vector.extract_strided_slice %301 {offsets = [0, 0], sizes = [2, 192], strides = [1, 1]} : vector<2x256xf32> to vector<2x192xf32>
    %303 = arith.negf %302 : vector<2x192xf32>
    %304 = math.exp %303 : vector<2x192xf32>
    %cst_101 = arith.constant 1.000000e+00 : f32
    %305 = vector.broadcast %cst_101 : f32 to vector<2x192xf32>
    %306 = arith.addf %305, %304 : vector<2x192xf32>
    %307 = arith.divf %305, %306 : vector<2x192xf32>
    %308 = vector.extract_strided_slice %307 {offsets = [0, 0], sizes = [2, 64], strides = [1, 1]} : vector<2x192xf32> to vector<2x64xf32>
    %309 = vector.extract_strided_slice %307 {offsets = [0, 64], sizes = [2, 64], strides = [1, 1]} : vector<2x192xf32> to vector<2x64xf32>
    %310 = vector.extract_strided_slice %307 {offsets = [0, 128], sizes = [2, 64], strides = [1, 1]} : vector<2x192xf32> to vector<2x64xf32>
    %311 = vector.extract_strided_slice %301 {offsets = [0, 192], sizes = [2, 64], strides = [1, 1]} : vector<2x256xf32> to vector<2x64xf32>
    %312 = math.tanh %311 : vector<2x64xf32>
    %313 = arith.mulf %309, %277 : vector<2x64xf32>
    %314 = arith.mulf %308, %312 : vector<2x64xf32>
    %315 = arith.addf %313, %314 : vector<2x64xf32>
    %316 = math.tanh %315 : vector<2x64xf32>
    %317 = arith.mulf %310, %316 : vector<2x64xf32>
    %318 = vector.extract_strided_slice %317 {offsets = [0, 0], sizes = [2, 32], strides = [1, 1]} : vector<2x64xf32> to vector<2x32xf32>
    %319 = arith.index_cast %c7_i32_94 : i32 to index
    %c0_102 = arith.constant 0 : index
    %c0_103 = arith.constant 0 : index
    %320 = vector.load %arg4[%319, %c0_102, %c0_103] : memref<8x2x32xf32, #tpu.memory_space<vmem>>, vector<1x2x32xf32>
    %321 = vector.shape_cast %320 : vector<1x2x32xf32> to vector<2x32xf32>
    %322 = vector.shape_cast %318 : vector<2x32xf32> to vector<1x2x32xf32>
    tpu.vector_store %arg4[%319, %c0_102, %c0_103], %322 {strides = array<i32>} : memref<8x2x32xf32, #tpu.memory_space<vmem>>, vector<1x2x32xf32>,
    %323 = vector.extract_strided_slice %317 {offsets = [0, 32], sizes = [2, 32], strides = [1, 1]} : vector<2x64xf32> to vector<2x32xf32>
    %c7_i32_104 = arith.constant 7 : i32
    %324 = arith.subi %c7_i32_104, %c7_i32_94 : i32
    %325 = arith.index_cast %324 : i32 to index
    %c0_105 = arith.constant 0 : index
    %c0_106 = arith.constant 0 : index
    %326 = vector.load %arg5[%325, %c0_105, %c0_106] : memref<8x2x32xf32, #tpu.memory_space<vmem>>, vector<1x2x32xf32>
    %327 = vector.shape_cast %326 : vector<1x2x32xf32> to vector<2x32xf32>
    %328 = vector.shape_cast %323 : vector<2x32xf32> to vector<1x2x32xf32>
    tpu.vector_store %arg5[%325, %c0_105, %c0_106], %328 {strides = array<i32>} : memref<8x2x32xf32, #tpu.memory_space<vmem>>, vector<1x2x32xf32>,
    %c8_i32 = arith.constant 8 : i32
    %c0_107 = arith.constant 0 : index
    %c0_108 = arith.constant 0 : index
    %329 = vector.load %arg6[%c0_107, %c0_108] : memref<2x64xf32, #tpu.memory_space<vmem>>, vector<2x64xf32>
    tpu.vector_store %arg6[%c0_107, %c0_108], %317 {strides = array<i32>} : memref<2x64xf32, #tpu.memory_space<vmem>>, vector<2x64xf32>,
    %c0_109 = arith.constant 0 : index
    %c0_110 = arith.constant 0 : index
    %330 = vector.load %arg7[%c0_109, %c0_110] : memref<2x64xf32, #tpu.memory_space<vmem>>, vector<2x64xf32>
    tpu.vector_store %arg7[%c0_109, %c0_110], %315 {strides = array<i32>} : memref<2x64xf32, #tpu.memory_space<vmem>>, vector<2x64xf32>,
    return
  }
  func.func @transform_0(%arg0: i32) -> (i32, i32, i32) {
    %c0_i32 = arith.constant 0 : i32
    %c0_i32_0 = arith.constant 0 : i32
    %c0_i32_1 = arith.constant 0 : i32
    return %arg0, %c0_i32, %c0_i32_0 : i32, i32, i32
  }
  func.func @transform_1(%arg0: i32) -> (i32, i32, i32) {
    %c0_i32 = arith.constant 0 : i32
    %0 = arith.subi %c0_i32, %arg0 : i32
    %c0_i32_0 = arith.constant 0 : i32
    %c0_i32_1 = arith.constant 0 : i32
    %c0_i32_2 = arith.constant 0 : i32
    return %0, %c0_i32_0, %c0_i32_1 : i32, i32, i32
  }
  func.func @transform_2(%arg0: i32) -> (i32, i32) {
    %c0_i32 = arith.constant 0 : i32
    %c0_i32_0 = arith.constant 0 : i32
    %c0_i32_1 = arith.constant 0 : i32
    return %c0_i32, %c0_i32_0 : i32, i32
  }
  func.func @transform_3(%arg0: i32) -> (i32, i32, i32) {
    %c0_i32 = arith.constant 0 : i32
    %c0_i32_0 = arith.constant 0 : i32
    %c0_i32_1 = arith.constant 0 : i32
    return %arg0, %c0_i32, %c0_i32_0 : i32, i32, i32
  }
  func.func @transform_4(%arg0: i32) -> (i32, i32, i32) {
    %c0_i32 = arith.constant 0 : i32
    %0 = arith.subi %c0_i32, %arg0 : i32
    %c0_i32_0 = arith.constant 0 : i32
    %c0_i32_1 = arith.constant 0 : i32
    %c0_i32_2 = arith.constant 0 : i32
    return %0, %c0_i32_0, %c0_i32_1 : i32, i32, i32
  }
}

</mosaic_0001>

<llo_original>
// kernel: encoder_forward.7
$region0: #{encoder_forward.7}
  #allocation0 [shape = 'u32[]', space=smem, size = 0x4, offset = 0x4, fixed_abs, tag = 'smem constant byte address 0x4 - core index']
  #allocation1 [shape = 'u32[144,128]{1,0:T(1,128)}', space=vmem, size = 0x12000, scoped, tag = 'internal scratch']
  #allocation2 [shape = 'f32[8,256]{1,0:T(8,128)}', space=vmem, size = 0x2000, scoped, tag = 'scratch operand']
  %s0 = inlined_call_operand.vmem [shape: bf16[2,12,32], index: 0, kind: input, shape index: {}]
  %s1 = inlined_call_operand.hbm [shape: bf16[5,32,512], index: 1, kind: input, shape index: {}]
  %s2 = inlined_call_operand.hbm [shape: f32[1,512], index: 2, kind: input, shape index: {}]
  %s3 = inlined_call_operand.vmem [shape: bf16[2,8,512], index: 3, kind: output, shape index: {}]
  %s4 = sld [smem:[#allocation0]]
  $region53: #{encoder_forward.7} parent=0
    _
  %s6 = ssub.s32 1, %s4
  %s7 = scalar_select 0, %s6, %s4
  $region1: #{encoder_forward.7} parent=0
    #allocation3 [shape = 'u8[163840]{0}', space=vmem, size = 0x28000, scoped, tag = 'input window, operand 1']
    #allocation4 [shape = 's32[2]{0}', space=sflag, size = 0x8, scoped, tag = 'scoped memory for encoder_forward.7']
    #allocation5 [shape = 'u8[2048]{0}', space=vmem, size = 0x800, scoped, tag = 'input window, operand 2']
    #allocation6 [shape = 's32[2]{0}', space=sflag, size = 0x8, scoped, tag = 'scoped memory for encoder_forward.7']
    %8 = vsyncpa [#allocation4], 0
    %s9 = scalar_lea.sflag [#allocation4], 1
    %10 = vsyncpa %s9, 0
    %11 = vsyncpa [#allocation6], 0
    %s12 = scalar_lea.sflag [#allocation6], 1
    %13 = vsyncpa %s12, 0
    loop: start=0, step=1, limit=6
    $region2: #{encoder_forward.7} parent=1 // loop_pre_header
      _
    $region3: #{encoder_forward.7} parent=1 // loop_header
      %s15 = sphi 0, %s19
      %p16 = scmp.ge.s32.totalorder %s15, 6
      %s22 = sphi 0, %s41
      %s23 = sphi 0, %s37
      %s24 = sphi 0, %s33
      %s25 = sphi 0, %s22
      %s26 = sphi 0, %s23
      %s27 = sphi 0, %s24
      %s28 = sphi 0, %s25
      %s29 = sphi 0, %s26
      %s30 = sphi 0, %s27
      %s44 = sphi 0, %s46
      %s47 = sphi 0, %s44
      %s48 = sphi 0, %s47
      %s64 = sphi 0, %s48
      %s70 = sphi 0, %s72
      %s73 = sphi 0, %s70
      %s74 = sphi 0, %s73
      %s90 = sphi 0, %s74
      %s96 = sphi 0, %s98
      %s99 = sphi 0, %s96
      %s100 = sphi 0, %s99
      %s116 = sphi 0, %s100
      %s126 = sphi 0, %s128
      %s129 = sphi 0, %s126
      %s130 = sphi 0, %s129
      %s146 = sphi 0, %s130
    $region4: #{encoder_forward.7} parent=1 // loop_header_branch
      %18 = sbr.rel (%p16) target = $region8
    $region5: #{encoder_forward.7} parent=1 // loop_body
      %s20 = ssub.s32 %s15, 1
      %s21 = ssub.s32 %s15, 2
      %s31 = sadd.s32 1, %s24
      %p32 = scmp.ge.s32.totalorder %s31, 1
      %s33 = scalar_select %p32, 0, %s31
      %s34 = sadd.s32 1, %s23
      %s35 = scalar_select %p32, %s34, %s23
      %p36 = scmp.ge.s32.totalorder %s35, 2
      %s37 = scalar_select %p36, 0, %s35
      %s38 = sadd.s32 1, %s22
      %s39 = scalar_select %p36, %s38, %s22
      %p40 = scmp.ge.s32.totalorder %s39, 2
      %s41 = scalar_select %p40, 0, %s39
      %s42 = ssub.s32 %s22, %s41
      %p43 = scmp.eq.s32.totalorder %s42, 0
      %s45 = sadd.s32 %s44, 1
      %s46 = scalar_select %p43, %s44, %s45
      %p49 = pneg %p43
      %p50 = scmp.eq.s32.totalorder %s15, 3
      %p51 = por %p49, %p50
      %p52 = scmp.ne.s32.totalorder %s44, %s47
      %p53 = scmp.eq.s32.totalorder %s15, 0
      %p54 = por %p52, %p53
      %p55 = scmp.ne.s32.totalorder %s44, %s47
      %p56 = scmp.eq.s32.totalorder %s20, 3
      %p57 = por %p55, %p56
      %p58 = scmp.ne.s32.totalorder %s47, %s48
      %p59 = scmp.eq.s32.totalorder %s20, 0
      %p60 = por %p58, %p59
      %p61 = scmp.ne.s32.totalorder %s47, %s48
      %p62 = scmp.eq.s32.totalorder %s21, 3
      %p63 = por %p61, %p62
      %p65 = scmp.ne.s32.totalorder %s48, %s64
      %p66 = scmp.eq.s32.totalorder %s21, 0
      %p67 = por %p65, %p66
      %s68 = ssub.s32 %s23, %s37
      %p69 = scmp.eq.s32.totalorder %s68, 0
      %s71 = sadd.s32 %s70, 1
      %s72 = scalar_select %p69, %s70, %s71
      %p75 = pneg %p69
      %p76 = scmp.eq.s32.totalorder %s15, 3
      %p77 = por %p75, %p76
      %p78 = scmp.ne.s32.totalorder %s70, %s73
      %p79 = scmp.eq.s32.totalorder %s15, 0
      %p80 = por %p78, %p79
      %p81 = scmp.ne.s32.totalorder %s70, %s73
      %p82 = scmp.eq.s32.totalorder %s20, 3
      %p83 = por %p81, %p82
      %p84 = scmp.ne.s32.totalorder %s73, %s74
      %p85 = scmp.eq.s32.totalorder %s20, 0
      %p86 = por %p84, %p85
      %p87 = scmp.ne.s32.totalorder %s73, %s74
      %p88 = scmp.eq.s32.totalorder %s21, 3
      %p89 = por %p87, %p88
      %p91 = scmp.ne.s32.totalorder %s74, %s90
      %p92 = scmp.eq.s32.totalorder %s21, 0
      %p93 = por %p91, %p92
      %s94 = ssub.s32 %s23, %s37
      %p95 = scmp.eq.s32.totalorder %s94, 0
      %s97 = sadd.s32 %s96, 1
      %s98 = scalar_select %p95, %s96, %s97
      %p101 = pneg %p95
      %p102 = scmp.eq.s32.totalorder %s15, 3
      %p103 = por %p101, %p102
      %p104 = scmp.ne.s32.totalorder %s96, %s99
      %p105 = scmp.eq.s32.totalorder %s15, 0
      %p106 = por %p104, %p105
      %p107 = scmp.ne.s32.totalorder %s96, %s99
      %p108 = scmp.eq.s32.totalorder %s20, 3
      %p109 = por %p107, %p108
      %p110 = scmp.ne.s32.totalorder %s99, %s100
      %p111 = scmp.eq.s32.totalorder %s20, 0
      %p112 = por %p110, %p111
      %p113 = scmp.ne.s32.totalorder %s99, %s100
      %p114 = scmp.eq.s32.totalorder %s21, 3
      %p115 = por %p113, %p114
      %p117 = scmp.ne.s32.totalorder %s100, %s116
      %p118 = scmp.eq.s32.totalorder %s21, 0
      %p119 = por %p117, %p118
      %s120 = ssub.s32 %s22, %s41
      %s121 = ssub.s32 %s24, %s33
      %s122 = sor.u32 %s120, %s121
      %s123 = ssub.s32 %s23, %s37
      %s124 = sor.u32 %s122, %s123
      %p125 = scmp.eq.s32.totalorder %s124, 0
      %s127 = sadd.s32 %s126, 1
      %s128 = scalar_select %p125, %s126, %s127
      %p131 = pneg %p125
      %p132 = scmp.eq.s32.totalorder %s15, 3
      %p133 = por %p131, %p132
      %p134 = scmp.ne.s32.totalorder %s126, %s129
      %p135 = scmp.eq.s32.totalorder %s15, 0
      %p136 = por %p134, %p135
      %p137 = scmp.ne.s32.totalorder %s126, %s129
      %p138 = scmp.eq.s32.totalorder %s20, 3
      %p139 = por %p137, %p138
      %p140 = scmp.ne.s32.totalorder %s129, %s130
      %p141 = scmp.eq.s32.totalorder %s20, 0
      %p142 = por %p140, %p141
      %p143 = scmp.ne.s32.totalorder %s129, %s130
      %p144 = scmp.eq.s32.totalorder %s21, 3
      %p145 = por %p143, %p144
      %p147 = scmp.ne.s32.totalorder %s130, %s146
      %p148 = scmp.eq.s32.totalorder %s21, 0
      %p149 = por %p147, %p148
      %p150 = scmp.le.s32.totalorder 1, %s15
      %p151 = scmp.lt.s32.totalorder %s15, 5
      %p152 = pnand %p150, %p151
      %p153 = pneg %p152
      // Predicated region
      $region9: #{encoder_forward.7} parent=5 // pred_check
        _
      $region10: #{encoder_forward.7} parent=5 // pred_check_branch
        %155 = sbr.rel (%p152) target = $region12
      $region11: #{encoder_forward.7} parent=5 // pred_region
        %s156 = ssub.s32 %s15, 1
      $region12: #{encoder_forward.7} parent=5 // pred_fallthru
        _
      %p157 = scmp.lt.s32.totalorder %s15, 4
      // Predicated region
      $region13: #{encoder_forward.7} parent=5 // pred_check
        %p158 = pneg %p157
      $region14: #{encoder_forward.7} parent=5 // pred_check_branch
        %160 = sbr.rel (%p158) target = $region16
      $region15: #{encoder_forward.7} parent=5 // pred_region
        // Predicated region
        $region17: #{encoder_forward.7} parent=15 // pred_check
          %p161 = pneg %p54
        $region18: #{encoder_forward.7} parent=15 // pred_check_branch
          %163 = sbr.rel (%p161) target = $region20
        $region19: #{encoder_forward.7} parent=15 // pred_region
          %p164 = scmp.lt.s32.totalorder %s22, 1
          %s165 = scalar_select %p164, %s22, 1
          %s166 = smul.addr %s165, 2
          %s167 = smul.addr %s166, 4
          %s168 = scalar_lea.vmem %s0, %s167
        $region20: #{encoder_forward.7} parent=15 // pred_fallthru
          _
        // Predicated region
        $region21: #{encoder_forward.7} parent=15 // pred_check
          %p169 = pneg %p80
        $region22: #{encoder_forward.7} parent=15 // pred_check_branch
          %171 = sbr.rel (%p169) target = $region24
        $region23: #{encoder_forward.7} parent=15 // pred_region
          %s172 = sand.u32 %s70, 1
          %s173 = scalar_lea.sflag [#allocation4], %s172
          %s174 = sand.u32 %s70, 1
          %s175 = smul.addr %s174, 160
          %s176 = scalar_lea.vmem [#allocation3], %s175
          %s177 = smul.u32 2, %s23
          %s179 = ssub.s32 2560, 2560
          %180 = vsyncadd %s173, %s179
          %s181 = smul.addr %s177, 64
          %s182 = scalar_lea.hbm %s1, %s181
          %s183 = sshll.u32 %s176, 4
          %s184 = int_to_ptr.vmem [resolvable:$true] %s183
          %189 = dma.hbm_to_vmem [thread:$0]  %s182, 2560, %s184, %s173, 256, 128, 8
        $region24: #{encoder_forward.7} parent=15 // pred_fallthru
          _
        // Predicated region
        $region25: #{encoder_forward.7} parent=15 // pred_check
          %p190 = pneg %p106
        $region26: #{encoder_forward.7} parent=15 // pred_check_branch
          %192 = sbr.rel (%p190) target = $region28
        $region27: #{encoder_forward.7} parent=15 // pred_region
          %s193 = sand.u32 %s96, 1
          %s194 = scalar_lea.sflag [#allocation6], %s193
          %s195 = sand.u32 %s96, 1
          %s196 = smul.addr %s195, 2
          %s197 = scalar_lea.vmem [#allocation5], %s196
          %s198 = smul.u32 2, %s23
          %s200 = ssub.s32 32, 32
          %201 = vsyncadd %s194, %s200
          %s202 = smul.addr %s198, 16
          %s203 = scalar_lea.hbm %s2, %s202
          %s205 = sshll.u32 %s197, 4
          %s206 = int_to_ptr.vmem [resolvable:$true] %s205
          %208 = dma.hbm_to_vmem [thread:$0]  %s203, 32, %s206, %s194
        $region28: #{encoder_forward.7} parent=15 // pred_fallthru
          _
      $region16: #{encoder_forward.7} parent=5 // pred_fallthru
        _
      %p209 = scmp.le.s32.totalorder 1, %s15
      %p210 = scmp.lt.s32.totalorder %s15, 5
      %p211 = pnand %p209, %p210
      %p212 = pneg %p211
      // Predicated region
      $region29: #{encoder_forward.7} parent=5 // pred_check
        _
      $region30: #{encoder_forward.7} parent=5 // pred_check_branch
        %214 = sbr.rel (%p211) target = $region32
      $region31: #{encoder_forward.7} parent=5 // pred_region
        %s215 = ssub.s32 %s15, 1
        %s216 = sand.u32 %s73, 1
        %s217 = scalar_lea.sflag [#allocation4], %s216
        %s218 = sand.u32 %s73, 1
        %s219 = smul.addr %s218, 160
        %s220 = scalar_lea.vmem [#allocation3], %s219
        // Predicated region
        $region33: #{encoder_forward.7} parent=31 // pred_check
          %p221 = pneg %p86
        $region34: #{encoder_forward.7} parent=31 // pred_check_branch
          %223 = sbr.rel (%p221) target = $region36
        $region35: #{encoder_forward.7} parent=31 // pred_region
          %224 = dma.done %s217, 2560
        $region36: #{encoder_forward.7} parent=31 // pred_fallthru
          _
        %s225 = sand.u32 %s99, 1
        %s226 = scalar_lea.sflag [#allocation6], %s225
        %s227 = sand.u32 %s99, 1
        %s228 = smul.addr %s227, 2
        %s229 = scalar_lea.vmem [#allocation5], %s228
        // Predicated region
        $region37: #{encoder_forward.7} parent=31 // pred_check
          %p230 = pneg %p112
        $region38: #{encoder_forward.7} parent=31 // pred_check_branch
          %232 = sbr.rel (%p230) target = $region40
        $region39: #{encoder_forward.7} parent=31 // pred_region
          %233 = dma.done %s226, 32
        $region40: #{encoder_forward.7} parent=31 // pred_fallthru
          _
        %p234 = scmp.lt.s32.totalorder %s25, 1
        %s235 = scalar_select %p234, %s25, 1
        %s236 = smul.addr %s235, 2
        %s237 = smul.addr %s236, 4
        %s238 = scalar_lea.vmem %s0, %s237
        %p239 = pneg %p60
        %p240 = pneg %p57
        %s241 = sand.u32 %s73, 1
        %s242 = scalar_lea.sflag [#allocation4], %s241
        %s243 = sand.u32 %s73, 1
        %s244 = smul.addr %s243, 160
        %s245 = scalar_lea.vmem [#allocation3], %s244
        %p246 = pneg %p86
        %p247 = pneg %p83
        %s248 = sand.u32 %s99, 1
        %s249 = scalar_lea.sflag [#allocation6], %s248
        %s250 = sand.u32 %s99, 1
        %s251 = smul.addr %s250, 2
        %s252 = scalar_lea.vmem [#allocation5], %s251
        %p253 = pneg %p112
        %p254 = pneg %p109
        %p255 = pneg %p142
        %p256 = pneg %p139
        %s257 = smul.u32 2, %s26
        %p258 = scmp.lt.s32.totalorder %s25, 1
        %s259 = scalar_select %p258, %s25, 1
        %p260 = scmp.lt.s32.totalorder %s27, 0
        %s261 = scalar_select %p260, %s27, 0
        %p262 = scmp.lt.s32.totalorder %s257, 3
        %s263 = scalar_select %p262, %s257, 3
        %s264 = smul.addr %s261, 4
        %s265 = sadd.s32 %s263, %s264
        %s266 = smul.addr %s259, 4
        %s267 = sadd.s32 %s265, %s266
        %s268 = smul.addr %s267, 4
        %s269 = scalar_lea.vmem %s3, %s268
        %p270 = scmp.lt.s32.totalorder %s25, 1
        %s271 = scalar_select %p270, %s25, 1
        %s272 = smul.addr %s271, 2
        %s273 = smul.addr %s272, 4
        %s274 = scalar_lea.vmem %s0, %s273
        %s275 = smul.u32 2, %s26
        %s276 = smul.u32 2, %s26
        %s277 = smul.u32 2, %s26
        %p278 = scmp.lt.s32.totalorder %s25, 1
        %s279 = scalar_select %p278, %s25, 1
        %p280 = scmp.lt.s32.totalorder %s27, 0
        %s281 = scalar_select %p280, %s27, 0
        %p282 = scmp.lt.s32.totalorder %s277, 3
        %s283 = scalar_select %p282, %s277, 3
        %s284 = smul.addr %s281, 4
        %s285 = sadd.s32 %s283, %s284
        %s286 = smul.addr %s279, 4
        %s287 = sadd.s32 %s285, %s286
        %s288 = smul.addr %s287, 4
        %s289 = scalar_lea.vmem %s3, %s288
        %s290 = smul.u32 2, %s26
        %s292 = smul.u32 %s27, 8
        %s293 = sshra.s32 %s292, 3
        %s294 = sand.u32 %s292, 7
        %s295 = smul.addr %s293, 4
        %s296 = scalar_lea.vmem %s274, %s295
        %v297 = vld [vmem:[%s296] sm:$0xf]
        %v298 = vld [vmem:[%s296 + $0x4] sm:$0x3]
        %v299 = vld [vmem:[%s220] sm:$0xff]
        %v300 = vld [vmem:[%s220 + $0x8] sm:$0xff]
        %v301 = vld [vmem:[%s220 + $0x10] sm:$0xff]
        %v302 = vld [vmem:[%s220 + $0x18] sm:$0xff]
        %v307 = vunpack.c.l.b16 %v299
        %v308 = vunpack.c.h.b16 %v299
        %v309 = vunpack.c.l.b16 %v300
        %v310 = vunpack.c.h.b16 %v300
        %v311 = vunpack.c.l.b16 %v301
        %v312 = vunpack.c.h.b16 %v301
        %v313 = vunpack.c.l.b16 %v302
        %v314 = vunpack.c.h.b16 %v302
        %v315 = vpack.c.b16 %v309, %v307
        %v316 = vpack.c.b16 %v310, %v308
        %v317 = vpack.c.b16 %v313, %v311
        %v318 = vpack.c.b16 %v314, %v312
        %vm323 = vcmask 261120
        %v325 = vsel %vm323, %v297, 0
        %327 = vmatprep.subr.bf16.mxu0 %v316
        %328 = vmatpush1.bf16.msra.mxu0 %v315
        %329 = vmatprep.subr.bf16.mxu0 %v318
        %330 = vmatpush1.bf16.msra.mxu0 %v317
        %331 = vmatprep.subr.bf16.mxu0 0
        %332 = vmatpush1.bf16.msra.mxu0 0
        %333 = vmatprep.subr.bf16.mxu0 0
        %334 = vmatpush1.bf16.msra.mxu0 0
        %335 = vmatprep.subr.bf16.mxu0 0
        %336 = vmatpush1.bf16.msra.mxu0 0
        %337 = vmatprep.subr.bf16.mxu0 0
        %338 = vmatpush1.bf16.msra.mxu0 0
        %339 = vmatprep.subr.bf16.mxu0 0
        %340 = vmatpush1.bf16.msra.mxu0 0
        %341 = vmatprep.subr.bf16.mxu0 0
        %342 = vmatpush1.bf16.msra.mxu0 0
        %343 = vmatprep.subr.bf16.mxu0 0
        %344 = vmatpush1.bf16.msra.mxu0 0
        %345 = vmatprep.subr.bf16.mxu0 0
        %346 = vmatpush1.bf16.msra.mxu0 0
        %347 = vmatprep.subr.bf16.mxu0 0
        %348 = vmatpush1.bf16.msra.mxu0 0
        %349 = vmatprep.subr.bf16.mxu0 0
        %350 = vmatpush1.bf16.msra.mxu0 0
        %351 = vmatprep.subr.bf16.mxu0 0
        %352 = vmatpush1.bf16.msra.mxu0 0
        %353 = vmatprep.subr.bf16.mxu0 0
        %354 = vmatpush1.bf16.msra.mxu0 0
        %355 = vmatprep.subr.bf16.mxu0 0
        %356 = vmatpush1.bf16.msra.mxu0 0
        %357 = vmatprep.subr.bf16.mxu0 0
        %358 = vmatpush1.bf16.msra.mxu0 0
        %359 = vmatprep.mubr.bf16.mxu0 0
        %360 = vmatmul.mubr.bf16.gmra.mrb[0].mxu0 %v325
        %v361 = vpop.f32.mrb[0].mxu0
        %v362 = vadd.f32 0.0, %v361
        %v363 = vpop.f32.mrb[0].mxu0
        %v364 = vadd.f32 0.0, %v363
        %v365 = vpop.f32.mrb[0].mxu0
        %v366 = vpop.f32.mrb[0].mxu0
        %367 = vdwg.mxu0
        %368 = vst [vmem:[#allocation2] sm:$0xff] %v362
        %369 = vst [vmem:[#allocation2 + $0x8] sm:$0xff] %v364
        %v370 = vld [vmem:[#allocation2] sm:$0xff]
        %v371 = vld [vmem:[#allocation2 + $0x8] sm:$0xff]
        %s372 = scalar_lea.vmem %s220, 32 [#allocation3]
        %v373 = vld [vmem:[%s372] sm:$0xff]
        %v374 = vld [vmem:[%s372 + $0x8] sm:$0xff]
        %v375 = vld [vmem:[%s372 + $0x10] sm:$0xff]
        %v376 = vld [vmem:[%s372 + $0x18] sm:$0xff]
        %v379 = vunpack.c.l.b16 %v297
        %v380 = vunpack.c.l.b16 %v298
        %v381 = vpack.c.b16 %v380, %v379
        %v383 = vshrl.u32 %v381, 16
        %v385 = vshll.u32 %v381, 16
        %v387 = vrot.slane %v385, 1
        %v388 = vor.u32 %v383, %v387
        %v393 = vunpack.c.l.b16 %v373
        %v394 = vunpack.c.h.b16 %v373
        %v395 = vunpack.c.l.b16 %v374
        %v396 = vunpack.c.h.b16 %v374
        %v397 = vunpack.c.l.b16 %v375
        %v398 = vunpack.c.h.b16 %v375
        %v399 = vunpack.c.l.b16 %v376
        %v400 = vunpack.c.h.b16 %v376
        %v401 = vpack.c.b16 %v395, %v393
        %v402 = vpack.c.b16 %v396, %v394
        %v403 = vpack.c.b16 %v399, %v397
        %v404 = vpack.c.b16 %v400, %v398
        %v410 = vsel %vm323, %v388, 0
        %412 = vmatprep.subr.bf16.mxu0 %v402
        %413 = vmatpush1.bf16.msra.mxu0 %v401
        %414 = vmatprep.subr.bf16.mxu0 %v404
        %415 = vmatpush1.bf16.msra.mxu0 %v403
        %416 = vmatprep.subr.bf16.mxu0 0
        %417 = vmatpush1.bf16.msra.mxu0 0
        %418 = vmatprep.subr.bf16.mxu0 0
        %419 = vmatpush1.bf16.msra.mxu0 0
        %420 = vmatprep.subr.bf16.mxu0 0
        %421 = vmatpush1.bf16.msra.mxu0 0
        %422 = vmatprep.subr.bf16.mxu0 0
        %423 = vmatpush1.bf16.msra.mxu0 0
        %424 = vmatprep.subr.bf16.mxu0 0
        %425 = vmatpush1.bf16.msra.mxu0 0
        %426 = vmatprep.subr.bf16.mxu0 0
        %427 = vmatpush1.bf16.msra.mxu0 0
        %428 = vmatprep.subr.bf16.mxu0 0
        %429 = vmatpush1.bf16.msra.mxu0 0
        %430 = vmatprep.subr.bf16.mxu0 0
        %431 = vmatpush1.bf16.msra.mxu0 0
        %432 = vmatprep.subr.bf16.mxu0 0
        %433 = vmatpush1.bf16.msra.mxu0 0
        %434 = vmatprep.subr.bf16.mxu0 0
        %435 = vmatpush1.bf16.msra.mxu0 0
        %436 = vmatprep.subr.bf16.mxu0 0
        %437 = vmatpush1.bf16.msra.mxu0 0
        %438 = vmatprep.subr.bf16.mxu0 0
        %439 = vmatpush1.bf16.msra.mxu0 0
        %440 = vmatprep.subr.bf16.mxu0 0
        %441 = vmatpush1.bf16.msra.mxu0 0
        %442 = vmatprep.subr.bf16.mxu0 0
        %443 = vmatpush1.bf16.msra.mxu0 0
        %444 = vmatprep.mubr.bf16.mxu0 0
        %445 = vmatmul.mubr.bf16.gmra.mrb[0].mxu0 %v410
        %v446 = vpop.f32.mrb[0].mxu0
        %v447 = vadd.f32 0.0, %v446
        %v448 = vpop.f32.mrb[0].mxu0
        %v449 = vadd.f32 0.0, %v448
        %v450 = vpop.f32.mrb[0].mxu0
        %v451 = vpop.f32.mrb[0].mxu0
        %452 = vdwg.mxu0
        %v453 = vadd.f32 %v370, %v447
        %v454 = vadd.f32 %v371, %v449
        %455 = vst [vmem:[#allocation2] sm:$0xff] %v453
        %456 = vst [vmem:[#allocation2 + $0x8] sm:$0xff] %v454
        %v457 = vld [vmem:[#allocation2] sm:$0xff]
        %v458 = vld [vmem:[#allocation2 + $0x8] sm:$0xff]
        %s459 = scalar_lea.vmem %s220, 64 [#allocation3]
        %v460 = vld [vmem:[%s459] sm:$0xff]
        %v461 = vld [vmem:[%s459 + $0x8] sm:$0xff]
        %v462 = vld [vmem:[%s459 + $0x10] sm:$0xff]
        %v463 = vld [vmem:[%s459 + $0x18] sm:$0xff]
        %v464 = vrot.slane %v381, 1
        %v469 = vunpack.c.l.b16 %v460
        %v470 = vunpack.c.h.b16 %v460
        %v471 = vunpack.c.l.b16 %v461
        %v472 = vunpack.c.h.b16 %v461
        %v473 = vunpack.c.l.b16 %v462
        %v474 = vunpack.c.h.b16 %v462
        %v475 = vunpack.c.l.b16 %v463
        %v476 = vunpack.c.h.b16 %v463
        %v477 = vpack.c.b16 %v471, %v469
        %v478 = vpack.c.b16 %v472, %v470
        %v479 = vpack.c.b16 %v475, %v473
        %v480 = vpack.c.b16 %v476, %v474
        %v486 = vsel %vm323, %v464, 0
        %488 = vmatprep.subr.bf16.mxu0 %v478
        %489 = vmatpush1.bf16.msra.mxu0 %v477
        %490 = vmatprep.subr.bf16.mxu0 %v480
        %491 = vmatpush1.bf16.msra.mxu0 %v479
        %492 = vmatprep.subr.bf16.mxu0 0
        %493 = vmatpush1.bf16.msra.mxu0 0
        %494 = vmatprep.subr.bf16.mxu0 0
        %495 = vmatpush1.bf16.msra.mxu0 0
        %496 = vmatprep.subr.bf16.mxu0 0
        %497 = vmatpush1.bf16.msra.mxu0 0
        %498 = vmatprep.subr.bf16.mxu0 0
        %499 = vmatpush1.bf16.msra.mxu0 0
        %500 = vmatprep.subr.bf16.mxu0 0
        %501 = vmatpush1.bf16.msra.mxu0 0
        %502 = vmatprep.subr.bf16.mxu0 0
        %503 = vmatpush1.bf16.msra.mxu0 0
        %504 = vmatprep.subr.bf16.mxu0 0
        %505 = vmatpush1.bf16.msra.mxu0 0
        %506 = vmatprep.subr.bf16.mxu0 0
        %507 = vmatpush1.bf16.msra.mxu0 0
        %508 = vmatprep.subr.bf16.mxu0 0
        %509 = vmatpush1.bf16.msra.mxu0 0
        %510 = vmatprep.subr.bf16.mxu0 0
        %511 = vmatpush1.bf16.msra.mxu0 0
        %512 = vmatprep.subr.bf16.mxu0 0
        %513 = vmatpush1.bf16.msra.mxu0 0
        %514 = vmatprep.subr.bf16.mxu0 0
        %515 = vmatpush1.bf16.msra.mxu0 0
        %516 = vmatprep.subr.bf16.mxu0 0
        %517 = vmatpush1.bf16.msra.mxu0 0
        %518 = vmatprep.subr.bf16.mxu0 0
        %519 = vmatpush1.bf16.msra.mxu0 0
        %520 = vmatprep.mubr.bf16.mxu0 0
        %521 = vmatmul.mubr.bf16.gmra.mrb[0].mxu0 %v486
        %v522 = vpop.f32.mrb[0].mxu0
        %v523 = vadd.f32 0.0, %v522
        %v524 = vpop.f32.mrb[0].mxu0
        %v525 = vadd.f32 0.0, %v524
        %v526 = vpop.f32.mrb[0].mxu0
        %v527 = vpop.f32.mrb[0].mxu0
        %528 = vdwg.mxu0
        %v529 = vadd.f32 %v457, %v523
        %v530 = vadd.f32 %v458, %v525
        %531 = vst [vmem:[#allocation2] sm:$0xff] %v529
        %532 = vst [vmem:[#allocation2 + $0x8] sm:$0xff] %v530
        %v533 = vld [vmem:[#allocation2] sm:$0xff]
        %v534 = vld [vmem:[#allocation2 + $0x8] sm:$0xff]
        %s535 = scalar_lea.vmem %s220, 96 [#allocation3]
        %v536 = vld [vmem:[%s535] sm:$0xff]
        %v537 = vld [vmem:[%s535 + $0x8] sm:$0xff]
        %v538 = vld [vmem:[%s535 + $0x10] sm:$0xff]
        %v539 = vld [vmem:[%s535 + $0x18] sm:$0xff]
        %v540 = vrot.slane %v383, 1
        %v541 = vrot.slane %v385, 2
        %v542 = vor.u32 %v540, %v541
        %v547 = vunpack.c.l.b16 %v536
        %v548 = vunpack.c.h.b16 %v536
        %v549 = vunpack.c.l.b16 %v537
        %v550 = vunpack.c.h.b16 %v537
        %v551 = vunpack.c.l.b16 %v538
        %v552 = vunpack.c.h.b16 %v538
        %v553 = vunpack.c.l.b16 %v539
        %v554 = vunpack.c.h.b16 %v539
        %v555 = vpack.c.b16 %v549, %v547
        %v556 = vpack.c.b16 %v550, %v548
        %v557 = vpack.c.b16 %v553, %v551
        %v558 = vpack.c.b16 %v554, %v552
        %v564 = vsel %vm323, %v542, 0
        %566 = vmatprep.subr.bf16.mxu0 %v556
        %567 = vmatpush1.bf16.msra.mxu0 %v555
        %568 = vmatprep.subr.bf16.mxu0 %v558
        %569 = vmatpush1.bf16.msra.mxu0 %v557
        %570 = vmatprep.subr.bf16.mxu0 0
        %571 = vmatpush1.bf16.msra.mxu0 0
        %572 = vmatprep.subr.bf16.mxu0 0
        %573 = vmatpush1.bf16.msra.mxu0 0
        %574 = vmatprep.subr.bf16.mxu0 0
        %575 = vmatpush1.bf16.msra.mxu0 0
        %576 = vmatprep.subr.bf16.mxu0 0
        %577 = vmatpush1.bf16.msra.mxu0 0
        %578 = vmatprep.subr.bf16.mxu0 0
        %579 = vmatpush1.bf16.msra.mxu0 0
        %580 = vmatprep.subr.bf16.mxu0 0
        %581 = vmatpush1.bf16.msra.mxu0 0
        %582 = vmatprep.subr.bf16.mxu0 0
        %583 = vmatpush1.bf16.msra.mxu0 0
        %584 = vmatprep.subr.bf16.mxu0 0
        %585 = vmatpush1.bf16.msra.mxu0 0
        %586 = vmatprep.subr.bf16.mxu0 0
        %587 = vmatpush1.bf16.msra.mxu0 0
        %588 = vmatprep.subr.bf16.mxu0 0
        %589 = vmatpush1.bf16.msra.mxu0 0
        %590 = vmatprep.subr.bf16.mxu0 0
        %591 = vmatpush1.bf16.msra.mxu0 0
        %592 = vmatprep.subr.bf16.mxu0 0
        %593 = vmatpush1.bf16.msra.mxu0 0
        %594 = vmatprep.subr.bf16.mxu0 0
        %595 = vmatpush1.bf16.msra.mxu0 0
        %596 = vmatprep.subr.bf16.mxu0 0
        %597 = vmatpush1.bf16.msra.mxu0 0
        %598 = vmatprep.mubr.bf16.mxu0 0
        %599 = vmatmul.mubr.bf16.gmra.mrb[0].mxu0 %v564
        %v600 = vpop.f32.mrb[0].mxu0
        %v601 = vadd.f32 0.0, %v600
        %v602 = vpop.f32.mrb[0].mxu0
        %v603 = vadd.f32 0.0, %v602
        %v604 = vpop.f32.mrb[0].mxu0
        %v605 = vpop.f32.mrb[0].mxu0
        %606 = vdwg.mxu0
        %v607 = vadd.f32 %v533, %v601
        %v608 = vadd.f32 %v534, %v603
        %609 = vst [vmem:[#allocation2] sm:$0xff] %v607
        %610 = vst [vmem:[#allocation2 + $0x8] sm:$0xff] %v608
        %v611 = vld [vmem:[#allocation2] sm:$0xff]
        %v612 = vld [vmem:[#allocation2 + $0x8] sm:$0xff]
        %s613 = scalar_lea.vmem %s220, 128 [#allocation3]
        %v614 = vld [vmem:[%s613] sm:$0xff]
        %v615 = vld [vmem:[%s613 + $0x8] sm:$0xff]
        %v616 = vld [vmem:[%s613 + $0x10] sm:$0xff]
        %v617 = vld [vmem:[%s613 + $0x18] sm:$0xff]
        %v618 = vrot.slane %v381, 2
        %v623 = vunpack.c.l.b16 %v614
        %v624 = vunpack.c.h.b16 %v614
        %v625 = vunpack.c.l.b16 %v615
        %v626 = vunpack.c.h.b16 %v615
        %v627 = vunpack.c.l.b16 %v616
        %v628 = vunpack.c.h.b16 %v616
        %v629 = vunpack.c.l.b16 %v617
        %v630 = vunpack.c.h.b16 %v617
        %v631 = vpack.c.b16 %v625, %v623
        %v632 = vpack.c.b16 %v626, %v624
        %v633 = vpack.c.b16 %v629, %v627
        %v634 = vpack.c.b16 %v630, %v628
        %v640 = vsel %vm323, %v618, 0
        %642 = vmatprep.subr.bf16.mxu0 %v632
        %643 = vmatpush1.bf16.msra.mxu0 %v631
        %644 = vmatprep.subr.bf16.mxu0 %v634
        %645 = vmatpush1.bf16.msra.mxu0 %v633
        %646 = vmatprep.subr.bf16.mxu0 0
        %647 = vmatpush1.bf16.msra.mxu0 0
        %648 = vmatprep.subr.bf16.mxu0 0
        %649 = vmatpush1.bf16.msra.mxu0 0
        %650 = vmatprep.subr.bf16.mxu0 0
        %651 = vmatpush1.bf16.msra.mxu0 0
        %652 = vmatprep.subr.bf16.mxu0 0
        %653 = vmatpush1.bf16.msra.mxu0 0
        %654 = vmatprep.subr.bf16.mxu0 0
        %655 = vmatpush1.bf16.msra.mxu0 0
        %656 = vmatprep.subr.bf16.mxu0 0
        %657 = vmatpush1.bf16.msra.mxu0 0
        %658 = vmatprep.subr.bf16.mxu0 0
        %659 = vmatpush1.bf16.msra.mxu0 0
        %660 = vmatprep.subr.bf16.mxu0 0
        %661 = vmatpush1.bf16.msra.mxu0 0
        %662 = vmatprep.subr.bf16.mxu0 0
        %663 = vmatpush1.bf16.msra.mxu0 0
        %664 = vmatprep.subr.bf16.mxu0 0
        %665 = vmatpush1.bf16.msra.mxu0 0
        %666 = vmatprep.subr.bf16.mxu0 0
        %667 = vmatpush1.bf16.msra.mxu0 0
        %668 = vmatprep.subr.bf16.mxu0 0
        %669 = vmatpush1.bf16.msra.mxu0 0
        %670 = vmatprep.subr.bf16.mxu0 0
        %671 = vmatpush1.bf16.msra.mxu0 0
        %672 = vmatprep.subr.bf16.mxu0 0
        %673 = vmatpush1.bf16.msra.mxu0 0
        %674 = vmatprep.mubr.bf16.mxu0 0
        %675 = vmatmul.mubr.bf16.gmra.mrb[0].mxu0 %v640
        %v676 = vpop.f32.mrb[0].mxu0
        %v677 = vadd.f32 0.0, %v676
        %v678 = vpop.f32.mrb[0].mxu0
        %v679 = vadd.f32 0.0, %v678
        %v680 = vpop.f32.mrb[0].mxu0
        %v681 = vpop.f32.mrb[0].mxu0
        %682 = vdwg.mxu0
        %v683 = vadd.f32 %v611, %v677
        %v684 = vadd.f32 %v612, %v679
        %685 = vst [vmem:[#allocation2] sm:$0xff] %v683
        %686 = vst [vmem:[#allocation2 + $0x8] sm:$0xff] %v684
        %v687 = vld [vmem:[#allocation2] sm:$0xff]
        %v688 = vld [vmem:[#allocation2 + $0x8] sm:$0xff]
        %v689 = vld [vmem:[%s229] sm:$0x3]
        %v691 = vlaneseq
        %v692 = vshrl.u32 %v691, 7
        %v693 = vsub.s32 0, %v692
        %v694 = vrot.slane %v689, %v693
        %v695 = vlaneseq
        %v696 = vshrl.u32 %v695, 7
        %v697 = vsub.s32 1, %v696
        %v698 = vrot.slane %v689, %v697
        %v701 = vadd.f32 %v687, %v694
        %v702 = vadd.f32 %v688, %v698
        %v703 = vmax.f32 %v701, 0.0
        %v704 = vmax.f32 %v702, 0.0
        %v705 = vpack.c.bf16 %v703, %v703
        %v706 = vpack.c.bf16 %v704, %v704
        %v709 = vunpack.c.l.b16 %v705
        %v710 = vunpack.c.l.b16 %v706
        %v711 = vpack.c.b16 %v710, %v709
        %713 = vst [vmem:[%s289] sm:$0xff] %v711
        %s714 = smul.u32 2, %s26
        %p715 = scmp.lt.s32.totalorder %s25, 1
        %s716 = scalar_select %p715, %s25, 1
        %p717 = scmp.lt.s32.totalorder %s27, 0
        %s718 = scalar_select %p717, %s27, 0
        %p719 = scmp.lt.s32.totalorder %s714, 3
        %s720 = scalar_select %p719, %s714, 3
        %s721 = smul.addr %s718, 4
        %s722 = sadd.s32 %s720, %s721
        %s723 = smul.addr %s716, 4
        %s724 = sadd.s32 %s722, %s723
        %s725 = smul.addr %s724, 4
        %s726 = scalar_lea.vmem %s3, %s725
        // Predicated region
        $region41: #{encoder_forward.7} parent=31 // pred_check
          %p727 = pneg %p139
        $region42: #{encoder_forward.7} parent=31 // pred_check_branch
          %729 = sbr.rel (%p727) target = $region44
        $region43: #{encoder_forward.7} parent=31 // pred_region
          %s730 = smul.u32 2, %s26
        $region44: #{encoder_forward.7} parent=31 // pred_fallthru
          _
      $region32: #{encoder_forward.7} parent=5 // pred_fallthru
        _
      %p731 = scmp.le.s32.totalorder 2, %s15
      // Predicated region
      $region45: #{encoder_forward.7} parent=5 // pred_check
        %p732 = pneg %p731
      $region46: #{encoder_forward.7} parent=5 // pred_check_branch
        %734 = sbr.rel (%p732) target = $region48
      $region47: #{encoder_forward.7} parent=5 // pred_region
        %s735 = ssub.s32 %s15, 2
        // Predicated region
        $region49: #{encoder_forward.7} parent=47 // pred_check
          %p736 = pneg %p145
        $region50: #{encoder_forward.7} parent=47 // pred_check_branch
          %738 = sbr.rel (%p736) target = $region52
        $region51: #{encoder_forward.7} parent=47 // pred_region
          %s739 = smul.u32 2, %s29
          %p740 = scmp.lt.s32.totalorder %s28, 1
          %s741 = scalar_select %p740, %s28, 1
          %p742 = scmp.lt.s32.totalorder %s30, 0
          %s743 = scalar_select %p742, %s30, 0
          %p744 = scmp.lt.s32.totalorder %s739, 3
          %s745 = scalar_select %p744, %s739, 3
          %s746 = smul.addr %s743, 4
          %s747 = sadd.s32 %s745, %s746
          %s748 = smul.addr %s741, 4
          %s749 = sadd.s32 %s747, %s748
          %s750 = smul.addr %s749, 4
          %s751 = scalar_lea.vmem %s3, %s750
        $region52: #{encoder_forward.7} parent=47 // pred_fallthru
          _
      $region48: #{encoder_forward.7} parent=5 // pred_fallthru
        _
    $region6: #{encoder_forward.7} parent=1 // loop_footer
      %s19 = sadd.s32 1, %s15
    $region7: #{encoder_forward.7} parent=1 // loop_footer_branch
      %14 = sbr.rel target = $region3
    $region8: #{encoder_forward.7} parent=1 // loop_exit
      _
    %752 = vsyncpa [#allocation4], 1
    %s753 = scalar_lea.sflag [#allocation4], 1
    %754 = vsyncpa %s753, 1
    %755 = vsyncpa [#allocation6], 1
    %s756 = scalar_lea.sflag [#allocation6], 1
    %757 = vsyncpa %s756, 1

// kernel: encoder_forward.10
$region0: #{encoder_forward.10}
  #allocation0 [shape = 'u32[]', space=smem, size = 0x4, offset = 0x4, fixed_abs, tag = 'smem constant byte address 0x4 - core index']
  #allocation1 [shape = 'u32[144,128]{1,0:T(1,128)}', space=vmem, size = 0x12000, scoped, tag = 'internal scratch']
  %s0 = inlined_call_operand.vmem [shape: bf16[16,512], index: 0, kind: input, shape index: {}]
  %s1 = inlined_call_operand.vmem [shape: bf16[512,256], index: 1, kind: input, shape index: {}]
  %s2 = inlined_call_operand.vmem [shape: f32[1,256], index: 2, kind: input, shape index: {}]
  %s3 = inlined_call_operand.vmem [shape: f32[16,256], index: 3, kind: output, shape index: {}]
  %s4 = sld [smem:[#allocation0]]
  $region22: #{encoder_forward.10} parent=0
    _
  %s6 = ssub.s32 1, %s4
  %s7 = scalar_select 0, %s6, %s4
  // Predicated region
  $region2: #{encoder_forward.10} parent=0 // pred_check
    _
  $region3: #{encoder_forward.10} parent=0 // pred_check_branch
    %9 = sbr.rel (0) target = $region5
  $region4: #{encoder_forward.10} parent=0 // pred_region
    _
  $region5: #{encoder_forward.10} parent=0 // pred_fallthru
    _
  // Predicated region
  $region6: #{encoder_forward.10} parent=0 // pred_check
    _
  $region7: #{encoder_forward.10} parent=0 // pred_check_branch
    %11 = sbr.rel (0) target = $region9
  $region8: #{encoder_forward.10} parent=0 // pred_region
    _
  $region9: #{encoder_forward.10} parent=0 // pred_fallthru
    _
  // Predicated region
  $region10: #{encoder_forward.10} parent=0 // pred_check
    _
  $region11: #{encoder_forward.10} parent=0 // pred_check_branch
    %13 = sbr.rel (0) target = $region13
  $region12: #{encoder_forward.10} parent=0 // pred_region
    _
  $region13: #{encoder_forward.10} parent=0 // pred_fallthru
    _
  %v14 = vld [vmem:[%s0] sm:$0xff]
  %v15 = vld [vmem:[%s0 + $0x8] sm:$0xff]
  %v16 = vld [vmem:[%s0 + $0x10] sm:$0xff]
  %v17 = vld [vmem:[%s0 + $0x18] sm:$0xff]
  %v18 = vld [vmem:[%s1] sm:$0xff]
  %v19 = vld [vmem:[%s1 + $0x8] sm:$0xff]
  %v20 = vld [vmem:[%s1 + $0x10] sm:$0xff]
  %v21 = vld [vmem:[%s1 + $0x18] sm:$0xff]
  %v22 = vld [vmem:[%s1 + $0x20] sm:$0xff]
  %v23 = vld [vmem:[%s1 + $0x28] sm:$0xff]
  %v24 = vld [vmem:[%s1 + $0x30] sm:$0xff]
  %v25 = vld [vmem:[%s1 + $0x38] sm:$0xff]
  %v26 = vld [vmem:[%s1 + $0x40] sm:$0xff]
  %v27 = vld [vmem:[%s1 + $0x48] sm:$0xff]
  %v28 = vld [vmem:[%s1 + $0x50] sm:$0xff]
  %v29 = vld [vmem:[%s1 + $0x58] sm:$0xff]
  %v30 = vld [vmem:[%s1 + $0x60] sm:$0xff]
  %v31 = vld [vmem:[%s1 + $0x68] sm:$0xff]
  %v32 = vld [vmem:[%s1 + $0x70] sm:$0xff]
  %v33 = vld [vmem:[%s1 + $0x78] sm:$0xff]
  %v34 = vld [vmem:[%s1 + $0x80] sm:$0xff]
  %v35 = vld [vmem:[%s1 + $0x88] sm:$0xff]
  %v36 = vld [vmem:[%s1 + $0x90] sm:$0xff]
  %v37 = vld [vmem:[%s1 + $0x98] sm:$0xff]
  %v38 = vld [vmem:[%s1 + $0xa0] sm:$0xff]
  %v39 = vld [vmem:[%s1 + $0xa8] sm:$0xff]
  %v40 = vld [vmem:[%s1 + $0xb0] sm:$0xff]
  %v41 = vld [vmem:[%s1 + $0xb8] sm:$0xff]
  %v42 = vld [vmem:[%s1 + $0xc0] sm:$0xff]
  %v43 = vld [vmem:[%s1 + $0xc8] sm:$0xff]
  %v44 = vld [vmem:[%s1 + $0xd0] sm:$0xff]
  %v45 = vld [vmem:[%s1 + $0xd8] sm:$0xff]
  %v46 = vld [vmem:[%s1 + $0xe0] sm:$0xff]
  %v47 = vld [vmem:[%s1 + $0xe8] sm:$0xff]
  %v48 = vld [vmem:[%s1 + $0xf0] sm:$0xff]
  %v49 = vld [vmem:[%s1 + $0xf8] sm:$0xff]
  %v50 = vld [vmem:[%s1 + $0x100] sm:$0xff]
  %v51 = vld [vmem:[%s1 + $0x108] sm:$0xff]
  %v52 = vld [vmem:[%s1 + $0x110] sm:$0xff]
  %v53 = vld [vmem:[%s1 + $0x118] sm:$0xff]
  %v54 = vld [vmem:[%s1 + $0x120] sm:$0xff]
  %v55 = vld [vmem:[%s1 + $0x128] sm:$0xff]
  %v56 = vld [vmem:[%s1 + $0x130] sm:$0xff]
  %v57 = vld [vmem:[%s1 + $0x138] sm:$0xff]
  %v58 = vld [vmem:[%s1 + $0x140] sm:$0xff]
  %v59 = vld [vmem:[%s1 + $0x148] sm:$0xff]
  %v60 = vld [vmem:[%s1 + $0x150] sm:$0xff]
  %v61 = vld [vmem:[%s1 + $0x158] sm:$0xff]
  %v62 = vld [vmem:[%s1 + $0x160] sm:$0xff]
  %v63 = vld [vmem:[%s1 + $0x168] sm:$0xff]
  %v64 = vld [vmem:[%s1 + $0x170] sm:$0xff]
  %v65 = vld [vmem:[%s1 + $0x178] sm:$0xff]
  %v66 = vld [vmem:[%s1 + $0x180] sm:$0xff]
  %v67 = vld [vmem:[%s1 + $0x188] sm:$0xff]
  %v68 = vld [vmem:[%s1 + $0x190] sm:$0xff]
  %v69 = vld [vmem:[%s1 + $0x198] sm:$0xff]
  %v70 = vld [vmem:[%s1 + $0x1a0] sm:$0xff]
  %v71 = vld [vmem:[%s1 + $0x1a8] sm:$0xff]
  %v72 = vld [vmem:[%s1 + $0x1b0] sm:$0xff]
  %v73 = vld [vmem:[%s1 + $0x1b8] sm:$0xff]
  %v74 = vld [vmem:[%s1 + $0x1c0] sm:$0xff]
  %v75 = vld [vmem:[%s1 + $0x1c8] sm:$0xff]
  %v76 = vld [vmem:[%s1 + $0x1d0] sm:$0xff]
  %v77 = vld [vmem:[%s1 + $0x1d8] sm:$0xff]
  %v78 = vld [vmem:[%s1 + $0x1e0] sm:$0xff]
  %v79 = vld [vmem:[%s1 + $0x1e8] sm:$0xff]
  %v80 = vld [vmem:[%s1 + $0x1f0] sm:$0xff]
  %v81 = vld [vmem:[%s1 + $0x1f8] sm:$0xff]
  %v82 = vld [vmem:[%s2] sm:$0x3]
  %v84 = vlaneseq
  %v85 = vshrl.u32 %v84, 7
  %v86 = vsub.s32 0, %v85
  %v87 = vrot.slane %v82, %v86
  %v88 = vlaneseq
  %v89 = vshrl.u32 %v88, 7
  %v90 = vsub.s32 1, %v89
  %v91 = vrot.slane %v82, %v90
  %v98 = vunpack.c.l.b16 %v14
  %v99 = vunpack.c.h.b16 %v14
  %v100 = vunpack.c.l.b16 %v15
  %v101 = vunpack.c.h.b16 %v15
  %v102 = vunpack.c.l.b16 %v16
  %v103 = vunpack.c.h.b16 %v16
  %v104 = vunpack.c.l.b16 %v17
  %v105 = vunpack.c.h.b16 %v17
  %v106 = vpack.c.b16 %v102, %v98
  %v107 = vpack.c.b16 %v103, %v99
  %v108 = vpack.c.b16 %v104, %v100
  %v109 = vpack.c.b16 %v105, %v101
  %v178 = vunpack.c.l.b16 %v18
  %v179 = vunpack.c.h.b16 %v18
  %v180 = vunpack.c.l.b16 %v19
  %v181 = vunpack.c.h.b16 %v19
  %v182 = vunpack.c.l.b16 %v20
  %v183 = vunpack.c.h.b16 %v20
  %v184 = vunpack.c.l.b16 %v21
  %v185 = vunpack.c.h.b16 %v21
  %v186 = vunpack.c.l.b16 %v22
  %v187 = vunpack.c.h.b16 %v22
  %v188 = vunpack.c.l.b16 %v23
  %v189 = vunpack.c.h.b16 %v23
  %v190 = vunpack.c.l.b16 %v24
  %v191 = vunpack.c.h.b16 %v24
  %v192 = vunpack.c.l.b16 %v25
  %v193 = vunpack.c.h.b16 %v25
  %v194 = vunpack.c.l.b16 %v26
  %v195 = vunpack.c.h.b16 %v26
  %v196 = vunpack.c.l.b16 %v27
  %v197 = vunpack.c.h.b16 %v27
  %v198 = vunpack.c.l.b16 %v28
  %v199 = vunpack.c.h.b16 %v28
  %v200 = vunpack.c.l.b16 %v29
  %v201 = vunpack.c.h.b16 %v29
  %v202 = vunpack.c.l.b16 %v30
  %v203 = vunpack.c.h.b16 %v30
  %v204 = vunpack.c.l.b16 %v31
  %v205 = vunpack.c.h.b16 %v31
  %v206 = vunpack.c.l.b16 %v32
  %v207 = vunpack.c.h.b16 %v32
  %v208 = vunpack.c.l.b16 %v33
  %v209 = vunpack.c.h.b16 %v33
  %v210 = vunpack.c.l.b16 %v34
  %v211 = vunpack.c.h.b16 %v34
  %v212 = vunpack.c.l.b16 %v35
  %v213 = vunpack.c.h.b16 %v35
  %v214 = vunpack.c.l.b16 %v36
  %v215 = vunpack.c.h.b16 %v36
  %v216 = vunpack.c.l.b16 %v37
  %v217 = vunpack.c.h.b16 %v37
  %v218 = vunpack.c.l.b16 %v38
  %v219 = vunpack.c.h.b16 %v38
  %v220 = vunpack.c.l.b16 %v39
  %v221 = vunpack.c.h.b16 %v39
  %v222 = vunpack.c.l.b16 %v40
  %v223 = vunpack.c.h.b16 %v40
  %v224 = vunpack.c.l.b16 %v41
  %v225 = vunpack.c.h.b16 %v41
  %v226 = vunpack.c.l.b16 %v42
  %v227 = vunpack.c.h.b16 %v42
  %v228 = vunpack.c.l.b16 %v43
  %v229 = vunpack.c.h.b16 %v43
  %v230 = vunpack.c.l.b16 %v44
  %v231 = vunpack.c.h.b16 %v44
  %v232 = vunpack.c.l.b16 %v45
  %v233 = vunpack.c.h.b16 %v45
  %v234 = vunpack.c.l.b16 %v46
  %v235 = vunpack.c.h.b16 %v46
  %v236 = vunpack.c.l.b16 %v47
  %v237 = vunpack.c.h.b16 %v47
  %v238 = vunpack.c.l.b16 %v48
  %v239 = vunpack.c.h.b16 %v48
  %v240 = vunpack.c.l.b16 %v49
  %v241 = vunpack.c.h.b16 %v49
  %v242 = vunpack.c.l.b16 %v50
  %v243 = vunpack.c.h.b16 %v50
  %v244 = vunpack.c.l.b16 %v51
  %v245 = vunpack.c.h.b16 %v51
  %v246 = vunpack.c.l.b16 %v52
  %v247 = vunpack.c.h.b16 %v52
  %v248 = vunpack.c.l.b16 %v53
  %v249 = vunpack.c.h.b16 %v53
  %v250 = vunpack.c.l.b16 %v54
  %v251 = vunpack.c.h.b16 %v54
  %v252 = vunpack.c.l.b16 %v55
  %v253 = vunpack.c.h.b16 %v55
  %v254 = vunpack.c.l.b16 %v56
  %v255 = vunpack.c.h.b16 %v56
  %v256 = vunpack.c.l.b16 %v57
  %v257 = vunpack.c.h.b16 %v57
  %v258 = vunpack.c.l.b16 %v58
  %v259 = vunpack.c.h.b16 %v58
  %v260 = vunpack.c.l.b16 %v59
  %v261 = vunpack.c.h.b16 %v59
  %v262 = vunpack.c.l.b16 %v60
  %v263 = vunpack.c.h.b16 %v60
  %v264 = vunpack.c.l.b16 %v61
  %v265 = vunpack.c.h.b16 %v61
  %v266 = vunpack.c.l.b16 %v62
  %v267 = vunpack.c.h.b16 %v62
  %v268 = vunpack.c.l.b16 %v63
  %v269 = vunpack.c.h.b16 %v63
  %v270 = vunpack.c.l.b16 %v64
  %v271 = vunpack.c.h.b16 %v64
  %v272 = vunpack.c.l.b16 %v65
  %v273 = vunpack.c.h.b16 %v65
  %v274 = vunpack.c.l.b16 %v66
  %v275 = vunpack.c.h.b16 %v66
  %v276 = vunpack.c.l.b16 %v67
  %v277 = vunpack.c.h.b16 %v67
  %v278 = vunpack.c.l.b16 %v68
  %v279 = vunpack.c.h.b16 %v68
  %v280 = vunpack.c.l.b16 %v69
  %v281 = vunpack.c.h.b16 %v69
  %v282 = vunpack.c.l.b16 %v70
  %v283 = vunpack.c.h.b16 %v70
  %v284 = vunpack.c.l.b16 %v71
  %v285 = vunpack.c.h.b16 %v71
  %v286 = vunpack.c.l.b16 %v72
  %v287 = vunpack.c.h.b16 %v72
  %v288 = vunpack.c.l.b16 %v73
  %v289 = vunpack.c.h.b16 %v73
  %v290 = vunpack.c.l.b16 %v74
  %v291 = vunpack.c.h.b16 %v74
  %v292 = vunpack.c.l.b16 %v75
  %v293 = vunpack.c.h.b16 %v75
  %v294 = vunpack.c.l.b16 %v76
  %v295 = vunpack.c.h.b16 %v76
  %v296 = vunpack.c.l.b16 %v77
  %v297 = vunpack.c.h.b16 %v77
  %v298 = vunpack.c.l.b16 %v78
  %v299 = vunpack.c.h.b16 %v78
  %v300 = vunpack.c.l.b16 %v79
  %v301 = vunpack.c.h.b16 %v79
  %v302 = vunpack.c.l.b16 %v80
  %v303 = vunpack.c.h.b16 %v80
  %v304 = vunpack.c.l.b16 %v81
  %v305 = vunpack.c.h.b16 %v81
  %v306 = vpack.c.b16 %v180, %v178
  %v307 = vpack.c.b16 %v181, %v179
  %v308 = vpack.c.b16 %v184, %v182
  %v309 = vpack.c.b16 %v185, %v183
  %v310 = vpack.c.b16 %v188, %v186
  %v311 = vpack.c.b16 %v189, %v187
  %v312 = vpack.c.b16 %v192, %v190
  %v313 = vpack.c.b16 %v193, %v191
  %v314 = vpack.c.b16 %v196, %v194
  %v315 = vpack.c.b16 %v197, %v195
  %v316 = vpack.c.b16 %v200, %v198
  %v317 = vpack.c.b16 %v201, %v199
  %v318 = vpack.c.b16 %v204, %v202
  %v319 = vpack.c.b16 %v205, %v203
  %v320 = vpack.c.b16 %v208, %v206
  %v321 = vpack.c.b16 %v209, %v207
  %v322 = vpack.c.b16 %v212, %v210
  %v323 = vpack.c.b16 %v213, %v211
  %v324 = vpack.c.b16 %v216, %v214
  %v325 = vpack.c.b16 %v217, %v215
  %v326 = vpack.c.b16 %v220, %v218
  %v327 = vpack.c.b16 %v221, %v219
  %v328 = vpack.c.b16 %v224, %v222
  %v329 = vpack.c.b16 %v225, %v223
  %v330 = vpack.c.b16 %v228, %v226
  %v331 = vpack.c.b16 %v229, %v227
  %v332 = vpack.c.b16 %v232, %v230
  %v333 = vpack.c.b16 %v233, %v231
  %v334 = vpack.c.b16 %v236, %v234
  %v335 = vpack.c.b16 %v237, %v235
  %v336 = vpack.c.b16 %v240, %v238
  %v337 = vpack.c.b16 %v241, %v239
  %v338 = vpack.c.b16 %v244, %v242
  %v339 = vpack.c.b16 %v245, %v243
  %v340 = vpack.c.b16 %v248, %v246
  %v341 = vpack.c.b16 %v249, %v247
  %v342 = vpack.c.b16 %v252, %v250
  %v343 = vpack.c.b16 %v253, %v251
  %v344 = vpack.c.b16 %v256, %v254
  %v345 = vpack.c.b16 %v257, %v255
  %v346 = vpack.c.b16 %v260, %v258
  %v347 = vpack.c.b16 %v261, %v259
  %v348 = vpack.c.b16 %v264, %v262
  %v349 = vpack.c.b16 %v265, %v263
  %v350 = vpack.c.b16 %v268, %v266
  %v351 = vpack.c.b16 %v269, %v267
  %v352 = vpack.c.b16 %v272, %v270
  %v353 = vpack.c.b16 %v273, %v271
  %v354 = vpack.c.b16 %v276, %v274
  %v355 = vpack.c.b16 %v277, %v275
  %v356 = vpack.c.b16 %v280, %v278
  %v357 = vpack.c.b16 %v281, %v279
  %v358 = vpack.c.b16 %v284, %v282
  %v359 = vpack.c.b16 %v285, %v283
  %v360 = vpack.c.b16 %v288, %v286
  %v361 = vpack.c.b16 %v289, %v287
  %v362 = vpack.c.b16 %v292, %v290
  %v363 = vpack.c.b16 %v293, %v291
  %v364 = vpack.c.b16 %v296, %v294
  %v365 = vpack.c.b16 %v297, %v295
  %v366 = vpack.c.b16 %v300, %v298
  %v367 = vpack.c.b16 %v301, %v299
  %v368 = vpack.c.b16 %v304, %v302
  %v369 = vpack.c.b16 %v305, %v303
  %434 = vmatprep.subr.bf16.mxu0 %v307
  %435 = vmatpush1.bf16.msra.mxu0 %v306
  %436 = vmatprep.subr.bf16.mxu0 %v309
  %437 = vmatpush1.bf16.msra.mxu0 %v308
  %438 = vmatprep.subr.bf16.mxu0 %v311
  %439 = vmatpush1.bf16.msra.mxu0 %v310
  %440 = vmatprep.subr.bf16.mxu0 %v313
  %441 = vmatpush1.bf16.msra.mxu0 %v312
  %442 = vmatprep.subr.bf16.mxu0 %v315
  %443 = vmatpush1.bf16.msra.mxu0 %v314
  %444 = vmatprep.subr.bf16.mxu0 %v317
  %445 = vmatpush1.bf16.msra.mxu0 %v316
  %446 = vmatprep.subr.bf16.mxu0 %v319
  %447 = vmatpush1.bf16.msra.mxu0 %v318
  %448 = vmatprep.subr.bf16.mxu0 %v321
  %449 = vmatpush1.bf16.msra.mxu0 %v320
  %450 = vmatprep.subr.bf16.mxu0 %v323
  %451 = vmatpush1.bf16.msra.mxu0 %v322
  %452 = vmatprep.subr.bf16.mxu0 %v325
  %453 = vmatpush1.bf16.msra.mxu0 %v324
  %454 = vmatprep.subr.bf16.mxu0 %v327
  %455 = vmatpush1.bf16.msra.mxu0 %v326
  %456 = vmatprep.subr.bf16.mxu0 %v329
  %457 = vmatpush1.bf16.msra.mxu0 %v328
  %458 = vmatprep.subr.bf16.mxu0 %v331
  %459 = vmatpush1.bf16.msra.mxu0 %v330
  %460 = vmatprep.subr.bf16.mxu0 %v333
  %461 = vmatpush1.bf16.msra.mxu0 %v332
  %462 = vmatprep.subr.bf16.mxu0 %v335
  %463 = vmatpush1.bf16.msra.mxu0 %v334
  %464 = vmatprep.subr.bf16.mxu0 %v337
  %465 = vmatpush1.bf16.msra.mxu0 %v336
  %466 = vmatprep.mubr.bf16.mxu0 %v107
  %467 = vmatmul.mubr.bf16.gmra.mrb[0].mxu0 %v106
  %v468 = vpop.f32.mrb[0].mxu0
  %v469 = vadd.f32 %v87, %v468
  %v470 = vpop.f32.mrb[0].mxu0
  %v471 = vadd.f32 %v91, %v470
  %v472 = vpop.f32.mrb[0].mxu0
  %v473 = vadd.f32 %v87, %v472
  %v474 = vpop.f32.mrb[0].mxu0
  %v475 = vadd.f32 %v91, %v474
  %476 = vdwg.mxu0
  %477 = vmatprep.subr.bf16.mxu0 %v339
  %478 = vmatpush1.bf16.msra.mxu0 %v338
  %479 = vmatprep.subr.bf16.mxu0 %v341
  %480 = vmatpush1.bf16.msra.mxu0 %v340
  %481 = vmatprep.subr.bf16.mxu0 %v343
  %482 = vmatpush1.bf16.msra.mxu0 %v342
  %483 = vmatprep.subr.bf16.mxu0 %v345
  %484 = vmatpush1.bf16.msra.mxu0 %v344
  %485 = vmatprep.subr.bf16.mxu0 %v347
  %486 = vmatpush1.bf16.msra.mxu0 %v346
  %487 = vmatprep.subr.bf16.mxu0 %v349
  %488 = vmatpush1.bf16.msra.mxu0 %v348
  %489 = vmatprep.subr.bf16.mxu0 %v351
  %490 = vmatpush1.bf16.msra.mxu0 %v350
  %491 = vmatprep.subr.bf16.mxu0 %v353
  %492 = vmatpush1.bf16.msra.mxu0 %v352
  %493 = vmatprep.subr.bf16.mxu0 %v355
  %494 = vmatpush1.bf16.msra.mxu0 %v354
  %495 = vmatprep.subr.bf16.mxu0 %v357
  %496 = vmatpush1.bf16.msra.mxu0 %v356
  %497 = vmatprep.subr.bf16.mxu0 %v359
  %498 = vmatpush1.bf16.msra.mxu0 %v358
  %499 = vmatprep.subr.bf16.mxu0 %v361
  %500 = vmatpush1.bf16.msra.mxu0 %v360
  %501 = vmatprep.subr.bf16.mxu0 %v363
  %502 = vmatpush1.bf16.msra.mxu0 %v362
  %503 = vmatprep.subr.bf16.mxu0 %v365
  %504 = vmatpush1.bf16.msra.mxu0 %v364
  %505 = vmatprep.subr.bf16.mxu0 %v367
  %506 = vmatpush1.bf16.msra.mxu0 %v366
  %507 = vmatprep.subr.bf16.mxu0 %v369
  %508 = vmatpush1.bf16.msra.mxu0 %v368
  %509 = vmatprep.mubr.bf16.mxu0 %v109
  %510 = vmatmul.mubr.bf16.gmra.mrb[0].mxu0 %v108
  %v511 = vpop.f32.mrb[0].mxu0
  %v512 = vadd.f32 %v469, %v511
  %v513 = vpop.f32.mrb[0].mxu0
  %v514 = vadd.f32 %v471, %v513
  %v515 = vpop.f32.mrb[0].mxu0
  %v516 = vadd.f32 %v473, %v515
  %v517 = vpop.f32.mrb[0].mxu0
  %v518 = vadd.f32 %v475, %v517
  %519 = vdwg.mxu0
  %520 = vst [vmem:[%s3] sm:$0xff] %v512
  %521 = vst [vmem:[%s3 + $0x8] sm:$0xff] %v514
  %522 = vst [vmem:[%s3 + $0x10] sm:$0xff] %v516
  %523 = vst [vmem:[%s3 + $0x18] sm:$0xff] %v518
  // Predicated region
  $region14: #{encoder_forward.10} parent=0 // pred_check
    _
  $region15: #{encoder_forward.10} parent=0 // pred_check_branch
    %525 = sbr.rel (0) target = $region17
  $region16: #{encoder_forward.10} parent=0 // pred_region
    _
  $region17: #{encoder_forward.10} parent=0 // pred_fallthru
    _
  // Predicated region
  $region18: #{encoder_forward.10} parent=0 // pred_check
    _
  $region19: #{encoder_forward.10} parent=0 // pred_check_branch
    %527 = sbr.rel (0) target = $region21
  $region20: #{encoder_forward.10} parent=0 // pred_region
    _
  $region21: #{encoder_forward.10} parent=0 // pred_fallthru
    _

// kernel: encoder_forward.8
$region0: #{encoder_forward.8}
  #allocation0 [shape = 'u32[]', space=smem, size = 0x4, offset = 0x4, fixed_abs, tag = 'smem constant byte address 0x4 - core index']
  #allocation1 [shape = 'u32[144,128]{1,0:T(1,128)}', space=vmem, size = 0x12000, scoped, tag = 'internal scratch']
  #allocation2 [shape = 'f32[8,256]{1,0:T(8,128)}', space=vmem, size = 0x2000, scoped, tag = 'scratch operand']
  %s0 = inlined_call_operand.vmem [shape: bf16[2,12,512], index: 0, kind: input, shape index: {}]
  %s1 = inlined_call_operand.hbm [shape: bf16[5,512,512], index: 1, kind: input, shape index: {}]
  %s2 = inlined_call_operand.hbm [shape: f32[1,512], index: 2, kind: input, shape index: {}]
  %s3 = inlined_call_operand.vmem [shape: bf16[2,8,512], index: 3, kind: output, shape index: {}]
  %s4 = sld [smem:[#allocation0]]
  $region53: #{encoder_forward.8} parent=0
    _
  %s6 = ssub.s32 1, %s4
  %s7 = scalar_select 0, %s6, %s4
  $region1: #{encoder_forward.8} parent=0
    #allocation3 [shape = 'u8[2621440]{0}', space=vmem, size = 0x280000, scoped, tag = 'input window, operand 1']
    #allocation4 [shape = 's32[2]{0}', space=sflag, size = 0x8, scoped, tag = 'scoped memory for encoder_forward.8']
    #allocation5 [shape = 'u8[2048]{0}', space=vmem, size = 0x800, scoped, tag = 'input window, operand 2']
    #allocation6 [shape = 's32[2]{0}', space=sflag, size = 0x8, scoped, tag = 'scoped memory for encoder_forward.8']
    %8 = vsyncpa [#allocation4], 0
    %s9 = scalar_lea.sflag [#allocation4], 1
    %10 = vsyncpa %s9, 0
    %11 = vsyncpa [#allocation6], 0
    %s12 = scalar_lea.sflag [#allocation6], 1
    %13 = vsyncpa %s12, 0
    loop: start=0, step=1, limit=6
    $region2: #{encoder_forward.8} parent=1 // loop_pre_header
      _
    $region3: #{encoder_forward.8} parent=1 // loop_header
      %s15 = sphi 0, %s19
      %p16 = scmp.ge.s32.totalorder %s15, 6
      %s22 = sphi 0, %s41
      %s23 = sphi 0, %s37
      %s24 = sphi 0, %s33
      %s25 = sphi 0, %s22
      %s26 = sphi 0, %s23
      %s27 = sphi 0, %s24
      %s28 = sphi 0, %s25
      %s29 = sphi 0, %s26
      %s30 = sphi 0, %s27
      %s44 = sphi 0, %s46
      %s47 = sphi 0, %s44
      %s48 = sphi 0, %s47
      %s64 = sphi 0, %s48
      %s70 = sphi 0, %s72
      %s73 = sphi 0, %s70
      %s74 = sphi 0, %s73
      %s90 = sphi 0, %s74
      %s96 = sphi 0, %s98
      %s99 = sphi 0, %s96
      %s100 = sphi 0, %s99
      %s116 = sphi 0, %s100
      %s126 = sphi 0, %s128
      %s129 = sphi 0, %s126
      %s130 = sphi 0, %s129
      %s146 = sphi 0, %s130
    $region4: #{encoder_forward.8} parent=1 // loop_header_branch
      %18 = sbr.rel (%p16) target = $region8
    $region5: #{encoder_forward.8} parent=1 // loop_body
      %s20 = ssub.s32 %s15, 1
      %s21 = ssub.s32 %s15, 2
      %s31 = sadd.s32 1, %s24
      %p32 = scmp.ge.s32.totalorder %s31, 1
      %s33 = scalar_select %p32, 0, %s31
      %s34 = sadd.s32 1, %s23
      %s35 = scalar_select %p32, %s34, %s23
      %p36 = scmp.ge.s32.totalorder %s35, 2
      %s37 = scalar_select %p36, 0, %s35
      %s38 = sadd.s32 1, %s22
      %s39 = scalar_select %p36, %s38, %s22
      %p40 = scmp.ge.s32.totalorder %s39, 2
      %s41 = scalar_select %p40, 0, %s39
      %s42 = ssub.s32 %s22, %s41
      %p43 = scmp.eq.s32.totalorder %s42, 0
      %s45 = sadd.s32 %s44, 1
      %s46 = scalar_select %p43, %s44, %s45
      %p49 = pneg %p43
      %p50 = scmp.eq.s32.totalorder %s15, 3
      %p51 = por %p49, %p50
      %p52 = scmp.ne.s32.totalorder %s44, %s47
      %p53 = scmp.eq.s32.totalorder %s15, 0
      %p54 = por %p52, %p53
      %p55 = scmp.ne.s32.totalorder %s44, %s47
      %p56 = scmp.eq.s32.totalorder %s20, 3
      %p57 = por %p55, %p56
      %p58 = scmp.ne.s32.totalorder %s47, %s48
      %p59 = scmp.eq.s32.totalorder %s20, 0
      %p60 = por %p58, %p59
      %p61 = scmp.ne.s32.totalorder %s47, %s48
      %p62 = scmp.eq.s32.totalorder %s21, 3
      %p63 = por %p61, %p62
      %p65 = scmp.ne.s32.totalorder %s48, %s64
      %p66 = scmp.eq.s32.totalorder %s21, 0
      %p67 = por %p65, %p66
      %s68 = ssub.s32 %s23, %s37
      %p69 = scmp.eq.s32.totalorder %s68, 0
      %s71 = sadd.s32 %s70, 1
      %s72 = scalar_select %p69, %s70, %s71
      %p75 = pneg %p69
      %p76 = scmp.eq.s32.totalorder %s15, 3
      %p77 = por %p75, %p76
      %p78 = scmp.ne.s32.totalorder %s70, %s73
      %p79 = scmp.eq.s32.totalorder %s15, 0
      %p80 = por %p78, %p79
      %p81 = scmp.ne.s32.totalorder %s70, %s73
      %p82 = scmp.eq.s32.totalorder %s20, 3
      %p83 = por %p81, %p82
      %p84 = scmp.ne.s32.totalorder %s73, %s74
      %p85 = scmp.eq.s32.totalorder %s20, 0
      %p86 = por %p84, %p85
      %p87 = scmp.ne.s32.totalorder %s73, %s74
      %p88 = scmp.eq.s32.totalorder %s21, 3
      %p89 = por %p87, %p88
      %p91 = scmp.ne.s32.totalorder %s74, %s90
      %p92 = scmp.eq.s32.totalorder %s21, 0
      %p93 = por %p91, %p92
      %s94 = ssub.s32 %s23, %s37
      %p95 = scmp.eq.s32.totalorder %s94, 0
      %s97 = sadd.s32 %s96, 1
      %s98 = scalar_select %p95, %s96, %s97
      %p101 = pneg %p95
      %p102 = scmp.eq.s32.totalorder %s15, 3
      %p103 = por %p101, %p102
      %p104 = scmp.ne.s32.totalorder %s96, %s99
      %p105 = scmp.eq.s32.totalorder %s15, 0
      %p106 = por %p104, %p105
      %p107 = scmp.ne.s32.totalorder %s96, %s99
      %p108 = scmp.eq.s32.totalorder %s20, 3
      %p109 = por %p107, %p108
      %p110 = scmp.ne.s32.totalorder %s99, %s100
      %p111 = scmp.eq.s32.totalorder %s20, 0
      %p112 = por %p110, %p111
      %p113 = scmp.ne.s32.totalorder %s99, %s100
      %p114 = scmp.eq.s32.totalorder %s21, 3
      %p115 = por %p113, %p114
      %p117 = scmp.ne.s32.totalorder %s100, %s116
      %p118 = scmp.eq.s32.totalorder %s21, 0
      %p119 = por %p117, %p118
      %s120 = ssub.s32 %s22, %s41
      %s121 = ssub.s32 %s24, %s33
      %s122 = sor.u32 %s120, %s121
      %s123 = ssub.s32 %s23, %s37
      %s124 = sor.u32 %s122, %s123
      %p125 = scmp.eq.s32.totalorder %s124, 0
      %s127 = sadd.s32 %s126, 1
      %s128 = scalar_select %p125, %s126, %s127
      %p131 = pneg %p125
      %p132 = scmp.eq.s32.totalorder %s15, 3
      %p133 = por %p131, %p132
      %p134 = scmp.ne.s32.totalorder %s126, %s129
      %p135 = scmp.eq.s32.totalorder %s15, 0
      %p136 = por %p134, %p135
      %p137 = scmp.ne.s32.totalorder %s126, %s129
      %p138 = scmp.eq.s32.totalorder %s20, 3
      %p139 = por %p137, %p138
      %p140 = scmp.ne.s32.totalorder %s129, %s130
      %p141 = scmp.eq.s32.totalorder %s20, 0
      %p142 = por %p140, %p141
      %p143 = scmp.ne.s32.totalorder %s129, %s130
      %p144 = scmp.eq.s32.totalorder %s21, 3
      %p145 = por %p143, %p144
      %p147 = scmp.ne.s32.totalorder %s130, %s146
      %p148 = scmp.eq.s32.totalorder %s21, 0
      %p149 = por %p147, %p148
      %p150 = scmp.le.s32.totalorder 1, %s15
      %p151 = scmp.lt.s32.totalorder %s15, 5
      %p152 = pnand %p150, %p151
      %p153 = pneg %p152
      // Predicated region
      $region9: #{encoder_forward.8} parent=5 // pred_check
        _
      $region10: #{encoder_forward.8} parent=5 // pred_check_branch
        %155 = sbr.rel (%p152) target = $region12
      $region11: #{encoder_forward.8} parent=5 // pred_region
        %s156 = ssub.s32 %s15, 1
      $region12: #{encoder_forward.8} parent=5 // pred_fallthru
        _
      %p157 = scmp.lt.s32.totalorder %s15, 4
      // Predicated region
      $region13: #{encoder_forward.8} parent=5 // pred_check
        %p158 = pneg %p157
      $region14: #{encoder_forward.8} parent=5 // pred_check_branch
        %160 = sbr.rel (%p158) target = $region16
      $region15: #{encoder_forward.8} parent=5 // pred_region
        // Predicated region
        $region17: #{encoder_forward.8} parent=15 // pred_check
          %p161 = pneg %p54
        $region18: #{encoder_forward.8} parent=15 // pred_check_branch
          %163 = sbr.rel (%p161) target = $region20
        $region19: #{encoder_forward.8} parent=15 // pred_region
          %p164 = scmp.lt.s32.totalorder %s22, 1
          %s165 = scalar_select %p164, %s22, 1
          %s166 = smul.addr %s165, 8
          %s167 = smul.addr %s166, 4
          %s168 = scalar_lea.vmem %s0, %s167
        $region20: #{encoder_forward.8} parent=15 // pred_fallthru
          _
        // Predicated region
        $region21: #{encoder_forward.8} parent=15 // pred_check
          %p169 = pneg %p80
        $region22: #{encoder_forward.8} parent=15 // pred_check_branch
          %171 = sbr.rel (%p169) target = $region24
        $region23: #{encoder_forward.8} parent=15 // pred_region
          %s172 = sand.u32 %s70, 1
          %s173 = scalar_lea.sflag [#allocation4], %s172
          %s174 = sand.u32 %s70, 1
          %s175 = smul.addr %s174, 2560
          %s176 = scalar_lea.vmem [#allocation3], %s175
          %s177 = smul.u32 2, %s23
          %s179 = ssub.s32 40960, 40960
          %180 = vsyncadd %s173, %s179
          %s181 = smul.addr %s177, 64
          %s182 = scalar_lea.hbm %s1, %s181
          %s183 = sshll.u32 %s176, 4
          %s184 = int_to_ptr.vmem [resolvable:$true] %s183
          %189 = dma.hbm_to_vmem [thread:$0]  %s182, 40960, %s184, %s173, 256, 128, 8
        $region24: #{encoder_forward.8} parent=15 // pred_fallthru
          _
        // Predicated region
        $region25: #{encoder_forward.8} parent=15 // pred_check
          %p190 = pneg %p106
        $region26: #{encoder_forward.8} parent=15 // pred_check_branch
          %192 = sbr.rel (%p190) target = $region28
        $region27: #{encoder_forward.8} parent=15 // pred_region
          %s193 = sand.u32 %s96, 1
          %s194 = scalar_lea.sflag [#allocation6], %s193
          %s195 = sand.u32 %s96, 1
          %s196 = smul.addr %s195, 2
          %s197 = scalar_lea.vmem [#allocation5], %s196
          %s198 = smul.u32 2, %s23
          %s200 = ssub.s32 32, 32
          %201 = vsyncadd %s194, %s200
          %s202 = smul.addr %s198, 16
          %s203 = scalar_lea.hbm %s2, %s202
          %s205 = sshll.u32 %s197, 4
          %s206 = int_to_ptr.vmem [resolvable:$true] %s205
          %208 = dma.hbm_to_vmem [thread:$0]  %s203, 32, %s206, %s194
        $region28: #{encoder_forward.8} parent=15 // pred_fallthru
          _
      $region16: #{encoder_forward.8} parent=5 // pred_fallthru
        _
      %p209 = scmp.le.s32.totalorder 1, %s15
      %p210 = scmp.lt.s32.totalorder %s15, 5
      %p211 = pnand %p209, %p210
      %p212 = pneg %p211
      // Predicated region
      $region29: #{encoder_forward.8} parent=5 // pred_check
        _
      $region30: #{encoder_forward.8} parent=5 // pred_check_branch
        %214 = sbr.rel (%p211) target = $region32
      $region31: #{encoder_forward.8} parent=5 // pred_region
        %s215 = ssub.s32 %s15, 1
        %s216 = sand.u32 %s73, 1
        %s217 = scalar_lea.sflag [#allocation4], %s216
        %s218 = sand.u32 %s73, 1
        %s219 = smul.addr %s218, 2560
        %s220 = scalar_lea.vmem [#allocation3], %s219
        // Predicated region
        $region33: #{encoder_forward.8} parent=31 // pred_check
          %p221 = pneg %p86
        $region34: #{encoder_forward.8} parent=31 // pred_check_branch
          %223 = sbr.rel (%p221) target = $region36
        $region35: #{encoder_forward.8} parent=31 // pred_region
          %224 = dma.done %s217, 40960
        $region36: #{encoder_forward.8} parent=31 // pred_fallthru
          _
        %s225 = sand.u32 %s99, 1
        %s226 = scalar_lea.sflag [#allocation6], %s225
        %s227 = sand.u32 %s99, 1
        %s228 = smul.addr %s227, 2
        %s229 = scalar_lea.vmem [#allocation5], %s228
        // Predicated region
        $region37: #{encoder_forward.8} parent=31 // pred_check
          %p230 = pneg %p112
        $region38: #{encoder_forward.8} parent=31 // pred_check_branch
          %232 = sbr.rel (%p230) target = $region40
        $region39: #{encoder_forward.8} parent=31 // pred_region
          %233 = dma.done %s226, 32
        $region40: #{encoder_forward.8} parent=31 // pred_fallthru
          _
        %p234 = scmp.lt.s32.totalorder %s25, 1
        %s235 = scalar_select %p234, %s25, 1
        %s236 = smul.addr %s235, 8
        %s237 = smul.addr %s236, 4
        %s238 = scalar_lea.vmem %s0, %s237
        %p239 = pneg %p60
        %p240 = pneg %p57
        %s241 = sand.u32 %s73, 1
        %s242 = scalar_lea.sflag [#allocation4], %s241
        %s243 = sand.u32 %s73, 1
        %s244 = smul.addr %s243, 2560
        %s245 = scalar_lea.vmem [#allocation3], %s244
        %p246 = pneg %p86
        %p247 = pneg %p83
        %s248 = sand.u32 %s99, 1
        %s249 = scalar_lea.sflag [#allocation6], %s248
        %s250 = sand.u32 %s99, 1
        %s251 = smul.addr %s250, 2
        %s252 = scalar_lea.vmem [#allocation5], %s251
        %p253 = pneg %p112
        %p254 = pneg %p109
        %p255 = pneg %p142
        %p256 = pneg %p139
        %s257 = smul.u32 2, %s26
        %p258 = scmp.lt.s32.totalorder %s25, 1
        %s259 = scalar_select %p258, %s25, 1
        %p260 = scmp.lt.s32.totalorder %s27, 0
        %s261 = scalar_select %p260, %s27, 0
        %p262 = scmp.lt.s32.totalorder %s257, 3
        %s263 = scalar_select %p262, %s257, 3
        %s264 = smul.addr %s261, 4
        %s265 = sadd.s32 %s263, %s264
        %s266 = smul.addr %s259, 4
        %s267 = sadd.s32 %s265, %s266
        %s268 = smul.addr %s267, 4
        %s269 = scalar_lea.vmem %s3, %s268
        %p270 = scmp.lt.s32.totalorder %s25, 1
        %s271 = scalar_select %p270, %s25, 1
        %s272 = smul.addr %s271, 8
        %s273 = smul.addr %s272, 4
        %s274 = scalar_lea.vmem %s0, %s273
        %s275 = smul.u32 2, %s26
        %s276 = smul.u32 2, %s26
        %s277 = smul.u32 2, %s26
        %p278 = scmp.lt.s32.totalorder %s25, 1
        %s279 = scalar_select %p278, %s25, 1
        %p280 = scmp.lt.s32.totalorder %s27, 0
        %s281 = scalar_select %p280, %s27, 0
        %p282 = scmp.lt.s32.totalorder %s277, 3
        %s283 = scalar_select %p282, %s277, 3
        %s284 = smul.addr %s281, 4
        %s285 = sadd.s32 %s283, %s284
        %s286 = smul.addr %s279, 4
        %s287 = sadd.s32 %s285, %s286
        %s288 = smul.addr %s287, 4
        %s289 = scalar_lea.vmem %s3, %s288
        %s290 = smul.u32 2, %s26
        %s291 = smul.u32 %s27, 8
        %s292 = sshra.s32 %s291, 3
        %s293 = sand.u32 %s291, 7
        %s294 = smul.u32 %s292, 4
        %s295 = smul.addr %s294, 4
        %s296 = scalar_lea.vmem %s274, %s295
        %v297 = vld [vmem:[%s296] sm:$0xff]
        %v298 = vld [vmem:[%s296 + $0x8] sm:$0xff]
        %v299 = vld [vmem:[%s296 + $0x10] sm:$0x33]
        %v300 = vld [vmem:[%s296 + $0x18] sm:$0x33]
        %v301 = vld [vmem:[%s220] sm:$0xff]
        %v302 = vld [vmem:[%s220 + $0x8] sm:$0xff]
        %v303 = vld [vmem:[%s220 + $0x10] sm:$0xff]
        %v304 = vld [vmem:[%s220 + $0x18] sm:$0xff]
        %v305 = vld [vmem:[%s220 + $0x20] sm:$0xff]
        %v306 = vld [vmem:[%s220 + $0x28] sm:$0xff]
        %v307 = vld [vmem:[%s220 + $0x30] sm:$0xff]
        %v308 = vld [vmem:[%s220 + $0x38] sm:$0xff]
        %v309 = vld [vmem:[%s220 + $0x40] sm:$0xff]
        %v310 = vld [vmem:[%s220 + $0x48] sm:$0xff]
        %v311 = vld [vmem:[%s220 + $0x50] sm:$0xff]
        %v312 = vld [vmem:[%s220 + $0x58] sm:$0xff]
        %v313 = vld [vmem:[%s220 + $0x60] sm:$0xff]
        %v314 = vld [vmem:[%s220 + $0x68] sm:$0xff]
        %v315 = vld [vmem:[%s220 + $0x70] sm:$0xff]
        %v316 = vld [vmem:[%s220 + $0x78] sm:$0xff]
        %v317 = vld [vmem:[%s220 + $0x80] sm:$0xff]
        %v318 = vld [vmem:[%s220 + $0x88] sm:$0xff]
        %v319 = vld [vmem:[%s220 + $0x90] sm:$0xff]
        %v320 = vld [vmem:[%s220 + $0x98] sm:$0xff]
        %v321 = vld [vmem:[%s220 + $0xa0] sm:$0xff]
        %v322 = vld [vmem:[%s220 + $0xa8] sm:$0xff]
        %v323 = vld [vmem:[%s220 + $0xb0] sm:$0xff]
        %v324 = vld [vmem:[%s220 + $0xb8] sm:$0xff]
        %v325 = vld [vmem:[%s220 + $0xc0] sm:$0xff]
        %v326 = vld [vmem:[%s220 + $0xc8] sm:$0xff]
        %v327 = vld [vmem:[%s220 + $0xd0] sm:$0xff]
        %v328 = vld [vmem:[%s220 + $0xd8] sm:$0xff]
        %v329 = vld [vmem:[%s220 + $0xe0] sm:$0xff]
        %v330 = vld [vmem:[%s220 + $0xe8] sm:$0xff]
        %v331 = vld [vmem:[%s220 + $0xf0] sm:$0xff]
        %v332 = vld [vmem:[%s220 + $0xf8] sm:$0xff]
        %v333 = vld [vmem:[%s220 + $0x100] sm:$0xff]
        %v334 = vld [vmem:[%s220 + $0x108] sm:$0xff]
        %v335 = vld [vmem:[%s220 + $0x110] sm:$0xff]
        %v336 = vld [vmem:[%s220 + $0x118] sm:$0xff]
        %v337 = vld [vmem:[%s220 + $0x120] sm:$0xff]
        %v338 = vld [vmem:[%s220 + $0x128] sm:$0xff]
        %v339 = vld [vmem:[%s220 + $0x130] sm:$0xff]
        %v340 = vld [vmem:[%s220 + $0x138] sm:$0xff]
        %v341 = vld [vmem:[%s220 + $0x140] sm:$0xff]
        %v342 = vld [vmem:[%s220 + $0x148] sm:$0xff]
        %v343 = vld [vmem:[%s220 + $0x150] sm:$0xff]
        %v344 = vld [vmem:[%s220 + $0x158] sm:$0xff]
        %v345 = vld [vmem:[%s220 + $0x160] sm:$0xff]
        %v346 = vld [vmem:[%s220 + $0x168] sm:$0xff]
        %v347 = vld [vmem:[%s220 + $0x170] sm:$0xff]
        %v348 = vld [vmem:[%s220 + $0x178] sm:$0xff]
        %v349 = vld [vmem:[%s220 + $0x180] sm:$0xff]
        %v350 = vld [vmem:[%s220 + $0x188] sm:$0xff]
        %v351 = vld [vmem:[%s220 + $0x190] sm:$0xff]
        %v352 = vld [vmem:[%s220 + $0x198] sm:$0xff]
        %v353 = vld [vmem:[%s220 + $0x1a0] sm:$0xff]
        %v354 = vld [vmem:[%s220 + $0x1a8] sm:$0xff]
        %v355 = vld [vmem:[%s220 + $0x1b0] sm:$0xff]
        %v356 = vld [vmem:[%s220 + $0x1b8] sm:$0xff]
        %v357 = vld [vmem:[%s220 + $0x1c0] sm:$0xff]
        %v358 = vld [vmem:[%s220 + $0x1c8] sm:$0xff]
        %v359 = vld [vmem:[%s220 + $0x1d0] sm:$0xff]
        %v360 = vld [vmem:[%s220 + $0x1d8] sm:$0xff]
        %v361 = vld [vmem:[%s220 + $0x1e0] sm:$0xff]
        %v362 = vld [vmem:[%s220 + $0x1e8] sm:$0xff]
        %v363 = vld [vmem:[%s220 + $0x1f0] sm:$0xff]
        %v364 = vld [vmem:[%s220 + $0x1f8] sm:$0xff]
        %v367 = vunpack.c.l.b16 %v297
        %v368 = vunpack.c.h.b16 %v297
        %v369 = vunpack.c.l.b16 %v298
        %v370 = vunpack.c.h.b16 %v298
        %v371 = vpack.c.b16 %v367, %v367
        %v372 = vpack.c.b16 %v368, %v368
        %v373 = vpack.c.b16 %v369, %v369
        %v374 = vpack.c.b16 %v370, %v370
        %v443 = vunpack.c.l.b16 %v301
        %v444 = vunpack.c.h.b16 %v301
        %v445 = vunpack.c.l.b16 %v302
        %v446 = vunpack.c.h.b16 %v302
        %v447 = vunpack.c.l.b16 %v303
        %v448 = vunpack.c.h.b16 %v303
        %v449 = vunpack.c.l.b16 %v304
        %v450 = vunpack.c.h.b16 %v304
        %v451 = vunpack.c.l.b16 %v305
        %v452 = vunpack.c.h.b16 %v305
        %v453 = vunpack.c.l.b16 %v306
        %v454 = vunpack.c.h.b16 %v306
        %v455 = vunpack.c.l.b16 %v307
        %v456 = vunpack.c.h.b16 %v307
        %v457 = vunpack.c.l.b16 %v308
        %v458 = vunpack.c.h.b16 %v308
        %v459 = vunpack.c.l.b16 %v309
        %v460 = vunpack.c.h.b16 %v309
        %v461 = vunpack.c.l.b16 %v310
        %v462 = vunpack.c.h.b16 %v310
        %v463 = vunpack.c.l.b16 %v311
        %v464 = vunpack.c.h.b16 %v311
        %v465 = vunpack.c.l.b16 %v312
        %v466 = vunpack.c.h.b16 %v312
        %v467 = vunpack.c.l.b16 %v313
        %v468 = vunpack.c.h.b16 %v313
        %v469 = vunpack.c.l.b16 %v314
        %v470 = vunpack.c.h.b16 %v314
        %v471 = vunpack.c.l.b16 %v315
        %v472 = vunpack.c.h.b16 %v315
        %v473 = vunpack.c.l.b16 %v316
        %v474 = vunpack.c.h.b16 %v316
        %v475 = vunpack.c.l.b16 %v317
        %v476 = vunpack.c.h.b16 %v317
        %v477 = vunpack.c.l.b16 %v318
        %v478 = vunpack.c.h.b16 %v318
        %v479 = vunpack.c.l.b16 %v319
        %v480 = vunpack.c.h.b16 %v319
        %v481 = vunpack.c.l.b16 %v320
        %v482 = vunpack.c.h.b16 %v320
        %v483 = vunpack.c.l.b16 %v321
        %v484 = vunpack.c.h.b16 %v321
        %v485 = vunpack.c.l.b16 %v322
        %v486 = vunpack.c.h.b16 %v322
        %v487 = vunpack.c.l.b16 %v323
        %v488 = vunpack.c.h.b16 %v323
        %v489 = vunpack.c.l.b16 %v324
        %v490 = vunpack.c.h.b16 %v324
        %v491 = vunpack.c.l.b16 %v325
        %v492 = vunpack.c.h.b16 %v325
        %v493 = vunpack.c.l.b16 %v326
        %v494 = vunpack.c.h.b16 %v326
        %v495 = vunpack.c.l.b16 %v327
        %v496 = vunpack.c.h.b16 %v327
        %v497 = vunpack.c.l.b16 %v328
        %v498 = vunpack.c.h.b16 %v328
        %v499 = vunpack.c.l.b16 %v329
        %v500 = vunpack.c.h.b16 %v329
        %v501 = vunpack.c.l.b16 %v330
        %v502 = vunpack.c.h.b16 %v330
        %v503 = vunpack.c.l.b16 %v331
        %v504 = vunpack.c.h.b16 %v331
        %v505 = vunpack.c.l.b16 %v332
        %v506 = vunpack.c.h.b16 %v332
        %v507 = vunpack.c.l.b16 %v333
        %v508 = vunpack.c.h.b16 %v333
        %v509 = vunpack.c.l.b16 %v334
        %v510 = vunpack.c.h.b16 %v334
        %v511 = vunpack.c.l.b16 %v335
        %v512 = vunpack.c.h.b16 %v335
        %v513 = vunpack.c.l.b16 %v336
        %v514 = vunpack.c.h.b16 %v336
        %v515 = vunpack.c.l.b16 %v337
        %v516 = vunpack.c.h.b16 %v337
        %v517 = vunpack.c.l.b16 %v338
        %v518 = vunpack.c.h.b16 %v338
        %v519 = vunpack.c.l.b16 %v339
        %v520 = vunpack.c.h.b16 %v339
        %v521 = vunpack.c.l.b16 %v340
        %v522 = vunpack.c.h.b16 %v340
        %v523 = vunpack.c.l.b16 %v341
        %v524 = vunpack.c.h.b16 %v341
        %v525 = vunpack.c.l.b16 %v342
        %v526 = vunpack.c.h.b16 %v342
        %v527 = vunpack.c.l.b16 %v343
        %v528 = vunpack.c.h.b16 %v343
        %v529 = vunpack.c.l.b16 %v344
        %v530 = vunpack.c.h.b16 %v344
        %v531 = vunpack.c.l.b16 %v345
        %v532 = vunpack.c.h.b16 %v345
        %v533 = vunpack.c.l.b16 %v346
        %v534 = vunpack.c.h.b16 %v346
        %v535 = vunpack.c.l.b16 %v347
        %v536 = vunpack.c.h.b16 %v347
        %v537 = vunpack.c.l.b16 %v348
        %v538 = vunpack.c.h.b16 %v348
        %v539 = vunpack.c.l.b16 %v349
        %v540 = vunpack.c.h.b16 %v349
        %v541 = vunpack.c.l.b16 %v350
        %v542 = vunpack.c.h.b16 %v350
        %v543 = vunpack.c.l.b16 %v351
        %v544 = vunpack.c.h.b16 %v351
        %v545 = vunpack.c.l.b16 %v352
        %v546 = vunpack.c.h.b16 %v352
        %v547 = vunpack.c.l.b16 %v353
        %v548 = vunpack.c.h.b16 %v353
        %v549 = vunpack.c.l.b16 %v354
        %v550 = vunpack.c.h.b16 %v354
        %v551 = vunpack.c.l.b16 %v355
        %v552 = vunpack.c.h.b16 %v355
        %v553 = vunpack.c.l.b16 %v356
        %v554 = vunpack.c.h.b16 %v356
        %v555 = vunpack.c.l.b16 %v357
        %v556 = vunpack.c.h.b16 %v357
        %v557 = vunpack.c.l.b16 %v358
        %v558 = vunpack.c.h.b16 %v358
        %v559 = vunpack.c.l.b16 %v359
        %v560 = vunpack.c.h.b16 %v359
        %v561 = vunpack.c.l.b16 %v360
        %v562 = vunpack.c.h.b16 %v360
        %v563 = vunpack.c.l.b16 %v361
        %v564 = vunpack.c.h.b16 %v361
        %v565 = vunpack.c.l.b16 %v362
        %v566 = vunpack.c.h.b16 %v362
        %v567 = vunpack.c.l.b16 %v363
        %v568 = vunpack.c.h.b16 %v363
        %v569 = vunpack.c.l.b16 %v364
        %v570 = vunpack.c.h.b16 %v364
        %v571 = vpack.c.b16 %v445, %v443
        %v572 = vpack.c.b16 %v446, %v444
        %v573 = vpack.c.b16 %v449, %v447
        %v574 = vpack.c.b16 %v450, %v448
        %v575 = vpack.c.b16 %v453, %v451
        %v576 = vpack.c.b16 %v454, %v452
        %v577 = vpack.c.b16 %v457, %v455
        %v578 = vpack.c.b16 %v458, %v456
        %v579 = vpack.c.b16 %v461, %v459
        %v580 = vpack.c.b16 %v462, %v460
        %v581 = vpack.c.b16 %v465, %v463
        %v582 = vpack.c.b16 %v466, %v464
        %v583 = vpack.c.b16 %v469, %v467
        %v584 = vpack.c.b16 %v470, %v468
        %v585 = vpack.c.b16 %v473, %v471
        %v586 = vpack.c.b16 %v474, %v472
        %v587 = vpack.c.b16 %v477, %v475
        %v588 = vpack.c.b16 %v478, %v476
        %v589 = vpack.c.b16 %v481, %v479
        %v590 = vpack.c.b16 %v482, %v480
        %v591 = vpack.c.b16 %v485, %v483
        %v592 = vpack.c.b16 %v486, %v484
        %v593 = vpack.c.b16 %v489, %v487
        %v594 = vpack.c.b16 %v490, %v488
        %v595 = vpack.c.b16 %v493, %v491
        %v596 = vpack.c.b16 %v494, %v492
        %v597 = vpack.c.b16 %v497, %v495
        %v598 = vpack.c.b16 %v498, %v496
        %v599 = vpack.c.b16 %v501, %v499
        %v600 = vpack.c.b16 %v502, %v500
        %v601 = vpack.c.b16 %v505, %v503
        %v602 = vpack.c.b16 %v506, %v504
        %v603 = vpack.c.b16 %v509, %v507
        %v604 = vpack.c.b16 %v510, %v508
        %v605 = vpack.c.b16 %v513, %v511
        %v606 = vpack.c.b16 %v514, %v512
        %v607 = vpack.c.b16 %v517, %v515
        %v608 = vpack.c.b16 %v518, %v516
        %v609 = vpack.c.b16 %v521, %v519
        %v610 = vpack.c.b16 %v522, %v520
        %v611 = vpack.c.b16 %v525, %v523
        %v612 = vpack.c.b16 %v526, %v524
        %v613 = vpack.c.b16 %v529, %v527
        %v614 = vpack.c.b16 %v530, %v528
        %v615 = vpack.c.b16 %v533, %v531
        %v616 = vpack.c.b16 %v534, %v532
        %v617 = vpack.c.b16 %v537, %v535
        %v618 = vpack.c.b16 %v538, %v536
        %v619 = vpack.c.b16 %v541, %v539
        %v620 = vpack.c.b16 %v542, %v540
        %v621 = vpack.c.b16 %v545, %v543
        %v622 = vpack.c.b16 %v546, %v544
        %v623 = vpack.c.b16 %v549, %v547
        %v624 = vpack.c.b16 %v550, %v548
        %v625 = vpack.c.b16 %v553, %v551
        %v626 = vpack.c.b16 %v554, %v552
        %v627 = vpack.c.b16 %v557, %v555
        %v628 = vpack.c.b16 %v558, %v556
        %v629 = vpack.c.b16 %v561, %v559
        %v630 = vpack.c.b16 %v562, %v560
        %v631 = vpack.c.b16 %v565, %v563
        %v632 = vpack.c.b16 %v566, %v564
        %v633 = vpack.c.b16 %v569, %v567
        %v634 = vpack.c.b16 %v570, %v568
        %699 = vmatprep.subr.bf16.mxu0 %v572
        %700 = vmatpush1.bf16.msra.mxu0 %v571
        %701 = vmatprep.subr.bf16.mxu0 %v574
        %702 = vmatpush1.bf16.msra.mxu0 %v573
        %703 = vmatprep.subr.bf16.mxu0 %v576
        %704 = vmatpush1.bf16.msra.mxu0 %v575
        %705 = vmatprep.subr.bf16.mxu0 %v578
        %706 = vmatpush1.bf16.msra.mxu0 %v577
        %707 = vmatprep.subr.bf16.mxu0 %v580
        %708 = vmatpush1.bf16.msra.mxu0 %v579
        %709 = vmatprep.subr.bf16.mxu0 %v582
        %710 = vmatpush1.bf16.msra.mxu0 %v581
        %711 = vmatprep.subr.bf16.mxu0 %v584
        %712 = vmatpush1.bf16.msra.mxu0 %v583
        %713 = vmatprep.subr.bf16.mxu0 %v586
        %714 = vmatpush1.bf16.msra.mxu0 %v585
        %715 = vmatprep.subr.bf16.mxu0 %v588
        %716 = vmatpush1.bf16.msra.mxu0 %v587
        %717 = vmatprep.subr.bf16.mxu0 %v590
        %718 = vmatpush1.bf16.msra.mxu0 %v589
        %719 = vmatprep.subr.bf16.mxu0 %v592
        %720 = vmatpush1.bf16.msra.mxu0 %v591
        %721 = vmatprep.subr.bf16.mxu0 %v594
        %722 = vmatpush1.bf16.msra.mxu0 %v593
        %723 = vmatprep.subr.bf16.mxu0 %v596
        %724 = vmatpush1.bf16.msra.mxu0 %v595
        %725 = vmatprep.subr.bf16.mxu0 %v598
        %726 = vmatpush1.bf16.msra.mxu0 %v597
        %727 = vmatprep.subr.bf16.mxu0 %v600
        %728 = vmatpush1.bf16.msra.mxu0 %v599
        %729 = vmatprep.subr.bf16.mxu0 %v602
        %730 = vmatpush1.bf16.msra.mxu0 %v601
        %731 = vmatprep.mubr.bf16.mxu0 %v372
        %732 = vmatmul.mubr.bf16.gmra.mrb[0].mxu0 %v371
        %v733 = vpop.f32.mrb[0].mxu0
        %v734 = vadd.f32 0.0, %v733
        %v735 = vpop.f32.mrb[0].mxu0
        %v736 = vadd.f32 0.0, %v735
        %v737 = vpop.f32.mrb[0].mxu0
        %v738 = vpop.f32.mrb[0].mxu0
        %739 = vdwg.mxu0
        %740 = vmatprep.subr.bf16.mxu0 %v604
        %741 = vmatpush1.bf16.msra.mxu0 %v603
        %742 = vmatprep.subr.bf16.mxu0 %v606
        %743 = vmatpush1.bf16.msra.mxu0 %v605
        %744 = vmatprep.subr.bf16.mxu0 %v608
        %745 = vmatpush1.bf16.msra.mxu0 %v607
        %746 = vmatprep.subr.bf16.mxu0 %v610
        %747 = vmatpush1.bf16.msra.mxu0 %v609
        %748 = vmatprep.subr.bf16.mxu0 %v612
        %749 = vmatpush1.bf16.msra.mxu0 %v611
        %750 = vmatprep.subr.bf16.mxu0 %v614
        %751 = vmatpush1.bf16.msra.mxu0 %v613
        %752 = vmatprep.subr.bf16.mxu0 %v616
        %753 = vmatpush1.bf16.msra.mxu0 %v615
        %754 = vmatprep.subr.bf16.mxu0 %v618
        %755 = vmatpush1.bf16.msra.mxu0 %v617
        %756 = vmatprep.subr.bf16.mxu0 %v620
        %757 = vmatpush1.bf16.msra.mxu0 %v619
        %758 = vmatprep.subr.bf16.mxu0 %v622
        %759 = vmatpush1.bf16.msra.mxu0 %v621
        %760 = vmatprep.subr.bf16.mxu0 %v624
        %761 = vmatpush1.bf16.msra.mxu0 %v623
        %762 = vmatprep.subr.bf16.mxu0 %v626
        %763 = vmatpush1.bf16.msra.mxu0 %v625
        %764 = vmatprep.subr.bf16.mxu0 %v628
        %765 = vmatpush1.bf16.msra.mxu0 %v627
        %766 = vmatprep.subr.bf16.mxu0 %v630
        %767 = vmatpush1.bf16.msra.mxu0 %v629
        %768 = vmatprep.subr.bf16.mxu0 %v632
        %769 = vmatpush1.bf16.msra.mxu0 %v631
        %770 = vmatprep.subr.bf16.mxu0 %v634
        %771 = vmatpush1.bf16.msra.mxu0 %v633
        %772 = vmatprep.mubr.bf16.mxu0 %v374
        %773 = vmatmul.mubr.bf16.gmra.mrb[0].mxu0 %v373
        %v774 = vpop.f32.mrb[0].mxu0
        %v775 = vadd.f32 %v734, %v774
        %v776 = vpop.f32.mrb[0].mxu0
        %v777 = vadd.f32 %v736, %v776
        %v778 = vpop.f32.mrb[0].mxu0
        %v779 = vpop.f32.mrb[0].mxu0
        %780 = vdwg.mxu0
        %781 = vst [vmem:[#allocation2] sm:$0xff] %v775
        %782 = vst [vmem:[#allocation2 + $0x8] sm:$0xff] %v777
        %v783 = vld [vmem:[#allocation2] sm:$0xff]
        %v784 = vld [vmem:[#allocation2 + $0x8] sm:$0xff]
        %s785 = scalar_lea.vmem %s220, 512 [#allocation3]
        %v786 = vld [vmem:[%s785] sm:$0xff]
        %v787 = vld [vmem:[%s785 + $0x8] sm:$0xff]
        %v788 = vld [vmem:[%s785 + $0x10] sm:$0xff]
        %v789 = vld [vmem:[%s785 + $0x18] sm:$0xff]
        %v790 = vld [vmem:[%s785 + $0x20] sm:$0xff]
        %v791 = vld [vmem:[%s785 + $0x28] sm:$0xff]
        %v792 = vld [vmem:[%s785 + $0x30] sm:$0xff]
        %v793 = vld [vmem:[%s785 + $0x38] sm:$0xff]
        %v794 = vld [vmem:[%s785 + $0x40] sm:$0xff]
        %v795 = vld [vmem:[%s785 + $0x48] sm:$0xff]
        %v796 = vld [vmem:[%s785 + $0x50] sm:$0xff]
        %v797 = vld [vmem:[%s785 + $0x58] sm:$0xff]
        %v798 = vld [vmem:[%s785 + $0x60] sm:$0xff]
        %v799 = vld [vmem:[%s785 + $0x68] sm:$0xff]
        %v800 = vld [vmem:[%s785 + $0x70] sm:$0xff]
        %v801 = vld [vmem:[%s785 + $0x78] sm:$0xff]
        %v802 = vld [vmem:[%s785 + $0x80] sm:$0xff]
        %v803 = vld [vmem:[%s785 + $0x88] sm:$0xff]
        %v804 = vld [vmem:[%s785 + $0x90] sm:$0xff]
        %v805 = vld [vmem:[%s785 + $0x98] sm:$0xff]
        %v806 = vld [vmem:[%s785 + $0xa0] sm:$0xff]
        %v807 = vld [vmem:[%s785 + $0xa8] sm:$0xff]
        %v808 = vld [vmem:[%s785 + $0xb0] sm:$0xff]
        %v809 = vld [vmem:[%s785 + $0xb8] sm:$0xff]
        %v810 = vld [vmem:[%s785 + $0xc0] sm:$0xff]
        %v811 = vld [vmem:[%s785 + $0xc8] sm:$0xff]
        %v812 = vld [vmem:[%s785 + $0xd0] sm:$0xff]
        %v813 = vld [vmem:[%s785 + $0xd8] sm:$0xff]
        %v814 = vld [vmem:[%s785 + $0xe0] sm:$0xff]
        %v815 = vld [vmem:[%s785 + $0xe8] sm:$0xff]
        %v816 = vld [vmem:[%s785 + $0xf0] sm:$0xff]
        %v817 = vld [vmem:[%s785 + $0xf8] sm:$0xff]
        %v818 = vld [vmem:[%s785 + $0x100] sm:$0xff]
        %v819 = vld [vmem:[%s785 + $0x108] sm:$0xff]
        %v820 = vld [vmem:[%s785 + $0x110] sm:$0xff]
        %v821 = vld [vmem:[%s785 + $0x118] sm:$0xff]
        %v822 = vld [vmem:[%s785 + $0x120] sm:$0xff]
        %v823 = vld [vmem:[%s785 + $0x128] sm:$0xff]
        %v824 = vld [vmem:[%s785 + $0x130] sm:$0xff]
        %v825 = vld [vmem:[%s785 + $0x138] sm:$0xff]
        %v826 = vld [vmem:[%s785 + $0x140] sm:$0xff]
        %v827 = vld [vmem:[%s785 + $0x148] sm:$0xff]
        %v828 = vld [vmem:[%s785 + $0x150] sm:$0xff]
        %v829 = vld [vmem:[%s785 + $0x158] sm:$0xff]
        %v830 = vld [vmem:[%s785 + $0x160] sm:$0xff]
        %v831 = vld [vmem:[%s785 + $0x168] sm:$0xff]
        %v832 = vld [vmem:[%s785 + $0x170] sm:$0xff]
        %v833 = vld [vmem:[%s785 + $0x178] sm:$0xff]
        %v834 = vld [vmem:[%s785 + $0x180] sm:$0xff]
        %v835 = vld [vmem:[%s785 + $0x188] sm:$0xff]
        %v836 = vld [vmem:[%s785 + $0x190] sm:$0xff]
        %v837 = vld [vmem:[%s785 + $0x198] sm:$0xff]
        %v838 = vld [vmem:[%s785 + $0x1a0] sm:$0xff]
        %v839 = vld [vmem:[%s785 + $0x1a8] sm:$0xff]
        %v840 = vld [vmem:[%s785 + $0x1b0] sm:$0xff]
        %v841 = vld [vmem:[%s785 + $0x1b8] sm:$0xff]
        %v842 = vld [vmem:[%s785 + $0x1c0] sm:$0xff]
        %v843 = vld [vmem:[%s785 + $0x1c8] sm:$0xff]
        %v844 = vld [vmem:[%s785 + $0x1d0] sm:$0xff]
        %v845 = vld [vmem:[%s785 + $0x1d8] sm:$0xff]
        %v846 = vld [vmem:[%s785 + $0x1e0] sm:$0xff]
        %v847 = vld [vmem:[%s785 + $0x1e8] sm:$0xff]
        %v848 = vld [vmem:[%s785 + $0x1f0] sm:$0xff]
        %v849 = vld [vmem:[%s785 + $0x1f8] sm:$0xff]
        %v852 = vunpack.c.l.b16 %v299
        %v853 = vunpack.c.h.b16 %v299
        %v854 = vunpack.c.l.b16 %v300
        %v855 = vunpack.c.h.b16 %v300
        %v856 = vpack.c.b16 %v852, %v367
        %v857 = vpack.c.b16 %v853, %v368
        %v858 = vpack.c.b16 %v854, %v369
        %v859 = vpack.c.b16 %v855, %v370
        %v861 = vshrl.u32 %v856, 16
        %v863 = vshll.u32 %v856, 16
        %v865 = vrot.slane %v863, 1
        %v866 = vor.u32 %v861, %v865
        %v868 = vshrl.u32 %v857, 16
        %v870 = vshll.u32 %v857, 16
        %v872 = vrot.slane %v870, 1
        %v873 = vor.u32 %v868, %v872
        %v875 = vshrl.u32 %v858, 16
        %v877 = vshll.u32 %v858, 16
        %v879 = vrot.slane %v877, 1
        %v880 = vor.u32 %v875, %v879
        %v882 = vshrl.u32 %v859, 16
        %v884 = vshll.u32 %v859, 16
        %v886 = vrot.slane %v884, 1
        %v887 = vor.u32 %v882, %v886
        %v956 = vunpack.c.l.b16 %v786
        %v957 = vunpack.c.h.b16 %v786
        %v958 = vunpack.c.l.b16 %v787
        %v959 = vunpack.c.h.b16 %v787
        %v960 = vunpack.c.l.b16 %v788
        %v961 = vunpack.c.h.b16 %v788
        %v962 = vunpack.c.l.b16 %v789
        %v963 = vunpack.c.h.b16 %v789
        %v964 = vunpack.c.l.b16 %v790
        %v965 = vunpack.c.h.b16 %v790
        %v966 = vunpack.c.l.b16 %v791
        %v967 = vunpack.c.h.b16 %v791
        %v968 = vunpack.c.l.b16 %v792
        %v969 = vunpack.c.h.b16 %v792
        %v970 = vunpack.c.l.b16 %v793
        %v971 = vunpack.c.h.b16 %v793
        %v972 = vunpack.c.l.b16 %v794
        %v973 = vunpack.c.h.b16 %v794
        %v974 = vunpack.c.l.b16 %v795
        %v975 = vunpack.c.h.b16 %v795
        %v976 = vunpack.c.l.b16 %v796
        %v977 = vunpack.c.h.b16 %v796
        %v978 = vunpack.c.l.b16 %v797
        %v979 = vunpack.c.h.b16 %v797
        %v980 = vunpack.c.l.b16 %v798
        %v981 = vunpack.c.h.b16 %v798
        %v982 = vunpack.c.l.b16 %v799
        %v983 = vunpack.c.h.b16 %v799
        %v984 = vunpack.c.l.b16 %v800
        %v985 = vunpack.c.h.b16 %v800
        %v986 = vunpack.c.l.b16 %v801
        %v987 = vunpack.c.h.b16 %v801
        %v988 = vunpack.c.l.b16 %v802
        %v989 = vunpack.c.h.b16 %v802
        %v990 = vunpack.c.l.b16 %v803
        %v991 = vunpack.c.h.b16 %v803
        %v992 = vunpack.c.l.b16 %v804
        %v993 = vunpack.c.h.b16 %v804
        %v994 = vunpack.c.l.b16 %v805
        %v995 = vunpack.c.h.b16 %v805
        %v996 = vunpack.c.l.b16 %v806
        %v997 = vunpack.c.h.b16 %v806
        %v998 = vunpack.c.l.b16 %v807
        %v999 = vunpack.c.h.b16 %v807
        %v1000 = vunpack.c.l.b16 %v808
        %v1001 = vunpack.c.h.b16 %v808
        %v1002 = vunpack.c.l.b16 %v809
        %v1003 = vunpack.c.h.b16 %v809
        %v1004 = vunpack.c.l.b16 %v810
        %v1005 = vunpack.c.h.b16 %v810
        %v1006 = vunpack.c.l.b16 %v811
        %v1007 = vunpack.c.h.b16 %v811
        %v1008 = vunpack.c.l.b16 %v812
        %v1009 = vunpack.c.h.b16 %v812
        %v1010 = vunpack.c.l.b16 %v813
        %v1011 = vunpack.c.h.b16 %v813
        %v1012 = vunpack.c.l.b16 %v814
        %v1013 = vunpack.c.h.b16 %v814
        %v1014 = vunpack.c.l.b16 %v815
        %v1015 = vunpack.c.h.b16 %v815
        %v1016 = vunpack.c.l.b16 %v816
        %v1017 = vunpack.c.h.b16 %v816
        %v1018 = vunpack.c.l.b16 %v817
        %v1019 = vunpack.c.h.b16 %v817
        %v1020 = vunpack.c.l.b16 %v818
        %v1021 = vunpack.c.h.b16 %v818
        %v1022 = vunpack.c.l.b16 %v819
        %v1023 = vunpack.c.h.b16 %v819
        %v1024 = vunpack.c.l.b16 %v820
        %v1025 = vunpack.c.h.b16 %v820
        %v1026 = vunpack.c.l.b16 %v821
        %v1027 = vunpack.c.h.b16 %v821
        %v1028 = vunpack.c.l.b16 %v822
        %v1029 = vunpack.c.h.b16 %v822
        %v1030 = vunpack.c.l.b16 %v823
        %v1031 = vunpack.c.h.b16 %v823
        %v1032 = vunpack.c.l.b16 %v824
        %v1033 = vunpack.c.h.b16 %v824
        %v1034 = vunpack.c.l.b16 %v825
        %v1035 = vunpack.c.h.b16 %v825
        %v1036 = vunpack.c.l.b16 %v826
        %v1037 = vunpack.c.h.b16 %v826
        %v1038 = vunpack.c.l.b16 %v827
        %v1039 = vunpack.c.h.b16 %v827
        %v1040 = vunpack.c.l.b16 %v828
        %v1041 = vunpack.c.h.b16 %v828
        %v1042 = vunpack.c.l.b16 %v829
        %v1043 = vunpack.c.h.b16 %v829
        %v1044 = vunpack.c.l.b16 %v830
        %v1045 = vunpack.c.h.b16 %v830
        %v1046 = vunpack.c.l.b16 %v831
        %v1047 = vunpack.c.h.b16 %v831
        %v1048 = vunpack.c.l.b16 %v832
        %v1049 = vunpack.c.h.b16 %v832
        %v1050 = vunpack.c.l.b16 %v833
        %v1051 = vunpack.c.h.b16 %v833
        %v1052 = vunpack.c.l.b16 %v834
        %v1053 = vunpack.c.h.b16 %v834
        %v1054 = vunpack.c.l.b16 %v835
        %v1055 = vunpack.c.h.b16 %v835
        %v1056 = vunpack.c.l.b16 %v836
        %v1057 = vunpack.c.h.b16 %v836
        %v1058 = vunpack.c.l.b16 %v837
        %v1059 = vunpack.c.h.b16 %v837
        %v1060 = vunpack.c.l.b16 %v838
        %v1061 = vunpack.c.h.b16 %v838
        %v1062 = vunpack.c.l.b16 %v839
        %v1063 = vunpack.c.h.b16 %v839
        %v1064 = vunpack.c.l.b16 %v840
        %v1065 = vunpack.c.h.b16 %v840
        %v1066 = vunpack.c.l.b16 %v841
        %v1067 = vunpack.c.h.b16 %v841
        %v1068 = vunpack.c.l.b16 %v842
        %v1069 = vunpack.c.h.b16 %v842
        %v1070 = vunpack.c.l.b16 %v843
        %v1071 = vunpack.c.h.b16 %v843
        %v1072 = vunpack.c.l.b16 %v844
        %v1073 = vunpack.c.h.b16 %v844
        %v1074 = vunpack.c.l.b16 %v845
        %v1075 = vunpack.c.h.b16 %v845
        %v1076 = vunpack.c.l.b16 %v846
        %v1077 = vunpack.c.h.b16 %v846
        %v1078 = vunpack.c.l.b16 %v847
        %v1079 = vunpack.c.h.b16 %v847
        %v1080 = vunpack.c.l.b16 %v848
        %v1081 = vunpack.c.h.b16 %v848
        %v1082 = vunpack.c.l.b16 %v849
        %v1083 = vunpack.c.h.b16 %v849
        %v1084 = vpack.c.b16 %v958, %v956
        %v1085 = vpack.c.b16 %v959, %v957
        %v1086 = vpack.c.b16 %v962, %v960
        %v1087 = vpack.c.b16 %v963, %v961
        %v1088 = vpack.c.b16 %v966, %v964
        %v1089 = vpack.c.b16 %v967, %v965
        %v1090 = vpack.c.b16 %v970, %v968
        %v1091 = vpack.c.b16 %v971, %v969
        %v1092 = vpack.c.b16 %v974, %v972
        %v1093 = vpack.c.b16 %v975, %v973
        %v1094 = vpack.c.b16 %v978, %v976
        %v1095 = vpack.c.b16 %v979, %v977
        %v1096 = vpack.c.b16 %v982, %v980
        %v1097 = vpack.c.b16 %v983, %v981
        %v1098 = vpack.c.b16 %v986, %v984
        %v1099 = vpack.c.b16 %v987, %v985
        %v1100 = vpack.c.b16 %v990, %v988
        %v1101 = vpack.c.b16 %v991, %v989
        %v1102 = vpack.c.b16 %v994, %v992
        %v1103 = vpack.c.b16 %v995, %v993
        %v1104 = vpack.c.b16 %v998, %v996
        %v1105 = vpack.c.b16 %v999, %v997
        %v1106 = vpack.c.b16 %v1002, %v1000
        %v1107 = vpack.c.b16 %v1003, %v1001
        %v1108 = vpack.c.b16 %v1006, %v1004
        %v1109 = vpack.c.b16 %v1007, %v1005
        %v1110 = vpack.c.b16 %v1010, %v1008
        %v1111 = vpack.c.b16 %v1011, %v1009
        %v1112 = vpack.c.b16 %v1014, %v1012
        %v1113 = vpack.c.b16 %v1015, %v1013
        %v1114 = vpack.c.b16 %v1018, %v1016
        %v1115 = vpack.c.b16 %v1019, %v1017
        %v1116 = vpack.c.b16 %v1022, %v1020
        %v1117 = vpack.c.b16 %v1023, %v1021
        %v1118 = vpack.c.b16 %v1026, %v1024
        %v1119 = vpack.c.b16 %v1027, %v1025
        %v1120 = vpack.c.b16 %v1030, %v1028
        %v1121 = vpack.c.b16 %v1031, %v1029
        %v1122 = vpack.c.b16 %v1034, %v1032
        %v1123 = vpack.c.b16 %v1035, %v1033
        %v1124 = vpack.c.b16 %v1038, %v1036
        %v1125 = vpack.c.b16 %v1039, %v1037
        %v1126 = vpack.c.b16 %v1042, %v1040
        %v1127 = vpack.c.b16 %v1043, %v1041
        %v1128 = vpack.c.b16 %v1046, %v1044
        %v1129 = vpack.c.b16 %v1047, %v1045
        %v1130 = vpack.c.b16 %v1050, %v1048
        %v1131 = vpack.c.b16 %v1051, %v1049
        %v1132 = vpack.c.b16 %v1054, %v1052
        %v1133 = vpack.c.b16 %v1055, %v1053
        %v1134 = vpack.c.b16 %v1058, %v1056
        %v1135 = vpack.c.b16 %v1059, %v1057
        %v1136 = vpack.c.b16 %v1062, %v1060
        %v1137 = vpack.c.b16 %v1063, %v1061
        %v1138 = vpack.c.b16 %v1066, %v1064
        %v1139 = vpack.c.b16 %v1067, %v1065
        %v1140 = vpack.c.b16 %v1070, %v1068
        %v1141 = vpack.c.b16 %v1071, %v1069
        %v1142 = vpack.c.b16 %v1074, %v1072
        %v1143 = vpack.c.b16 %v1075, %v1073
        %v1144 = vpack.c.b16 %v1078, %v1076
        %v1145 = vpack.c.b16 %v1079, %v1077
        %v1146 = vpack.c.b16 %v1082, %v1080
        %v1147 = vpack.c.b16 %v1083, %v1081
        %1212 = vmatprep.subr.bf16.mxu0 %v1085
        %1213 = vmatpush1.bf16.msra.mxu0 %v1084
        %1214 = vmatprep.subr.bf16.mxu0 %v1087
        %1215 = vmatpush1.bf16.msra.mxu0 %v1086
        %1216 = vmatprep.subr.bf16.mxu0 %v1089
        %1217 = vmatpush1.bf16.msra.mxu0 %v1088
        %1218 = vmatprep.subr.bf16.mxu0 %v1091
        %1219 = vmatpush1.bf16.msra.mxu0 %v1090
        %1220 = vmatprep.subr.bf16.mxu0 %v1093
        %1221 = vmatpush1.bf16.msra.mxu0 %v1092
        %1222 = vmatprep.subr.bf16.mxu0 %v1095
        %1223 = vmatpush1.bf16.msra.mxu0 %v1094
        %1224 = vmatprep.subr.bf16.mxu0 %v1097
        %1225 = vmatpush1.bf16.msra.mxu0 %v1096
        %1226 = vmatprep.subr.bf16.mxu0 %v1099
        %1227 = vmatpush1.bf16.msra.mxu0 %v1098
        %1228 = vmatprep.subr.bf16.mxu0 %v1101
        %1229 = vmatpush1.bf16.msra.mxu0 %v1100
        %1230 = vmatprep.subr.bf16.mxu0 %v1103
        %1231 = vmatpush1.bf16.msra.mxu0 %v1102
        %1232 = vmatprep.subr.bf16.mxu0 %v1105
        %1233 = vmatpush1.bf16.msra.mxu0 %v1104
        %1234 = vmatprep.subr.bf16.mxu0 %v1107
        %1235 = vmatpush1.bf16.msra.mxu0 %v1106
        %1236 = vmatprep.subr.bf16.mxu0 %v1109
        %1237 = vmatpush1.bf16.msra.mxu0 %v1108
        %1238 = vmatprep.subr.bf16.mxu0 %v1111
        %1239 = vmatpush1.bf16.msra.mxu0 %v1110
        %1240 = vmatprep.subr.bf16.mxu0 %v1113
        %1241 = vmatpush1.bf16.msra.mxu0 %v1112
        %1242 = vmatprep.subr.bf16.mxu0 %v1115
        %1243 = vmatpush1.bf16.msra.mxu0 %v1114
        %1244 = vmatprep.mubr.bf16.mxu0 %v873
        %1245 = vmatmul.mubr.bf16.gmra.mrb[0].mxu0 %v866
        %v1246 = vpop.f32.mrb[0].mxu0
        %v1247 = vadd.f32 0.0, %v1246
        %v1248 = vpop.f32.mrb[0].mxu0
        %v1249 = vadd.f32 0.0, %v1248
        %v1250 = vpop.f32.mrb[0].mxu0
        %v1251 = vpop.f32.mrb[0].mxu0
        %1252 = vdwg.mxu0
        %1253 = vmatprep.subr.bf16.mxu0 %v1117
        %1254 = vmatpush1.bf16.msra.mxu0 %v1116
        %1255 = vmatprep.subr.bf16.mxu0 %v1119
        %1256 = vmatpush1.bf16.msra.mxu0 %v1118
        %1257 = vmatprep.subr.bf16.mxu0 %v1121
        %1258 = vmatpush1.bf16.msra.mxu0 %v1120
        %1259 = vmatprep.subr.bf16.mxu0 %v1123
        %1260 = vmatpush1.bf16.msra.mxu0 %v1122
        %1261 = vmatprep.subr.bf16.mxu0 %v1125
        %1262 = vmatpush1.bf16.msra.mxu0 %v1124
        %1263 = vmatprep.subr.bf16.mxu0 %v1127
        %1264 = vmatpush1.bf16.msra.mxu0 %v1126
        %1265 = vmatprep.subr.bf16.mxu0 %v1129
        %1266 = vmatpush1.bf16.msra.mxu0 %v1128
        %1267 = vmatprep.subr.bf16.mxu0 %v1131
        %1268 = vmatpush1.bf16.msra.mxu0 %v1130
        %1269 = vmatprep.subr.bf16.mxu0 %v1133
        %1270 = vmatpush1.bf16.msra.mxu0 %v1132
        %1271 = vmatprep.subr.bf16.mxu0 %v1135
        %1272 = vmatpush1.bf16.msra.mxu0 %v1134
        %1273 = vmatprep.subr.bf16.mxu0 %v1137
        %1274 = vmatpush1.bf16.msra.mxu0 %v1136
        %1275 = vmatprep.subr.bf16.mxu0 %v1139
        %1276 = vmatpush1.bf16.msra.mxu0 %v1138
        %1277 = vmatprep.subr.bf16.mxu0 %v1141
        %1278 = vmatpush1.bf16.msra.mxu0 %v1140
        %1279 = vmatprep.subr.bf16.mxu0 %v1143
        %1280 = vmatpush1.bf16.msra.mxu0 %v1142
        %1281 = vmatprep.subr.bf16.mxu0 %v1145
        %1282 = vmatpush1.bf16.msra.mxu0 %v1144
        %1283 = vmatprep.subr.bf16.mxu0 %v1147
        %1284 = vmatpush1.bf16.msra.mxu0 %v1146
        %1285 = vmatprep.mubr.bf16.mxu0 %v887
        %1286 = vmatmul.mubr.bf16.gmra.mrb[0].mxu0 %v880
        %v1287 = vpop.f32.mrb[0].mxu0
        %v1288 = vadd.f32 %v1247, %v1287
        %v1289 = vpop.f32.mrb[0].mxu0
        %v1290 = vadd.f32 %v1249, %v1289
        %v1291 = vpop.f32.mrb[0].mxu0
        %v1292 = vpop.f32.mrb[0].mxu0
        %1293 = vdwg.mxu0
        %v1294 = vadd.f32 %v783, %v1288
        %v1295 = vadd.f32 %v784, %v1290
        %1296 = vst [vmem:[#allocation2] sm:$0xff] %v1294
        %1297 = vst [vmem:[#allocation2 + $0x8] sm:$0xff] %v1295
        %v1298 = vld [vmem:[#allocation2] sm:$0xff]
        %v1299 = vld [vmem:[#allocation2 + $0x8] sm:$0xff]
        %s1300 = scalar_lea.vmem %s220, 1024 [#allocation3]
        %v1301 = vld [vmem:[%s1300] sm:$0xff]
        %v1302 = vld [vmem:[%s1300 + $0x8] sm:$0xff]
        %v1303 = vld [vmem:[%s1300 + $0x10] sm:$0xff]
        %v1304 = vld [vmem:[%s1300 + $0x18] sm:$0xff]
        %v1305 = vld [vmem:[%s1300 + $0x20] sm:$0xff]
        %v1306 = vld [vmem:[%s1300 + $0x28] sm:$0xff]
        %v1307 = vld [vmem:[%s1300 + $0x30] sm:$0xff]
        %v1308 = vld [vmem:[%s1300 + $0x38] sm:$0xff]
        %v1309 = vld [vmem:[%s1300 + $0x40] sm:$0xff]
        %v1310 = vld [vmem:[%s1300 + $0x48] sm:$0xff]
        %v1311 = vld [vmem:[%s1300 + $0x50] sm:$0xff]
        %v1312 = vld [vmem:[%s1300 + $0x58] sm:$0xff]
        %v1313 = vld [vmem:[%s1300 + $0x60] sm:$0xff]
        %v1314 = vld [vmem:[%s1300 + $0x68] sm:$0xff]
        %v1315 = vld [vmem:[%s1300 + $0x70] sm:$0xff]
        %v1316 = vld [vmem:[%s1300 + $0x78] sm:$0xff]
        %v1317 = vld [vmem:[%s1300 + $0x80] sm:$0xff]
        %v1318 = vld [vmem:[%s1300 + $0x88] sm:$0xff]
        %v1319 = vld [vmem:[%s1300 + $0x90] sm:$0xff]
        %v1320 = vld [vmem:[%s1300 + $0x98] sm:$0xff]
        %v1321 = vld [vmem:[%s1300 + $0xa0] sm:$0xff]
        %v1322 = vld [vmem:[%s1300 + $0xa8] sm:$0xff]
        %v1323 = vld [vmem:[%s1300 + $0xb0] sm:$0xff]
        %v1324 = vld [vmem:[%s1300 + $0xb8] sm:$0xff]
        %v1325 = vld [vmem:[%s1300 + $0xc0] sm:$0xff]
        %v1326 = vld [vmem:[%s1300 + $0xc8] sm:$0xff]
        %v1327 = vld [vmem:[%s1300 + $0xd0] sm:$0xff]
        %v1328 = vld [vmem:[%s1300 + $0xd8] sm:$0xff]
        %v1329 = vld [vmem:[%s1300 + $0xe0] sm:$0xff]
        %v1330 = vld [vmem:[%s1300 + $0xe8] sm:$0xff]
        %v1331 = vld [vmem:[%s1300 + $0xf0] sm:$0xff]
        %v1332 = vld [vmem:[%s1300 + $0xf8] sm:$0xff]
        %v1333 = vld [vmem:[%s1300 + $0x100] sm:$0xff]
        %v1334 = vld [vmem:[%s1300 + $0x108] sm:$0xff]
        %v1335 = vld [vmem:[%s1300 + $0x110] sm:$0xff]
        %v1336 = vld [vmem:[%s1300 + $0x118] sm:$0xff]
        %v1337 = vld [vmem:[%s1300 + $0x120] sm:$0xff]
        %v1338 = vld [vmem:[%s1300 + $0x128] sm:$0xff]
        %v1339 = vld [vmem:[%s1300 + $0x130] sm:$0xff]
        %v1340 = vld [vmem:[%s1300 + $0x138] sm:$0xff]
        %v1341 = vld [vmem:[%s1300 + $0x140] sm:$0xff]
        %v1342 = vld [vmem:[%s1300 + $0x148] sm:$0xff]
        %v1343 = vld [vmem:[%s1300 + $0x150] sm:$0xff]
        %v1344 = vld [vmem:[%s1300 + $0x158] sm:$0xff]
        %v1345 = vld [vmem:[%s1300 + $0x160] sm:$0xff]
        %v1346 = vld [vmem:[%s1300 + $0x168] sm:$0xff]
        %v1347 = vld [vmem:[%s1300 + $0x170] sm:$0xff]
        %v1348 = vld [vmem:[%s1300 + $0x178] sm:$0xff]
        %v1349 = vld [vmem:[%s1300 + $0x180] sm:$0xff]
        %v1350 = vld [vmem:[%s1300 + $0x188] sm:$0xff]
        %v1351 = vld [vmem:[%s1300 + $0x190] sm:$0xff]
        %v1352 = vld [vmem:[%s1300 + $0x198] sm:$0xff]
        %v1353 = vld [vmem:[%s1300 + $0x1a0] sm:$0xff]
        %v1354 = vld [vmem:[%s1300 + $0x1a8] sm:$0xff]
        %v1355 = vld [vmem:[%s1300 + $0x1b0] sm:$0xff]
        %v1356 = vld [vmem:[%s1300 + $0x1b8] sm:$0xff]
        %v1357 = vld [vmem:[%s1300 + $0x1c0] sm:$0xff]
        %v1358 = vld [vmem:[%s1300 + $0x1c8] sm:$0xff]
        %v1359 = vld [vmem:[%s1300 + $0x1d0] sm:$0xff]
        %v1360 = vld [vmem:[%s1300 + $0x1d8] sm:$0xff]
        %v1361 = vld [vmem:[%s1300 + $0x1e0] sm:$0xff]
        %v1362 = vld [vmem:[%s1300 + $0x1e8] sm:$0xff]
        %v1363 = vld [vmem:[%s1300 + $0x1f0] sm:$0xff]
        %v1364 = vld [vmem:[%s1300 + $0x1f8] sm:$0xff]
        %v1365 = vrot.slane %v856, 1
        %v1366 = vrot.slane %v857, 1
        %v1367 = vrot.slane %v858, 1
        %v1368 = vrot.slane %v859, 1
        %v1437 = vunpack.c.l.b16 %v1301
        %v1438 = vunpack.c.h.b16 %v1301
        %v1439 = vunpack.c.l.b16 %v1302
        %v1440 = vunpack.c.h.b16 %v1302
        %v1441 = vunpack.c.l.b16 %v1303
        %v1442 = vunpack.c.h.b16 %v1303
        %v1443 = vunpack.c.l.b16 %v1304
        %v1444 = vunpack.c.h.b16 %v1304
        %v1445 = vunpack.c.l.b16 %v1305
        %v1446 = vunpack.c.h.b16 %v1305
        %v1447 = vunpack.c.l.b16 %v1306
        %v1448 = vunpack.c.h.b16 %v1306
        %v1449 = vunpack.c.l.b16 %v1307
        %v1450 = vunpack.c.h.b16 %v1307
        %v1451 = vunpack.c.l.b16 %v1308
        %v1452 = vunpack.c.h.b16 %v1308
        %v1453 = vunpack.c.l.b16 %v1309
        %v1454 = vunpack.c.h.b16 %v1309
        %v1455 = vunpack.c.l.b16 %v1310
        %v1456 = vunpack.c.h.b16 %v1310
        %v1457 = vunpack.c.l.b16 %v1311
        %v1458 = vunpack.c.h.b16 %v1311
        %v1459 = vunpack.c.l.b16 %v1312
        %v1460 = vunpack.c.h.b16 %v1312
        %v1461 = vunpack.c.l.b16 %v1313
        %v1462 = vunpack.c.h.b16 %v1313
        %v1463 = vunpack.c.l.b16 %v1314
        %v1464 = vunpack.c.h.b16 %v1314
        %v1465 = vunpack.c.l.b16 %v1315
        %v1466 = vunpack.c.h.b16 %v1315
        %v1467 = vunpack.c.l.b16 %v1316
        %v1468 = vunpack.c.h.b16 %v1316
        %v1469 = vunpack.c.l.b16 %v1317
        %v1470 = vunpack.c.h.b16 %v1317
        %v1471 = vunpack.c.l.b16 %v1318
        %v1472 = vunpack.c.h.b16 %v1318
        %v1473 = vunpack.c.l.b16 %v1319
        %v1474 = vunpack.c.h.b16 %v1319
        %v1475 = vunpack.c.l.b16 %v1320
        %v1476 = vunpack.c.h.b16 %v1320
        %v1477 = vunpack.c.l.b16 %v1321
        %v1478 = vunpack.c.h.b16 %v1321
        %v1479 = vunpack.c.l.b16 %v1322
        %v1480 = vunpack.c.h.b16 %v1322
        %v1481 = vunpack.c.l.b16 %v1323
        %v1482 = vunpack.c.h.b16 %v1323
        %v1483 = vunpack.c.l.b16 %v1324
        %v1484 = vunpack.c.h.b16 %v1324
        %v1485 = vunpack.c.l.b16 %v1325
        %v1486 = vunpack.c.h.b16 %v1325
        %v1487 = vunpack.c.l.b16 %v1326
        %v1488 = vunpack.c.h.b16 %v1326
        %v1489 = vunpack.c.l.b16 %v1327
        %v1490 = vunpack.c.h.b16 %v1327
        %v1491 = vunpack.c.l.b16 %v1328
        %v1492 = vunpack.c.h.b16 %v1328
        %v1493 = vunpack.c.l.b16 %v1329
        %v1494 = vunpack.c.h.b16 %v1329
        %v1495 = vunpack.c.l.b16 %v1330
        %v1496 = vunpack.c.h.b16 %v1330
        %v1497 = vunpack.c.l.b16 %v1331
        %v1498 = vunpack.c.h.b16 %v1331
        %v1499 = vunpack.c.l.b16 %v1332
        %v1500 = vunpack.c.h.b16 %v1332
        %v1501 = vunpack.c.l.b16 %v1333
        %v1502 = vunpack.c.h.b16 %v1333
        %v1503 = vunpack.c.l.b16 %v1334
        %v1504 = vunpack.c.h.b16 %v1334
        %v1505 = vunpack.c.l.b16 %v1335
        %v1506 = vunpack.c.h.b16 %v1335
        %v1507 = vunpack.c.l.b16 %v1336
        %v1508 = vunpack.c.h.b16 %v1336
        %v1509 = vunpack.c.l.b16 %v1337
        %v1510 = vunpack.c.h.b16 %v1337
        %v1511 = vunpack.c.l.b16 %v1338
        %v1512 = vunpack.c.h.b16 %v1338
        %v1513 = vunpack.c.l.b16 %v1339
        %v1514 = vunpack.c.h.b16 %v1339
        %v1515 = vunpack.c.l.b16 %v1340
        %v1516 = vunpack.c.h.b16 %v1340
        %v1517 = vunpack.c.l.b16 %v1341
        %v1518 = vunpack.c.h.b16 %v1341
        %v1519 = vunpack.c.l.b16 %v1342
        %v1520 = vunpack.c.h.b16 %v1342
        %v1521 = vunpack.c.l.b16 %v1343
        %v1522 = vunpack.c.h.b16 %v1343
        %v1523 = vunpack.c.l.b16 %v1344
        %v1524 = vunpack.c.h.b16 %v1344
        %v1525 = vunpack.c.l.b16 %v1345
        %v1526 = vunpack.c.h.b16 %v1345
        %v1527 = vunpack.c.l.b16 %v1346
        %v1528 = vunpack.c.h.b16 %v1346
        %v1529 = vunpack.c.l.b16 %v1347
        %v1530 = vunpack.c.h.b16 %v1347
        %v1531 = vunpack.c.l.b16 %v1348
        %v1532 = vunpack.c.h.b16 %v1348
        %v1533 = vunpack.c.l.b16 %v1349
        %v1534 = vunpack.c.h.b16 %v1349
        %v1535 = vunpack.c.l.b16 %v1350
        %v1536 = vunpack.c.h.b16 %v1350
        %v1537 = vunpack.c.l.b16 %v1351
        %v1538 = vunpack.c.h.b16 %v1351
        %v1539 = vunpack.c.l.b16 %v1352
        %v1540 = vunpack.c.h.b16 %v1352
        %v1541 = vunpack.c.l.b16 %v1353
        %v1542 = vunpack.c.h.b16 %v1353
        %v1543 = vunpack.c.l.b16 %v1354
        %v1544 = vunpack.c.h.b16 %v1354
        %v1545 = vunpack.c.l.b16 %v1355
        %v1546 = vunpack.c.h.b16 %v1355
        %v1547 = vunpack.c.l.b16 %v1356
        %v1548 = vunpack.c.h.b16 %v1356
        %v1549 = vunpack.c.l.b16 %v1357
        %v1550 = vunpack.c.h.b16 %v1357
        %v1551 = vunpack.c.l.b16 %v1358
        %v1552 = vunpack.c.h.b16 %v1358
        %v1553 = vunpack.c.l.b16 %v1359
        %v1554 = vunpack.c.h.b16 %v1359
        %v1555 = vunpack.c.l.b16 %v1360
        %v1556 = vunpack.c.h.b16 %v1360
        %v1557 = vunpack.c.l.b16 %v1361
        %v1558 = vunpack.c.h.b16 %v1361
        %v1559 = vunpack.c.l.b16 %v1362
        %v1560 = vunpack.c.h.b16 %v1362
        %v1561 = vunpack.c.l.b16 %v1363
        %v1562 = vunpack.c.h.b16 %v1363
        %v1563 = vunpack.c.l.b16 %v1364
        %v1564 = vunpack.c.h.b16 %v1364
        %v1565 = vpack.c.b16 %v1439, %v1437
        %v1566 = vpack.c.b16 %v1440, %v1438
        %v1567 = vpack.c.b16 %v1443, %v1441
        %v1568 = vpack.c.b16 %v1444, %v1442
        %v1569 = vpack.c.b16 %v1447, %v1445
        %v1570 = vpack.c.b16 %v1448, %v1446
        %v1571 = vpack.c.b16 %v1451, %v1449
        %v1572 = vpack.c.b16 %v1452, %v1450
        %v1573 = vpack.c.b16 %v1455, %v1453
        %v1574 = vpack.c.b16 %v1456, %v1454
        %v1575 = vpack.c.b16 %v1459, %v1457
        %v1576 = vpack.c.b16 %v1460, %v1458
        %v1577 = vpack.c.b16 %v1463, %v1461
        %v1578 = vpack.c.b16 %v1464, %v1462
        %v1579 = vpack.c.b16 %v1467, %v1465
        %v1580 = vpack.c.b16 %v1468, %v1466
        %v1581 = vpack.c.b16 %v1471, %v1469
        %v1582 = vpack.c.b16 %v1472, %v1470
        %v1583 = vpack.c.b16 %v1475, %v1473
        %v1584 = vpack.c.b16 %v1476, %v1474
        %v1585 = vpack.c.b16 %v1479, %v1477
        %v1586 = vpack.c.b16 %v1480, %v1478
        %v1587 = vpack.c.b16 %v1483, %v1481
        %v1588 = vpack.c.b16 %v1484, %v1482
        %v1589 = vpack.c.b16 %v1487, %v1485
        %v1590 = vpack.c.b16 %v1488, %v1486
        %v1591 = vpack.c.b16 %v1491, %v1489
        %v1592 = vpack.c.b16 %v1492, %v1490
        %v1593 = vpack.c.b16 %v1495, %v1493
        %v1594 = vpack.c.b16 %v1496, %v1494
        %v1595 = vpack.c.b16 %v1499, %v1497
        %v1596 = vpack.c.b16 %v1500, %v1498
        %v1597 = vpack.c.b16 %v1503, %v1501
        %v1598 = vpack.c.b16 %v1504, %v1502
        %v1599 = vpack.c.b16 %v1507, %v1505
        %v1600 = vpack.c.b16 %v1508, %v1506
        %v1601 = vpack.c.b16 %v1511, %v1509
        %v1602 = vpack.c.b16 %v1512, %v1510
        %v1603 = vpack.c.b16 %v1515, %v1513
        %v1604 = vpack.c.b16 %v1516, %v1514
        %v1605 = vpack.c.b16 %v1519, %v1517
        %v1606 = vpack.c.b16 %v1520, %v1518
        %v1607 = vpack.c.b16 %v1523, %v1521
        %v1608 = vpack.c.b16 %v1524, %v1522
        %v1609 = vpack.c.b16 %v1527, %v1525
        %v1610 = vpack.c.b16 %v1528, %v1526
        %v1611 = vpack.c.b16 %v1531, %v1529
        %v1612 = vpack.c.b16 %v1532, %v1530
        %v1613 = vpack.c.b16 %v1535, %v1533
        %v1614 = vpack.c.b16 %v1536, %v1534
        %v1615 = vpack.c.b16 %v1539, %v1537
        %v1616 = vpack.c.b16 %v1540, %v1538
        %v1617 = vpack.c.b16 %v1543, %v1541
        %v1618 = vpack.c.b16 %v1544, %v1542
        %v1619 = vpack.c.b16 %v1547, %v1545
        %v1620 = vpack.c.b16 %v1548, %v1546
        %v1621 = vpack.c.b16 %v1551, %v1549
        %v1622 = vpack.c.b16 %v1552, %v1550
        %v1623 = vpack.c.b16 %v1555, %v1553
        %v1624 = vpack.c.b16 %v1556, %v1554
        %v1625 = vpack.c.b16 %v1559, %v1557
        %v1626 = vpack.c.b16 %v1560, %v1558
        %v1627 = vpack.c.b16 %v1563, %v1561
        %v1628 = vpack.c.b16 %v1564, %v1562
        %1693 = vmatprep.subr.bf16.mxu0 %v1566
        %1694 = vmatpush1.bf16.msra.mxu0 %v1565
        %1695 = vmatprep.subr.bf16.mxu0 %v1568
        %1696 = vmatpush1.bf16.msra.mxu0 %v1567
        %1697 = vmatprep.subr.bf16.mxu0 %v1570
        %1698 = vmatpush1.bf16.msra.mxu0 %v1569
        %1699 = vmatprep.subr.bf16.mxu0 %v1572
        %1700 = vmatpush1.bf16.msra.mxu0 %v1571
        %1701 = vmatprep.subr.bf16.mxu0 %v1574
        %1702 = vmatpush1.bf16.msra.mxu0 %v1573
        %1703 = vmatprep.subr.bf16.mxu0 %v1576
        %1704 = vmatpush1.bf16.msra.mxu0 %v1575
        %1705 = vmatprep.subr.bf16.mxu0 %v1578
        %1706 = vmatpush1.bf16.msra.mxu0 %v1577
        %1707 = vmatprep.subr.bf16.mxu0 %v1580
        %1708 = vmatpush1.bf16.msra.mxu0 %v1579
        %1709 = vmatprep.subr.bf16.mxu0 %v1582
        %1710 = vmatpush1.bf16.msra.mxu0 %v1581
        %1711 = vmatprep.subr.bf16.mxu0 %v1584
        %1712 = vmatpush1.bf16.msra.mxu0 %v1583
        %1713 = vmatprep.subr.bf16.mxu0 %v1586
        %1714 = vmatpush1.bf16.msra.mxu0 %v1585
        %1715 = vmatprep.subr.bf16.mxu0 %v1588
        %1716 = vmatpush1.bf16.msra.mxu0 %v1587
        %1717 = vmatprep.subr.bf16.mxu0 %v1590
        %1718 = vmatpush1.bf16.msra.mxu0 %v1589
        %1719 = vmatprep.subr.bf16.mxu0 %v1592
        %1720 = vmatpush1.bf16.msra.mxu0 %v1591
        %1721 = vmatprep.subr.bf16.mxu0 %v1594
        %1722 = vmatpush1.bf16.msra.mxu0 %v1593
        %1723 = vmatprep.subr.bf16.mxu0 %v1596
        %1724 = vmatpush1.bf16.msra.mxu0 %v1595
        %1725 = vmatprep.mubr.bf16.mxu0 %v1366
        %1726 = vmatmul.mubr.bf16.gmra.mrb[0].mxu0 %v1365
        %v1727 = vpop.f32.mrb[0].mxu0
        %v1728 = vadd.f32 0.0, %v1727
        %v1729 = vpop.f32.mrb[0].mxu0
        %v1730 = vadd.f32 0.0, %v1729
        %v1731 = vpop.f32.mrb[0].mxu0
        %v1732 = vpop.f32.mrb[0].mxu0
        %1733 = vdwg.mxu0
        %1734 = vmatprep.subr.bf16.mxu0 %v1598
        %1735 = vmatpush1.bf16.msra.mxu0 %v1597
        %1736 = vmatprep.subr.bf16.mxu0 %v1600
        %1737 = vmatpush1.bf16.msra.mxu0 %v1599
        %1738 = vmatprep.subr.bf16.mxu0 %v1602
        %1739 = vmatpush1.bf16.msra.mxu0 %v1601
        %1740 = vmatprep.subr.bf16.mxu0 %v1604
        %1741 = vmatpush1.bf16.msra.mxu0 %v1603
        %1742 = vmatprep.subr.bf16.mxu0 %v1606
        %1743 = vmatpush1.bf16.msra.mxu0 %v1605
        %1744 = vmatprep.subr.bf16.mxu0 %v1608
        %1745 = vmatpush1.bf16.msra.mxu0 %v1607
        %1746 = vmatprep.subr.bf16.mxu0 %v1610
        %1747 = vmatpush1.bf16.msra.mxu0 %v1609
        %1748 = vmatprep.subr.bf16.mxu0 %v1612
        %1749 = vmatpush1.bf16.msra.mxu0 %v1611
        %1750 = vmatprep.subr.bf16.mxu0 %v1614
        %1751 = vmatpush1.bf16.msra.mxu0 %v1613
        %1752 = vmatprep.subr.bf16.mxu0 %v1616
        %1753 = vmatpush1.bf16.msra.mxu0 %v1615
        %1754 = vmatprep.subr.bf16.mxu0 %v1618
        %1755 = vmatpush1.bf16.msra.mxu0 %v1617
        %1756 = vmatprep.subr.bf16.mxu0 %v1620
        %1757 = vmatpush1.bf16.msra.mxu0 %v1619
        %1758 = vmatprep.subr.bf16.mxu0 %v1622
        %1759 = vmatpush1.bf16.msra.mxu0 %v1621
        %1760 = vmatprep.subr.bf16.mxu0 %v1624
        %1761 = vmatpush1.bf16.msra.mxu0 %v1623
        %1762 = vmatprep.subr.bf16.mxu0 %v1626
        %1763 = vmatpush1.bf16.msra.mxu0 %v1625
        %1764 = vmatprep.subr.bf16.mxu0 %v1628
        %1765 = vmatpush1.bf16.msra.mxu0 %v1627
        %1766 = vmatprep.mubr.bf16.mxu0 %v1368
        %1767 = vmatmul.mubr.bf16.gmra.mrb[0].mxu0 %v1367
        %v1768 = vpop.f32.mrb[0].mxu0
        %v1769 = vadd.f32 %v1728, %v1768
        %v1770 = vpop.f32.mrb[0].mxu0
        %v1771 = vadd.f32 %v1730, %v1770
        %v1772 = vpop.f32.mrb[0].mxu0
        %v1773 = vpop.f32.mrb[0].mxu0
        %1774 = vdwg.mxu0
        %v1775 = vadd.f32 %v1298, %v1769
        %v1776 = vadd.f32 %v1299, %v1771
        %1777 = vst [vmem:[#allocation2] sm:$0xff] %v1775
        %1778 = vst [vmem:[#allocation2 + $0x8] sm:$0xff] %v1776
        %v1779 = vld [vmem:[#allocation2] sm:$0xff]
        %v1780 = vld [vmem:[#allocation2 + $0x8] sm:$0xff]
        %s1781 = scalar_lea.vmem %s220, 1536 [#allocation3]
        %v1782 = vld [vmem:[%s1781] sm:$0xff]
        %v1783 = vld [vmem:[%s1781 + $0x8] sm:$0xff]
        %v1784 = vld [vmem:[%s1781 + $0x10] sm:$0xff]
        %v1785 = vld [vmem:[%s1781 + $0x18] sm:$0xff]
        %v1786 = vld [vmem:[%s1781 + $0x20] sm:$0xff]
        %v1787 = vld [vmem:[%s1781 + $0x28] sm:$0xff]
        %v1788 = vld [vmem:[%s1781 + $0x30] sm:$0xff]
        %v1789 = vld [vmem:[%s1781 + $0x38] sm:$0xff]
        %v1790 = vld [vmem:[%s1781 + $0x40] sm:$0xff]
        %v1791 = vld [vmem:[%s1781 + $0x48] sm:$0xff]
        %v1792 = vld [vmem:[%s1781 + $0x50] sm:$0xff]
        %v1793 = vld [vmem:[%s1781 + $0x58] sm:$0xff]
        %v1794 = vld [vmem:[%s1781 + $0x60] sm:$0xff]
        %v1795 = vld [vmem:[%s1781 + $0x68] sm:$0xff]
        %v1796 = vld [vmem:[%s1781 + $0x70] sm:$0xff]
        %v1797 = vld [vmem:[%s1781 + $0x78] sm:$0xff]
        %v1798 = vld [vmem:[%s1781 + $0x80] sm:$0xff]
        %v1799 = vld [vmem:[%s1781 + $0x88] sm:$0xff]
        %v1800 = vld [vmem:[%s1781 + $0x90] sm:$0xff]
        %v1801 = vld [vmem:[%s1781 + $0x98] sm:$0xff]
        %v1802 = vld [vmem:[%s1781 + $0xa0] sm:$0xff]
        %v1803 = vld [vmem:[%s1781 + $0xa8] sm:$0xff]
        %v1804 = vld [vmem:[%s1781 + $0xb0] sm:$0xff]
        %v1805 = vld [vmem:[%s1781 + $0xb8] sm:$0xff]
        %v1806 = vld [vmem:[%s1781 + $0xc0] sm:$0xff]
        %v1807 = vld [vmem:[%s1781 + $0xc8] sm:$0xff]
        %v1808 = vld [vmem:[%s1781 + $0xd0] sm:$0xff]
        %v1809 = vld [vmem:[%s1781 + $0xd8] sm:$0xff]
        %v1810 = vld [vmem:[%s1781 + $0xe0] sm:$0xff]
        %v1811 = vld [vmem:[%s1781 + $0xe8] sm:$0xff]
        %v1812 = vld [vmem:[%s1781 + $0xf0] sm:$0xff]
        %v1813 = vld [vmem:[%s1781 + $0xf8] sm:$0xff]
        %v1814 = vld [vmem:[%s1781 + $0x100] sm:$0xff]
        %v1815 = vld [vmem:[%s1781 + $0x108] sm:$0xff]
        %v1816 = vld [vmem:[%s1781 + $0x110] sm:$0xff]
        %v1817 = vld [vmem:[%s1781 + $0x118] sm:$0xff]
        %v1818 = vld [vmem:[%s1781 + $0x120] sm:$0xff]
        %v1819 = vld [vmem:[%s1781 + $0x128] sm:$0xff]
        %v1820 = vld [vmem:[%s1781 + $0x130] sm:$0xff]
        %v1821 = vld [vmem:[%s1781 + $0x138] sm:$0xff]
        %v1822 = vld [vmem:[%s1781 + $0x140] sm:$0xff]
        %v1823 = vld [vmem:[%s1781 + $0x148] sm:$0xff]
        %v1824 = vld [vmem:[%s1781 + $0x150] sm:$0xff]
        %v1825 = vld [vmem:[%s1781 + $0x158] sm:$0xff]
        %v1826 = vld [vmem:[%s1781 + $0x160] sm:$0xff]
        %v1827 = vld [vmem:[%s1781 + $0x168] sm:$0xff]
        %v1828 = vld [vmem:[%s1781 + $0x170] sm:$0xff]
        %v1829 = vld [vmem:[%s1781 + $0x178] sm:$0xff]
        %v1830 = vld [vmem:[%s1781 + $0x180] sm:$0xff]
        %v1831 = vld [vmem:[%s1781 + $0x188] sm:$0xff]
        %v1832 = vld [vmem:[%s1781 + $0x190] sm:$0xff]
        %v1833 = vld [vmem:[%s1781 + $0x198] sm:$0xff]
        %v1834 = vld [vmem:[%s1781 + $0x1a0] sm:$0xff]
        %v1835 = vld [vmem:[%s1781 + $0x1a8] sm:$0xff]
        %v1836 = vld [vmem:[%s1781 + $0x1b0] sm:$0xff]
        %v1837 = vld [vmem:[%s1781 + $0x1b8] sm:$0xff]
        %v1838 = vld [vmem:[%s1781 + $0x1c0] sm:$0xff]
        %v1839 = vld [vmem:[%s1781 + $0x1c8] sm:$0xff]
        %v1840 = vld [vmem:[%s1781 + $0x1d0] sm:$0xff]
        %v1841 = vld [vmem:[%s1781 + $0x1d8] sm:$0xff]
        %v1842 = vld [vmem:[%s1781 + $0x1e0] sm:$0xff]
        %v1843 = vld [vmem:[%s1781 + $0x1e8] sm:$0xff]
        %v1844 = vld [vmem:[%s1781 + $0x1f0] sm:$0xff]
        %v1845 = vld [vmem:[%s1781 + $0x1f8] sm:$0xff]
        %v1846 = vrot.slane %v861, 1
        %v1847 = vrot.slane %v863, 2
        %v1848 = vor.u32 %v1846, %v1847
        %v1849 = vrot.slane %v868, 1
        %v1850 = vrot.slane %v870, 2
        %v1851 = vor.u32 %v1849, %v1850
        %v1852 = vrot.slane %v875, 1
        %v1853 = vrot.slane %v877, 2
        %v1854 = vor.u32 %v1852, %v1853
        %v1855 = vrot.slane %v882, 1
        %v1856 = vrot.slane %v884, 2
        %v1857 = vor.u32 %v1855, %v1856
        %v1926 = vunpack.c.l.b16 %v1782
        %v1927 = vunpack.c.h.b16 %v1782
        %v1928 = vunpack.c.l.b16 %v1783
        %v1929 = vunpack.c.h.b16 %v1783
        %v1930 = vunpack.c.l.b16 %v1784
        %v1931 = vunpack.c.h.b16 %v1784
        %v1932 = vunpack.c.l.b16 %v1785
        %v1933 = vunpack.c.h.b16 %v1785
        %v1934 = vunpack.c.l.b16 %v1786
        %v1935 = vunpack.c.h.b16 %v1786
        %v1936 = vunpack.c.l.b16 %v1787
        %v1937 = vunpack.c.h.b16 %v1787
        %v1938 = vunpack.c.l.b16 %v1788
        %v1939 = vunpack.c.h.b16 %v1788
        %v1940 = vunpack.c.l.b16 %v1789
        %v1941 = vunpack.c.h.b16 %v1789
        %v1942 = vunpack.c.l.b16 %v1790
        %v1943 = vunpack.c.h.b16 %v1790
        %v1944 = vunpack.c.l.b16 %v1791
        %v1945 = vunpack.c.h.b16 %v1791
        %v1946 = vunpack.c.l.b16 %v1792
        %v1947 = vunpack.c.h.b16 %v1792
        %v1948 = vunpack.c.l.b16 %v1793
        %v1949 = vunpack.c.h.b16 %v1793
        %v1950 = vunpack.c.l.b16 %v1794
        %v1951 = vunpack.c.h.b16 %v1794
        %v1952 = vunpack.c.l.b16 %v1795
        %v1953 = vunpack.c.h.b16 %v1795
        %v1954 = vunpack.c.l.b16 %v1796
        %v1955 = vunpack.c.h.b16 %v1796
        %v1956 = vunpack.c.l.b16 %v1797
        %v1957 = vunpack.c.h.b16 %v1797
        %v1958 = vunpack.c.l.b16 %v1798
        %v1959 = vunpack.c.h.b16 %v1798
        %v1960 = vunpack.c.l.b16 %v1799
        %v1961 = vunpack.c.h.b16 %v1799
        %v1962 = vunpack.c.l.b16 %v1800
        %v1963 = vunpack.c.h.b16 %v1800
        %v1964 = vunpack.c.l.b16 %v1801
        %v1965 = vunpack.c.h.b16 %v1801
        %v1966 = vunpack.c.l.b16 %v1802
        %v1967 = vunpack.c.h.b16 %v1802
        %v1968 = vunpack.c.l.b16 %v1803
        %v1969 = vunpack.c.h.b16 %v1803
        %v1970 = vunpack.c.l.b16 %v1804
        %v1971 = vunpack.c.h.b16 %v1804
        %v1972 = vunpack.c.l.b16 %v1805
        %v1973 = vunpack.c.h.b16 %v1805
        %v1974 = vunpack.c.l.b16 %v1806
        %v1975 = vunpack.c.h.b16 %v1806
        %v1976 = vunpack.c.l.b16 %v1807
        %v1977 = vunpack.c.h.b16 %v1807
        %v1978 = vunpack.c.l.b16 %v1808
        %v1979 = vunpack.c.h.b16 %v1808
        %v1980 = vunpack.c.l.b16 %v1809
        %v1981 = vunpack.c.h.b16 %v1809
        %v1982 = vunpack.c.l.b16 %v1810
        %v1983 = vunpack.c.h.b16 %v1810
        %v1984 = vunpack.c.l.b16 %v1811
        %v1985 = vunpack.c.h.b16 %v1811
        %v1986 = vunpack.c.l.b16 %v1812
        %v1987 = vunpack.c.h.b16 %v1812
        %v1988 = vunpack.c.l.b16 %v1813
        %v1989 = vunpack.c.h.b16 %v1813
        %v1990 = vunpack.c.l.b16 %v1814
        %v1991 = vunpack.c.h.b16 %v1814
        %v1992 = vunpack.c.l.b16 %v1815
        %v1993 = vunpack.c.h.b16 %v1815
        %v1994 = vunpack.c.l.b16 %v1816
        %v1995 = vunpack.c.h.b16 %v1816
        %v1996 = vunpack.c.l.b16 %v1817
        %v1997 = vunpack.c.h.b16 %v1817
        %v1998 = vunpack.c.l.b16 %v1818
        %v1999 = vunpack.c.h.b16 %v1818
        %v2000 = vunpack.c.l.b16 %v1819
        %v2001 = vunpack.c.h.b16 %v1819
        %v2002 = vunpack.c.l.b16 %v1820
        %v2003 = vunpack.c.h.b16 %v1820
        %v2004 = vunpack.c.l.b16 %v1821
        %v2005 = vunpack.c.h.b16 %v1821
        %v2006 = vunpack.c.l.b16 %v1822
        %v2007 = vunpack.c.h.b16 %v1822
        %v2008 = vunpack.c.l.b16 %v1823
        %v2009 = vunpack.c.h.b16 %v1823
        %v2010 = vunpack.c.l.b16 %v1824
        %v2011 = vunpack.c.h.b16 %v1824
        %v2012 = vunpack.c.l.b16 %v1825
        %v2013 = vunpack.c.h.b16 %v1825
        %v2014 = vunpack.c.l.b16 %v1826
        %v2015 = vunpack.c.h.b16 %v1826
        %v2016 = vunpack.c.l.b16 %v1827
        %v2017 = vunpack.c.h.b16 %v1827
        %v2018 = vunpack.c.l.b16 %v1828
        %v2019 = vunpack.c.h.b16 %v1828
        %v2020 = vunpack.c.l.b16 %v1829
        %v2021 = vunpack.c.h.b16 %v1829
        %v2022 = vunpack.c.l.b16 %v1830
        %v2023 = vunpack.c.h.b16 %v1830
        %v2024 = vunpack.c.l.b16 %v1831
        %v2025 = vunpack.c.h.b16 %v1831
        %v2026 = vunpack.c.l.b16 %v1832
        %v2027 = vunpack.c.h.b16 %v1832
        %v2028 = vunpack.c.l.b16 %v1833
        %v2029 = vunpack.c.h.b16 %v1833
        %v2030 = vunpack.c.l.b16 %v1834
        %v2031 = vunpack.c.h.b16 %v1834
        %v2032 = vunpack.c.l.b16 %v1835
        %v2033 = vunpack.c.h.b16 %v1835
        %v2034 = vunpack.c.l.b16 %v1836
        %v2035 = vunpack.c.h.b16 %v1836
        %v2036 = vunpack.c.l.b16 %v1837
        %v2037 = vunpack.c.h.b16 %v1837
        %v2038 = vunpack.c.l.b16 %v1838
        %v2039 = vunpack.c.h.b16 %v1838
        %v2040 = vunpack.c.l.b16 %v1839
        %v2041 = vunpack.c.h.b16 %v1839
        %v2042 = vunpack.c.l.b16 %v1840
        %v2043 = vunpack.c.h.b16 %v1840
        %v2044 = vunpack.c.l.b16 %v1841
        %v2045 = vunpack.c.h.b16 %v1841
        %v2046 = vunpack.c.l.b16 %v1842
        %v2047 = vunpack.c.h.b16 %v1842
        %v2048 = vunpack.c.l.b16 %v1843
        %v2049 = vunpack.c.h.b16 %v1843
        %v2050 = vunpack.c.l.b16 %v1844
        %v2051 = vunpack.c.h.b16 %v1844
        %v2052 = vunpack.c.l.b16 %v1845
        %v2053 = vunpack.c.h.b16 %v1845
        %v2054 = vpack.c.b16 %v1928, %v1926
        %v2055 = vpack.c.b16 %v1929, %v1927
        %v2056 = vpack.c.b16 %v1932, %v1930
        %v2057 = vpack.c.b16 %v1933, %v1931
        %v2058 = vpack.c.b16 %v1936, %v1934
        %v2059 = vpack.c.b16 %v1937, %v1935
        %v2060 = vpack.c.b16 %v1940, %v1938
        %v2061 = vpack.c.b16 %v1941, %v1939
        %v2062 = vpack.c.b16 %v1944, %v1942
        %v2063 = vpack.c.b16 %v1945, %v1943
        %v2064 = vpack.c.b16 %v1948, %v1946
        %v2065 = vpack.c.b16 %v1949, %v1947
        %v2066 = vpack.c.b16 %v1952, %v1950
        %v2067 = vpack.c.b16 %v1953, %v1951
        %v2068 = vpack.c.b16 %v1956, %v1954
        %v2069 = vpack.c.b16 %v1957, %v1955
        %v2070 = vpack.c.b16 %v1960, %v1958
        %v2071 = vpack.c.b16 %v1961, %v1959
        %v2072 = vpack.c.b16 %v1964, %v1962
        %v2073 = vpack.c.b16 %v1965, %v1963
        %v2074 = vpack.c.b16 %v1968, %v1966
        %v2075 = vpack.c.b16 %v1969, %v1967
        %v2076 = vpack.c.b16 %v1972, %v1970
        %v2077 = vpack.c.b16 %v1973, %v1971
        %v2078 = vpack.c.b16 %v1976, %v1974
        %v2079 = vpack.c.b16 %v1977, %v1975
        %v2080 = vpack.c.b16 %v1980, %v1978
        %v2081 = vpack.c.b16 %v1981, %v1979
        %v2082 = vpack.c.b16 %v1984, %v1982
        %v2083 = vpack.c.b16 %v1985, %v1983
        %v2084 = vpack.c.b16 %v1988, %v1986
        %v2085 = vpack.c.b16 %v1989, %v1987
        %v2086 = vpack.c.b16 %v1992, %v1990
        %v2087 = vpack.c.b16 %v1993, %v1991
        %v2088 = vpack.c.b16 %v1996, %v1994
        %v2089 = vpack.c.b16 %v1997, %v1995
        %v2090 = vpack.c.b16 %v2000, %v1998
        %v2091 = vpack.c.b16 %v2001, %v1999
        %v2092 = vpack.c.b16 %v2004, %v2002
        %v2093 = vpack.c.b16 %v2005, %v2003
        %v2094 = vpack.c.b16 %v2008, %v2006
        %v2095 = vpack.c.b16 %v2009, %v2007
        %v2096 = vpack.c.b16 %v2012, %v2010
        %v2097 = vpack.c.b16 %v2013, %v2011
        %v2098 = vpack.c.b16 %v2016, %v2014
        %v2099 = vpack.c.b16 %v2017, %v2015
        %v2100 = vpack.c.b16 %v2020, %v2018
        %v2101 = vpack.c.b16 %v2021, %v2019
        %v2102 = vpack.c.b16 %v2024, %v2022
        %v2103 = vpack.c.b16 %v2025, %v2023
        %v2104 = vpack.c.b16 %v2028, %v2026
        %v2105 = vpack.c.b16 %v2029, %v2027
        %v2106 = vpack.c.b16 %v2032, %v2030
        %v2107 = vpack.c.b16 %v2033, %v2031
        %v2108 = vpack.c.b16 %v2036, %v2034
        %v2109 = vpack.c.b16 %v2037, %v2035
        %v2110 = vpack.c.b16 %v2040, %v2038
        %v2111 = vpack.c.b16 %v2041, %v2039
        %v2112 = vpack.c.b16 %v2044, %v2042
        %v2113 = vpack.c.b16 %v2045, %v2043
        %v2114 = vpack.c.b16 %v2048, %v2046
        %v2115 = vpack.c.b16 %v2049, %v2047
        %v2116 = vpack.c.b16 %v2052, %v2050
        %v2117 = vpack.c.b16 %v2053, %v2051
        %2182 = vmatprep.subr.bf16.mxu0 %v2055
        %2183 = vmatpush1.bf16.msra.mxu0 %v2054
        %2184 = vmatprep.subr.bf16.mxu0 %v2057
        %2185 = vmatpush1.bf16.msra.mxu0 %v2056
        %2186 = vmatprep.subr.bf16.mxu0 %v2059
        %2187 = vmatpush1.bf16.msra.mxu0 %v2058
        %2188 = vmatprep.subr.bf16.mxu0 %v2061
        %2189 = vmatpush1.bf16.msra.mxu0 %v2060
        %2190 = vmatprep.subr.bf16.mxu0 %v2063
        %2191 = vmatpush1.bf16.msra.mxu0 %v2062
        %2192 = vmatprep.subr.bf16.mxu0 %v2065
        %2193 = vmatpush1.bf16.msra.mxu0 %v2064
        %2194 = vmatprep.subr.bf16.mxu0 %v2067
        %2195 = vmatpush1.bf16.msra.mxu0 %v2066
        %2196 = vmatprep.subr.bf16.mxu0 %v2069
        %2197 = vmatpush1.bf16.msra.mxu0 %v2068
        %2198 = vmatprep.subr.bf16.mxu0 %v2071
        %2199 = vmatpush1.bf16.msra.mxu0 %v2070
        %2200 = vmatprep.subr.bf16.mxu0 %v2073
        %2201 = vmatpush1.bf16.msra.mxu0 %v2072
        %2202 = vmatprep.subr.bf16.mxu0 %v2075
        %2203 = vmatpush1.bf16.msra.mxu0 %v2074
        %2204 = vmatprep.subr.bf16.mxu0 %v2077
        %2205 = vmatpush1.bf16.msra.mxu0 %v2076
        %2206 = vmatprep.subr.bf16.mxu0 %v2079
        %2207 = vmatpush1.bf16.msra.mxu0 %v2078
        %2208 = vmatprep.subr.bf16.mxu0 %v2081
        %2209 = vmatpush1.bf16.msra.mxu0 %v2080
        %2210 = vmatprep.subr.bf16.mxu0 %v2083
        %2211 = vmatpush1.bf16.msra.mxu0 %v2082
        %2212 = vmatprep.subr.bf16.mxu0 %v2085
        %2213 = vmatpush1.bf16.msra.mxu0 %v2084
        %2214 = vmatprep.mubr.bf16.mxu0 %v1851
        %2215 = vmatmul.mubr.bf16.gmra.mrb[0].mxu0 %v1848
        %v2216 = vpop.f32.mrb[0].mxu0
        %v2217 = vadd.f32 0.0, %v2216
        %v2218 = vpop.f32.mrb[0].mxu0
        %v2219 = vadd.f32 0.0, %v2218
        %v2220 = vpop.f32.mrb[0].mxu0
        %v2221 = vpop.f32.mrb[0].mxu0
        %2222 = vdwg.mxu0
        %2223 = vmatprep.subr.bf16.mxu0 %v2087
        %2224 = vmatpush1.bf16.msra.mxu0 %v2086
        %2225 = vmatprep.subr.bf16.mxu0 %v2089
        %2226 = vmatpush1.bf16.msra.mxu0 %v2088
        %2227 = vmatprep.subr.bf16.mxu0 %v2091
        %2228 = vmatpush1.bf16.msra.mxu0 %v2090
        %2229 = vmatprep.subr.bf16.mxu0 %v2093
        %2230 = vmatpush1.bf16.msra.mxu0 %v2092
        %2231 = vmatprep.subr.bf16.mxu0 %v2095
        %2232 = vmatpush1.bf16.msra.mxu0 %v2094
        %2233 = vmatprep.subr.bf16.mxu0 %v2097
        %2234 = vmatpush1.bf16.msra.mxu0 %v2096
        %2235 = vmatprep.subr.bf16.mxu0 %v2099
        %2236 = vmatpush1.bf16.msra.mxu0 %v2098
        %2237 = vmatprep.subr.bf16.mxu0 %v2101
        %2238 = vmatpush1.bf16.msra.mxu0 %v2100
        %2239 = vmatprep.subr.bf16.mxu0 %v2103
        %2240 = vmatpush1.bf16.msra.mxu0 %v2102
        %2241 = vmatprep.subr.bf16.mxu0 %v2105
        %2242 = vmatpush1.bf16.msra.mxu0 %v2104
        %2243 = vmatprep.subr.bf16.mxu0 %v2107
        %2244 = vmatpush1.bf16.msra.mxu0 %v2106
        %2245 = vmatprep.subr.bf16.mxu0 %v2109
        %2246 = vmatpush1.bf16.msra.mxu0 %v2108
        %2247 = vmatprep.subr.bf16.mxu0 %v2111
        %2248 = vmatpush1.bf16.msra.mxu0 %v2110
        %2249 = vmatprep.subr.bf16.mxu0 %v2113
        %2250 = vmatpush1.bf16.msra.mxu0 %v2112
        %2251 = vmatprep.subr.bf16.mxu0 %v2115
        %2252 = vmatpush1.bf16.msra.mxu0 %v2114
        %2253 = vmatprep.subr.bf16.mxu0 %v2117
        %2254 = vmatpush1.bf16.msra.mxu0 %v2116
        %2255 = vmatprep.mubr.bf16.mxu0 %v1857
        %2256 = vmatmul.mubr.bf16.gmra.mrb[0].mxu0 %v1854
        %v2257 = vpop.f32.mrb[0].mxu0
        %v2258 = vadd.f32 %v2217, %v2257
        %v2259 = vpop.f32.mrb[0].mxu0
        %v2260 = vadd.f32 %v2219, %v2259
        %v2261 = vpop.f32.mrb[0].mxu0
        %v2262 = vpop.f32.mrb[0].mxu0
        %2263 = vdwg.mxu0
        %v2264 = vadd.f32 %v1779, %v2258
        %v2265 = vadd.f32 %v1780, %v2260
        %2266 = vst [vmem:[#allocation2] sm:$0xff] %v2264
        %2267 = vst [vmem:[#allocation2 + $0x8] sm:$0xff] %v2265
        %v2268 = vld [vmem:[#allocation2] sm:$0xff]
        %v2269 = vld [vmem:[#allocation2 + $0x8] sm:$0xff]
        %s2270 = scalar_lea.vmem %s220, 2048 [#allocation3]
        %v2271 = vld [vmem:[%s2270] sm:$0xff]
        %v2272 = vld [vmem:[%s2270 + $0x8] sm:$0xff]
        %v2273 = vld [vmem:[%s2270 + $0x10] sm:$0xff]
        %v2274 = vld [vmem:[%s2270 + $0x18] sm:$0xff]
        %v2275 = vld [vmem:[%s2270 + $0x20] sm:$0xff]
        %v2276 = vld [vmem:[%s2270 + $0x28] sm:$0xff]
        %v2277 = vld [vmem:[%s2270 + $0x30] sm:$0xff]
        %v2278 = vld [vmem:[%s2270 + $0x38] sm:$0xff]
        %v2279 = vld [vmem:[%s2270 + $0x40] sm:$0xff]
        %v2280 = vld [vmem:[%s2270 + $0x48] sm:$0xff]
        %v2281 = vld [vmem:[%s2270 + $0x50] sm:$0xff]
        %v2282 = vld [vmem:[%s2270 + $0x58] sm:$0xff]
        %v2283 = vld [vmem:[%s2270 + $0x60] sm:$0xff]
        %v2284 = vld [vmem:[%s2270 + $0x68] sm:$0xff]
        %v2285 = vld [vmem:[%s2270 + $0x70] sm:$0xff]
        %v2286 = vld [vmem:[%s2270 + $0x78] sm:$0xff]
        %v2287 = vld [vmem:[%s2270 + $0x80] sm:$0xff]
        %v2288 = vld [vmem:[%s2270 + $0x88] sm:$0xff]
        %v2289 = vld [vmem:[%s2270 + $0x90] sm:$0xff]
        %v2290 = vld [vmem:[%s2270 + $0x98] sm:$0xff]
        %v2291 = vld [vmem:[%s2270 + $0xa0] sm:$0xff]
        %v2292 = vld [vmem:[%s2270 + $0xa8] sm:$0xff]
        %v2293 = vld [vmem:[%s2270 + $0xb0] sm:$0xff]
        %v2294 = vld [vmem:[%s2270 + $0xb8] sm:$0xff]
        %v2295 = vld [vmem:[%s2270 + $0xc0] sm:$0xff]
        %v2296 = vld [vmem:[%s2270 + $0xc8] sm:$0xff]
        %v2297 = vld [vmem:[%s2270 + $0xd0] sm:$0xff]
        %v2298 = vld [vmem:[%s2270 + $0xd8] sm:$0xff]
        %v2299 = vld [vmem:[%s2270 + $0xe0] sm:$0xff]
        %v2300 = vld [vmem:[%s2270 + $0xe8] sm:$0xff]
        %v2301 = vld [vmem:[%s2270 + $0xf0] sm:$0xff]
        %v2302 = vld [vmem:[%s2270 + $0xf8] sm:$0xff]
        %v2303 = vld [vmem:[%s2270 + $0x100] sm:$0xff]
        %v2304 = vld [vmem:[%s2270 + $0x108] sm:$0xff]
        %v2305 = vld [vmem:[%s2270 + $0x110] sm:$0xff]
        %v2306 = vld [vmem:[%s2270 + $0x118] sm:$0xff]
        %v2307 = vld [vmem:[%s2270 + $0x120] sm:$0xff]
        %v2308 = vld [vmem:[%s2270 + $0x128] sm:$0xff]
        %v2309 = vld [vmem:[%s2270 + $0x130] sm:$0xff]
        %v2310 = vld [vmem:[%s2270 + $0x138] sm:$0xff]
        %v2311 = vld [vmem:[%s2270 + $0x140] sm:$0xff]
        %v2312 = vld [vmem:[%s2270 + $0x148] sm:$0xff]
        %v2313 = vld [vmem:[%s2270 + $0x150] sm:$0xff]
        %v2314 = vld [vmem:[%s2270 + $0x158] sm:$0xff]
        %v2315 = vld [vmem:[%s2270 + $0x160] sm:$0xff]
        %v2316 = vld [vmem:[%s2270 + $0x168] sm:$0xff]
        %v2317 = vld [vmem:[%s2270 + $0x170] sm:$0xff]
        %v2318 = vld [vmem:[%s2270 + $0x178] sm:$0xff]
        %v2319 = vld [vmem:[%s2270 + $0x180] sm:$0xff]
        %v2320 = vld [vmem:[%s2270 + $0x188] sm:$0xff]
        %v2321 = vld [vmem:[%s2270 + $0x190] sm:$0xff]
        %v2322 = vld [vmem:[%s2270 + $0x198] sm:$0xff]
        %v2323 = vld [vmem:[%s2270 + $0x1a0] sm:$0xff]
        %v2324 = vld [vmem:[%s2270 + $0x1a8] sm:$0xff]
        %v2325 = vld [vmem:[%s2270 + $0x1b0] sm:$0xff]
        %v2326 = vld [vmem:[%s2270 + $0x1b8] sm:$0xff]
        %v2327 = vld [vmem:[%s2270 + $0x1c0] sm:$0xff]
        %v2328 = vld [vmem:[%s2270 + $0x1c8] sm:$0xff]
        %v2329 = vld [vmem:[%s2270 + $0x1d0] sm:$0xff]
        %v2330 = vld [vmem:[%s2270 + $0x1d8] sm:$0xff]
        %v2331 = vld [vmem:[%s2270 + $0x1e0] sm:$0xff]
        %v2332 = vld [vmem:[%s2270 + $0x1e8] sm:$0xff]
        %v2333 = vld [vmem:[%s2270 + $0x1f0] sm:$0xff]
        %v2334 = vld [vmem:[%s2270 + $0x1f8] sm:$0xff]
        %v2335 = vrot.slane %v856, 2
        %v2336 = vrot.slane %v857, 2
        %v2337 = vrot.slane %v858, 2
        %v2338 = vrot.slane %v859, 2
        %v2407 = vunpack.c.l.b16 %v2271
        %v2408 = vunpack.c.h.b16 %v2271
        %v2409 = vunpack.c.l.b16 %v2272
        %v2410 = vunpack.c.h.b16 %v2272
        %v2411 = vunpack.c.l.b16 %v2273
        %v2412 = vunpack.c.h.b16 %v2273
        %v2413 = vunpack.c.l.b16 %v2274
        %v2414 = vunpack.c.h.b16 %v2274
        %v2415 = vunpack.c.l.b16 %v2275
        %v2416 = vunpack.c.h.b16 %v2275
        %v2417 = vunpack.c.l.b16 %v2276
        %v2418 = vunpack.c.h.b16 %v2276
        %v2419 = vunpack.c.l.b16 %v2277
        %v2420 = vunpack.c.h.b16 %v2277
        %v2421 = vunpack.c.l.b16 %v2278
        %v2422 = vunpack.c.h.b16 %v2278
        %v2423 = vunpack.c.l.b16 %v2279
        %v2424 = vunpack.c.h.b16 %v2279
        %v2425 = vunpack.c.l.b16 %v2280
        %v2426 = vunpack.c.h.b16 %v2280
        %v2427 = vunpack.c.l.b16 %v2281
        %v2428 = vunpack.c.h.b16 %v2281
        %v2429 = vunpack.c.l.b16 %v2282
        %v2430 = vunpack.c.h.b16 %v2282
        %v2431 = vunpack.c.l.b16 %v2283
        %v2432 = vunpack.c.h.b16 %v2283
        %v2433 = vunpack.c.l.b16 %v2284
        %v2434 = vunpack.c.h.b16 %v2284
        %v2435 = vunpack.c.l.b16 %v2285
        %v2436 = vunpack.c.h.b16 %v2285
        %v2437 = vunpack.c.l.b16 %v2286
        %v2438 = vunpack.c.h.b16 %v2286
        %v2439 = vunpack.c.l.b16 %v2287
        %v2440 = vunpack.c.h.b16 %v2287
        %v2441 = vunpack.c.l.b16 %v2288
        %v2442 = vunpack.c.h.b16 %v2288
        %v2443 = vunpack.c.l.b16 %v2289
        %v2444 = vunpack.c.h.b16 %v2289
        %v2445 = vunpack.c.l.b16 %v2290
        %v2446 = vunpack.c.h.b16 %v2290
        %v2447 = vunpack.c.l.b16 %v2291
        %v2448 = vunpack.c.h.b16 %v2291
        %v2449 = vunpack.c.l.b16 %v2292
        %v2450 = vunpack.c.h.b16 %v2292
        %v2451 = vunpack.c.l.b16 %v2293
        %v2452 = vunpack.c.h.b16 %v2293
        %v2453 = vunpack.c.l.b16 %v2294
        %v2454 = vunpack.c.h.b16 %v2294
        %v2455 = vunpack.c.l.b16 %v2295
        %v2456 = vunpack.c.h.b16 %v2295
        %v2457 = vunpack.c.l.b16 %v2296
        %v2458 = vunpack.c.h.b16 %v2296
        %v2459 = vunpack.c.l.b16 %v2297
        %v2460 = vunpack.c.h.b16 %v2297
        %v2461 = vunpack.c.l.b16 %v2298
        %v2462 = vunpack.c.h.b16 %v2298
        %v2463 = vunpack.c.l.b16 %v2299
        %v2464 = vunpack.c.h.b16 %v2299
        %v2465 = vunpack.c.l.b16 %v2300
        %v2466 = vunpack.c.h.b16 %v2300
        %v2467 = vunpack.c.l.b16 %v2301
        %v2468 = vunpack.c.h.b16 %v2301
        %v2469 = vunpack.c.l.b16 %v2302
        %v2470 = vunpack.c.h.b16 %v2302
        %v2471 = vunpack.c.l.b16 %v2303
        %v2472 = vunpack.c.h.b16 %v2303
        %v2473 = vunpack.c.l.b16 %v2304
        %v2474 = vunpack.c.h.b16 %v2304
        %v2475 = vunpack.c.l.b16 %v2305
        %v2476 = vunpack.c.h.b16 %v2305
        %v2477 = vunpack.c.l.b16 %v2306
        %v2478 = vunpack.c.h.b16 %v2306
        %v2479 = vunpack.c.l.b16 %v2307
        %v2480 = vunpack.c.h.b16 %v2307
        %v2481 = vunpack.c.l.b16 %v2308
        %v2482 = vunpack.c.h.b16 %v2308
        %v2483 = vunpack.c.l.b16 %v2309
        %v2484 = vunpack.c.h.b16 %v2309
        %v2485 = vunpack.c.l.b16 %v2310
        %v2486 = vunpack.c.h.b16 %v2310
        %v2487 = vunpack.c.l.b16 %v2311
        %v2488 = vunpack.c.h.b16 %v2311
        %v2489 = vunpack.c.l.b16 %v2312
        %v2490 = vunpack.c.h.b16 %v2312
        %v2491 = vunpack.c.l.b16 %v2313
        %v2492 = vunpack.c.h.b16 %v2313
        %v2493 = vunpack.c.l.b16 %v2314
        %v2494 = vunpack.c.h.b16 %v2314
        %v2495 = vunpack.c.l.b16 %v2315
        %v2496 = vunpack.c.h.b16 %v2315
        %v2497 = vunpack.c.l.b16 %v2316
        %v2498 = vunpack.c.h.b16 %v2316
        %v2499 = vunpack.c.l.b16 %v2317
        %v2500 = vunpack.c.h.b16 %v2317
        %v2501 = vunpack.c.l.b16 %v2318
        %v2502 = vunpack.c.h.b16 %v2318
        %v2503 = vunpack.c.l.b16 %v2319
        %v2504 = vunpack.c.h.b16 %v2319
        %v2505 = vunpack.c.l.b16 %v2320
        %v2506 = vunpack.c.h.b16 %v2320
        %v2507 = vunpack.c.l.b16 %v2321
        %v2508 = vunpack.c.h.b16 %v2321
        %v2509 = vunpack.c.l.b16 %v2322
        %v2510 = vunpack.c.h.b16 %v2322
        %v2511 = vunpack.c.l.b16 %v2323
        %v2512 = vunpack.c.h.b16 %v2323
        %v2513 = vunpack.c.l.b16 %v2324
        %v2514 = vunpack.c.h.b16 %v2324
        %v2515 = vunpack.c.l.b16 %v2325
        %v2516 = vunpack.c.h.b16 %v2325
        %v2517 = vunpack.c.l.b16 %v2326
        %v2518 = vunpack.c.h.b16 %v2326
        %v2519 = vunpack.c.l.b16 %v2327
        %v2520 = vunpack.c.h.b16 %v2327
        %v2521 = vunpack.c.l.b16 %v2328
        %v2522 = vunpack.c.h.b16 %v2328
        %v2523 = vunpack.c.l.b16 %v2329
        %v2524 = vunpack.c.h.b16 %v2329
        %v2525 = vunpack.c.l.b16 %v2330
        %v2526 = vunpack.c.h.b16 %v2330
        %v2527 = vunpack.c.l.b16 %v2331
        %v2528 = vunpack.c.h.b16 %v2331
        %v2529 = vunpack.c.l.b16 %v2332
        %v2530 = vunpack.c.h.b16 %v2332
        %v2531 = vunpack.c.l.b16 %v2333
        %v2532 = vunpack.c.h.b16 %v2333
        %v2533 = vunpack.c.l.b16 %v2334
        %v2534 = vunpack.c.h.b16 %v2334
        %v2535 = vpack.c.b16 %v2409, %v2407
        %v2536 = vpack.c.b16 %v2410, %v2408
        %v2537 = vpack.c.b16 %v2413, %v2411
        %v2538 = vpack.c.b16 %v2414, %v2412
        %v2539 = vpack.c.b16 %v2417, %v2415
        %v2540 = vpack.c.b16 %v2418, %v2416
        %v2541 = vpack.c.b16 %v2421, %v2419
        %v2542 = vpack.c.b16 %v2422, %v2420
        %v2543 = vpack.c.b16 %v2425, %v2423
        %v2544 = vpack.c.b16 %v2426, %v2424
        %v2545 = vpack.c.b16 %v2429, %v2427
        %v2546 = vpack.c.b16 %v2430, %v2428
        %v2547 = vpack.c.b16 %v2433, %v2431
        %v2548 = vpack.c.b16 %v2434, %v2432
        %v2549 = vpack.c.b16 %v2437, %v2435
        %v2550 = vpack.c.b16 %v2438, %v2436
        %v2551 = vpack.c.b16 %v2441, %v2439
        %v2552 = vpack.c.b16 %v2442, %v2440
        %v2553 = vpack.c.b16 %v2445, %v2443
        %v2554 = vpack.c.b16 %v2446, %v2444
        %v2555 = vpack.c.b16 %v2449, %v2447
        %v2556 = vpack.c.b16 %v2450, %v2448
        %v2557 = vpack.c.b16 %v2453, %v2451
        %v2558 = vpack.c.b16 %v2454, %v2452
        %v2559 = vpack.c.b16 %v2457, %v2455
        %v2560 = vpack.c.b16 %v2458, %v2456
        %v2561 = vpack.c.b16 %v2461, %v2459
        %v2562 = vpack.c.b16 %v2462, %v2460
        %v2563 = vpack.c.b16 %v2465, %v2463
        %v2564 = vpack.c.b16 %v2466, %v2464
        %v2565 = vpack.c.b16 %v2469, %v2467
        %v2566 = vpack.c.b16 %v2470, %v2468
        %v2567 = vpack.c.b16 %v2473, %v2471
        %v2568 = vpack.c.b16 %v2474, %v2472
        %v2569 = vpack.c.b16 %v2477, %v2475
        %v2570 = vpack.c.b16 %v2478, %v2476
        %v2571 = vpack.c.b16 %v2481, %v2479
        %v2572 = vpack.c.b16 %v2482, %v2480
        %v2573 = vpack.c.b16 %v2485, %v2483
        %v2574 = vpack.c.b16 %v2486, %v2484
        %v2575 = vpack.c.b16 %v2489, %v2487
        %v2576 = vpack.c.b16 %v2490, %v2488
        %v2577 = vpack.c.b16 %v2493, %v2491
        %v2578 = vpack.c.b16 %v2494, %v2492
        %v2579 = vpack.c.b16 %v2497, %v2495
        %v2580 = vpack.c.b16 %v2498, %v2496
        %v2581 = vpack.c.b16 %v2501, %v2499
        %v2582 = vpack.c.b16 %v2502, %v2500
        %v2583 = vpack.c.b16 %v2505, %v2503
        %v2584 = vpack.c.b16 %v2506, %v2504
        %v2585 = vpack.c.b16 %v2509, %v2507
        %v2586 = vpack.c.b16 %v2510, %v2508
        %v2587 = vpack.c.b16 %v2513, %v2511
        %v2588 = vpack.c.b16 %v2514, %v2512
        %v2589 = vpack.c.b16 %v2517, %v2515
        %v2590 = vpack.c.b16 %v2518, %v2516
        %v2591 = vpack.c.b16 %v2521, %v2519
        %v2592 = vpack.c.b16 %v2522, %v2520
        %v2593 = vpack.c.b16 %v2525, %v2523
        %v2594 = vpack.c.b16 %v2526, %v2524
        %v2595 = vpack.c.b16 %v2529, %v2527
        %v2596 = vpack.c.b16 %v2530, %v2528
        %v2597 = vpack.c.b16 %v2533, %v2531
        %v2598 = vpack.c.b16 %v2534, %v2532
        %2663 = vmatprep.subr.bf16.mxu0 %v2536
        %2664 = vmatpush1.bf16.msra.mxu0 %v2535
        %2665 = vmatprep.subr.bf16.mxu0 %v2538
        %2666 = vmatpush1.bf16.msra.mxu0 %v2537
        %2667 = vmatprep.subr.bf16.mxu0 %v2540
        %2668 = vmatpush1.bf16.msra.mxu0 %v2539
        %2669 = vmatprep.subr.bf16.mxu0 %v2542
        %2670 = vmatpush1.bf16.msra.mxu0 %v2541
        %2671 = vmatprep.subr.bf16.mxu0 %v2544
        %2672 = vmatpush1.bf16.msra.mxu0 %v2543
        %2673 = vmatprep.subr.bf16.mxu0 %v2546
        %2674 = vmatpush1.bf16.msra.mxu0 %v2545
        %2675 = vmatprep.subr.bf16.mxu0 %v2548
        %2676 = vmatpush1.bf16.msra.mxu0 %v2547
        %2677 = vmatprep.subr.bf16.mxu0 %v2550
        %2678 = vmatpush1.bf16.msra.mxu0 %v2549
        %2679 = vmatprep.subr.bf16.mxu0 %v2552
        %2680 = vmatpush1.bf16.msra.mxu0 %v2551
        %2681 = vmatprep.subr.bf16.mxu0 %v2554
        %2682 = vmatpush1.bf16.msra.mxu0 %v2553
        %2683 = vmatprep.subr.bf16.mxu0 %v2556
        %2684 = vmatpush1.bf16.msra.mxu0 %v2555
        %2685 = vmatprep.subr.bf16.mxu0 %v2558
        %2686 = vmatpush1.bf16.msra.mxu0 %v2557
        %2687 = vmatprep.subr.bf16.mxu0 %v2560
        %2688 = vmatpush1.bf16.msra.mxu0 %v2559
        %2689 = vmatprep.subr.bf16.mxu0 %v2562
        %2690 = vmatpush1.bf16.msra.mxu0 %v2561
        %2691 = vmatprep.subr.bf16.mxu0 %v2564
        %2692 = vmatpush1.bf16.msra.mxu0 %v2563
        %2693 = vmatprep.subr.bf16.mxu0 %v2566
        %2694 = vmatpush1.bf16.msra.mxu0 %v2565
        %2695 = vmatprep.mubr.bf16.mxu0 %v2336
        %2696 = vmatmul.mubr.bf16.gmra.mrb[0].mxu0 %v2335
        %v2697 = vpop.f32.mrb[0].mxu0
        %v2698 = vadd.f32 0.0, %v2697
        %v2699 = vpop.f32.mrb[0].mxu0
        %v2700 = vadd.f32 0.0, %v2699
        %v2701 = vpop.f32.mrb[0].mxu0
        %v2702 = vpop.f32.mrb[0].mxu0
        %2703 = vdwg.mxu0
        %2704 = vmatprep.subr.bf16.mxu0 %v2568
        %2705 = vmatpush1.bf16.msra.mxu0 %v2567
        %2706 = vmatprep.subr.bf16.mxu0 %v2570
        %2707 = vmatpush1.bf16.msra.mxu0 %v2569
        %2708 = vmatprep.subr.bf16.mxu0 %v2572
        %2709 = vmatpush1.bf16.msra.mxu0 %v2571
        %2710 = vmatprep.subr.bf16.mxu0 %v2574
        %2711 = vmatpush1.bf16.msra.mxu0 %v2573
        %2712 = vmatprep.subr.bf16.mxu0 %v2576
        %2713 = vmatpush1.bf16.msra.mxu0 %v2575
        %2714 = vmatprep.subr.bf16.mxu0 %v2578
        %2715 = vmatpush1.bf16.msra.mxu0 %v2577
        %2716 = vmatprep.subr.bf16.mxu0 %v2580
        %2717 = vmatpush1.bf16.msra.mxu0 %v2579
        %2718 = vmatprep.subr.bf16.mxu0 %v2582
        %2719 = vmatpush1.bf16.msra.mxu0 %v2581
        %2720 = vmatprep.subr.bf16.mxu0 %v2584
        %2721 = vmatpush1.bf16.msra.mxu0 %v2583
        %2722 = vmatprep.subr.bf16.mxu0 %v2586
        %2723 = vmatpush1.bf16.msra.mxu0 %v2585
        %2724 = vmatprep.subr.bf16.mxu0 %v2588
        %2725 = vmatpush1.bf16.msra.mxu0 %v2587
        %2726 = vmatprep.subr.bf16.mxu0 %v2590
        %2727 = vmatpush1.bf16.msra.mxu0 %v2589
        %2728 = vmatprep.subr.bf16.mxu0 %v2592
        %2729 = vmatpush1.bf16.msra.mxu0 %v2591
        %2730 = vmatprep.subr.bf16.mxu0 %v2594
        %2731 = vmatpush1.bf16.msra.mxu0 %v2593
        %2732 = vmatprep.subr.bf16.mxu0 %v2596
        %2733 = vmatpush1.bf16.msra.mxu0 %v2595
        %2734 = vmatprep.subr.bf16.mxu0 %v2598
        %2735 = vmatpush1.bf16.msra.mxu0 %v2597
        %2736 = vmatprep.mubr.bf16.mxu0 %v2338
        %2737 = vmatmul.mubr.bf16.gmra.mrb[0].mxu0 %v2337
        %v2738 = vpop.f32.mrb[0].mxu0
        %v2739 = vadd.f32 %v2698, %v2738
        %v2740 = vpop.f32.mrb[0].mxu0
        %v2741 = vadd.f32 %v2700, %v2740
        %v2742 = vpop.f32.mrb[0].mxu0
        %v2743 = vpop.f32.mrb[0].mxu0
        %2744 = vdwg.mxu0
        %v2745 = vadd.f32 %v2268, %v2739
        %v2746 = vadd.f32 %v2269, %v2741
        %2747 = vst [vmem:[#allocation2] sm:$0xff] %v2745
        %2748 = vst [vmem:[#allocation2 + $0x8] sm:$0xff] %v2746
        %v2749 = vld [vmem:[#allocation2] sm:$0xff]
        %v2750 = vld [vmem:[#allocation2 + $0x8] sm:$0xff]
        %v2751 = vld [vmem:[%s229] sm:$0x3]
        %v2753 = vlaneseq
        %v2754 = vshrl.u32 %v2753, 7
        %v2755 = vsub.s32 0, %v2754
        %v2756 = vrot.slane %v2751, %v2755
        %v2757 = vlaneseq
        %v2758 = vshrl.u32 %v2757, 7
        %v2759 = vsub.s32 1, %v2758
        %v2760 = vrot.slane %v2751, %v2759
        %v2763 = vadd.f32 %v2749, %v2756
        %v2764 = vadd.f32 %v2750, %v2760
        %v2765 = vmax.f32 %v2763, 0.0
        %v2766 = vmax.f32 %v2764, 0.0
        %v2767 = vpack.c.bf16 %v2765, %v2765
        %v2768 = vpack.c.bf16 %v2766, %v2766
        %v2771 = vunpack.c.l.b16 %v2767
        %v2772 = vunpack.c.l.b16 %v2768
        %v2773 = vpack.c.b16 %v2772, %v2771
        %2775 = vst [vmem:[%s289] sm:$0xff] %v2773
        %s2776 = smul.u32 2, %s26
        %p2777 = scmp.lt.s32.totalorder %s25, 1
        %s2778 = scalar_select %p2777, %s25, 1
        %p2779 = scmp.lt.s32.totalorder %s27, 0
        %s2780 = scalar_select %p2779, %s27, 0
        %p2781 = scmp.lt.s32.totalorder %s2776, 3
        %s2782 = scalar_select %p2781, %s2776, 3
        %s2783 = smul.addr %s2780, 4
        %s2784 = sadd.s32 %s2782, %s2783
        %s2785 = smul.addr %s2778, 4
        %s2786 = sadd.s32 %s2784, %s2785
        %s2787 = smul.addr %s2786, 4
        %s2788 = scalar_lea.vmem %s3, %s2787
        // Predicated region
        $region41: #{encoder_forward.8} parent=31 // pred_check
          %p2789 = pneg %p139
        $region42: #{encoder_forward.8} parent=31 // pred_check_branch
          %2791 = sbr.rel (%p2789) target = $region44
        $region43: #{encoder_forward.8} parent=31 // pred_region
          %s2792 = smul.u32 2, %s26
        $region44: #{encoder_forward.8} parent=31 // pred_fallthru
          _
      $region32: #{encoder_forward.8} parent=5 // pred_fallthru
        _
      %p2793 = scmp.le.s32.totalorder 2, %s15
      // Predicated region
      $region45: #{encoder_forward.8} parent=5 // pred_check
        %p2794 = pneg %p2793
      $region46: #{encoder_forward.8} parent=5 // pred_check_branch
        %2796 = sbr.rel (%p2794) target = $region48
      $region47: #{encoder_forward.8} parent=5 // pred_region
        %s2797 = ssub.s32 %s15, 2
        // Predicated region
        $region49: #{encoder_forward.8} parent=47 // pred_check
          %p2798 = pneg %p145
        $region50: #{encoder_forward.8} parent=47 // pred_check_branch
          %2800 = sbr.rel (%p2798) target = $region52
        $region51: #{encoder_forward.8} parent=47 // pred_region
          %s2801 = smul.u32 2, %s29
          %p2802 = scmp.lt.s32.totalorder %s28, 1
          %s2803 = scalar_select %p2802, %s28, 1
          %p2804 = scmp.lt.s32.totalorder %s30, 0
          %s2805 = scalar_select %p2804, %s30, 0
          %p2806 = scmp.lt.s32.totalorder %s2801, 3
          %s2807 = scalar_select %p2806, %s2801, 3
          %s2808 = smul.addr %s2805, 4
          %s2809 = sadd.s32 %s2807, %s2808
          %s2810 = smul.addr %s2803, 4
          %s2811 = sadd.s32 %s2809, %s2810
          %s2812 = smul.addr %s2811, 4
          %s2813 = scalar_lea.vmem %s3, %s2812
        $region52: #{encoder_forward.8} parent=47 // pred_fallthru
          _
      $region48: #{encoder_forward.8} parent=5 // pred_fallthru
        _
    $region6: #{encoder_forward.8} parent=1 // loop_footer
      %s19 = sadd.s32 1, %s15
    $region7: #{encoder_forward.8} parent=1 // loop_footer_branch
      %14 = sbr.rel target = $region3
    $region8: #{encoder_forward.8} parent=1 // loop_exit
      _
    %2814 = vsyncpa [#allocation4], 1
    %s2815 = scalar_lea.sflag [#allocation4], 1
    %2816 = vsyncpa %s2815, 1
    %2817 = vsyncpa [#allocation6], 1
    %s2818 = scalar_lea.sflag [#allocation6], 1
    %2819 = vsyncpa %s2818, 1

// kernel: encoder_forward.12
$region0: #{encoder_forward.12}
  #allocation0 [shape = 'u32[]', space=smem, size = 0x4, offset = 0x4, fixed_abs, tag = 'smem constant byte address 0x4 - core index']
  #allocation1 [shape = 'u32[144,128]{1,0:T(1,128)}', space=vmem, size = 0x12000, scoped, tag = 'internal scratch']
  %s0 = inlined_call_operand.vmem [shape: bf16[16,64], index: 0, kind: input, shape index: {}]
  %s1 = inlined_call_operand.vmem [shape: bf16[64,256], index: 1, kind: input, shape index: {}]
  %s2 = inlined_call_operand.vmem [shape: f32[1,256], index: 2, kind: input, shape index: {}]
  %s3 = inlined_call_operand.vmem [shape: f32[16,256], index: 3, kind: output, shape index: {}]
  %s4 = sld [smem:[#allocation0]]
  $region22: #{encoder_forward.12} parent=0
    _
  %s6 = ssub.s32 1, %s4
  %s7 = scalar_select 0, %s6, %s4
  // Predicated region
  $region2: #{encoder_forward.12} parent=0 // pred_check
    _
  $region3: #{encoder_forward.12} parent=0 // pred_check_branch
    %9 = sbr.rel (0) target = $region5
  $region4: #{encoder_forward.12} parent=0 // pred_region
    _
  $region5: #{encoder_forward.12} parent=0 // pred_fallthru
    _
  // Predicated region
  $region6: #{encoder_forward.12} parent=0 // pred_check
    _
  $region7: #{encoder_forward.12} parent=0 // pred_check_branch
    %11 = sbr.rel (0) target = $region9
  $region8: #{encoder_forward.12} parent=0 // pred_region
    _
  $region9: #{encoder_forward.12} parent=0 // pred_fallthru
    _
  // Predicated region
  $region10: #{encoder_forward.12} parent=0 // pred_check
    _
  $region11: #{encoder_forward.12} parent=0 // pred_check_branch
    %13 = sbr.rel (0) target = $region13
  $region12: #{encoder_forward.12} parent=0 // pred_region
    _
  $region13: #{encoder_forward.12} parent=0 // pred_fallthru
    _
  %v15 = vld [vmem:[%s0] sm:$0xf]
  %v16 = vld [vmem:[%s0 + $0x4] sm:$0xf]
  %v17 = vld [vmem:[%s1] sm:$0xff]
  %v18 = vld [vmem:[%s1 + $0x8] sm:$0xff]
  %v19 = vld [vmem:[%s1 + $0x10] sm:$0xff]
  %v20 = vld [vmem:[%s1 + $0x18] sm:$0xff]
  %v21 = vld [vmem:[%s1 + $0x20] sm:$0xff]
  %v22 = vld [vmem:[%s1 + $0x28] sm:$0xff]
  %v23 = vld [vmem:[%s1 + $0x30] sm:$0xff]
  %v24 = vld [vmem:[%s1 + $0x38] sm:$0xff]
  %v25 = vld [vmem:[%s2] sm:$0x3]
  %v27 = vlaneseq
  %v28 = vshrl.u32 %v27, 7
  %v29 = vsub.s32 0, %v28
  %v30 = vrot.slane %v25, %v29
  %v31 = vlaneseq
  %v32 = vshrl.u32 %v31, 7
  %v33 = vsub.s32 1, %v32
  %v34 = vrot.slane %v25, %v33
  %v39 = vunpack.c.l.b16 %v15
  %v40 = vunpack.c.l.b16 %v16
  %v41 = vpack.c.b16 %v40, %v39
  %v50 = vunpack.c.l.b16 %v17
  %v51 = vunpack.c.h.b16 %v17
  %v52 = vunpack.c.l.b16 %v18
  %v53 = vunpack.c.h.b16 %v18
  %v54 = vunpack.c.l.b16 %v19
  %v55 = vunpack.c.h.b16 %v19
  %v56 = vunpack.c.l.b16 %v20
  %v57 = vunpack.c.h.b16 %v20
  %v58 = vunpack.c.l.b16 %v21
  %v59 = vunpack.c.h.b16 %v21
  %v60 = vunpack.c.l.b16 %v22
  %v61 = vunpack.c.h.b16 %v22
  %v62 = vunpack.c.l.b16 %v23
  %v63 = vunpack.c.h.b16 %v23
  %v64 = vunpack.c.l.b16 %v24
  %v65 = vunpack.c.h.b16 %v24
  %v66 = vpack.c.b16 %v52, %v50
  %v67 = vpack.c.b16 %v53, %v51
  %v68 = vpack.c.b16 %v56, %v54
  %v69 = vpack.c.b16 %v57, %v55
  %v70 = vpack.c.b16 %v60, %v58
  %v71 = vpack.c.b16 %v61, %v59
  %v72 = vpack.c.b16 %v64, %v62
  %v73 = vpack.c.b16 %v65, %v63
  %vm82 = vcmask 523264
  %v84 = vsel %vm82, %v41, 0
  %86 = vmatprep.subr.bf16.mxu0 %v67
  %87 = vmatpush1.bf16.msra.mxu0 %v66
  %88 = vmatprep.subr.bf16.mxu0 %v69
  %89 = vmatpush1.bf16.msra.mxu0 %v68
  %90 = vmatprep.subr.bf16.mxu0 %v71
  %91 = vmatpush1.bf16.msra.mxu0 %v70
  %92 = vmatprep.subr.bf16.mxu0 %v73
  %93 = vmatpush1.bf16.msra.mxu0 %v72
  %94 = vmatprep.subr.bf16.mxu0 0
  %95 = vmatpush1.bf16.msra.mxu0 0
  %96 = vmatprep.subr.bf16.mxu0 0
  %97 = vmatpush1.bf16.msra.mxu0 0
  %98 = vmatprep.subr.bf16.mxu0 0
  %99 = vmatpush1.bf16.msra.mxu0 0
  %100 = vmatprep.subr.bf16.mxu0 0
  %101 = vmatpush1.bf16.msra.mxu0 0
  %102 = vmatprep.subr.bf16.mxu0 0
  %103 = vmatpush1.bf16.msra.mxu0 0
  %104 = vmatprep.subr.bf16.mxu0 0
  %105 = vmatpush1.bf16.msra.mxu0 0
  %106 = vmatprep.subr.bf16.mxu0 0
  %107 = vmatpush1.bf16.msra.mxu0 0
  %108 = vmatprep.subr.bf16.mxu0 0
  %109 = vmatpush1.bf16.msra.mxu0 0
  %110 = vmatprep.subr.bf16.mxu0 0
  %111 = vmatpush1.bf16.msra.mxu0 0
  %112 = vmatprep.subr.bf16.mxu0 0
  %113 = vmatpush1.bf16.msra.mxu0 0
  %114 = vmatprep.subr.bf16.mxu0 0
  %115 = vmatpush1.bf16.msra.mxu0 0
  %116 = vmatprep.subr.bf16.mxu0 0
  %117 = vmatpush1.bf16.msra.mxu0 0
  %118 = vmatprep.mubr.bf16.mxu0 0
  %119 = vmatmul.mubr.bf16.gmra.mrb[0].mxu0 %v84
  %v120 = vpop.f32.mrb[0].mxu0
  %v121 = vadd.f32 %v30, %v120
  %v122 = vpop.f32.mrb[0].mxu0
  %v123 = vadd.f32 %v34, %v122
  %v124 = vpop.f32.mrb[0].mxu0
  %v125 = vadd.f32 %v30, %v124
  %v126 = vpop.f32.mrb[0].mxu0
  %v127 = vadd.f32 %v34, %v126
  %128 = vdwg.mxu0
  %129 = vst [vmem:[%s3] sm:$0xff] %v121
  %130 = vst [vmem:[%s3 + $0x8] sm:$0xff] %v123
  %131 = vst [vmem:[%s3 + $0x10] sm:$0xff] %v125
  %132 = vst [vmem:[%s3 + $0x18] sm:$0xff] %v127
  // Predicated region
  $region14: #{encoder_forward.12} parent=0 // pred_check
    _
  $region15: #{encoder_forward.12} parent=0 // pred_check_branch
    %134 = sbr.rel (0) target = $region17
  $region16: #{encoder_forward.12} parent=0 // pred_region
    _
  $region17: #{encoder_forward.12} parent=0 // pred_fallthru
    _
  // Predicated region
  $region18: #{encoder_forward.12} parent=0 // pred_check
    _
  $region19: #{encoder_forward.12} parent=0 // pred_check_branch
    %136 = sbr.rel (0) target = $region21
  $region20: #{encoder_forward.12} parent=0 // pred_region
    _
  $region21: #{encoder_forward.12} parent=0 // pred_fallthru
    _

// kernel: encoder_forward.9
$region0: #{encoder_forward.9}
  #allocation0 [shape = 'u32[]', space=smem, size = 0x4, offset = 0x4, fixed_abs, tag = 'smem constant byte address 0x4 - core index']
  #allocation1 [shape = 'u32[144,128]{1,0:T(1,128)}', space=vmem, size = 0x12000, scoped, tag = 'internal scratch']
  #allocation2 [shape = 'f32[8,256]{1,0:T(8,128)}', space=vmem, size = 0x2000, scoped, tag = 'scratch operand']
  %s0 = inlined_call_operand.vmem [shape: bf16[2,12,512], index: 0, kind: input, shape index: {}]
  %s1 = inlined_call_operand.vmem [shape: bf16[5,512,512], index: 1, kind: input, shape index: {}]
  %s2 = inlined_call_operand.vmem [shape: f32[1,512], index: 2, kind: input, shape index: {}]
  %s3 = inlined_call_operand.vmem [shape: bf16[2,8,512], index: 3, kind: output, shape index: {}]
  %s4 = sld [smem:[#allocation0]]
  $region83: #{encoder_forward.9} parent=0
    _
  %s6 = ssub.s32 1, %s4
  %s7 = scalar_select 0, %s6, %s4
  $region1: #{encoder_forward.9} parent=0
    #allocation3 [shape = 'u8[2621440]{0}', space=vmem, size = 0x280000, scoped, tag = 'input window, operand 1']
    loop: start=0, step=1, limit=6
    $region2: #{encoder_forward.9} parent=1 // loop_pre_header
      _
    $region3: #{encoder_forward.9} parent=1 // loop_header
      %s9 = sphi 0, %s13
      %p10 = scmp.ge.s32.totalorder %s9, 6
      %s16 = sphi 0, %s35
      %s17 = sphi 0, %s31
      %s18 = sphi 0, %s27
      %s19 = sphi 0, %s16
      %s20 = sphi 0, %s17
      %s21 = sphi 0, %s18
      %s22 = sphi 0, %s19
      %s23 = sphi 0, %s20
      %s24 = sphi 0, %s21
      %s38 = sphi 0, %s40
      %s41 = sphi 0, %s38
      %s42 = sphi 0, %s41
      %s58 = sphi 0, %s42
      %s64 = sphi 0, %s66
      %s67 = sphi 0, %s64
      %s68 = sphi 0, %s67
      %s84 = sphi 0, %s68
      %s90 = sphi 0, %s92
      %s93 = sphi 0, %s90
      %s94 = sphi 0, %s93
      %s110 = sphi 0, %s94
      %s120 = sphi 0, %s122
      %s123 = sphi 0, %s120
      %s124 = sphi 0, %s123
      %s140 = sphi 0, %s124
    $region4: #{encoder_forward.9} parent=1 // loop_header_branch
      %12 = sbr.rel (%p10) target = $region8
    $region5: #{encoder_forward.9} parent=1 // loop_body
      %s14 = ssub.s32 %s9, 1
      %s15 = ssub.s32 %s9, 2
      %s25 = sadd.s32 1, %s18
      %p26 = scmp.ge.s32.totalorder %s25, 1
      %s27 = scalar_select %p26, 0, %s25
      %s28 = sadd.s32 1, %s17
      %s29 = scalar_select %p26, %s28, %s17
      %p30 = scmp.ge.s32.totalorder %s29, 2
      %s31 = scalar_select %p30, 0, %s29
      %s32 = sadd.s32 1, %s16
      %s33 = scalar_select %p30, %s32, %s16
      %p34 = scmp.ge.s32.totalorder %s33, 2
      %s35 = scalar_select %p34, 0, %s33
      %s36 = ssub.s32 %s16, %s35
      %p37 = scmp.eq.s32.totalorder %s36, 0
      %s39 = sadd.s32 %s38, 1
      %s40 = scalar_select %p37, %s38, %s39
      %p43 = pneg %p37
      %p44 = scmp.eq.s32.totalorder %s9, 3
      %p45 = por %p43, %p44
      %p46 = scmp.ne.s32.totalorder %s38, %s41
      %p47 = scmp.eq.s32.totalorder %s9, 0
      %p48 = por %p46, %p47
      %p49 = scmp.ne.s32.totalorder %s38, %s41
      %p50 = scmp.eq.s32.totalorder %s14, 3
      %p51 = por %p49, %p50
      %p52 = scmp.ne.s32.totalorder %s41, %s42
      %p53 = scmp.eq.s32.totalorder %s14, 0
      %p54 = por %p52, %p53
      %p55 = scmp.ne.s32.totalorder %s41, %s42
      %p56 = scmp.eq.s32.totalorder %s15, 3
      %p57 = por %p55, %p56
      %p59 = scmp.ne.s32.totalorder %s42, %s58
      %p60 = scmp.eq.s32.totalorder %s15, 0
      %p61 = por %p59, %p60
      %s62 = ssub.s32 %s17, %s31
      %p63 = scmp.eq.s32.totalorder %s62, 0
      %s65 = sadd.s32 %s64, 1
      %s66 = scalar_select %p63, %s64, %s65
      %p69 = pneg %p63
      %p70 = scmp.eq.s32.totalorder %s9, 3
      %p71 = por %p69, %p70
      %p72 = scmp.ne.s32.totalorder %s64, %s67
      %p73 = scmp.eq.s32.totalorder %s9, 0
      %p74 = por %p72, %p73
      %p75 = scmp.ne.s32.totalorder %s64, %s67
      %p76 = scmp.eq.s32.totalorder %s14, 3
      %p77 = por %p75, %p76
      %p78 = scmp.ne.s32.totalorder %s67, %s68
      %p79 = scmp.eq.s32.totalorder %s14, 0
      %p80 = por %p78, %p79
      %p81 = scmp.ne.s32.totalorder %s67, %s68
      %p82 = scmp.eq.s32.totalorder %s15, 3
      %p83 = por %p81, %p82
      %p85 = scmp.ne.s32.totalorder %s68, %s84
      %p86 = scmp.eq.s32.totalorder %s15, 0
      %p87 = por %p85, %p86
      %s88 = ssub.s32 %s17, %s31
      %p89 = scmp.eq.s32.totalorder %s88, 0
      %s91 = sadd.s32 %s90, 1
      %s92 = scalar_select %p89, %s90, %s91
      %p95 = pneg %p89
      %p96 = scmp.eq.s32.totalorder %s9, 3
      %p97 = por %p95, %p96
      %p98 = scmp.ne.s32.totalorder %s90, %s93
      %p99 = scmp.eq.s32.totalorder %s9, 0
      %p100 = por %p98, %p99
      %p101 = scmp.ne.s32.totalorder %s90, %s93
      %p102 = scmp.eq.s32.totalorder %s14, 3
      %p103 = por %p101, %p102
      %p104 = scmp.ne.s32.totalorder %s93, %s94
      %p105 = scmp.eq.s32.totalorder %s14, 0
      %p106 = por %p104, %p105
      %p107 = scmp.ne.s32.totalorder %s93, %s94
      %p108 = scmp.eq.s32.totalorder %s15, 3
      %p109 = por %p107, %p108
      %p111 = scmp.ne.s32.totalorder %s94, %s110
      %p112 = scmp.eq.s32.totalorder %s15, 0
      %p113 = por %p111, %p112
      %s114 = ssub.s32 %s16, %s35
      %s115 = ssub.s32 %s18, %s27
      %s116 = sor.u32 %s114, %s115
      %s117 = ssub.s32 %s17, %s31
      %s118 = sor.u32 %s116, %s117
      %p119 = scmp.eq.s32.totalorder %s118, 0
      %s121 = sadd.s32 %s120, 1
      %s122 = scalar_select %p119, %s120, %s121
      %p125 = pneg %p119
      %p126 = scmp.eq.s32.totalorder %s9, 3
      %p127 = por %p125, %p126
      %p128 = scmp.ne.s32.totalorder %s120, %s123
      %p129 = scmp.eq.s32.totalorder %s9, 0
      %p130 = por %p128, %p129
      %p131 = scmp.ne.s32.totalorder %s120, %s123
      %p132 = scmp.eq.s32.totalorder %s14, 3
      %p133 = por %p131, %p132
      %p134 = scmp.ne.s32.totalorder %s123, %s124
      %p135 = scmp.eq.s32.totalorder %s14, 0
      %p136 = por %p134, %p135
      %p137 = scmp.ne.s32.totalorder %s123, %s124
      %p138 = scmp.eq.s32.totalorder %s15, 3
      %p139 = por %p137, %p138
      %p141 = scmp.ne.s32.totalorder %s124, %s140
      %p142 = scmp.eq.s32.totalorder %s15, 0
      %p143 = por %p141, %p142
      %p144 = scmp.le.s32.totalorder 1, %s9
      %p145 = scmp.lt.s32.totalorder %s9, 5
      %p146 = pnand %p144, %p145
      %p147 = pneg %p146
      // Predicated region
      $region9: #{encoder_forward.9} parent=5 // pred_check
        _
      $region10: #{encoder_forward.9} parent=5 // pred_check_branch
        %149 = sbr.rel (%p146) target = $region12
      $region11: #{encoder_forward.9} parent=5 // pred_region
        %s150 = ssub.s32 %s9, 1
      $region12: #{encoder_forward.9} parent=5 // pred_fallthru
        _
      %p151 = scmp.lt.s32.totalorder %s9, 4
      // Predicated region
      $region13: #{encoder_forward.9} parent=5 // pred_check
        %p152 = pneg %p151
      $region14: #{encoder_forward.9} parent=5 // pred_check_branch
        %154 = sbr.rel (%p152) target = $region16
      $region15: #{encoder_forward.9} parent=5 // pred_region
        // Predicated region
        $region17: #{encoder_forward.9} parent=15 // pred_check
          %p155 = pneg %p48
        $region18: #{encoder_forward.9} parent=15 // pred_check_branch
          %157 = sbr.rel (%p155) target = $region20
        $region19: #{encoder_forward.9} parent=15 // pred_region
          %p158 = scmp.lt.s32.totalorder %s16, 1
          %s159 = scalar_select %p158, %s16, 1
          %s160 = smul.addr %s159, 8
          %s161 = smul.addr %s160, 4
          %s162 = scalar_lea.vmem %s0, %s161
        $region20: #{encoder_forward.9} parent=15 // pred_fallthru
          _
        // Predicated region
        $region21: #{encoder_forward.9} parent=15 // pred_check
          %p163 = pneg %p74
        $region22: #{encoder_forward.9} parent=15 // pred_check_branch
          %165 = sbr.rel (%p163) target = $region24
        $region23: #{encoder_forward.9} parent=15 // pred_region
          %s166 = sand.u32 %s64, 1
          %s167 = sand.u32 %s64, 1
          %s168 = smul.addr %s167, 2560
          %s169 = scalar_lea.vmem [#allocation3], %s168
          %s170 = smul.u32 2, %s17
          %s171 = smul.addr %s170, 4
          %s172 = scalar_lea.vmem %s1, %s171
          // Predicated region
          $region25: #{encoder_forward.9} parent=23 // pred_check
            _
          $region26: #{encoder_forward.9} parent=23 // pred_check_branch
            %174 = sbr.rel (0) target = $region28
          $region27: #{encoder_forward.9} parent=23 // pred_region
            // Predicated region
            $region29: #{encoder_forward.9} parent=27 // pred_check
              _
            $region30: #{encoder_forward.9} parent=27 // pred_check_branch
              %176 = sbr.rel (0) target = $region32
            $region31: #{encoder_forward.9} parent=27 // pred_region
              // Predicated region
              $region44: #{encoder_forward.9} parent=31 // pred_check
                _
              $region45: #{encoder_forward.9} parent=31 // pred_check_branch
                %829 = sbr.rel (0) target = $region47
              $region46: #{encoder_forward.9} parent=31 // pred_region
                loop: start=0, step=1, limit=1
                $region48: #{encoder_forward.9} parent=46 // loop_pre_header
                  _
                $region49: #{encoder_forward.9} parent=46 // loop_header
                  %s831 = sphi 0, %s835
                  %p832 = scmp.ge.s32.totalorder %s831, 1
                  %s836 = sphi %s172, %s172
                  %s837 = sphi %s169, %s169
                $region50: #{encoder_forward.9} parent=46 // loop_header_branch
                  %834 = sbr.rel (%p832) target = $region54
                $region51: #{encoder_forward.9} parent=46 // loop_body
                  %v838 = vld [vmem:[%s836] sm:$0xff]
                  %839 = vst [vmem:[%s837] sm:$0xff] %v838
                  %v840 = vld [vmem:[%s836 + $0x10] sm:$0xff]
                  %841 = vst [vmem:[%s837 + $0x8] sm:$0xff] %v840
                  %v842 = vld [vmem:[%s836 + $0x20] sm:$0xff]
                  %843 = vst [vmem:[%s837 + $0x10] sm:$0xff] %v842
                  %v844 = vld [vmem:[%s836 + $0x30] sm:$0xff]
                  %845 = vst [vmem:[%s837 + $0x18] sm:$0xff] %v844
                  %v846 = vld [vmem:[%s836 + $0x40] sm:$0xff]
                  %847 = vst [vmem:[%s837 + $0x20] sm:$0xff] %v846
                  %v848 = vld [vmem:[%s836 + $0x50] sm:$0xff]
                  %849 = vst [vmem:[%s837 + $0x28] sm:$0xff] %v848
                  %v850 = vld [vmem:[%s836 + $0x60] sm:$0xff]
                  %851 = vst [vmem:[%s837 + $0x30] sm:$0xff] %v850
                  %v852 = vld [vmem:[%s836 + $0x70] sm:$0xff]
                  %853 = vst [vmem:[%s837 + $0x38] sm:$0xff] %v852
                  %v854 = vld [vmem:[%s836 + $0x80] sm:$0xff]
                  %855 = vst [vmem:[%s837 + $0x40] sm:$0xff] %v854
                  %v856 = vld [vmem:[%s836 + $0x90] sm:$0xff]
                  %857 = vst [vmem:[%s837 + $0x48] sm:$0xff] %v856
                  %v858 = vld [vmem:[%s836 + $0xa0] sm:$0xff]
                  %859 = vst [vmem:[%s837 + $0x50] sm:$0xff] %v858
                  %v860 = vld [vmem:[%s836 + $0xb0] sm:$0xff]
                  %861 = vst [vmem:[%s837 + $0x58] sm:$0xff] %v860
                  %v862 = vld [vmem:[%s836 + $0xc0] sm:$0xff]
                  %863 = vst [vmem:[%s837 + $0x60] sm:$0xff] %v862
                  %v864 = vld [vmem:[%s836 + $0xd0] sm:$0xff]
                  %865 = vst [vmem:[%s837 + $0x68] sm:$0xff] %v864
                  %v866 = vld [vmem:[%s836 + $0xe0] sm:$0xff]
                  %867 = vst [vmem:[%s837 + $0x70] sm:$0xff] %v866
                  %v868 = vld [vmem:[%s836 + $0xf0] sm:$0xff]
                  %869 = vst [vmem:[%s837 + $0x78] sm:$0xff] %v868
                  %v870 = vld [vmem:[%s836 + $0x100] sm:$0xff]
                  %871 = vst [vmem:[%s837 + $0x80] sm:$0xff] %v870
                  %v872 = vld [vmem:[%s836 + $0x110] sm:$0xff]
                  %873 = vst [vmem:[%s837 + $0x88] sm:$0xff] %v872
                  %v874 = vld [vmem:[%s836 + $0x120] sm:$0xff]
                  %875 = vst [vmem:[%s837 + $0x90] sm:$0xff] %v874
                  %v876 = vld [vmem:[%s836 + $0x130] sm:$0xff]
                  %877 = vst [vmem:[%s837 + $0x98] sm:$0xff] %v876
                  %v878 = vld [vmem:[%s836 + $0x140] sm:$0xff]
                  %879 = vst [vmem:[%s837 + $0xa0] sm:$0xff] %v878
                  %v880 = vld [vmem:[%s836 + $0x150] sm:$0xff]
                  %881 = vst [vmem:[%s837 + $0xa8] sm:$0xff] %v880
                  %v882 = vld [vmem:[%s836 + $0x160] sm:$0xff]
                  %883 = vst [vmem:[%s837 + $0xb0] sm:$0xff] %v882
                  %v884 = vld [vmem:[%s836 + $0x170] sm:$0xff]
                  %885 = vst [vmem:[%s837 + $0xb8] sm:$0xff] %v884
                  %v886 = vld [vmem:[%s836 + $0x180] sm:$0xff]
                  %887 = vst [vmem:[%s837 + $0xc0] sm:$0xff] %v886
                  %v888 = vld [vmem:[%s836 + $0x190] sm:$0xff]
                  %889 = vst [vmem:[%s837 + $0xc8] sm:$0xff] %v888
                  %v890 = vld [vmem:[%s836 + $0x1a0] sm:$0xff]
                  %891 = vst [vmem:[%s837 + $0xd0] sm:$0xff] %v890
                  %v892 = vld [vmem:[%s836 + $0x1b0] sm:$0xff]
                  %893 = vst [vmem:[%s837 + $0xd8] sm:$0xff] %v892
                  %v894 = vld [vmem:[%s836 + $0x1c0] sm:$0xff]
                  %895 = vst [vmem:[%s837 + $0xe0] sm:$0xff] %v894
                  %v896 = vld [vmem:[%s836 + $0x1d0] sm:$0xff]
                  %897 = vst [vmem:[%s837 + $0xe8] sm:$0xff] %v896
                  %v898 = vld [vmem:[%s836 + $0x1e0] sm:$0xff]
                  %899 = vst [vmem:[%s837 + $0xf0] sm:$0xff] %v898
                  %v900 = vld [vmem:[%s836 + $0x1f0] sm:$0xff]
                  %901 = vst [vmem:[%s837 + $0xf8] sm:$0xff] %v900
                  %v902 = vld [vmem:[%s836 + $0x200] sm:$0xff]
                  %903 = vst [vmem:[%s837 + $0x100] sm:$0xff] %v902
                  %v904 = vld [vmem:[%s836 + $0x210] sm:$0xff]
                  %905 = vst [vmem:[%s837 + $0x108] sm:$0xff] %v904
                  %v906 = vld [vmem:[%s836 + $0x220] sm:$0xff]
                  %907 = vst [vmem:[%s837 + $0x110] sm:$0xff] %v906
                  %v908 = vld [vmem:[%s836 + $0x230] sm:$0xff]
                  %909 = vst [vmem:[%s837 + $0x118] sm:$0xff] %v908
                  %v910 = vld [vmem:[%s836 + $0x240] sm:$0xff]
                  %911 = vst [vmem:[%s837 + $0x120] sm:$0xff] %v910
                  %v912 = vld [vmem:[%s836 + $0x250] sm:$0xff]
                  %913 = vst [vmem:[%s837 + $0x128] sm:$0xff] %v912
                  %v914 = vld [vmem:[%s836 + $0x260] sm:$0xff]
                  %915 = vst [vmem:[%s837 + $0x130] sm:$0xff] %v914
                  %v916 = vld [vmem:[%s836 + $0x270] sm:$0xff]
                  %917 = vst [vmem:[%s837 + $0x138] sm:$0xff] %v916
                  %v918 = vld [vmem:[%s836 + $0x280] sm:$0xff]
                  %919 = vst [vmem:[%s837 + $0x140] sm:$0xff] %v918
                  %v920 = vld [vmem:[%s836 + $0x290] sm:$0xff]
                  %921 = vst [vmem:[%s837 + $0x148] sm:$0xff] %v920
                  %v922 = vld [vmem:[%s836 + $0x2a0] sm:$0xff]
                  %923 = vst [vmem:[%s837 + $0x150] sm:$0xff] %v922
                  %v924 = vld [vmem:[%s836 + $0x2b0] sm:$0xff]
                  %925 = vst [vmem:[%s837 + $0x158] sm:$0xff] %v924
                  %v926 = vld [vmem:[%s836 + $0x2c0] sm:$0xff]
                  %927 = vst [vmem:[%s837 + $0x160] sm:$0xff] %v926
                  %v928 = vld [vmem:[%s836 + $0x2d0] sm:$0xff]
                  %929 = vst [vmem:[%s837 + $0x168] sm:$0xff] %v928
                  %v930 = vld [vmem:[%s836 + $0x2e0] sm:$0xff]
                  %931 = vst [vmem:[%s837 + $0x170] sm:$0xff] %v930
                  %v932 = vld [vmem:[%s836 + $0x2f0] sm:$0xff]
                  %933 = vst [vmem:[%s837 + $0x178] sm:$0xff] %v932
                  %v934 = vld [vmem:[%s836 + $0x300] sm:$0xff]
                  %935 = vst [vmem:[%s837 + $0x180] sm:$0xff] %v934
                  %v936 = vld [vmem:[%s836 + $0x310] sm:$0xff]
                  %937 = vst [vmem:[%s837 + $0x188] sm:$0xff] %v936
                  %v938 = vld [vmem:[%s836 + $0x320] sm:$0xff]
                  %939 = vst [vmem:[%s837 + $0x190] sm:$0xff] %v938
                  %v940 = vld [vmem:[%s836 + $0x330] sm:$0xff]
                  %941 = vst [vmem:[%s837 + $0x198] sm:$0xff] %v940
                  %v942 = vld [vmem:[%s836 + $0x340] sm:$0xff]
                  %943 = vst [vmem:[%s837 + $0x1a0] sm:$0xff] %v942
                  %v944 = vld [vmem:[%s836 + $0x350] sm:$0xff]
                  %945 = vst [vmem:[%s837 + $0x1a8] sm:$0xff] %v944
                  %v946 = vld [vmem:[%s836 + $0x360] sm:$0xff]
                  %947 = vst [vmem:[%s837 + $0x1b0] sm:$0xff] %v946
                  %v948 = vld [vmem:[%s836 + $0x370] sm:$0xff]
                  %949 = vst [vmem:[%s837 + $0x1b8] sm:$0xff] %v948
                  %v950 = vld [vmem:[%s836 + $0x380] sm:$0xff]
                  %951 = vst [vmem:[%s837 + $0x1c0] sm:$0xff] %v950
                  %v952 = vld [vmem:[%s836 + $0x390] sm:$0xff]
                  %953 = vst [vmem:[%s837 + $0x1c8] sm:$0xff] %v952
                  %v954 = vld [vmem:[%s836 + $0x3a0] sm:$0xff]
                  %955 = vst [vmem:[%s837 + $0x1d0] sm:$0xff] %v954
                  %v956 = vld [vmem:[%s836 + $0x3b0] sm:$0xff]
                  %957 = vst [vmem:[%s837 + $0x1d8] sm:$0xff] %v956
                  %v958 = vld [vmem:[%s836 + $0x3c0] sm:$0xff]
                  %959 = vst [vmem:[%s837 + $0x1e0] sm:$0xff] %v958
                  %v960 = vld [vmem:[%s836 + $0x3d0] sm:$0xff]
                  %961 = vst [vmem:[%s837 + $0x1e8] sm:$0xff] %v960
                  %v962 = vld [vmem:[%s836 + $0x3e0] sm:$0xff]
                  %963 = vst [vmem:[%s837 + $0x1f0] sm:$0xff] %v962
                  %v964 = vld [vmem:[%s836 + $0x3f0] sm:$0xff]
                  %965 = vst [vmem:[%s837 + $0x1f8] sm:$0xff] %v964
                  %v966 = vld [vmem:[%s836 + $0x400] sm:$0xff]
                  %967 = vst [vmem:[%s837 + $0x200] sm:$0xff] %v966
                  %v968 = vld [vmem:[%s836 + $0x410] sm:$0xff]
                  %969 = vst [vmem:[%s837 + $0x208] sm:$0xff] %v968
                  %v970 = vld [vmem:[%s836 + $0x420] sm:$0xff]
                  %971 = vst [vmem:[%s837 + $0x210] sm:$0xff] %v970
                  %v972 = vld [vmem:[%s836 + $0x430] sm:$0xff]
                  %973 = vst [vmem:[%s837 + $0x218] sm:$0xff] %v972
                  %v974 = vld [vmem:[%s836 + $0x440] sm:$0xff]
                  %975 = vst [vmem:[%s837 + $0x220] sm:$0xff] %v974
                  %v976 = vld [vmem:[%s836 + $0x450] sm:$0xff]
                  %977 = vst [vmem:[%s837 + $0x228] sm:$0xff] %v976
                  %v978 = vld [vmem:[%s836 + $0x460] sm:$0xff]
                  %979 = vst [vmem:[%s837 + $0x230] sm:$0xff] %v978
                  %v980 = vld [vmem:[%s836 + $0x470] sm:$0xff]
                  %981 = vst [vmem:[%s837 + $0x238] sm:$0xff] %v980
                  %v982 = vld [vmem:[%s836 + $0x480] sm:$0xff]
                  %983 = vst [vmem:[%s837 + $0x240] sm:$0xff] %v982
                  %v984 = vld [vmem:[%s836 + $0x490] sm:$0xff]
                  %985 = vst [vmem:[%s837 + $0x248] sm:$0xff] %v984
                  %v986 = vld [vmem:[%s836 + $0x4a0] sm:$0xff]
                  %987 = vst [vmem:[%s837 + $0x250] sm:$0xff] %v986
                  %v988 = vld [vmem:[%s836 + $0x4b0] sm:$0xff]
                  %989 = vst [vmem:[%s837 + $0x258] sm:$0xff] %v988
                  %v990 = vld [vmem:[%s836 + $0x4c0] sm:$0xff]
                  %991 = vst [vmem:[%s837 + $0x260] sm:$0xff] %v990
                  %v992 = vld [vmem:[%s836 + $0x4d0] sm:$0xff]
                  %993 = vst [vmem:[%s837 + $0x268] sm:$0xff] %v992
                  %v994 = vld [vmem:[%s836 + $0x4e0] sm:$0xff]
                  %995 = vst [vmem:[%s837 + $0x270] sm:$0xff] %v994
                  %v996 = vld [vmem:[%s836 + $0x4f0] sm:$0xff]
                  %997 = vst [vmem:[%s837 + $0x278] sm:$0xff] %v996
                  %v998 = vld [vmem:[%s836 + $0x500] sm:$0xff]
                  %999 = vst [vmem:[%s837 + $0x280] sm:$0xff] %v998
                  %v1000 = vld [vmem:[%s836 + $0x510] sm:$0xff]
                  %1001 = vst [vmem:[%s837 + $0x288] sm:$0xff] %v1000
                  %v1002 = vld [vmem:[%s836 + $0x520] sm:$0xff]
                  %1003 = vst [vmem:[%s837 + $0x290] sm:$0xff] %v1002
                  %v1004 = vld [vmem:[%s836 + $0x530] sm:$0xff]
                  %1005 = vst [vmem:[%s837 + $0x298] sm:$0xff] %v1004
                  %v1006 = vld [vmem:[%s836 + $0x540] sm:$0xff]
                  %1007 = vst [vmem:[%s837 + $0x2a0] sm:$0xff] %v1006
                  %v1008 = vld [vmem:[%s836 + $0x550] sm:$0xff]
                  %1009 = vst [vmem:[%s837 + $0x2a8] sm:$0xff] %v1008
                  %v1010 = vld [vmem:[%s836 + $0x560] sm:$0xff]
                  %1011 = vst [vmem:[%s837 + $0x2b0] sm:$0xff] %v1010
                  %v1012 = vld [vmem:[%s836 + $0x570] sm:$0xff]
                  %1013 = vst [vmem:[%s837 + $0x2b8] sm:$0xff] %v1012
                  %v1014 = vld [vmem:[%s836 + $0x580] sm:$0xff]
                  %1015 = vst [vmem:[%s837 + $0x2c0] sm:$0xff] %v1014
                  %v1016 = vld [vmem:[%s836 + $0x590] sm:$0xff]
                  %1017 = vst [vmem:[%s837 + $0x2c8] sm:$0xff] %v1016
                  %v1018 = vld [vmem:[%s836 + $0x5a0] sm:$0xff]
                  %1019 = vst [vmem:[%s837 + $0x2d0] sm:$0xff] %v1018
                  %v1020 = vld [vmem:[%s836 + $0x5b0] sm:$0xff]
                  %1021 = vst [vmem:[%s837 + $0x2d8] sm:$0xff] %v1020
                  %v1022 = vld [vmem:[%s836 + $0x5c0] sm:$0xff]
                  %1023 = vst [vmem:[%s837 + $0x2e0] sm:$0xff] %v1022
                  %v1024 = vld [vmem:[%s836 + $0x5d0] sm:$0xff]
                  %1025 = vst [vmem:[%s837 + $0x2e8] sm:$0xff] %v1024
                  %v1026 = vld [vmem:[%s836 + $0x5e0] sm:$0xff]
                  %1027 = vst [vmem:[%s837 + $0x2f0] sm:$0xff] %v1026
                  %v1028 = vld [vmem:[%s836 + $0x5f0] sm:$0xff]
                  %1029 = vst [vmem:[%s837 + $0x2f8] sm:$0xff] %v1028
                  %v1030 = vld [vmem:[%s836 + $0x600] sm:$0xff]
                  %1031 = vst [vmem:[%s837 + $0x300] sm:$0xff] %v1030
                  %v1032 = vld [vmem:[%s836 + $0x610] sm:$0xff]
                  %1033 = vst [vmem:[%s837 + $0x308] sm:$0xff] %v1032
                  %v1034 = vld [vmem:[%s836 + $0x620] sm:$0xff]
                  %1035 = vst [vmem:[%s837 + $0x310] sm:$0xff] %v1034
                  %v1036 = vld [vmem:[%s836 + $0x630] sm:$0xff]
                  %1037 = vst [vmem:[%s837 + $0x318] sm:$0xff] %v1036
                  %v1038 = vld [vmem:[%s836 + $0x640] sm:$0xff]
                  %1039 = vst [vmem:[%s837 + $0x320] sm:$0xff] %v1038
                  %v1040 = vld [vmem:[%s836 + $0x650] sm:$0xff]
                  %1041 = vst [vmem:[%s837 + $0x328] sm:$0xff] %v1040
                  %v1042 = vld [vmem:[%s836 + $0x660] sm:$0xff]
                  %1043 = vst [vmem:[%s837 + $0x330] sm:$0xff] %v1042
                  %v1044 = vld [vmem:[%s836 + $0x670] sm:$0xff]
                  %1045 = vst [vmem:[%s837 + $0x338] sm:$0xff] %v1044
                  %v1046 = vld [vmem:[%s836 + $0x680] sm:$0xff]
                  %1047 = vst [vmem:[%s837 + $0x340] sm:$0xff] %v1046
                  %v1048 = vld [vmem:[%s836 + $0x690] sm:$0xff]
                  %1049 = vst [vmem:[%s837 + $0x348] sm:$0xff] %v1048
                  %v1050 = vld [vmem:[%s836 + $0x6a0] sm:$0xff]
                  %1051 = vst [vmem:[%s837 + $0x350] sm:$0xff] %v1050
                  %v1052 = vld [vmem:[%s836 + $0x6b0] sm:$0xff]
                  %1053 = vst [vmem:[%s837 + $0x358] sm:$0xff] %v1052
                  %v1054 = vld [vmem:[%s836 + $0x6c0] sm:$0xff]
                  %1055 = vst [vmem:[%s837 + $0x360] sm:$0xff] %v1054
                  %v1056 = vld [vmem:[%s836 + $0x6d0] sm:$0xff]
                  %1057 = vst [vmem:[%s837 + $0x368] sm:$0xff] %v1056
                  %v1058 = vld [vmem:[%s836 + $0x6e0] sm:$0xff]
                  %1059 = vst [vmem:[%s837 + $0x370] sm:$0xff] %v1058
                  %v1060 = vld [vmem:[%s836 + $0x6f0] sm:$0xff]
                  %1061 = vst [vmem:[%s837 + $0x378] sm:$0xff] %v1060
                  %v1062 = vld [vmem:[%s836 + $0x700] sm:$0xff]
                  %1063 = vst [vmem:[%s837 + $0x380] sm:$0xff] %v1062
                  %v1064 = vld [vmem:[%s836 + $0x710] sm:$0xff]
                  %1065 = vst [vmem:[%s837 + $0x388] sm:$0xff] %v1064
                  %v1066 = vld [vmem:[%s836 + $0x720] sm:$0xff]
                  %1067 = vst [vmem:[%s837 + $0x390] sm:$0xff] %v1066
                  %v1068 = vld [vmem:[%s836 + $0x730] sm:$0xff]
                  %1069 = vst [vmem:[%s837 + $0x398] sm:$0xff] %v1068
                  %v1070 = vld [vmem:[%s836 + $0x740] sm:$0xff]
                  %1071 = vst [vmem:[%s837 + $0x3a0] sm:$0xff] %v1070
                  %v1072 = vld [vmem:[%s836 + $0x750] sm:$0xff]
                  %1073 = vst [vmem:[%s837 + $0x3a8] sm:$0xff] %v1072
                  %v1074 = vld [vmem:[%s836 + $0x760] sm:$0xff]
                  %1075 = vst [vmem:[%s837 + $0x3b0] sm:$0xff] %v1074
                  %v1076 = vld [vmem:[%s836 + $0x770] sm:$0xff]
                  %1077 = vst [vmem:[%s837 + $0x3b8] sm:$0xff] %v1076
                  %v1078 = vld [vmem:[%s836 + $0x780] sm:$0xff]
                  %1079 = vst [vmem:[%s837 + $0x3c0] sm:$0xff] %v1078
                  %v1080 = vld [vmem:[%s836 + $0x790] sm:$0xff]
                  %1081 = vst [vmem:[%s837 + $0x3c8] sm:$0xff] %v1080
                  %v1082 = vld [vmem:[%s836 + $0x7a0] sm:$0xff]
                  %1083 = vst [vmem:[%s837 + $0x3d0] sm:$0xff] %v1082
                  %v1084 = vld [vmem:[%s836 + $0x7b0] sm:$0xff]
                  %1085 = vst [vmem:[%s837 + $0x3d8] sm:$0xff] %v1084
                  %v1086 = vld [vmem:[%s836 + $0x7c0] sm:$0xff]
                  %1087 = vst [vmem:[%s837 + $0x3e0] sm:$0xff] %v1086
                  %v1088 = vld [vmem:[%s836 + $0x7d0] sm:$0xff]
                  %1089 = vst [vmem:[%s837 + $0x3e8] sm:$0xff] %v1088
                  %v1090 = vld [vmem:[%s836 + $0x7e0] sm:$0xff]
                  %1091 = vst [vmem:[%s837 + $0x3f0] sm:$0xff] %v1090
                  %v1092 = vld [vmem:[%s836 + $0x7f0] sm:$0xff]
                  %1093 = vst [vmem:[%s837 + $0x3f8] sm:$0xff] %v1092
                  %v1094 = vld [vmem:[%s836 + $0x800] sm:$0xff]
                  %1095 = vst [vmem:[%s837 + $0x400] sm:$0xff] %v1094
                  %v1096 = vld [vmem:[%s836 + $0x810] sm:$0xff]
                  %1097 = vst [vmem:[%s837 + $0x408] sm:$0xff] %v1096
                  %v1098 = vld [vmem:[%s836 + $0x820] sm:$0xff]
                  %1099 = vst [vmem:[%s837 + $0x410] sm:$0xff] %v1098
                  %v1100 = vld [vmem:[%s836 + $0x830] sm:$0xff]
                  %1101 = vst [vmem:[%s837 + $0x418] sm:$0xff] %v1100
                  %v1102 = vld [vmem:[%s836 + $0x840] sm:$0xff]
                  %1103 = vst [vmem:[%s837 + $0x420] sm:$0xff] %v1102
                  %v1104 = vld [vmem:[%s836 + $0x850] sm:$0xff]
                  %1105 = vst [vmem:[%s837 + $0x428] sm:$0xff] %v1104
                  %v1106 = vld [vmem:[%s836 + $0x860] sm:$0xff]
                  %1107 = vst [vmem:[%s837 + $0x430] sm:$0xff] %v1106
                  %v1108 = vld [vmem:[%s836 + $0x870] sm:$0xff]
                  %1109 = vst [vmem:[%s837 + $0x438] sm:$0xff] %v1108
                  %v1110 = vld [vmem:[%s836 + $0x880] sm:$0xff]
                  %1111 = vst [vmem:[%s837 + $0x440] sm:$0xff] %v1110
                  %v1112 = vld [vmem:[%s836 + $0x890] sm:$0xff]
                  %1113 = vst [vmem:[%s837 + $0x448] sm:$0xff] %v1112
                  %v1114 = vld [vmem:[%s836 + $0x8a0] sm:$0xff]
                  %1115 = vst [vmem:[%s837 + $0x450] sm:$0xff] %v1114
                  %v1116 = vld [vmem:[%s836 + $0x8b0] sm:$0xff]
                  %1117 = vst [vmem:[%s837 + $0x458] sm:$0xff] %v1116
                  %v1118 = vld [vmem:[%s836 + $0x8c0] sm:$0xff]
                  %1119 = vst [vmem:[%s837 + $0x460] sm:$0xff] %v1118
                  %v1120 = vld [vmem:[%s836 + $0x8d0] sm:$0xff]
                  %1121 = vst [vmem:[%s837 + $0x468] sm:$0xff] %v1120
                  %v1122 = vld [vmem:[%s836 + $0x8e0] sm:$0xff]
                  %1123 = vst [vmem:[%s837 + $0x470] sm:$0xff] %v1122
                  %v1124 = vld [vmem:[%s836 + $0x8f0] sm:$0xff]
                  %1125 = vst [vmem:[%s837 + $0x478] sm:$0xff] %v1124
                  %v1126 = vld [vmem:[%s836 + $0x900] sm:$0xff]
                  %1127 = vst [vmem:[%s837 + $0x480] sm:$0xff] %v1126
                  %v1128 = vld [vmem:[%s836 + $0x910] sm:$0xff]
                  %1129 = vst [vmem:[%s837 + $0x488] sm:$0xff] %v1128
                  %v1130 = vld [vmem:[%s836 + $0x920] sm:$0xff]
                  %1131 = vst [vmem:[%s837 + $0x490] sm:$0xff] %v1130
                  %v1132 = vld [vmem:[%s836 + $0x930] sm:$0xff]
                  %1133 = vst [vmem:[%s837 + $0x498] sm:$0xff] %v1132
                  %v1134 = vld [vmem:[%s836 + $0x940] sm:$0xff]
                  %1135 = vst [vmem:[%s837 + $0x4a0] sm:$0xff] %v1134
                  %v1136 = vld [vmem:[%s836 + $0x950] sm:$0xff]
                  %1137 = vst [vmem:[%s837 + $0x4a8] sm:$0xff] %v1136
                  %v1138 = vld [vmem:[%s836 + $0x960] sm:$0xff]
                  %1139 = vst [vmem:[%s837 + $0x4b0] sm:$0xff] %v1138
                  %v1140 = vld [vmem:[%s836 + $0x970] sm:$0xff]
                  %1141 = vst [vmem:[%s837 + $0x4b8] sm:$0xff] %v1140
                  %v1142 = vld [vmem:[%s836 + $0x980] sm:$0xff]
                  %1143 = vst [vmem:[%s837 + $0x4c0] sm:$0xff] %v1142
                  %v1144 = vld [vmem:[%s836 + $0x990] sm:$0xff]
                  %1145 = vst [vmem:[%s837 + $0x4c8] sm:$0xff] %v1144
                  %v1146 = vld [vmem:[%s836 + $0x9a0] sm:$0xff]
                  %1147 = vst [vmem:[%s837 + $0x4d0] sm:$0xff] %v1146
                  %v1148 = vld [vmem:[%s836 + $0x9b0] sm:$0xff]
                  %1149 = vst [vmem:[%s837 + $0x4d8] sm:$0xff] %v1148
                  %v1150 = vld [vmem:[%s836 + $0x9c0] sm:$0xff]
                  %1151 = vst [vmem:[%s837 + $0x4e0] sm:$0xff] %v1150
                  %v1152 = vld [vmem:[%s836 + $0x9d0] sm:$0xff]
                  %1153 = vst [vmem:[%s837 + $0x4e8] sm:$0xff] %v1152
                  %v1154 = vld [vmem:[%s836 + $0x9e0] sm:$0xff]
                  %1155 = vst [vmem:[%s837 + $0x4f0] sm:$0xff] %v1154
                  %v1156 = vld [vmem:[%s836 + $0x9f0] sm:$0xff]
                  %1157 = vst [vmem:[%s837 + $0x4f8] sm:$0xff] %v1156
                  %v1158 = vld [vmem:[%s836 + $0xa00] sm:$0xff]
                  %1159 = vst [vmem:[%s837 + $0x500] sm:$0xff] %v1158
                  %v1160 = vld [vmem:[%s836 + $0xa10] sm:$0xff]
                  %1161 = vst [vmem:[%s837 + $0x508] sm:$0xff] %v1160
                  %v1162 = vld [vmem:[%s836 + $0xa20] sm:$0xff]
                  %1163 = vst [vmem:[%s837 + $0x510] sm:$0xff] %v1162
                  %v1164 = vld [vmem:[%s836 + $0xa30] sm:$0xff]
                  %1165 = vst [vmem:[%s837 + $0x518] sm:$0xff] %v1164
                  %v1166 = vld [vmem:[%s836 + $0xa40] sm:$0xff]
                  %1167 = vst [vmem:[%s837 + $0x520] sm:$0xff] %v1166
                  %v1168 = vld [vmem:[%s836 + $0xa50] sm:$0xff]
                  %1169 = vst [vmem:[%s837 + $0x528] sm:$0xff] %v1168
                  %v1170 = vld [vmem:[%s836 + $0xa60] sm:$0xff]
                  %1171 = vst [vmem:[%s837 + $0x530] sm:$0xff] %v1170
                  %v1172 = vld [vmem:[%s836 + $0xa70] sm:$0xff]
                  %1173 = vst [vmem:[%s837 + $0x538] sm:$0xff] %v1172
                  %v1174 = vld [vmem:[%s836 + $0xa80] sm:$0xff]
                  %1175 = vst [vmem:[%s837 + $0x540] sm:$0xff] %v1174
                  %v1176 = vld [vmem:[%s836 + $0xa90] sm:$0xff]
                  %1177 = vst [vmem:[%s837 + $0x548] sm:$0xff] %v1176
                  %v1178 = vld [vmem:[%s836 + $0xaa0] sm:$0xff]
                  %1179 = vst [vmem:[%s837 + $0x550] sm:$0xff] %v1178
                  %v1180 = vld [vmem:[%s836 + $0xab0] sm:$0xff]
                  %1181 = vst [vmem:[%s837 + $0x558] sm:$0xff] %v1180
                  %v1182 = vld [vmem:[%s836 + $0xac0] sm:$0xff]
                  %1183 = vst [vmem:[%s837 + $0x560] sm:$0xff] %v1182
                  %v1184 = vld [vmem:[%s836 + $0xad0] sm:$0xff]
                  %1185 = vst [vmem:[%s837 + $0x568] sm:$0xff] %v1184
                  %v1186 = vld [vmem:[%s836 + $0xae0] sm:$0xff]
                  %1187 = vst [vmem:[%s837 + $0x570] sm:$0xff] %v1186
                  %v1188 = vld [vmem:[%s836 + $0xaf0] sm:$0xff]
                  %1189 = vst [vmem:[%s837 + $0x578] sm:$0xff] %v1188
                  %v1190 = vld [vmem:[%s836 + $0xb00] sm:$0xff]
                  %1191 = vst [vmem:[%s837 + $0x580] sm:$0xff] %v1190
                  %v1192 = vld [vmem:[%s836 + $0xb10] sm:$0xff]
                  %1193 = vst [vmem:[%s837 + $0x588] sm:$0xff] %v1192
                  %v1194 = vld [vmem:[%s836 + $0xb20] sm:$0xff]
                  %1195 = vst [vmem:[%s837 + $0x590] sm:$0xff] %v1194
                  %v1196 = vld [vmem:[%s836 + $0xb30] sm:$0xff]
                  %1197 = vst [vmem:[%s837 + $0x598] sm:$0xff] %v1196
                  %v1198 = vld [vmem:[%s836 + $0xb40] sm:$0xff]
                  %1199 = vst [vmem:[%s837 + $0x5a0] sm:$0xff] %v1198
                  %v1200 = vld [vmem:[%s836 + $0xb50] sm:$0xff]
                  %1201 = vst [vmem:[%s837 + $0x5a8] sm:$0xff] %v1200
                  %v1202 = vld [vmem:[%s836 + $0xb60] sm:$0xff]
                  %1203 = vst [vmem:[%s837 + $0x5b0] sm:$0xff] %v1202
                  %v1204 = vld [vmem:[%s836 + $0xb70] sm:$0xff]
                  %1205 = vst [vmem:[%s837 + $0x5b8] sm:$0xff] %v1204
                  %v1206 = vld [vmem:[%s836 + $0xb80] sm:$0xff]
                  %1207 = vst [vmem:[%s837 + $0x5c0] sm:$0xff] %v1206
                  %v1208 = vld [vmem:[%s836 + $0xb90] sm:$0xff]
                  %1209 = vst [vmem:[%s837 + $0x5c8] sm:$0xff] %v1208
                  %v1210 = vld [vmem:[%s836 + $0xba0] sm:$0xff]
                  %1211 = vst [vmem:[%s837 + $0x5d0] sm:$0xff] %v1210
                  %v1212 = vld [vmem:[%s836 + $0xbb0] sm:$0xff]
                  %1213 = vst [vmem:[%s837 + $0x5d8] sm:$0xff] %v1212
                  %v1214 = vld [vmem:[%s836 + $0xbc0] sm:$0xff]
                  %1215 = vst [vmem:[%s837 + $0x5e0] sm:$0xff] %v1214
                  %v1216 = vld [vmem:[%s836 + $0xbd0] sm:$0xff]
                  %1217 = vst [vmem:[%s837 + $0x5e8] sm:$0xff] %v1216
                  %v1218 = vld [vmem:[%s836 + $0xbe0] sm:$0xff]
                  %1219 = vst [vmem:[%s837 + $0x5f0] sm:$0xff] %v1218
                  %v1220 = vld [vmem:[%s836 + $0xbf0] sm:$0xff]
                  %1221 = vst [vmem:[%s837 + $0x5f8] sm:$0xff] %v1220
                  %v1222 = vld [vmem:[%s836 + $0xc00] sm:$0xff]
                  %1223 = vst [vmem:[%s837 + $0x600] sm:$0xff] %v1222
                  %v1224 = vld [vmem:[%s836 + $0xc10] sm:$0xff]
                  %1225 = vst [vmem:[%s837 + $0x608] sm:$0xff] %v1224
                  %v1226 = vld [vmem:[%s836 + $0xc20] sm:$0xff]
                  %1227 = vst [vmem:[%s837 + $0x610] sm:$0xff] %v1226
                  %v1228 = vld [vmem:[%s836 + $0xc30] sm:$0xff]
                  %1229 = vst [vmem:[%s837 + $0x618] sm:$0xff] %v1228
                  %v1230 = vld [vmem:[%s836 + $0xc40] sm:$0xff]
                  %1231 = vst [vmem:[%s837 + $0x620] sm:$0xff] %v1230
                  %v1232 = vld [vmem:[%s836 + $0xc50] sm:$0xff]
                  %1233 = vst [vmem:[%s837 + $0x628] sm:$0xff] %v1232
                  %v1234 = vld [vmem:[%s836 + $0xc60] sm:$0xff]
                  %1235 = vst [vmem:[%s837 + $0x630] sm:$0xff] %v1234
                  %v1236 = vld [vmem:[%s836 + $0xc70] sm:$0xff]
                  %1237 = vst [vmem:[%s837 + $0x638] sm:$0xff] %v1236
                  %v1238 = vld [vmem:[%s836 + $0xc80] sm:$0xff]
                  %1239 = vst [vmem:[%s837 + $0x640] sm:$0xff] %v1238
                  %v1240 = vld [vmem:[%s836 + $0xc90] sm:$0xff]
                  %1241 = vst [vmem:[%s837 + $0x648] sm:$0xff] %v1240
                  %v1242 = vld [vmem:[%s836 + $0xca0] sm:$0xff]
                  %1243 = vst [vmem:[%s837 + $0x650] sm:$0xff] %v1242
                  %v1244 = vld [vmem:[%s836 + $0xcb0] sm:$0xff]
                  %1245 = vst [vmem:[%s837 + $0x658] sm:$0xff] %v1244
                  %v1246 = vld [vmem:[%s836 + $0xcc0] sm:$0xff]
                  %1247 = vst [vmem:[%s837 + $0x660] sm:$0xff] %v1246
                  %v1248 = vld [vmem:[%s836 + $0xcd0] sm:$0xff]
                  %1249 = vst [vmem:[%s837 + $0x668] sm:$0xff] %v1248
                  %v1250 = vld [vmem:[%s836 + $0xce0] sm:$0xff]
                  %1251 = vst [vmem:[%s837 + $0x670] sm:$0xff] %v1250
                  %v1252 = vld [vmem:[%s836 + $0xcf0] sm:$0xff]
                  %1253 = vst [vmem:[%s837 + $0x678] sm:$0xff] %v1252
                  %v1254 = vld [vmem:[%s836 + $0xd00] sm:$0xff]
                  %1255 = vst [vmem:[%s837 + $0x680] sm:$0xff] %v1254
                  %v1256 = vld [vmem:[%s836 + $0xd10] sm:$0xff]
                  %1257 = vst [vmem:[%s837 + $0x688] sm:$0xff] %v1256
                  %v1258 = vld [vmem:[%s836 + $0xd20] sm:$0xff]
                  %1259 = vst [vmem:[%s837 + $0x690] sm:$0xff] %v1258
                  %v1260 = vld [vmem:[%s836 + $0xd30] sm:$0xff]
                  %1261 = vst [vmem:[%s837 + $0x698] sm:$0xff] %v1260
                  %v1262 = vld [vmem:[%s836 + $0xd40] sm:$0xff]
                  %1263 = vst [vmem:[%s837 + $0x6a0] sm:$0xff] %v1262
                  %v1264 = vld [vmem:[%s836 + $0xd50] sm:$0xff]
                  %1265 = vst [vmem:[%s837 + $0x6a8] sm:$0xff] %v1264
                  %v1266 = vld [vmem:[%s836 + $0xd60] sm:$0xff]
                  %1267 = vst [vmem:[%s837 + $0x6b0] sm:$0xff] %v1266
                  %v1268 = vld [vmem:[%s836 + $0xd70] sm:$0xff]
                  %1269 = vst [vmem:[%s837 + $0x6b8] sm:$0xff] %v1268
                  %v1270 = vld [vmem:[%s836 + $0xd80] sm:$0xff]
                  %1271 = vst [vmem:[%s837 + $0x6c0] sm:$0xff] %v1270
                  %v1272 = vld [vmem:[%s836 + $0xd90] sm:$0xff]
                  %1273 = vst [vmem:[%s837 + $0x6c8] sm:$0xff] %v1272
                  %v1274 = vld [vmem:[%s836 + $0xda0] sm:$0xff]
                  %1275 = vst [vmem:[%s837 + $0x6d0] sm:$0xff] %v1274
                  %v1276 = vld [vmem:[%s836 + $0xdb0] sm:$0xff]
                  %1277 = vst [vmem:[%s837 + $0x6d8] sm:$0xff] %v1276
                  %v1278 = vld [vmem:[%s836 + $0xdc0] sm:$0xff]
                  %1279 = vst [vmem:[%s837 + $0x6e0] sm:$0xff] %v1278
                  %v1280 = vld [vmem:[%s836 + $0xdd0] sm:$0xff]
                  %1281 = vst [vmem:[%s837 + $0x6e8] sm:$0xff] %v1280
                  %v1282 = vld [vmem:[%s836 + $0xde0] sm:$0xff]
                  %1283 = vst [vmem:[%s837 + $0x6f0] sm:$0xff] %v1282
                  %v1284 = vld [vmem:[%s836 + $0xdf0] sm:$0xff]
                  %1285 = vst [vmem:[%s837 + $0x6f8] sm:$0xff] %v1284
                  %v1286 = vld [vmem:[%s836 + $0xe00] sm:$0xff]
                  %1287 = vst [vmem:[%s837 + $0x700] sm:$0xff] %v1286
                  %v1288 = vld [vmem:[%s836 + $0xe10] sm:$0xff]
                  %1289 = vst [vmem:[%s837 + $0x708] sm:$0xff] %v1288
                  %v1290 = vld [vmem:[%s836 + $0xe20] sm:$0xff]
                  %1291 = vst [vmem:[%s837 + $0x710] sm:$0xff] %v1290
                  %v1292 = vld [vmem:[%s836 + $0xe30] sm:$0xff]
                  %1293 = vst [vmem:[%s837 + $0x718] sm:$0xff] %v1292
                  %v1294 = vld [vmem:[%s836 + $0xe40] sm:$0xff]
                  %1295 = vst [vmem:[%s837 + $0x720] sm:$0xff] %v1294
                  %v1296 = vld [vmem:[%s836 + $0xe50] sm:$0xff]
                  %1297 = vst [vmem:[%s837 + $0x728] sm:$0xff] %v1296
                  %v1298 = vld [vmem:[%s836 + $0xe60] sm:$0xff]
                  %1299 = vst [vmem:[%s837 + $0x730] sm:$0xff] %v1298
                  %v1300 = vld [vmem:[%s836 + $0xe70] sm:$0xff]
                  %1301 = vst [vmem:[%s837 + $0x738] sm:$0xff] %v1300
                  %v1302 = vld [vmem:[%s836 + $0xe80] sm:$0xff]
                  %1303 = vst [vmem:[%s837 + $0x740] sm:$0xff] %v1302
                  %v1304 = vld [vmem:[%s836 + $0xe90] sm:$0xff]
                  %1305 = vst [vmem:[%s837 + $0x748] sm:$0xff] %v1304
                  %v1306 = vld [vmem:[%s836 + $0xea0] sm:$0xff]
                  %1307 = vst [vmem:[%s837 + $0x750] sm:$0xff] %v1306
                  %v1308 = vld [vmem:[%s836 + $0xeb0] sm:$0xff]
                  %1309 = vst [vmem:[%s837 + $0x758] sm:$0xff] %v1308
                  %v1310 = vld [vmem:[%s836 + $0xec0] sm:$0xff]
                  %1311 = vst [vmem:[%s837 + $0x760] sm:$0xff] %v1310
                  %v1312 = vld [vmem:[%s836 + $0xed0] sm:$0xff]
                  %1313 = vst [vmem:[%s837 + $0x768] sm:$0xff] %v1312
                  %v1314 = vld [vmem:[%s836 + $0xee0] sm:$0xff]
                  %1315 = vst [vmem:[%s837 + $0x770] sm:$0xff] %v1314
                  %v1316 = vld [vmem:[%s836 + $0xef0] sm:$0xff]
                  %1317 = vst [vmem:[%s837 + $0x778] sm:$0xff] %v1316
                  %v1318 = vld [vmem:[%s836 + $0xf00] sm:$0xff]
                  %1319 = vst [vmem:[%s837 + $0x780] sm:$0xff] %v1318
                  %v1320 = vld [vmem:[%s836 + $0xf10] sm:$0xff]
                  %1321 = vst [vmem:[%s837 + $0x788] sm:$0xff] %v1320
                  %v1322 = vld [vmem:[%s836 + $0xf20] sm:$0xff]
                  %1323 = vst [vmem:[%s837 + $0x790] sm:$0xff] %v1322
                  %v1324 = vld [vmem:[%s836 + $0xf30] sm:$0xff]
                  %1325 = vst [vmem:[%s837 + $0x798] sm:$0xff] %v1324
                  %v1326 = vld [vmem:[%s836 + $0xf40] sm:$0xff]
                  %1327 = vst [vmem:[%s837 + $0x7a0] sm:$0xff] %v1326
                  %v1328 = vld [vmem:[%s836 + $0xf50] sm:$0xff]
                  %1329 = vst [vmem:[%s837 + $0x7a8] sm:$0xff] %v1328
                  %v1330 = vld [vmem:[%s836 + $0xf60] sm:$0xff]
                  %1331 = vst [vmem:[%s837 + $0x7b0] sm:$0xff] %v1330
                  %v1332 = vld [vmem:[%s836 + $0xf70] sm:$0xff]
                  %1333 = vst [vmem:[%s837 + $0x7b8] sm:$0xff] %v1332
                  %v1334 = vld [vmem:[%s836 + $0xf80] sm:$0xff]
                  %1335 = vst [vmem:[%s837 + $0x7c0] sm:$0xff] %v1334
                  %v1336 = vld [vmem:[%s836 + $0xf90] sm:$0xff]
                  %1337 = vst [vmem:[%s837 + $0x7c8] sm:$0xff] %v1336
                  %v1338 = vld [vmem:[%s836 + $0xfa0] sm:$0xff]
                  %1339 = vst [vmem:[%s837 + $0x7d0] sm:$0xff] %v1338
                  %v1340 = vld [vmem:[%s836 + $0xfb0] sm:$0xff]
                  %1341 = vst [vmem:[%s837 + $0x7d8] sm:$0xff] %v1340
                  %v1342 = vld [vmem:[%s836 + $0xfc0] sm:$0xff]
                  %1343 = vst [vmem:[%s837 + $0x7e0] sm:$0xff] %v1342
                  %v1344 = vld [vmem:[%s836 + $0xfd0] sm:$0xff]
                  %1345 = vst [vmem:[%s837 + $0x7e8] sm:$0xff] %v1344
                  %v1346 = vld [vmem:[%s836 + $0xfe0] sm:$0xff]
                  %1347 = vst [vmem:[%s837 + $0x7f0] sm:$0xff] %v1346
                  %v1348 = vld [vmem:[%s836 + $0xff0] sm:$0xff]
                  %1349 = vst [vmem:[%s837 + $0x7f8] sm:$0xff] %v1348
                  %v1350 = vld [vmem:[%s836 + $0x1000] sm:$0xff]
                  %1351 = vst [vmem:[%s837 + $0x800] sm:$0xff] %v1350
                  %v1352 = vld [vmem:[%s836 + $0x1010] sm:$0xff]
                  %1353 = vst [vmem:[%s837 + $0x808] sm:$0xff] %v1352
                  %v1354 = vld [vmem:[%s836 + $0x1020] sm:$0xff]
                  %1355 = vst [vmem:[%s837 + $0x810] sm:$0xff] %v1354
                  %v1356 = vld [vmem:[%s836 + $0x1030] sm:$0xff]
                  %1357 = vst [vmem:[%s837 + $0x818] sm:$0xff] %v1356
                  %v1358 = vld [vmem:[%s836 + $0x1040] sm:$0xff]
                  %1359 = vst [vmem:[%s837 + $0x820] sm:$0xff] %v1358
                  %v1360 = vld [vmem:[%s836 + $0x1050] sm:$0xff]
                  %1361 = vst [vmem:[%s837 + $0x828] sm:$0xff] %v1360
                  %v1362 = vld [vmem:[%s836 + $0x1060] sm:$0xff]
                  %1363 = vst [vmem:[%s837 + $0x830] sm:$0xff] %v1362
                  %v1364 = vld [vmem:[%s836 + $0x1070] sm:$0xff]
                  %1365 = vst [vmem:[%s837 + $0x838] sm:$0xff] %v1364
                  %v1366 = vld [vmem:[%s836 + $0x1080] sm:$0xff]
                  %1367 = vst [vmem:[%s837 + $0x840] sm:$0xff] %v1366
                  %v1368 = vld [vmem:[%s836 + $0x1090] sm:$0xff]
                  %1369 = vst [vmem:[%s837 + $0x848] sm:$0xff] %v1368
                  %v1370 = vld [vmem:[%s836 + $0x10a0] sm:$0xff]
                  %1371 = vst [vmem:[%s837 + $0x850] sm:$0xff] %v1370
                  %v1372 = vld [vmem:[%s836 + $0x10b0] sm:$0xff]
                  %1373 = vst [vmem:[%s837 + $0x858] sm:$0xff] %v1372
                  %v1374 = vld [vmem:[%s836 + $0x10c0] sm:$0xff]
                  %1375 = vst [vmem:[%s837 + $0x860] sm:$0xff] %v1374
                  %v1376 = vld [vmem:[%s836 + $0x10d0] sm:$0xff]
                  %1377 = vst [vmem:[%s837 + $0x868] sm:$0xff] %v1376
                  %v1378 = vld [vmem:[%s836 + $0x10e0] sm:$0xff]
                  %1379 = vst [vmem:[%s837 + $0x870] sm:$0xff] %v1378
                  %v1380 = vld [vmem:[%s836 + $0x10f0] sm:$0xff]
                  %1381 = vst [vmem:[%s837 + $0x878] sm:$0xff] %v1380
                  %v1382 = vld [vmem:[%s836 + $0x1100] sm:$0xff]
                  %1383 = vst [vmem:[%s837 + $0x880] sm:$0xff] %v1382
                  %v1384 = vld [vmem:[%s836 + $0x1110] sm:$0xff]
                  %1385 = vst [vmem:[%s837 + $0x888] sm:$0xff] %v1384
                  %v1386 = vld [vmem:[%s836 + $0x1120] sm:$0xff]
                  %1387 = vst [vmem:[%s837 + $0x890] sm:$0xff] %v1386
                  %v1388 = vld [vmem:[%s836 + $0x1130] sm:$0xff]
                  %1389 = vst [vmem:[%s837 + $0x898] sm:$0xff] %v1388
                  %v1390 = vld [vmem:[%s836 + $0x1140] sm:$0xff]
                  %1391 = vst [vmem:[%s837 + $0x8a0] sm:$0xff] %v1390
                  %v1392 = vld [vmem:[%s836 + $0x1150] sm:$0xff]
                  %1393 = vst [vmem:[%s837 + $0x8a8] sm:$0xff] %v1392
                  %v1394 = vld [vmem:[%s836 + $0x1160] sm:$0xff]
                  %1395 = vst [vmem:[%s837 + $0x8b0] sm:$0xff] %v1394
                  %v1396 = vld [vmem:[%s836 + $0x1170] sm:$0xff]
                  %1397 = vst [vmem:[%s837 + $0x8b8] sm:$0xff] %v1396
                  %v1398 = vld [vmem:[%s836 + $0x1180] sm:$0xff]
                  %1399 = vst [vmem:[%s837 + $0x8c0] sm:$0xff] %v1398
                  %v1400 = vld [vmem:[%s836 + $0x1190] sm:$0xff]
                  %1401 = vst [vmem:[%s837 + $0x8c8] sm:$0xff] %v1400
                  %v1402 = vld [vmem:[%s836 + $0x11a0] sm:$0xff]
                  %1403 = vst [vmem:[%s837 + $0x8d0] sm:$0xff] %v1402
                  %v1404 = vld [vmem:[%s836 + $0x11b0] sm:$0xff]
                  %1405 = vst [vmem:[%s837 + $0x8d8] sm:$0xff] %v1404
                  %v1406 = vld [vmem:[%s836 + $0x11c0] sm:$0xff]
                  %1407 = vst [vmem:[%s837 + $0x8e0] sm:$0xff] %v1406
                  %v1408 = vld [vmem:[%s836 + $0x11d0] sm:$0xff]
                  %1409 = vst [vmem:[%s837 + $0x8e8] sm:$0xff] %v1408
                  %v1410 = vld [vmem:[%s836 + $0x11e0] sm:$0xff]
                  %1411 = vst [vmem:[%s837 + $0x8f0] sm:$0xff] %v1410
                  %v1412 = vld [vmem:[%s836 + $0x11f0] sm:$0xff]
                  %1413 = vst [vmem:[%s837 + $0x8f8] sm:$0xff] %v1412
                  %v1414 = vld [vmem:[%s836 + $0x1200] sm:$0xff]
                  %1415 = vst [vmem:[%s837 + $0x900] sm:$0xff] %v1414
                  %v1416 = vld [vmem:[%s836 + $0x1210] sm:$0xff]
                  %1417 = vst [vmem:[%s837 + $0x908] sm:$0xff] %v1416
                  %v1418 = vld [vmem:[%s836 + $0x1220] sm:$0xff]
                  %1419 = vst [vmem:[%s837 + $0x910] sm:$0xff] %v1418
                  %v1420 = vld [vmem:[%s836 + $0x1230] sm:$0xff]
                  %1421 = vst [vmem:[%s837 + $0x918] sm:$0xff] %v1420
                  %v1422 = vld [vmem:[%s836 + $0x1240] sm:$0xff]
                  %1423 = vst [vmem:[%s837 + $0x920] sm:$0xff] %v1422
                  %v1424 = vld [vmem:[%s836 + $0x1250] sm:$0xff]
                  %1425 = vst [vmem:[%s837 + $0x928] sm:$0xff] %v1424
                  %v1426 = vld [vmem:[%s836 + $0x1260] sm:$0xff]
                  %1427 = vst [vmem:[%s837 + $0x930] sm:$0xff] %v1426
                  %v1428 = vld [vmem:[%s836 + $0x1270] sm:$0xff]
                  %1429 = vst [vmem:[%s837 + $0x938] sm:$0xff] %v1428
                  %v1430 = vld [vmem:[%s836 + $0x1280] sm:$0xff]
                  %1431 = vst [vmem:[%s837 + $0x940] sm:$0xff] %v1430
                  %v1432 = vld [vmem:[%s836 + $0x1290] sm:$0xff]
                  %1433 = vst [vmem:[%s837 + $0x948] sm:$0xff] %v1432
                  %v1434 = vld [vmem:[%s836 + $0x12a0] sm:$0xff]
                  %1435 = vst [vmem:[%s837 + $0x950] sm:$0xff] %v1434
                  %v1436 = vld [vmem:[%s836 + $0x12b0] sm:$0xff]
                  %1437 = vst [vmem:[%s837 + $0x958] sm:$0xff] %v1436
                  %v1438 = vld [vmem:[%s836 + $0x12c0] sm:$0xff]
                  %1439 = vst [vmem:[%s837 + $0x960] sm:$0xff] %v1438
                  %v1440 = vld [vmem:[%s836 + $0x12d0] sm:$0xff]
                  %1441 = vst [vmem:[%s837 + $0x968] sm:$0xff] %v1440
                  %v1442 = vld [vmem:[%s836 + $0x12e0] sm:$0xff]
                  %1443 = vst [vmem:[%s837 + $0x970] sm:$0xff] %v1442
                  %v1444 = vld [vmem:[%s836 + $0x12f0] sm:$0xff]
                  %1445 = vst [vmem:[%s837 + $0x978] sm:$0xff] %v1444
                  %v1446 = vld [vmem:[%s836 + $0x1300] sm:$0xff]
                  %1447 = vst [vmem:[%s837 + $0x980] sm:$0xff] %v1446
                  %v1448 = vld [vmem:[%s836 + $0x1310] sm:$0xff]
                  %1449 = vst [vmem:[%s837 + $0x988] sm:$0xff] %v1448
                  %v1450 = vld [vmem:[%s836 + $0x1320] sm:$0xff]
                  %1451 = vst [vmem:[%s837 + $0x990] sm:$0xff] %v1450
                  %v1452 = vld [vmem:[%s836 + $0x1330] sm:$0xff]
                  %1453 = vst [vmem:[%s837 + $0x998] sm:$0xff] %v1452
                  %v1454 = vld [vmem:[%s836 + $0x1340] sm:$0xff]
                  %1455 = vst [vmem:[%s837 + $0x9a0] sm:$0xff] %v1454
                  %v1456 = vld [vmem:[%s836 + $0x1350] sm:$0xff]
                  %1457 = vst [vmem:[%s837 + $0x9a8] sm:$0xff] %v1456
                  %v1458 = vld [vmem:[%s836 + $0x1360] sm:$0xff]
                  %1459 = vst [vmem:[%s837 + $0x9b0] sm:$0xff] %v1458
                  %v1460 = vld [vmem:[%s836 + $0x1370] sm:$0xff]
                  %1461 = vst [vmem:[%s837 + $0x9b8] sm:$0xff] %v1460
                  %v1462 = vld [vmem:[%s836 + $0x1380] sm:$0xff]
                  %1463 = vst [vmem:[%s837 + $0x9c0] sm:$0xff] %v1462
                  %v1464 = vld [vmem:[%s836 + $0x1390] sm:$0xff]
                  %1465 = vst [vmem:[%s837 + $0x9c8] sm:$0xff] %v1464
                  %v1466 = vld [vmem:[%s836 + $0x13a0] sm:$0xff]
                  %1467 = vst [vmem:[%s837 + $0x9d0] sm:$0xff] %v1466
                  %v1468 = vld [vmem:[%s836 + $0x13b0] sm:$0xff]
                  %1469 = vst [vmem:[%s837 + $0x9d8] sm:$0xff] %v1468
                  %v1470 = vld [vmem:[%s836 + $0x13c0] sm:$0xff]
                  %1471 = vst [vmem:[%s837 + $0x9e0] sm:$0xff] %v1470
                  %v1472 = vld [vmem:[%s836 + $0x13d0] sm:$0xff]
                  %1473 = vst [vmem:[%s837 + $0x9e8] sm:$0xff] %v1472
                  %v1474 = vld [vmem:[%s836 + $0x13e0] sm:$0xff]
                  %1475 = vst [vmem:[%s837 + $0x9f0] sm:$0xff] %v1474
                  %v1476 = vld [vmem:[%s836 + $0x13f0] sm:$0xff]
                  %1477 = vst [vmem:[%s837 + $0x9f8] sm:$0xff] %v1476
                $region52: #{encoder_forward.9} parent=46 // loop_footer
                  %s835 = sadd.s32 1, %s831
                $region53: #{encoder_forward.9} parent=46 // loop_footer_branch
                  %830 = sbr.rel target = $region49
                $region54: #{encoder_forward.9} parent=46 // loop_exit
                  _
              $region47: #{encoder_forward.9} parent=31 // pred_fallthru
                _
              // Predicated region
              $region55: #{encoder_forward.9} parent=31 // pred_check
                _
              $region56: #{encoder_forward.9} parent=31 // pred_check_branch
                %1479 = sbr.rel target = $region58
              $region57: #{encoder_forward.9} parent=31 // pred_region
                _
              $region58: #{encoder_forward.9} parent=31 // pred_fallthru
                _
            $region32: #{encoder_forward.9} parent=27 // pred_fallthru
              _
            // Predicated region
            $region33: #{encoder_forward.9} parent=27 // pred_check
              _
            $region34: #{encoder_forward.9} parent=27 // pred_check_branch
              %178 = sbr.rel target = $region36
            $region35: #{encoder_forward.9} parent=27 // pred_region
              loop: start=0, step=1, limit=1
              $region37: #{encoder_forward.9} parent=35 // loop_pre_header
                _
              $region38: #{encoder_forward.9} parent=35 // loop_header
                %s181 = sphi 0, %s185
                %p182 = scmp.ge.s32.totalorder %s181, 1
                %s186 = sphi %s172, %s172
                %s187 = sphi %s169, %s169
              $region39: #{encoder_forward.9} parent=35 // loop_header_branch
                %184 = sbr.rel (%p182) target = $region43
              $region40: #{encoder_forward.9} parent=35 // loop_body
                %v188 = vld [vmem:[%s186] sm:$0xff]
                %189 = vst [vmem:[%s187] sm:$0xff] %v188
                %v190 = vld [vmem:[%s186 + $0x10] sm:$0xff]
                %191 = vst [vmem:[%s187 + $0x8] sm:$0xff] %v190
                %v192 = vld [vmem:[%s186 + $0x20] sm:$0xff]
                %193 = vst [vmem:[%s187 + $0x10] sm:$0xff] %v192
                %v194 = vld [vmem:[%s186 + $0x30] sm:$0xff]
                %195 = vst [vmem:[%s187 + $0x18] sm:$0xff] %v194
                %v196 = vld [vmem:[%s186 + $0x40] sm:$0xff]
                %197 = vst [vmem:[%s187 + $0x20] sm:$0xff] %v196
                %v198 = vld [vmem:[%s186 + $0x50] sm:$0xff]
                %199 = vst [vmem:[%s187 + $0x28] sm:$0xff] %v198
                %v200 = vld [vmem:[%s186 + $0x60] sm:$0xff]
                %201 = vst [vmem:[%s187 + $0x30] sm:$0xff] %v200
                %v202 = vld [vmem:[%s186 + $0x70] sm:$0xff]
                %203 = vst [vmem:[%s187 + $0x38] sm:$0xff] %v202
                %v204 = vld [vmem:[%s186 + $0x80] sm:$0xff]
                %205 = vst [vmem:[%s187 + $0x40] sm:$0xff] %v204
                %v206 = vld [vmem:[%s186 + $0x90] sm:$0xff]
                %207 = vst [vmem:[%s187 + $0x48] sm:$0xff] %v206
                %v208 = vld [vmem:[%s186 + $0xa0] sm:$0xff]
                %209 = vst [vmem:[%s187 + $0x50] sm:$0xff] %v208
                %v210 = vld [vmem:[%s186 + $0xb0] sm:$0xff]
                %211 = vst [vmem:[%s187 + $0x58] sm:$0xff] %v210
                %v212 = vld [vmem:[%s186 + $0xc0] sm:$0xff]
                %213 = vst [vmem:[%s187 + $0x60] sm:$0xff] %v212
                %v214 = vld [vmem:[%s186 + $0xd0] sm:$0xff]
                %215 = vst [vmem:[%s187 + $0x68] sm:$0xff] %v214
                %v216 = vld [vmem:[%s186 + $0xe0] sm:$0xff]
                %217 = vst [vmem:[%s187 + $0x70] sm:$0xff] %v216
                %v218 = vld [vmem:[%s186 + $0xf0] sm:$0xff]
                %219 = vst [vmem:[%s187 + $0x78] sm:$0xff] %v218
                %v220 = vld [vmem:[%s186 + $0x100] sm:$0xff]
                %221 = vst [vmem:[%s187 + $0x80] sm:$0xff] %v220
                %v222 = vld [vmem:[%s186 + $0x110] sm:$0xff]
                %223 = vst [vmem:[%s187 + $0x88] sm:$0xff] %v222
                %v224 = vld [vmem:[%s186 + $0x120] sm:$0xff]
                %225 = vst [vmem:[%s187 + $0x90] sm:$0xff] %v224
                %v226 = vld [vmem:[%s186 + $0x130] sm:$0xff]
                %227 = vst [vmem:[%s187 + $0x98] sm:$0xff] %v226
                %v228 = vld [vmem:[%s186 + $0x140] sm:$0xff]
                %229 = vst [vmem:[%s187 + $0xa0] sm:$0xff] %v228
                %v230 = vld [vmem:[%s186 + $0x150] sm:$0xff]
                %231 = vst [vmem:[%s187 + $0xa8] sm:$0xff] %v230
                %v232 = vld [vmem:[%s186 + $0x160] sm:$0xff]
                %233 = vst [vmem:[%s187 + $0xb0] sm:$0xff] %v232
                %v234 = vld [vmem:[%s186 + $0x170] sm:$0xff]
                %235 = vst [vmem:[%s187 + $0xb8] sm:$0xff] %v234
                %v236 = vld [vmem:[%s186 + $0x180] sm:$0xff]
                %237 = vst [vmem:[%s187 + $0xc0] sm:$0xff] %v236
                %v238 = vld [vmem:[%s186 + $0x190] sm:$0xff]
                %239 = vst [vmem:[%s187 + $0xc8] sm:$0xff] %v238
                %v240 = vld [vmem:[%s186 + $0x1a0] sm:$0xff]
                %241 = vst [vmem:[%s187 + $0xd0] sm:$0xff] %v240
                %v242 = vld [vmem:[%s186 + $0x1b0] sm:$0xff]
                %243 = vst [vmem:[%s187 + $0xd8] sm:$0xff] %v242
                %v244 = vld [vmem:[%s186 + $0x1c0] sm:$0xff]
                %245 = vst [vmem:[%s187 + $0xe0] sm:$0xff] %v244
                %v246 = vld [vmem:[%s186 + $0x1d0] sm:$0xff]
                %247 = vst [vmem:[%s187 + $0xe8] sm:$0xff] %v246
                %v248 = vld [vmem:[%s186 + $0x1e0] sm:$0xff]
                %249 = vst [vmem:[%s187 + $0xf0] sm:$0xff] %v248
                %v250 = vld [vmem:[%s186 + $0x1f0] sm:$0xff]
                %251 = vst [vmem:[%s187 + $0xf8] sm:$0xff] %v250
                %v252 = vld [vmem:[%s186 + $0x200] sm:$0xff]
                %253 = vst [vmem:[%s187 + $0x100] sm:$0xff] %v252
                %v254 = vld [vmem:[%s186 + $0x210] sm:$0xff]
                %255 = vst [vmem:[%s187 + $0x108] sm:$0xff] %v254
                %v256 = vld [vmem:[%s186 + $0x220] sm:$0xff]
                %257 = vst [vmem:[%s187 + $0x110] sm:$0xff] %v256
                %v258 = vld [vmem:[%s186 + $0x230] sm:$0xff]
                %259 = vst [vmem:[%s187 + $0x118] sm:$0xff] %v258
                %v260 = vld [vmem:[%s186 + $0x240] sm:$0xff]
                %261 = vst [vmem:[%s187 + $0x120] sm:$0xff] %v260
                %v262 = vld [vmem:[%s186 + $0x250] sm:$0xff]
                %263 = vst [vmem:[%s187 + $0x128] sm:$0xff] %v262
                %v264 = vld [vmem:[%s186 + $0x260] sm:$0xff]
                %265 = vst [vmem:[%s187 + $0x130] sm:$0xff] %v264
                %v266 = vld [vmem:[%s186 + $0x270] sm:$0xff]
                %267 = vst [vmem:[%s187 + $0x138] sm:$0xff] %v266
                %v268 = vld [vmem:[%s186 + $0x280] sm:$0xff]
                %269 = vst [vmem:[%s187 + $0x140] sm:$0xff] %v268
                %v270 = vld [vmem:[%s186 + $0x290] sm:$0xff]
                %271 = vst [vmem:[%s187 + $0x148] sm:$0xff] %v270
                %v272 = vld [vmem:[%s186 + $0x2a0] sm:$0xff]
                %273 = vst [vmem:[%s187 + $0x150] sm:$0xff] %v272
                %v274 = vld [vmem:[%s186 + $0x2b0] sm:$0xff]
                %275 = vst [vmem:[%s187 + $0x158] sm:$0xff] %v274
                %v276 = vld [vmem:[%s186 + $0x2c0] sm:$0xff]
                %277 = vst [vmem:[%s187 + $0x160] sm:$0xff] %v276
                %v278 = vld [vmem:[%s186 + $0x2d0] sm:$0xff]
                %279 = vst [vmem:[%s187 + $0x168] sm:$0xff] %v278
                %v280 = vld [vmem:[%s186 + $0x2e0] sm:$0xff]
                %281 = vst [vmem:[%s187 + $0x170] sm:$0xff] %v280
                %v282 = vld [vmem:[%s186 + $0x2f0] sm:$0xff]
                %283 = vst [vmem:[%s187 + $0x178] sm:$0xff] %v282
                %v284 = vld [vmem:[%s186 + $0x300] sm:$0xff]
                %285 = vst [vmem:[%s187 + $0x180] sm:$0xff] %v284
                %v286 = vld [vmem:[%s186 + $0x310] sm:$0xff]
                %287 = vst [vmem:[%s187 + $0x188] sm:$0xff] %v286
                %v288 = vld [vmem:[%s186 + $0x320] sm:$0xff]
                %289 = vst [vmem:[%s187 + $0x190] sm:$0xff] %v288
                %v290 = vld [vmem:[%s186 + $0x330] sm:$0xff]
                %291 = vst [vmem:[%s187 + $0x198] sm:$0xff] %v290
                %v292 = vld [vmem:[%s186 + $0x340] sm:$0xff]
                %293 = vst [vmem:[%s187 + $0x1a0] sm:$0xff] %v292
                %v294 = vld [vmem:[%s186 + $0x350] sm:$0xff]
                %295 = vst [vmem:[%s187 + $0x1a8] sm:$0xff] %v294
                %v296 = vld [vmem:[%s186 + $0x360] sm:$0xff]
                %297 = vst [vmem:[%s187 + $0x1b0] sm:$0xff] %v296
                %v298 = vld [vmem:[%s186 + $0x370] sm:$0xff]
                %299 = vst [vmem:[%s187 + $0x1b8] sm:$0xff] %v298
                %v300 = vld [vmem:[%s186 + $0x380] sm:$0xff]
                %301 = vst [vmem:[%s187 + $0x1c0] sm:$0xff] %v300
                %v302 = vld [vmem:[%s186 + $0x390] sm:$0xff]
                %303 = vst [vmem:[%s187 + $0x1c8] sm:$0xff] %v302
                %v304 = vld [vmem:[%s186 + $0x3a0] sm:$0xff]
                %305 = vst [vmem:[%s187 + $0x1d0] sm:$0xff] %v304
                %v306 = vld [vmem:[%s186 + $0x3b0] sm:$0xff]
                %307 = vst [vmem:[%s187 + $0x1d8] sm:$0xff] %v306
                %v308 = vld [vmem:[%s186 + $0x3c0] sm:$0xff]
                %309 = vst [vmem:[%s187 + $0x1e0] sm:$0xff] %v308
                %v310 = vld [vmem:[%s186 + $0x3d0] sm:$0xff]
                %311 = vst [vmem:[%s187 + $0x1e8] sm:$0xff] %v310
                %v312 = vld [vmem:[%s186 + $0x3e0] sm:$0xff]
                %313 = vst [vmem:[%s187 + $0x1f0] sm:$0xff] %v312
                %v314 = vld [vmem:[%s186 + $0x3f0] sm:$0xff]
                %315 = vst [vmem:[%s187 + $0x1f8] sm:$0xff] %v314
                %v316 = vld [vmem:[%s186 + $0x400] sm:$0xff]
                %317 = vst [vmem:[%s187 + $0x200] sm:$0xff] %v316
                %v318 = vld [vmem:[%s186 + $0x410] sm:$0xff]
                %319 = vst [vmem:[%s187 + $0x208] sm:$0xff] %v318
                %v320 = vld [vmem:[%s186 + $0x420] sm:$0xff]
                %321 = vst [vmem:[%s187 + $0x210] sm:$0xff] %v320
                %v322 = vld [vmem:[%s186 + $0x430] sm:$0xff]
                %323 = vst [vmem:[%s187 + $0x218] sm:$0xff] %v322
                %v324 = vld [vmem:[%s186 + $0x440] sm:$0xff]
                %325 = vst [vmem:[%s187 + $0x220] sm:$0xff] %v324
                %v326 = vld [vmem:[%s186 + $0x450] sm:$0xff]
                %327 = vst [vmem:[%s187 + $0x228] sm:$0xff] %v326
                %v328 = vld [vmem:[%s186 + $0x460] sm:$0xff]
                %329 = vst [vmem:[%s187 + $0x230] sm:$0xff] %v328
                %v330 = vld [vmem:[%s186 + $0x470] sm:$0xff]
                %331 = vst [vmem:[%s187 + $0x238] sm:$0xff] %v330
                %v332 = vld [vmem:[%s186 + $0x480] sm:$0xff]
                %333 = vst [vmem:[%s187 + $0x240] sm:$0xff] %v332
                %v334 = vld [vmem:[%s186 + $0x490] sm:$0xff]
                %335 = vst [vmem:[%s187 + $0x248] sm:$0xff] %v334
                %v336 = vld [vmem:[%s186 + $0x4a0] sm:$0xff]
                %337 = vst [vmem:[%s187 + $0x250] sm:$0xff] %v336
                %v338 = vld [vmem:[%s186 + $0x4b0] sm:$0xff]
                %339 = vst [vmem:[%s187 + $0x258] sm:$0xff] %v338
                %v340 = vld [vmem:[%s186 + $0x4c0] sm:$0xff]
                %341 = vst [vmem:[%s187 + $0x260] sm:$0xff] %v340
                %v342 = vld [vmem:[%s186 + $0x4d0] sm:$0xff]
                %343 = vst [vmem:[%s187 + $0x268] sm:$0xff] %v342
                %v344 = vld [vmem:[%s186 + $0x4e0] sm:$0xff]
                %345 = vst [vmem:[%s187 + $0x270] sm:$0xff] %v344
                %v346 = vld [vmem:[%s186 + $0x4f0] sm:$0xff]
                %347 = vst [vmem:[%s187 + $0x278] sm:$0xff] %v346
                %v348 = vld [vmem:[%s186 + $0x500] sm:$0xff]
                %349 = vst [vmem:[%s187 + $0x280] sm:$0xff] %v348
                %v350 = vld [vmem:[%s186 + $0x510] sm:$0xff]
                %351 = vst [vmem:[%s187 + $0x288] sm:$0xff] %v350
                %v352 = vld [vmem:[%s186 + $0x520] sm:$0xff]
                %353 = vst [vmem:[%s187 + $0x290] sm:$0xff] %v352
                %v354 = vld [vmem:[%s186 + $0x530] sm:$0xff]
                %355 = vst [vmem:[%s187 + $0x298] sm:$0xff] %v354
                %v356 = vld [vmem:[%s186 + $0x540] sm:$0xff]
                %357 = vst [vmem:[%s187 + $0x2a0] sm:$0xff] %v356
                %v358 = vld [vmem:[%s186 + $0x550] sm:$0xff]
                %359 = vst [vmem:[%s187 + $0x2a8] sm:$0xff] %v358
                %v360 = vld [vmem:[%s186 + $0x560] sm:$0xff]
                %361 = vst [vmem:[%s187 + $0x2b0] sm:$0xff] %v360
                %v362 = vld [vmem:[%s186 + $0x570] sm:$0xff]
                %363 = vst [vmem:[%s187 + $0x2b8] sm:$0xff] %v362
                %v364 = vld [vmem:[%s186 + $0x580] sm:$0xff]
                %365 = vst [vmem:[%s187 + $0x2c0] sm:$0xff] %v364
                %v366 = vld [vmem:[%s186 + $0x590] sm:$0xff]
                %367 = vst [vmem:[%s187 + $0x2c8] sm:$0xff] %v366
                %v368 = vld [vmem:[%s186 + $0x5a0] sm:$0xff]
                %369 = vst [vmem:[%s187 + $0x2d0] sm:$0xff] %v368
                %v370 = vld [vmem:[%s186 + $0x5b0] sm:$0xff]
                %371 = vst [vmem:[%s187 + $0x2d8] sm:$0xff] %v370
                %v372 = vld [vmem:[%s186 + $0x5c0] sm:$0xff]
                %373 = vst [vmem:[%s187 + $0x2e0] sm:$0xff] %v372
                %v374 = vld [vmem:[%s186 + $0x5d0] sm:$0xff]
                %375 = vst [vmem:[%s187 + $0x2e8] sm:$0xff] %v374
                %v376 = vld [vmem:[%s186 + $0x5e0] sm:$0xff]
                %377 = vst [vmem:[%s187 + $0x2f0] sm:$0xff] %v376
                %v378 = vld [vmem:[%s186 + $0x5f0] sm:$0xff]
                %379 = vst [vmem:[%s187 + $0x2f8] sm:$0xff] %v378
                %v380 = vld [vmem:[%s186 + $0x600] sm:$0xff]
                %381 = vst [vmem:[%s187 + $0x300] sm:$0xff] %v380
                %v382 = vld [vmem:[%s186 + $0x610] sm:$0xff]
                %383 = vst [vmem:[%s187 + $0x308] sm:$0xff] %v382
                %v384 = vld [vmem:[%s186 + $0x620] sm:$0xff]
                %385 = vst [vmem:[%s187 + $0x310] sm:$0xff] %v384
                %v386 = vld [vmem:[%s186 + $0x630] sm:$0xff]
                %387 = vst [vmem:[%s187 + $0x318] sm:$0xff] %v386
                %v388 = vld [vmem:[%s186 + $0x640] sm:$0xff]
                %389 = vst [vmem:[%s187 + $0x320] sm:$0xff] %v388
                %v390 = vld [vmem:[%s186 + $0x650] sm:$0xff]
                %391 = vst [vmem:[%s187 + $0x328] sm:$0xff] %v390
                %v392 = vld [vmem:[%s186 + $0x660] sm:$0xff]
                %393 = vst [vmem:[%s187 + $0x330] sm:$0xff] %v392
                %v394 = vld [vmem:[%s186 + $0x670] sm:$0xff]
                %395 = vst [vmem:[%s187 + $0x338] sm:$0xff] %v394
                %v396 = vld [vmem:[%s186 + $0x680] sm:$0xff]
                %397 = vst [vmem:[%s187 + $0x340] sm:$0xff] %v396
                %v398 = vld [vmem:[%s186 + $0x690] sm:$0xff]
                %399 = vst [vmem:[%s187 + $0x348] sm:$0xff] %v398
                %v400 = vld [vmem:[%s186 + $0x6a0] sm:$0xff]
                %401 = vst [vmem:[%s187 + $0x350] sm:$0xff] %v400
                %v402 = vld [vmem:[%s186 + $0x6b0] sm:$0xff]
                %403 = vst [vmem:[%s187 + $0x358] sm:$0xff] %v402
                %v404 = vld [vmem:[%s186 + $0x6c0] sm:$0xff]
                %405 = vst [vmem:[%s187 + $0x360] sm:$0xff] %v404
                %v406 = vld [vmem:[%s186 + $0x6d0] sm:$0xff]
                %407 = vst [vmem:[%s187 + $0x368] sm:$0xff] %v406
                %v408 = vld [vmem:[%s186 + $0x6e0] sm:$0xff]
                %409 = vst [vmem:[%s187 + $0x370] sm:$0xff] %v408
                %v410 = vld [vmem:[%s186 + $0x6f0] sm:$0xff]
                %411 = vst [vmem:[%s187 + $0x378] sm:$0xff] %v410
                %v412 = vld [vmem:[%s186 + $0x700] sm:$0xff]
                %413 = vst [vmem:[%s187 + $0x380] sm:$0xff] %v412
                %v414 = vld [vmem:[%s186 + $0x710] sm:$0xff]
                %415 = vst [vmem:[%s187 + $0x388] sm:$0xff] %v414
                %v416 = vld [vmem:[%s186 + $0x720] sm:$0xff]
                %417 = vst [vmem:[%s187 + $0x390] sm:$0xff] %v416
                %v418 = vld [vmem:[%s186 + $0x730] sm:$0xff]
                %419 = vst [vmem:[%s187 + $0x398] sm:$0xff] %v418
                %v420 = vld [vmem:[%s186 + $0x740] sm:$0xff]
                %421 = vst [vmem:[%s187 + $0x3a0] sm:$0xff] %v420
                %v422 = vld [vmem:[%s186 + $0x750] sm:$0xff]
                %423 = vst [vmem:[%s187 + $0x3a8] sm:$0xff] %v422
                %v424 = vld [vmem:[%s186 + $0x760] sm:$0xff]
                %425 = vst [vmem:[%s187 + $0x3b0] sm:$0xff] %v424
                %v426 = vld [vmem:[%s186 + $0x770] sm:$0xff]
                %427 = vst [vmem:[%s187 + $0x3b8] sm:$0xff] %v426
                %v428 = vld [vmem:[%s186 + $0x780] sm:$0xff]
                %429 = vst [vmem:[%s187 + $0x3c0] sm:$0xff] %v428
                %v430 = vld [vmem:[%s186 + $0x790] sm:$0xff]
                %431 = vst [vmem:[%s187 + $0x3c8] sm:$0xff] %v430
                %v432 = vld [vmem:[%s186 + $0x7a0] sm:$0xff]
                %433 = vst [vmem:[%s187 + $0x3d0] sm:$0xff] %v432
                %v434 = vld [vmem:[%s186 + $0x7b0] sm:$0xff]
                %435 = vst [vmem:[%s187 + $0x3d8] sm:$0xff] %v434
                %v436 = vld [vmem:[%s186 + $0x7c0] sm:$0xff]
                %437 = vst [vmem:[%s187 + $0x3e0] sm:$0xff] %v436
                %v438 = vld [vmem:[%s186 + $0x7d0] sm:$0xff]
                %439 = vst [vmem:[%s187 + $0x3e8] sm:$0xff] %v438
                %v440 = vld [vmem:[%s186 + $0x7e0] sm:$0xff]
                %441 = vst [vmem:[%s187 + $0x3f0] sm:$0xff] %v440
                %v442 = vld [vmem:[%s186 + $0x7f0] sm:$0xff]
                %443 = vst [vmem:[%s187 + $0x3f8] sm:$0xff] %v442
                %v444 = vld [vmem:[%s186 + $0x800] sm:$0xff]
                %445 = vst [vmem:[%s187 + $0x400] sm:$0xff] %v444
                %v446 = vld [vmem:[%s186 + $0x810] sm:$0xff]
                %447 = vst [vmem:[%s187 + $0x408] sm:$0xff] %v446
                %v448 = vld [vmem:[%s186 + $0x820] sm:$0xff]
                %449 = vst [vmem:[%s187 + $0x410] sm:$0xff] %v448
                %v450 = vld [vmem:[%s186 + $0x830] sm:$0xff]
                %451 = vst [vmem:[%s187 + $0x418] sm:$0xff] %v450
                %v452 = vld [vmem:[%s186 + $0x840] sm:$0xff]
                %453 = vst [vmem:[%s187 + $0x420] sm:$0xff] %v452
                %v454 = vld [vmem:[%s186 + $0x850] sm:$0xff]
                %455 = vst [vmem:[%s187 + $0x428] sm:$0xff] %v454
                %v456 = vld [vmem:[%s186 + $0x860] sm:$0xff]
                %457 = vst [vmem:[%s187 + $0x430] sm:$0xff] %v456
                %v458 = vld [vmem:[%s186 + $0x870] sm:$0xff]
                %459 = vst [vmem:[%s187 + $0x438] sm:$0xff] %v458
                %v460 = vld [vmem:[%s186 + $0x880] sm:$0xff]
                %461 = vst [vmem:[%s187 + $0x440] sm:$0xff] %v460
                %v462 = vld [vmem:[%s186 + $0x890] sm:$0xff]
                %463 = vst [vmem:[%s187 + $0x448] sm:$0xff] %v462
                %v464 = vld [vmem:[%s186 + $0x8a0] sm:$0xff]
                %465 = vst [vmem:[%s187 + $0x450] sm:$0xff] %v464
                %v466 = vld [vmem:[%s186 + $0x8b0] sm:$0xff]
                %467 = vst [vmem:[%s187 + $0x458] sm:$0xff] %v466
                %v468 = vld [vmem:[%s186 + $0x8c0] sm:$0xff]
                %469 = vst [vmem:[%s187 + $0x460] sm:$0xff] %v468
                %v470 = vld [vmem:[%s186 + $0x8d0] sm:$0xff]
                %471 = vst [vmem:[%s187 + $0x468] sm:$0xff] %v470
                %v472 = vld [vmem:[%s186 + $0x8e0] sm:$0xff]
                %473 = vst [vmem:[%s187 + $0x470] sm:$0xff] %v472
                %v474 = vld [vmem:[%s186 + $0x8f0] sm:$0xff]
                %475 = vst [vmem:[%s187 + $0x478] sm:$0xff] %v474
                %v476 = vld [vmem:[%s186 + $0x900] sm:$0xff]
                %477 = vst [vmem:[%s187 + $0x480] sm:$0xff] %v476
                %v478 = vld [vmem:[%s186 + $0x910] sm:$0xff]
                %479 = vst [vmem:[%s187 + $0x488] sm:$0xff] %v478
                %v480 = vld [vmem:[%s186 + $0x920] sm:$0xff]
                %481 = vst [vmem:[%s187 + $0x490] sm:$0xff] %v480
                %v482 = vld [vmem:[%s186 + $0x930] sm:$0xff]
                %483 = vst [vmem:[%s187 + $0x498] sm:$0xff] %v482
                %v484 = vld [vmem:[%s186 + $0x940] sm:$0xff]
                %485 = vst [vmem:[%s187 + $0x4a0] sm:$0xff] %v484
                %v486 = vld [vmem:[%s186 + $0x950] sm:$0xff]
                %487 = vst [vmem:[%s187 + $0x4a8] sm:$0xff] %v486
                %v488 = vld [vmem:[%s186 + $0x960] sm:$0xff]
                %489 = vst [vmem:[%s187 + $0x4b0] sm:$0xff] %v488
                %v490 = vld [vmem:[%s186 + $0x970] sm:$0xff]
                %491 = vst [vmem:[%s187 + $0x4b8] sm:$0xff] %v490
                %v492 = vld [vmem:[%s186 + $0x980] sm:$0xff]
                %493 = vst [vmem:[%s187 + $0x4c0] sm:$0xff] %v492
                %v494 = vld [vmem:[%s186 + $0x990] sm:$0xff]
                %495 = vst [vmem:[%s187 + $0x4c8] sm:$0xff] %v494
                %v496 = vld [vmem:[%s186 + $0x9a0] sm:$0xff]
                %497 = vst [vmem:[%s187 + $0x4d0] sm:$0xff] %v496
                %v498 = vld [vmem:[%s186 + $0x9b0] sm:$0xff]
                %499 = vst [vmem:[%s187 + $0x4d8] sm:$0xff] %v498
                %v500 = vld [vmem:[%s186 + $0x9c0] sm:$0xff]
                %501 = vst [vmem:[%s187 + $0x4e0] sm:$0xff] %v500
                %v502 = vld [vmem:[%s186 + $0x9d0] sm:$0xff]
                %503 = vst [vmem:[%s187 + $0x4e8] sm:$0xff] %v502
                %v504 = vld [vmem:[%s186 + $0x9e0] sm:$0xff]
                %505 = vst [vmem:[%s187 + $0x4f0] sm:$0xff] %v504
                %v506 = vld [vmem:[%s186 + $0x9f0] sm:$0xff]
                %507 = vst [vmem:[%s187 + $0x4f8] sm:$0xff] %v506
                %v508 = vld [vmem:[%s186 + $0xa00] sm:$0xff]
                %509 = vst [vmem:[%s187 + $0x500] sm:$0xff] %v508
                %v510 = vld [vmem:[%s186 + $0xa10] sm:$0xff]
                %511 = vst [vmem:[%s187 + $0x508] sm:$0xff] %v510
                %v512 = vld [vmem:[%s186 + $0xa20] sm:$0xff]
                %513 = vst [vmem:[%s187 + $0x510] sm:$0xff] %v512
                %v514 = vld [vmem:[%s186 + $0xa30] sm:$0xff]
                %515 = vst [vmem:[%s187 + $0x518] sm:$0xff] %v514
                %v516 = vld [vmem:[%s186 + $0xa40] sm:$0xff]
                %517 = vst [vmem:[%s187 + $0x520] sm:$0xff] %v516
                %v518 = vld [vmem:[%s186 + $0xa50] sm:$0xff]
                %519 = vst [vmem:[%s187 + $0x528] sm:$0xff] %v518
                %v520 = vld [vmem:[%s186 + $0xa60] sm:$0xff]
                %521 = vst [vmem:[%s187 + $0x530] sm:$0xff] %v520
                %v522 = vld [vmem:[%s186 + $0xa70] sm:$0xff]
                %523 = vst [vmem:[%s187 + $0x538] sm:$0xff] %v522
                %v524 = vld [vmem:[%s186 + $0xa80] sm:$0xff]
                %525 = vst [vmem:[%s187 + $0x540] sm:$0xff] %v524
                %v526 = vld [vmem:[%s186 + $0xa90] sm:$0xff]
                %527 = vst [vmem:[%s187 + $0x548] sm:$0xff] %v526
                %v528 = vld [vmem:[%s186 + $0xaa0] sm:$0xff]
                %529 = vst [vmem:[%s187 + $0x550] sm:$0xff] %v528
                %v530 = vld [vmem:[%s186 + $0xab0] sm:$0xff]
                %531 = vst [vmem:[%s187 + $0x558] sm:$0xff] %v530
                %v532 = vld [vmem:[%s186 + $0xac0] sm:$0xff]
                %533 = vst [vmem:[%s187 + $0x560] sm:$0xff] %v532
                %v534 = vld [vmem:[%s186 + $0xad0] sm:$0xff]
                %535 = vst [vmem:[%s187 + $0x568] sm:$0xff] %v534
                %v536 = vld [vmem:[%s186 + $0xae0] sm:$0xff]
                %537 = vst [vmem:[%s187 + $0x570] sm:$0xff] %v536
                %v538 = vld [vmem:[%s186 + $0xaf0] sm:$0xff]
                %539 = vst [vmem:[%s187 + $0x578] sm:$0xff] %v538
                %v540 = vld [vmem:[%s186 + $0xb00] sm:$0xff]
                %541 = vst [vmem:[%s187 + $0x580] sm:$0xff] %v540
                %v542 = vld [vmem:[%s186 + $0xb10] sm:$0xff]
                %543 = vst [vmem:[%s187 + $0x588] sm:$0xff] %v542
                %v544 = vld [vmem:[%s186 + $0xb20] sm:$0xff]
                %545 = vst [vmem:[%s187 + $0x590] sm:$0xff] %v544
                %v546 = vld [vmem:[%s186 + $0xb30] sm:$0xff]
                %547 = vst [vmem:[%s187 + $0x598] sm:$0xff] %v546
                %v548 = vld [vmem:[%s186 + $0xb40] sm:$0xff]
                %549 = vst [vmem:[%s187 + $0x5a0] sm:$0xff] %v548
                %v550 = vld [vmem:[%s186 + $0xb50] sm:$0xff]
                %551 = vst [vmem:[%s187 + $0x5a8] sm:$0xff] %v550
                %v552 = vld [vmem:[%s186 + $0xb60] sm:$0xff]
                %553 = vst [vmem:[%s187 + $0x5b0] sm:$0xff] %v552
                %v554 = vld [vmem:[%s186 + $0xb70] sm:$0xff]
                %555 = vst [vmem:[%s187 + $0x5b8] sm:$0xff] %v554
                %v556 = vld [vmem:[%s186 + $0xb80] sm:$0xff]
                %557 = vst [vmem:[%s187 + $0x5c0] sm:$0xff] %v556
                %v558 = vld [vmem:[%s186 + $0xb90] sm:$0xff]
                %559 = vst [vmem:[%s187 + $0x5c8] sm:$0xff] %v558
                %v560 = vld [vmem:[%s186 + $0xba0] sm:$0xff]
                %561 = vst [vmem:[%s187 + $0x5d0] sm:$0xff] %v560
                %v562 = vld [vmem:[%s186 + $0xbb0] sm:$0xff]
                %563 = vst [vmem:[%s187 + $0x5d8] sm:$0xff] %v562
                %v564 = vld [vmem:[%s186 + $0xbc0] sm:$0xff]
                %565 = vst [vmem:[%s187 + $0x5e0] sm:$0xff] %v564
                %v566 = vld [vmem:[%s186 + $0xbd0] sm:$0xff]
                %567 = vst [vmem:[%s187 + $0x5e8] sm:$0xff] %v566
                %v568 = vld [vmem:[%s186 + $0xbe0] sm:$0xff]
                %569 = vst [vmem:[%s187 + $0x5f0] sm:$0xff] %v568
                %v570 = vld [vmem:[%s186 + $0xbf0] sm:$0xff]
                %571 = vst [vmem:[%s187 + $0x5f8] sm:$0xff] %v570
                %v572 = vld [vmem:[%s186 + $0xc00] sm:$0xff]
                %573 = vst [vmem:[%s187 + $0x600] sm:$0xff] %v572
                %v574 = vld [vmem:[%s186 + $0xc10] sm:$0xff]
                %575 = vst [vmem:[%s187 + $0x608] sm:$0xff] %v574
                %v576 = vld [vmem:[%s186 + $0xc20] sm:$0xff]
                %577 = vst [vmem:[%s187 + $0x610] sm:$0xff] %v576
                %v578 = vld [vmem:[%s186 + $0xc30] sm:$0xff]
                %579 = vst [vmem:[%s187 + $0x618] sm:$0xff] %v578
                %v580 = vld [vmem:[%s186 + $0xc40] sm:$0xff]
                %581 = vst [vmem:[%s187 + $0x620] sm:$0xff] %v580
                %v582 = vld [vmem:[%s186 + $0xc50] sm:$0xff]
                %583 = vst [vmem:[%s187 + $0x628] sm:$0xff] %v582
                %v584 = vld [vmem:[%s186 + $0xc60] sm:$0xff]
                %585 = vst [vmem:[%s187 + $0x630] sm:$0xff] %v584
                %v586 = vld [vmem:[%s186 + $0xc70] sm:$0xff]
                %587 = vst [vmem:[%s187 + $0x638] sm:$0xff] %v586
                %v588 = vld [vmem:[%s186 + $0xc80] sm:$0xff]
                %589 = vst [vmem:[%s187 + $0x640] sm:$0xff] %v588
                %v590 = vld [vmem:[%s186 + $0xc90] sm:$0xff]
                %591 = vst [vmem:[%s187 + $0x648] sm:$0xff] %v590
                %v592 = vld [vmem:[%s186 + $0xca0] sm:$0xff]
                %593 = vst [vmem:[%s187 + $0x650] sm:$0xff] %v592
                %v594 = vld [vmem:[%s186 + $0xcb0] sm:$0xff]
                %595 = vst [vmem:[%s187 + $0x658] sm:$0xff] %v594
                %v596 = vld [vmem:[%s186 + $0xcc0] sm:$0xff]
                %597 = vst [vmem:[%s187 + $0x660] sm:$0xff] %v596
                %v598 = vld [vmem:[%s186 + $0xcd0] sm:$0xff]
                %599 = vst [vmem:[%s187 + $0x668] sm:$0xff] %v598
                %v600 = vld [vmem:[%s186 + $0xce0] sm:$0xff]
                %601 = vst [vmem:[%s187 + $0x670] sm:$0xff] %v600
                %v602 = vld [vmem:[%s186 + $0xcf0] sm:$0xff]
                %603 = vst [vmem:[%s187 + $0x678] sm:$0xff] %v602
                %v604 = vld [vmem:[%s186 + $0xd00] sm:$0xff]
                %605 = vst [vmem:[%s187 + $0x680] sm:$0xff] %v604
                %v606 = vld [vmem:[%s186 + $0xd10] sm:$0xff]
                %607 = vst [vmem:[%s187 + $0x688] sm:$0xff] %v606
                %v608 = vld [vmem:[%s186 + $0xd20] sm:$0xff]
                %609 = vst [vmem:[%s187 + $0x690] sm:$0xff] %v608
                %v610 = vld [vmem:[%s186 + $0xd30] sm:$0xff]
                %611 = vst [vmem:[%s187 + $0x698] sm:$0xff] %v610
                %v612 = vld [vmem:[%s186 + $0xd40] sm:$0xff]
                %613 = vst [vmem:[%s187 + $0x6a0] sm:$0xff] %v612
                %v614 = vld [vmem:[%s186 + $0xd50] sm:$0xff]
                %615 = vst [vmem:[%s187 + $0x6a8] sm:$0xff] %v614
                %v616 = vld [vmem:[%s186 + $0xd60] sm:$0xff]
                %617 = vst [vmem:[%s187 + $0x6b0] sm:$0xff] %v616
                %v618 = vld [vmem:[%s186 + $0xd70] sm:$0xff]
                %619 = vst [vmem:[%s187 + $0x6b8] sm:$0xff] %v618
                %v620 = vld [vmem:[%s186 + $0xd80] sm:$0xff]
                %621 = vst [vmem:[%s187 + $0x6c0] sm:$0xff] %v620
                %v622 = vld [vmem:[%s186 + $0xd90] sm:$0xff]
                %623 = vst [vmem:[%s187 + $0x6c8] sm:$0xff] %v622
                %v624 = vld [vmem:[%s186 + $0xda0] sm:$0xff]
                %625 = vst [vmem:[%s187 + $0x6d0] sm:$0xff] %v624
                %v626 = vld [vmem:[%s186 + $0xdb0] sm:$0xff]
                %627 = vst [vmem:[%s187 + $0x6d8] sm:$0xff] %v626
                %v628 = vld [vmem:[%s186 + $0xdc0] sm:$0xff]
                %629 = vst [vmem:[%s187 + $0x6e0] sm:$0xff] %v628
                %v630 = vld [vmem:[%s186 + $0xdd0] sm:$0xff]
                %631 = vst [vmem:[%s187 + $0x6e8] sm:$0xff] %v630
                %v632 = vld [vmem:[%s186 + $0xde0] sm:$0xff]
                %633 = vst [vmem:[%s187 + $0x6f0] sm:$0xff] %v632
                %v634 = vld [vmem:[%s186 + $0xdf0] sm:$0xff]
                %635 = vst [vmem:[%s187 + $0x6f8] sm:$0xff] %v634
                %v636 = vld [vmem:[%s186 + $0xe00] sm:$0xff]
                %637 = vst [vmem:[%s187 + $0x700] sm:$0xff] %v636
                %v638 = vld [vmem:[%s186 + $0xe10] sm:$0xff]
                %639 = vst [vmem:[%s187 + $0x708] sm:$0xff] %v638
                %v640 = vld [vmem:[%s186 + $0xe20] sm:$0xff]
                %641 = vst [vmem:[%s187 + $0x710] sm:$0xff] %v640
                %v642 = vld [vmem:[%s186 + $0xe30] sm:$0xff]
                %643 = vst [vmem:[%s187 + $0x718] sm:$0xff] %v642
                %v644 = vld [vmem:[%s186 + $0xe40] sm:$0xff]
                %645 = vst [vmem:[%s187 + $0x720] sm:$0xff] %v644
                %v646 = vld [vmem:[%s186 + $0xe50] sm:$0xff]
                %647 = vst [vmem:[%s187 + $0x728] sm:$0xff] %v646
                %v648 = vld [vmem:[%s186 + $0xe60] sm:$0xff]
                %649 = vst [vmem:[%s187 + $0x730] sm:$0xff] %v648
                %v650 = vld [vmem:[%s186 + $0xe70] sm:$0xff]
                %651 = vst [vmem:[%s187 + $0x738] sm:$0xff] %v650
                %v652 = vld [vmem:[%s186 + $0xe80] sm:$0xff]
                %653 = vst [vmem:[%s187 + $0x740] sm:$0xff] %v652
                %v654 = vld [vmem:[%s186 + $0xe90] sm:$0xff]
                %655 = vst [vmem:[%s187 + $0x748] sm:$0xff] %v654
                %v656 = vld [vmem:[%s186 + $0xea0] sm:$0xff]
                %657 = vst [vmem:[%s187 + $0x750] sm:$0xff] %v656
                %v658 = vld [vmem:[%s186 + $0xeb0] sm:$0xff]
                %659 = vst [vmem:[%s187 + $0x758] sm:$0xff] %v658
                %v660 = vld [vmem:[%s186 + $0xec0] sm:$0xff]
                %661 = vst [vmem:[%s187 + $0x760] sm:$0xff] %v660
                %v662 = vld [vmem:[%s186 + $0xed0] sm:$0xff]
                %663 = vst [vmem:[%s187 + $0x768] sm:$0xff] %v662
                %v664 = vld [vmem:[%s186 + $0xee0] sm:$0xff]
                %665 = vst [vmem:[%s187 + $0x770] sm:$0xff] %v664
                %v666 = vld [vmem:[%s186 + $0xef0] sm:$0xff]
                %667 = vst [vmem:[%s187 + $0x778] sm:$0xff] %v666
                %v668 = vld [vmem:[%s186 + $0xf00] sm:$0xff]
                %669 = vst [vmem:[%s187 + $0x780] sm:$0xff] %v668
                %v670 = vld [vmem:[%s186 + $0xf10] sm:$0xff]
                %671 = vst [vmem:[%s187 + $0x788] sm:$0xff] %v670
                %v672 = vld [vmem:[%s186 + $0xf20] sm:$0xff]
                %673 = vst [vmem:[%s187 + $0x790] sm:$0xff] %v672
                %v674 = vld [vmem:[%s186 + $0xf30] sm:$0xff]
                %675 = vst [vmem:[%s187 + $0x798] sm:$0xff] %v674
                %v676 = vld [vmem:[%s186 + $0xf40] sm:$0xff]
                %677 = vst [vmem:[%s187 + $0x7a0] sm:$0xff] %v676
                %v678 = vld [vmem:[%s186 + $0xf50] sm:$0xff]
                %679 = vst [vmem:[%s187 + $0x7a8] sm:$0xff] %v678
                %v680 = vld [vmem:[%s186 + $0xf60] sm:$0xff]
                %681 = vst [vmem:[%s187 + $0x7b0] sm:$0xff] %v680
                %v682 = vld [vmem:[%s186 + $0xf70] sm:$0xff]
                %683 = vst [vmem:[%s187 + $0x7b8] sm:$0xff] %v682
                %v684 = vld [vmem:[%s186 + $0xf80] sm:$0xff]
                %685 = vst [vmem:[%s187 + $0x7c0] sm:$0xff] %v684
                %v686 = vld [vmem:[%s186 + $0xf90] sm:$0xff]
                %687 = vst [vmem:[%s187 + $0x7c8] sm:$0xff] %v686
                %v688 = vld [vmem:[%s186 + $0xfa0] sm:$0xff]
                %689 = vst [vmem:[%s187 + $0x7d0] sm:$0xff] %v688
                %v690 = vld [vmem:[%s186 + $0xfb0] sm:$0xff]
                %691 = vst [vmem:[%s187 + $0x7d8] sm:$0xff] %v690
                %v692 = vld [vmem:[%s186 + $0xfc0] sm:$0xff]
                %693 = vst [vmem:[%s187 + $0x7e0] sm:$0xff] %v692
                %v694 = vld [vmem:[%s186 + $0xfd0] sm:$0xff]
                %695 = vst [vmem:[%s187 + $0x7e8] sm:$0xff] %v694
                %v696 = vld [vmem:[%s186 + $0xfe0] sm:$0xff]
                %697 = vst [vmem:[%s187 + $0x7f0] sm:$0xff] %v696
                %v698 = vld [vmem:[%s186 + $0xff0] sm:$0xff]
                %699 = vst [vmem:[%s187 + $0x7f8] sm:$0xff] %v698
                %v700 = vld [vmem:[%s186 + $0x1000] sm:$0xff]
                %701 = vst [vmem:[%s187 + $0x800] sm:$0xff] %v700
                %v702 = vld [vmem:[%s186 + $0x1010] sm:$0xff]
                %703 = vst [vmem:[%s187 + $0x808] sm:$0xff] %v702
                %v704 = vld [vmem:[%s186 + $0x1020] sm:$0xff]
                %705 = vst [vmem:[%s187 + $0x810] sm:$0xff] %v704
                %v706 = vld [vmem:[%s186 + $0x1030] sm:$0xff]
                %707 = vst [vmem:[%s187 + $0x818] sm:$0xff] %v706
                %v708 = vld [vmem:[%s186 + $0x1040] sm:$0xff]
                %709 = vst [vmem:[%s187 + $0x820] sm:$0xff] %v708
                %v710 = vld [vmem:[%s186 + $0x1050] sm:$0xff]
                %711 = vst [vmem:[%s187 + $0x828] sm:$0xff] %v710
                %v712 = vld [vmem:[%s186 + $0x1060] sm:$0xff]
                %713 = vst [vmem:[%s187 + $0x830] sm:$0xff] %v712
                %v714 = vld [vmem:[%s186 + $0x1070] sm:$0xff]
                %715 = vst [vmem:[%s187 + $0x838] sm:$0xff] %v714
                %v716 = vld [vmem:[%s186 + $0x1080] sm:$0xff]
                %717 = vst [vmem:[%s187 + $0x840] sm:$0xff] %v716
                %v718 = vld [vmem:[%s186 + $0x1090] sm:$0xff]
                %719 = vst [vmem:[%s187 + $0x848] sm:$0xff] %v718
                %v720 = vld [vmem:[%s186 + $0x10a0] sm:$0xff]
                %721 = vst [vmem:[%s187 + $0x850] sm:$0xff] %v720
                %v722 = vld [vmem:[%s186 + $0x10b0] sm:$0xff]
                %723 = vst [vmem:[%s187 + $0x858] sm:$0xff] %v722
                %v724 = vld [vmem:[%s186 + $0x10c0] sm:$0xff]
                %725 = vst [vmem:[%s187 + $0x860] sm:$0xff] %v724
                %v726 = vld [vmem:[%s186 + $0x10d0] sm:$0xff]
                %727 = vst [vmem:[%s187 + $0x868] sm:$0xff] %v726
                %v728 = vld [vmem:[%s186 + $0x10e0] sm:$0xff]
                %729 = vst [vmem:[%s187 + $0x870] sm:$0xff] %v728
                %v730 = vld [vmem:[%s186 + $0x10f0] sm:$0xff]
                %731 = vst [vmem:[%s187 + $0x878] sm:$0xff] %v730
                %v732 = vld [vmem:[%s186 + $0x1100] sm:$0xff]
                %733 = vst [vmem:[%s187 + $0x880] sm:$0xff] %v732
                %v734 = vld [vmem:[%s186 + $0x1110] sm:$0xff]
                %735 = vst [vmem:[%s187 + $0x888] sm:$0xff] %v734
                %v736 = vld [vmem:[%s186 + $0x1120] sm:$0xff]
                %737 = vst [vmem:[%s187 + $0x890] sm:$0xff] %v736
                %v738 = vld [vmem:[%s186 + $0x1130] sm:$0xff]
                %739 = vst [vmem:[%s187 + $0x898] sm:$0xff] %v738
                %v740 = vld [vmem:[%s186 + $0x1140] sm:$0xff]
                %741 = vst [vmem:[%s187 + $0x8a0] sm:$0xff] %v740
                %v742 = vld [vmem:[%s186 + $0x1150] sm:$0xff]
                %743 = vst [vmem:[%s187 + $0x8a8] sm:$0xff] %v742
                %v744 = vld [vmem:[%s186 + $0x1160] sm:$0xff]
                %745 = vst [vmem:[%s187 + $0x8b0] sm:$0xff] %v744
                %v746 = vld [vmem:[%s186 + $0x1170] sm:$0xff]
                %747 = vst [vmem:[%s187 + $0x8b8] sm:$0xff] %v746
                %v748 = vld [vmem:[%s186 + $0x1180] sm:$0xff]
                %749 = vst [vmem:[%s187 + $0x8c0] sm:$0xff] %v748
                %v750 = vld [vmem:[%s186 + $0x1190] sm:$0xff]
                %751 = vst [vmem:[%s187 + $0x8c8] sm:$0xff] %v750
                %v752 = vld [vmem:[%s186 + $0x11a0] sm:$0xff]
                %753 = vst [vmem:[%s187 + $0x8d0] sm:$0xff] %v752
                %v754 = vld [vmem:[%s186 + $0x11b0] sm:$0xff]
                %755 = vst [vmem:[%s187 + $0x8d8] sm:$0xff] %v754
                %v756 = vld [vmem:[%s186 + $0x11c0] sm:$0xff]
                %757 = vst [vmem:[%s187 + $0x8e0] sm:$0xff] %v756
                %v758 = vld [vmem:[%s186 + $0x11d0] sm:$0xff]
                %759 = vst [vmem:[%s187 + $0x8e8] sm:$0xff] %v758
                %v760 = vld [vmem:[%s186 + $0x11e0] sm:$0xff]
                %761 = vst [vmem:[%s187 + $0x8f0] sm:$0xff] %v760
                %v762 = vld [vmem:[%s186 + $0x11f0] sm:$0xff]
                %763 = vst [vmem:[%s187 + $0x8f8] sm:$0xff] %v762
                %v764 = vld [vmem:[%s186 + $0x1200] sm:$0xff]
                %765 = vst [vmem:[%s187 + $0x900] sm:$0xff] %v764
                %v766 = vld [vmem:[%s186 + $0x1210] sm:$0xff]
                %767 = vst [vmem:[%s187 + $0x908] sm:$0xff] %v766
                %v768 = vld [vmem:[%s186 + $0x1220] sm:$0xff]
                %769 = vst [vmem:[%s187 + $0x910] sm:$0xff] %v768
                %v770 = vld [vmem:[%s186 + $0x1230] sm:$0xff]
                %771 = vst [vmem:[%s187 + $0x918] sm:$0xff] %v770
                %v772 = vld [vmem:[%s186 + $0x1240] sm:$0xff]
                %773 = vst [vmem:[%s187 + $0x920] sm:$0xff] %v772
                %v774 = vld [vmem:[%s186 + $0x1250] sm:$0xff]
                %775 = vst [vmem:[%s187 + $0x928] sm:$0xff] %v774
                %v776 = vld [vmem:[%s186 + $0x1260] sm:$0xff]
                %777 = vst [vmem:[%s187 + $0x930] sm:$0xff] %v776
                %v778 = vld [vmem:[%s186 + $0x1270] sm:$0xff]
                %779 = vst [vmem:[%s187 + $0x938] sm:$0xff] %v778
                %v780 = vld [vmem:[%s186 + $0x1280] sm:$0xff]
                %781 = vst [vmem:[%s187 + $0x940] sm:$0xff] %v780
                %v782 = vld [vmem:[%s186 + $0x1290] sm:$0xff]
                %783 = vst [vmem:[%s187 + $0x948] sm:$0xff] %v782
                %v784 = vld [vmem:[%s186 + $0x12a0] sm:$0xff]
                %785 = vst [vmem:[%s187 + $0x950] sm:$0xff] %v784
                %v786 = vld [vmem:[%s186 + $0x12b0] sm:$0xff]
                %787 = vst [vmem:[%s187 + $0x958] sm:$0xff] %v786
                %v788 = vld [vmem:[%s186 + $0x12c0] sm:$0xff]
                %789 = vst [vmem:[%s187 + $0x960] sm:$0xff] %v788
                %v790 = vld [vmem:[%s186 + $0x12d0] sm:$0xff]
                %791 = vst [vmem:[%s187 + $0x968] sm:$0xff] %v790
                %v792 = vld [vmem:[%s186 + $0x12e0] sm:$0xff]
                %793 = vst [vmem:[%s187 + $0x970] sm:$0xff] %v792
                %v794 = vld [vmem:[%s186 + $0x12f0] sm:$0xff]
                %795 = vst [vmem:[%s187 + $0x978] sm:$0xff] %v794
                %v796 = vld [vmem:[%s186 + $0x1300] sm:$0xff]
                %797 = vst [vmem:[%s187 + $0x980] sm:$0xff] %v796
                %v798 = vld [vmem:[%s186 + $0x1310] sm:$0xff]
                %799 = vst [vmem:[%s187 + $0x988] sm:$0xff] %v798
                %v800 = vld [vmem:[%s186 + $0x1320] sm:$0xff]
                %801 = vst [vmem:[%s187 + $0x990] sm:$0xff] %v800
                %v802 = vld [vmem:[%s186 + $0x1330] sm:$0xff]
                %803 = vst [vmem:[%s187 + $0x998] sm:$0xff] %v802
                %v804 = vld [vmem:[%s186 + $0x1340] sm:$0xff]
                %805 = vst [vmem:[%s187 + $0x9a0] sm:$0xff] %v804
                %v806 = vld [vmem:[%s186 + $0x1350] sm:$0xff]
                %807 = vst [vmem:[%s187 + $0x9a8] sm:$0xff] %v806
                %v808 = vld [vmem:[%s186 + $0x1360] sm:$0xff]
                %809 = vst [vmem:[%s187 + $0x9b0] sm:$0xff] %v808
                %v810 = vld [vmem:[%s186 + $0x1370] sm:$0xff]
                %811 = vst [vmem:[%s187 + $0x9b8] sm:$0xff] %v810
                %v812 = vld [vmem:[%s186 + $0x1380] sm:$0xff]
                %813 = vst [vmem:[%s187 + $0x9c0] sm:$0xff] %v812
                %v814 = vld [vmem:[%s186 + $0x1390] sm:$0xff]
                %815 = vst [vmem:[%s187 + $0x9c8] sm:$0xff] %v814
                %v816 = vld [vmem:[%s186 + $0x13a0] sm:$0xff]
                %817 = vst [vmem:[%s187 + $0x9d0] sm:$0xff] %v816
                %v818 = vld [vmem:[%s186 + $0x13b0] sm:$0xff]
                %819 = vst [vmem:[%s187 + $0x9d8] sm:$0xff] %v818
                %v820 = vld [vmem:[%s186 + $0x13c0] sm:$0xff]
                %821 = vst [vmem:[%s187 + $0x9e0] sm:$0xff] %v820
                %v822 = vld [vmem:[%s186 + $0x13d0] sm:$0xff]
                %823 = vst [vmem:[%s187 + $0x9e8] sm:$0xff] %v822
                %v824 = vld [vmem:[%s186 + $0x13e0] sm:$0xff]
                %825 = vst [vmem:[%s187 + $0x9f0] sm:$0xff] %v824
                %v826 = vld [vmem:[%s186 + $0x13f0] sm:$0xff]
                %827 = vst [vmem:[%s187 + $0x9f8] sm:$0xff] %v826
              $region41: #{encoder_forward.9} parent=35 // loop_footer
                %s185 = sadd.s32 1, %s181
              $region42: #{encoder_forward.9} parent=35 // loop_footer_branch
                %180 = sbr.rel target = $region38
              $region43: #{encoder_forward.9} parent=35 // loop_exit
                _
            $region36: #{encoder_forward.9} parent=27 // pred_fallthru
              _
          $region28: #{encoder_forward.9} parent=23 // pred_fallthru
            _
          %1480 = vnop
        $region24: #{encoder_forward.9} parent=15 // pred_fallthru
          _
        // Predicated region
        $region59: #{encoder_forward.9} parent=15 // pred_check
          %p1481 = pneg %p100
        $region60: #{encoder_forward.9} parent=15 // pred_check_branch
          %1483 = sbr.rel (%p1481) target = $region62
        $region61: #{encoder_forward.9} parent=15 // pred_region
          %s1484 = smul.u32 2, %s17
          %p1485 = scmp.lt.s32.totalorder %s1484, 3
          %s1486 = scalar_select %p1485, %s1484, 3
          %s1487 = scalar_lea.vmem %s2, %s1486
          %s1488 = smul.u32 2, %s17
        $region62: #{encoder_forward.9} parent=15 // pred_fallthru
          _
      $region16: #{encoder_forward.9} parent=5 // pred_fallthru
        _
      %p1489 = scmp.le.s32.totalorder 1, %s9
      %p1490 = scmp.lt.s32.totalorder %s9, 5
      %p1491 = pnand %p1489, %p1490
      %p1492 = pneg %p1491
      // Predicated region
      $region63: #{encoder_forward.9} parent=5 // pred_check
        _
      $region64: #{encoder_forward.9} parent=5 // pred_check_branch
        %1494 = sbr.rel (%p1491) target = $region66
      $region65: #{encoder_forward.9} parent=5 // pred_region
        %s1495 = ssub.s32 %s9, 1
        %s1496 = sand.u32 %s67, 1
        %s1497 = sand.u32 %s67, 1
        %s1498 = smul.addr %s1497, 2560
        %s1499 = scalar_lea.vmem [#allocation3], %s1498
        // Predicated region
        $region67: #{encoder_forward.9} parent=65 // pred_check
          %p1500 = pneg %p80
        $region68: #{encoder_forward.9} parent=65 // pred_check_branch
          %1502 = sbr.rel (%p1500) target = $region70
        $region69: #{encoder_forward.9} parent=65 // pred_region
          _
        $region70: #{encoder_forward.9} parent=65 // pred_fallthru
          _
        %p1503 = scmp.lt.s32.totalorder %s19, 1
        %s1504 = scalar_select %p1503, %s19, 1
        %s1505 = smul.addr %s1504, 8
        %s1506 = smul.addr %s1505, 4
        %s1507 = scalar_lea.vmem %s0, %s1506
        %p1508 = pneg %p54
        %p1509 = pneg %p51
        %s1510 = sand.u32 %s67, 1
        %s1511 = sand.u32 %s67, 1
        %s1512 = smul.addr %s1511, 2560
        %s1513 = scalar_lea.vmem [#allocation3], %s1512
        %p1514 = pneg %p80
        %p1515 = pneg %p77
        %s1516 = smul.u32 2, %s20
        %p1517 = scmp.lt.s32.totalorder %s1516, 3
        %s1518 = scalar_select %p1517, %s1516, 3
        %s1519 = scalar_lea.vmem %s2, %s1518
        %p1520 = pneg %p106
        %p1521 = pneg %p103
        %p1522 = pneg %p136
        %p1523 = pneg %p133
        %s1524 = smul.u32 2, %s20
        %p1525 = scmp.lt.s32.totalorder %s19, 1
        %s1526 = scalar_select %p1525, %s19, 1
        %p1527 = scmp.lt.s32.totalorder %s21, 0
        %s1528 = scalar_select %p1527, %s21, 0
        %p1529 = scmp.lt.s32.totalorder %s1524, 3
        %s1530 = scalar_select %p1529, %s1524, 3
        %s1531 = smul.addr %s1528, 4
        %s1532 = sadd.s32 %s1530, %s1531
        %s1533 = smul.addr %s1526, 4
        %s1534 = sadd.s32 %s1532, %s1533
        %s1535 = smul.addr %s1534, 4
        %s1536 = scalar_lea.vmem %s3, %s1535
        %p1537 = scmp.lt.s32.totalorder %s19, 1
        %s1538 = scalar_select %p1537, %s19, 1
        %s1539 = smul.addr %s1538, 8
        %s1540 = smul.addr %s1539, 4
        %s1541 = scalar_lea.vmem %s0, %s1540
        %s1542 = smul.u32 2, %s20
        %s1543 = smul.u32 2, %s20
        %p1544 = scmp.lt.s32.totalorder %s1543, 3
        %s1545 = scalar_select %p1544, %s1543, 3
        %s1546 = scalar_lea.vmem %s2, %s1545
        %s1547 = smul.u32 2, %s20
        %s1548 = smul.u32 2, %s20
        %p1549 = scmp.lt.s32.totalorder %s19, 1
        %s1550 = scalar_select %p1549, %s19, 1
        %p1551 = scmp.lt.s32.totalorder %s21, 0
        %s1552 = scalar_select %p1551, %s21, 0
        %p1553 = scmp.lt.s32.totalorder %s1548, 3
        %s1554 = scalar_select %p1553, %s1548, 3
        %s1555 = smul.addr %s1552, 4
        %s1556 = sadd.s32 %s1554, %s1555
        %s1557 = smul.addr %s1550, 4
        %s1558 = sadd.s32 %s1556, %s1557
        %s1559 = smul.addr %s1558, 4
        %s1560 = scalar_lea.vmem %s3, %s1559
        %s1561 = smul.u32 2, %s20
        %s1562 = smul.u32 %s21, 8
        %s1563 = sshra.s32 %s1562, 3
        %s1564 = sand.u32 %s1562, 7
        %s1565 = smul.u32 %s1563, 4
        %s1566 = smul.addr %s1565, 4
        %s1567 = scalar_lea.vmem %s1541, %s1566
        %v1568 = vld [vmem:[%s1567] sm:$0xff]
        %v1569 = vld [vmem:[%s1567 + $0x8] sm:$0xff]
        %v1570 = vld [vmem:[%s1567 + $0x10] sm:$0x33]
        %v1571 = vld [vmem:[%s1567 + $0x18] sm:$0x33]
        %v1572 = vld [vmem:[%s1499] sm:$0xff]
        %v1573 = vld [vmem:[%s1499 + $0x8] sm:$0xff]
        %v1574 = vld [vmem:[%s1499 + $0x10] sm:$0xff]
        %v1575 = vld [vmem:[%s1499 + $0x18] sm:$0xff]
        %v1576 = vld [vmem:[%s1499 + $0x20] sm:$0xff]
        %v1577 = vld [vmem:[%s1499 + $0x28] sm:$0xff]
        %v1578 = vld [vmem:[%s1499 + $0x30] sm:$0xff]
        %v1579 = vld [vmem:[%s1499 + $0x38] sm:$0xff]
        %v1580 = vld [vmem:[%s1499 + $0x40] sm:$0xff]
        %v1581 = vld [vmem:[%s1499 + $0x48] sm:$0xff]
        %v1582 = vld [vmem:[%s1499 + $0x50] sm:$0xff]
        %v1583 = vld [vmem:[%s1499 + $0x58] sm:$0xff]
        %v1584 = vld [vmem:[%s1499 + $0x60] sm:$0xff]
        %v1585 = vld [vmem:[%s1499 + $0x68] sm:$0xff]
        %v1586 = vld [vmem:[%s1499 + $0x70] sm:$0xff]
        %v1587 = vld [vmem:[%s1499 + $0x78] sm:$0xff]
        %v1588 = vld [vmem:[%s1499 + $0x80] sm:$0xff]
        %v1589 = vld [vmem:[%s1499 + $0x88] sm:$0xff]
        %v1590 = vld [vmem:[%s1499 + $0x90] sm:$0xff]
        %v1591 = vld [vmem:[%s1499 + $0x98] sm:$0xff]
        %v1592 = vld [vmem:[%s1499 + $0xa0] sm:$0xff]
        %v1593 = vld [vmem:[%s1499 + $0xa8] sm:$0xff]
        %v1594 = vld [vmem:[%s1499 + $0xb0] sm:$0xff]
        %v1595 = vld [vmem:[%s1499 + $0xb8] sm:$0xff]
        %v1596 = vld [vmem:[%s1499 + $0xc0] sm:$0xff]
        %v1597 = vld [vmem:[%s1499 + $0xc8] sm:$0xff]
        %v1598 = vld [vmem:[%s1499 + $0xd0] sm:$0xff]
        %v1599 = vld [vmem:[%s1499 + $0xd8] sm:$0xff]
        %v1600 = vld [vmem:[%s1499 + $0xe0] sm:$0xff]
        %v1601 = vld [vmem:[%s1499 + $0xe8] sm:$0xff]
        %v1602 = vld [vmem:[%s1499 + $0xf0] sm:$0xff]
        %v1603 = vld [vmem:[%s1499 + $0xf8] sm:$0xff]
        %v1604 = vld [vmem:[%s1499 + $0x100] sm:$0xff]
        %v1605 = vld [vmem:[%s1499 + $0x108] sm:$0xff]
        %v1606 = vld [vmem:[%s1499 + $0x110] sm:$0xff]
        %v1607 = vld [vmem:[%s1499 + $0x118] sm:$0xff]
        %v1608 = vld [vmem:[%s1499 + $0x120] sm:$0xff]
        %v1609 = vld [vmem:[%s1499 + $0x128] sm:$0xff]
        %v1610 = vld [vmem:[%s1499 + $0x130] sm:$0xff]
        %v1611 = vld [vmem:[%s1499 + $0x138] sm:$0xff]
        %v1612 = vld [vmem:[%s1499 + $0x140] sm:$0xff]
        %v1613 = vld [vmem:[%s1499 + $0x148] sm:$0xff]
        %v1614 = vld [vmem:[%s1499 + $0x150] sm:$0xff]
        %v1615 = vld [vmem:[%s1499 + $0x158] sm:$0xff]
        %v1616 = vld [vmem:[%s1499 + $0x160] sm:$0xff]
        %v1617 = vld [vmem:[%s1499 + $0x168] sm:$0xff]
        %v1618 = vld [vmem:[%s1499 + $0x170] sm:$0xff]
        %v1619 = vld [vmem:[%s1499 + $0x178] sm:$0xff]
        %v1620 = vld [vmem:[%s1499 + $0x180] sm:$0xff]
        %v1621 = vld [vmem:[%s1499 + $0x188] sm:$0xff]
        %v1622 = vld [vmem:[%s1499 + $0x190] sm:$0xff]
        %v1623 = vld [vmem:[%s1499 + $0x198] sm:$0xff]
        %v1624 = vld [vmem:[%s1499 + $0x1a0] sm:$0xff]
        %v1625 = vld [vmem:[%s1499 + $0x1a8] sm:$0xff]
        %v1626 = vld [vmem:[%s1499 + $0x1b0] sm:$0xff]
        %v1627 = vld [vmem:[%s1499 + $0x1b8] sm:$0xff]
        %v1628 = vld [vmem:[%s1499 + $0x1c0] sm:$0xff]
        %v1629 = vld [vmem:[%s1499 + $0x1c8] sm:$0xff]
        %v1630 = vld [vmem:[%s1499 + $0x1d0] sm:$0xff]
        %v1631 = vld [vmem:[%s1499 + $0x1d8] sm:$0xff]
        %v1632 = vld [vmem:[%s1499 + $0x1e0] sm:$0xff]
        %v1633 = vld [vmem:[%s1499 + $0x1e8] sm:$0xff]
        %v1634 = vld [vmem:[%s1499 + $0x1f0] sm:$0xff]
        %v1635 = vld [vmem:[%s1499 + $0x1f8] sm:$0xff]
        %v1638 = vunpack.c.l.b16 %v1568
        %v1639 = vunpack.c.h.b16 %v1568
        %v1640 = vunpack.c.l.b16 %v1569
        %v1641 = vunpack.c.h.b16 %v1569
        %v1642 = vpack.c.b16 %v1638, %v1638
        %v1643 = vpack.c.b16 %v1639, %v1639
        %v1644 = vpack.c.b16 %v1640, %v1640
        %v1645 = vpack.c.b16 %v1641, %v1641
        %v1714 = vunpack.c.l.b16 %v1572
        %v1715 = vunpack.c.h.b16 %v1572
        %v1716 = vunpack.c.l.b16 %v1573
        %v1717 = vunpack.c.h.b16 %v1573
        %v1718 = vunpack.c.l.b16 %v1574
        %v1719 = vunpack.c.h.b16 %v1574
        %v1720 = vunpack.c.l.b16 %v1575
        %v1721 = vunpack.c.h.b16 %v1575
        %v1722 = vunpack.c.l.b16 %v1576
        %v1723 = vunpack.c.h.b16 %v1576
        %v1724 = vunpack.c.l.b16 %v1577
        %v1725 = vunpack.c.h.b16 %v1577
        %v1726 = vunpack.c.l.b16 %v1578
        %v1727 = vunpack.c.h.b16 %v1578
        %v1728 = vunpack.c.l.b16 %v1579
        %v1729 = vunpack.c.h.b16 %v1579
        %v1730 = vunpack.c.l.b16 %v1580
        %v1731 = vunpack.c.h.b16 %v1580
        %v1732 = vunpack.c.l.b16 %v1581
        %v1733 = vunpack.c.h.b16 %v1581
        %v1734 = vunpack.c.l.b16 %v1582
        %v1735 = vunpack.c.h.b16 %v1582
        %v1736 = vunpack.c.l.b16 %v1583
        %v1737 = vunpack.c.h.b16 %v1583
        %v1738 = vunpack.c.l.b16 %v1584
        %v1739 = vunpack.c.h.b16 %v1584
        %v1740 = vunpack.c.l.b16 %v1585
        %v1741 = vunpack.c.h.b16 %v1585
        %v1742 = vunpack.c.l.b16 %v1586
        %v1743 = vunpack.c.h.b16 %v1586
        %v1744 = vunpack.c.l.b16 %v1587
        %v1745 = vunpack.c.h.b16 %v1587
        %v1746 = vunpack.c.l.b16 %v1588
        %v1747 = vunpack.c.h.b16 %v1588
        %v1748 = vunpack.c.l.b16 %v1589
        %v1749 = vunpack.c.h.b16 %v1589
        %v1750 = vunpack.c.l.b16 %v1590
        %v1751 = vunpack.c.h.b16 %v1590
        %v1752 = vunpack.c.l.b16 %v1591
        %v1753 = vunpack.c.h.b16 %v1591
        %v1754 = vunpack.c.l.b16 %v1592
        %v1755 = vunpack.c.h.b16 %v1592
        %v1756 = vunpack.c.l.b16 %v1593
        %v1757 = vunpack.c.h.b16 %v1593
        %v1758 = vunpack.c.l.b16 %v1594
        %v1759 = vunpack.c.h.b16 %v1594
        %v1760 = vunpack.c.l.b16 %v1595
        %v1761 = vunpack.c.h.b16 %v1595
        %v1762 = vunpack.c.l.b16 %v1596
        %v1763 = vunpack.c.h.b16 %v1596
        %v1764 = vunpack.c.l.b16 %v1597
        %v1765 = vunpack.c.h.b16 %v1597
        %v1766 = vunpack.c.l.b16 %v1598
        %v1767 = vunpack.c.h.b16 %v1598
        %v1768 = vunpack.c.l.b16 %v1599
        %v1769 = vunpack.c.h.b16 %v1599
        %v1770 = vunpack.c.l.b16 %v1600
        %v1771 = vunpack.c.h.b16 %v1600
        %v1772 = vunpack.c.l.b16 %v1601
        %v1773 = vunpack.c.h.b16 %v1601
        %v1774 = vunpack.c.l.b16 %v1602
        %v1775 = vunpack.c.h.b16 %v1602
        %v1776 = vunpack.c.l.b16 %v1603
        %v1777 = vunpack.c.h.b16 %v1603
        %v1778 = vunpack.c.l.b16 %v1604
        %v1779 = vunpack.c.h.b16 %v1604
        %v1780 = vunpack.c.l.b16 %v1605
        %v1781 = vunpack.c.h.b16 %v1605
        %v1782 = vunpack.c.l.b16 %v1606
        %v1783 = vunpack.c.h.b16 %v1606
        %v1784 = vunpack.c.l.b16 %v1607
        %v1785 = vunpack.c.h.b16 %v1607
        %v1786 = vunpack.c.l.b16 %v1608
        %v1787 = vunpack.c.h.b16 %v1608
        %v1788 = vunpack.c.l.b16 %v1609
        %v1789 = vunpack.c.h.b16 %v1609
        %v1790 = vunpack.c.l.b16 %v1610
        %v1791 = vunpack.c.h.b16 %v1610
        %v1792 = vunpack.c.l.b16 %v1611
        %v1793 = vunpack.c.h.b16 %v1611
        %v1794 = vunpack.c.l.b16 %v1612
        %v1795 = vunpack.c.h.b16 %v1612
        %v1796 = vunpack.c.l.b16 %v1613
        %v1797 = vunpack.c.h.b16 %v1613
        %v1798 = vunpack.c.l.b16 %v1614
        %v1799 = vunpack.c.h.b16 %v1614
        %v1800 = vunpack.c.l.b16 %v1615
        %v1801 = vunpack.c.h.b16 %v1615
        %v1802 = vunpack.c.l.b16 %v1616
        %v1803 = vunpack.c.h.b16 %v1616
        %v1804 = vunpack.c.l.b16 %v1617
        %v1805 = vunpack.c.h.b16 %v1617
        %v1806 = vunpack.c.l.b16 %v1618
        %v1807 = vunpack.c.h.b16 %v1618
        %v1808 = vunpack.c.l.b16 %v1619
        %v1809 = vunpack.c.h.b16 %v1619
        %v1810 = vunpack.c.l.b16 %v1620
        %v1811 = vunpack.c.h.b16 %v1620
        %v1812 = vunpack.c.l.b16 %v1621
        %v1813 = vunpack.c.h.b16 %v1621
        %v1814 = vunpack.c.l.b16 %v1622
        %v1815 = vunpack.c.h.b16 %v1622
        %v1816 = vunpack.c.l.b16 %v1623
        %v1817 = vunpack.c.h.b16 %v1623
        %v1818 = vunpack.c.l.b16 %v1624
        %v1819 = vunpack.c.h.b16 %v1624
        %v1820 = vunpack.c.l.b16 %v1625
        %v1821 = vunpack.c.h.b16 %v1625
        %v1822 = vunpack.c.l.b16 %v1626
        %v1823 = vunpack.c.h.b16 %v1626
        %v1824 = vunpack.c.l.b16 %v1627
        %v1825 = vunpack.c.h.b16 %v1627
        %v1826 = vunpack.c.l.b16 %v1628
        %v1827 = vunpack.c.h.b16 %v1628
        %v1828 = vunpack.c.l.b16 %v1629
        %v1829 = vunpack.c.h.b16 %v1629
        %v1830 = vunpack.c.l.b16 %v1630
        %v1831 = vunpack.c.h.b16 %v1630
        %v1832 = vunpack.c.l.b16 %v1631
        %v1833 = vunpack.c.h.b16 %v1631
        %v1834 = vunpack.c.l.b16 %v1632
        %v1835 = vunpack.c.h.b16 %v1632
        %v1836 = vunpack.c.l.b16 %v1633
        %v1837 = vunpack.c.h.b16 %v1633
        %v1838 = vunpack.c.l.b16 %v1634
        %v1839 = vunpack.c.h.b16 %v1634
        %v1840 = vunpack.c.l.b16 %v1635
        %v1841 = vunpack.c.h.b16 %v1635
        %v1842 = vpack.c.b16 %v1716, %v1714
        %v1843 = vpack.c.b16 %v1717, %v1715
        %v1844 = vpack.c.b16 %v1720, %v1718
        %v1845 = vpack.c.b16 %v1721, %v1719
        %v1846 = vpack.c.b16 %v1724, %v1722
        %v1847 = vpack.c.b16 %v1725, %v1723
        %v1848 = vpack.c.b16 %v1728, %v1726
        %v1849 = vpack.c.b16 %v1729, %v1727
        %v1850 = vpack.c.b16 %v1732, %v1730
        %v1851 = vpack.c.b16 %v1733, %v1731
        %v1852 = vpack.c.b16 %v1736, %v1734
        %v1853 = vpack.c.b16 %v1737, %v1735
        %v1854 = vpack.c.b16 %v1740, %v1738
        %v1855 = vpack.c.b16 %v1741, %v1739
        %v1856 = vpack.c.b16 %v1744, %v1742
        %v1857 = vpack.c.b16 %v1745, %v1743
        %v1858 = vpack.c.b16 %v1748, %v1746
        %v1859 = vpack.c.b16 %v1749, %v1747
        %v1860 = vpack.c.b16 %v1752, %v1750
        %v1861 = vpack.c.b16 %v1753, %v1751
        %v1862 = vpack.c.b16 %v1756, %v1754
        %v1863 = vpack.c.b16 %v1757, %v1755
        %v1864 = vpack.c.b16 %v1760, %v1758
        %v1865 = vpack.c.b16 %v1761, %v1759
        %v1866 = vpack.c.b16 %v1764, %v1762
        %v1867 = vpack.c.b16 %v1765, %v1763
        %v1868 = vpack.c.b16 %v1768, %v1766
        %v1869 = vpack.c.b16 %v1769, %v1767
        %v1870 = vpack.c.b16 %v1772, %v1770
        %v1871 = vpack.c.b16 %v1773, %v1771
        %v1872 = vpack.c.b16 %v1776, %v1774
        %v1873 = vpack.c.b16 %v1777, %v1775
        %v1874 = vpack.c.b16 %v1780, %v1778
        %v1875 = vpack.c.b16 %v1781, %v1779
        %v1876 = vpack.c.b16 %v1784, %v1782
        %v1877 = vpack.c.b16 %v1785, %v1783
        %v1878 = vpack.c.b16 %v1788, %v1786
        %v1879 = vpack.c.b16 %v1789, %v1787
        %v1880 = vpack.c.b16 %v1792, %v1790
        %v1881 = vpack.c.b16 %v1793, %v1791
        %v1882 = vpack.c.b16 %v1796, %v1794
        %v1883 = vpack.c.b16 %v1797, %v1795
        %v1884 = vpack.c.b16 %v1800, %v1798
        %v1885 = vpack.c.b16 %v1801, %v1799
        %v1886 = vpack.c.b16 %v1804, %v1802
        %v1887 = vpack.c.b16 %v1805, %v1803
        %v1888 = vpack.c.b16 %v1808, %v1806
        %v1889 = vpack.c.b16 %v1809, %v1807
        %v1890 = vpack.c.b16 %v1812, %v1810
        %v1891 = vpack.c.b16 %v1813, %v1811
        %v1892 = vpack.c.b16 %v1816, %v1814
        %v1893 = vpack.c.b16 %v1817, %v1815
        %v1894 = vpack.c.b16 %v1820, %v1818
        %v1895 = vpack.c.b16 %v1821, %v1819
        %v1896 = vpack.c.b16 %v1824, %v1822
        %v1897 = vpack.c.b16 %v1825, %v1823
        %v1898 = vpack.c.b16 %v1828, %v1826
        %v1899 = vpack.c.b16 %v1829, %v1827
        %v1900 = vpack.c.b16 %v1832, %v1830
        %v1901 = vpack.c.b16 %v1833, %v1831
        %v1902 = vpack.c.b16 %v1836, %v1834
        %v1903 = vpack.c.b16 %v1837, %v1835
        %v1904 = vpack.c.b16 %v1840, %v1838
        %v1905 = vpack.c.b16 %v1841, %v1839
        %1970 = vmatprep.subr.bf16.mxu0 %v1843
        %1971 = vmatpush1.bf16.msra.mxu0 %v1842
        %1972 = vmatprep.subr.bf16.mxu0 %v1845
        %1973 = vmatpush1.bf16.msra.mxu0 %v1844
        %1974 = vmatprep.subr.bf16.mxu0 %v1847
        %1975 = vmatpush1.bf16.msra.mxu0 %v1846
        %1976 = vmatprep.subr.bf16.mxu0 %v1849
        %1977 = vmatpush1.bf16.msra.mxu0 %v1848
        %1978 = vmatprep.subr.bf16.mxu0 %v1851
        %1979 = vmatpush1.bf16.msra.mxu0 %v1850
        %1980 = vmatprep.subr.bf16.mxu0 %v1853
        %1981 = vmatpush1.bf16.msra.mxu0 %v1852
        %1982 = vmatprep.subr.bf16.mxu0 %v1855
        %1983 = vmatpush1.bf16.msra.mxu0 %v1854
        %1984 = vmatprep.subr.bf16.mxu0 %v1857
        %1985 = vmatpush1.bf16.msra.mxu0 %v1856
        %1986 = vmatprep.subr.bf16.mxu0 %v1859
        %1987 = vmatpush1.bf16.msra.mxu0 %v1858
        %1988 = vmatprep.subr.bf16.mxu0 %v1861
        %1989 = vmatpush1.bf16.msra.mxu0 %v1860
        %1990 = vmatprep.subr.bf16.mxu0 %v1863
        %1991 = vmatpush1.bf16.msra.mxu0 %v1862
        %1992 = vmatprep.subr.bf16.mxu0 %v1865
        %1993 = vmatpush1.bf16.msra.mxu0 %v1864
        %1994 = vmatprep.subr.bf16.mxu0 %v1867
        %1995 = vmatpush1.bf16.msra.mxu0 %v1866
        %1996 = vmatprep.subr.bf16.mxu0 %v1869
        %1997 = vmatpush1.bf16.msra.mxu0 %v1868
        %1998 = vmatprep.subr.bf16.mxu0 %v1871
        %1999 = vmatpush1.bf16.msra.mxu0 %v1870
        %2000 = vmatprep.subr.bf16.mxu0 %v1873
        %2001 = vmatpush1.bf16.msra.mxu0 %v1872
        %2002 = vmatprep.mubr.bf16.mxu0 %v1643
        %2003 = vmatmul.mubr.bf16.gmra.mrb[0].mxu0 %v1642
        %v2004 = vpop.f32.mrb[0].mxu0
        %v2005 = vadd.f32 0.0, %v2004
        %v2006 = vpop.f32.mrb[0].mxu0
        %v2007 = vadd.f32 0.0, %v2006
        %v2008 = vpop.f32.mrb[0].mxu0
        %v2009 = vpop.f32.mrb[0].mxu0
        %2010 = vdwg.mxu0
        %2011 = vmatprep.subr.bf16.mxu0 %v1875
        %2012 = vmatpush1.bf16.msra.mxu0 %v1874
        %2013 = vmatprep.subr.bf16.mxu0 %v1877
        %2014 = vmatpush1.bf16.msra.mxu0 %v1876
        %2015 = vmatprep.subr.bf16.mxu0 %v1879
        %2016 = vmatpush1.bf16.msra.mxu0 %v1878
        %2017 = vmatprep.subr.bf16.mxu0 %v1881
        %2018 = vmatpush1.bf16.msra.mxu0 %v1880
        %2019 = vmatprep.subr.bf16.mxu0 %v1883
        %2020 = vmatpush1.bf16.msra.mxu0 %v1882
        %2021 = vmatprep.subr.bf16.mxu0 %v1885
        %2022 = vmatpush1.bf16.msra.mxu0 %v1884
        %2023 = vmatprep.subr.bf16.mxu0 %v1887
        %2024 = vmatpush1.bf16.msra.mxu0 %v1886
        %2025 = vmatprep.subr.bf16.mxu0 %v1889
        %2026 = vmatpush1.bf16.msra.mxu0 %v1888
        %2027 = vmatprep.subr.bf16.mxu0 %v1891
        %2028 = vmatpush1.bf16.msra.mxu0 %v1890
        %2029 = vmatprep.subr.bf16.mxu0 %v1893
        %2030 = vmatpush1.bf16.msra.mxu0 %v1892
        %2031 = vmatprep.subr.bf16.mxu0 %v1895
        %2032 = vmatpush1.bf16.msra.mxu0 %v1894
        %2033 = vmatprep.subr.bf16.mxu0 %v1897
        %2034 = vmatpush1.bf16.msra.mxu0 %v1896
        %2035 = vmatprep.subr.bf16.mxu0 %v1899
        %2036 = vmatpush1.bf16.msra.mxu0 %v1898
        %2037 = vmatprep.subr.bf16.mxu0 %v1901
        %2038 = vmatpush1.bf16.msra.mxu0 %v1900
        %2039 = vmatprep.subr.bf16.mxu0 %v1903
        %2040 = vmatpush1.bf16.msra.mxu0 %v1902
        %2041 = vmatprep.subr.bf16.mxu0 %v1905
        %2042 = vmatpush1.bf16.msra.mxu0 %v1904
        %2043 = vmatprep.mubr.bf16.mxu0 %v1645
        %2044 = vmatmul.mubr.bf16.gmra.mrb[0].mxu0 %v1644
        %v2045 = vpop.f32.mrb[0].mxu0
        %v2046 = vadd.f32 %v2005, %v2045
        %v2047 = vpop.f32.mrb[0].mxu0
        %v2048 = vadd.f32 %v2007, %v2047
        %v2049 = vpop.f32.mrb[0].mxu0
        %v2050 = vpop.f32.mrb[0].mxu0
        %2051 = vdwg.mxu0
        %2052 = vst [vmem:[#allocation2] sm:$0xff] %v2046
        %2053 = vst [vmem:[#allocation2 + $0x8] sm:$0xff] %v2048
        %v2054 = vld [vmem:[#allocation2] sm:$0xff]
        %v2055 = vld [vmem:[#allocation2 + $0x8] sm:$0xff]
        %s2056 = scalar_lea.vmem %s1499, 512 [#allocation3]
        %v2057 = vld [vmem:[%s2056] sm:$0xff]
        %v2058 = vld [vmem:[%s2056 + $0x8] sm:$0xff]
        %v2059 = vld [vmem:[%s2056 + $0x10] sm:$0xff]
        %v2060 = vld [vmem:[%s2056 + $0x18] sm:$0xff]
        %v2061 = vld [vmem:[%s2056 + $0x20] sm:$0xff]
        %v2062 = vld [vmem:[%s2056 + $0x28] sm:$0xff]
        %v2063 = vld [vmem:[%s2056 + $0x30] sm:$0xff]
        %v2064 = vld [vmem:[%s2056 + $0x38] sm:$0xff]
        %v2065 = vld [vmem:[%s2056 + $0x40] sm:$0xff]
        %v2066 = vld [vmem:[%s2056 + $0x48] sm:$0xff]
        %v2067 = vld [vmem:[%s2056 + $0x50] sm:$0xff]
        %v2068 = vld [vmem:[%s2056 + $0x58] sm:$0xff]
        %v2069 = vld [vmem:[%s2056 + $0x60] sm:$0xff]
        %v2070 = vld [vmem:[%s2056 + $0x68] sm:$0xff]
        %v2071 = vld [vmem:[%s2056 + $0x70] sm:$0xff]
        %v2072 = vld [vmem:[%s2056 + $0x78] sm:$0xff]
        %v2073 = vld [vmem:[%s2056 + $0x80] sm:$0xff]
        %v2074 = vld [vmem:[%s2056 + $0x88] sm:$0xff]
        %v2075 = vld [vmem:[%s2056 + $0x90] sm:$0xff]
        %v2076 = vld [vmem:[%s2056 + $0x98] sm:$0xff]
        %v2077 = vld [vmem:[%s2056 + $0xa0] sm:$0xff]
        %v2078 = vld [vmem:[%s2056 + $0xa8] sm:$0xff]
        %v2079 = vld [vmem:[%s2056 + $0xb0] sm:$0xff]
        %v2080 = vld [vmem:[%s2056 + $0xb8] sm:$0xff]
        %v2081 = vld [vmem:[%s2056 + $0xc0] sm:$0xff]
        %v2082 = vld [vmem:[%s2056 + $0xc8] sm:$0xff]
        %v2083 = vld [vmem:[%s2056 + $0xd0] sm:$0xff]
        %v2084 = vld [vmem:[%s2056 + $0xd8] sm:$0xff]
        %v2085 = vld [vmem:[%s2056 + $0xe0] sm:$0xff]
        %v2086 = vld [vmem:[%s2056 + $0xe8] sm:$0xff]
        %v2087 = vld [vmem:[%s2056 + $0xf0] sm:$0xff]
        %v2088 = vld [vmem:[%s2056 + $0xf8] sm:$0xff]
        %v2089 = vld [vmem:[%s2056 + $0x100] sm:$0xff]
        %v2090 = vld [vmem:[%s2056 + $0x108] sm:$0xff]
        %v2091 = vld [vmem:[%s2056 + $0x110] sm:$0xff]
        %v2092 = vld [vmem:[%s2056 + $0x118] sm:$0xff]
        %v2093 = vld [vmem:[%s2056 + $0x120] sm:$0xff]
        %v2094 = vld [vmem:[%s2056 + $0x128] sm:$0xff]
        %v2095 = vld [vmem:[%s2056 + $0x130] sm:$0xff]
        %v2096 = vld [vmem:[%s2056 + $0x138] sm:$0xff]
        %v2097 = vld [vmem:[%s2056 + $0x140] sm:$0xff]
        %v2098 = vld [vmem:[%s2056 + $0x148] sm:$0xff]
        %v2099 = vld [vmem:[%s2056 + $0x150] sm:$0xff]
        %v2100 = vld [vmem:[%s2056 + $0x158] sm:$0xff]
        %v2101 = vld [vmem:[%s2056 + $0x160] sm:$0xff]
        %v2102 = vld [vmem:[%s2056 + $0x168] sm:$0xff]
        %v2103 = vld [vmem:[%s2056 + $0x170] sm:$0xff]
        %v2104 = vld [vmem:[%s2056 + $0x178] sm:$0xff]
        %v2105 = vld [vmem:[%s2056 + $0x180] sm:$0xff]
        %v2106 = vld [vmem:[%s2056 + $0x188] sm:$0xff]
        %v2107 = vld [vmem:[%s2056 + $0x190] sm:$0xff]
        %v2108 = vld [vmem:[%s2056 + $0x198] sm:$0xff]
        %v2109 = vld [vmem:[%s2056 + $0x1a0] sm:$0xff]
        %v2110 = vld [vmem:[%s2056 + $0x1a8] sm:$0xff]
        %v2111 = vld [vmem:[%s2056 + $0x1b0] sm:$0xff]
        %v2112 = vld [vmem:[%s2056 + $0x1b8] sm:$0xff]
        %v2113 = vld [vmem:[%s2056 + $0x1c0] sm:$0xff]
        %v2114 = vld [vmem:[%s2056 + $0x1c8] sm:$0xff]
        %v2115 = vld [vmem:[%s2056 + $0x1d0] sm:$0xff]
        %v2116 = vld [vmem:[%s2056 + $0x1d8] sm:$0xff]
        %v2117 = vld [vmem:[%s2056 + $0x1e0] sm:$0xff]
        %v2118 = vld [vmem:[%s2056 + $0x1e8] sm:$0xff]
        %v2119 = vld [vmem:[%s2056 + $0x1f0] sm:$0xff]
        %v2120 = vld [vmem:[%s2056 + $0x1f8] sm:$0xff]
        %v2123 = vunpack.c.l.b16 %v1570
        %v2124 = vunpack.c.h.b16 %v1570
        %v2125 = vunpack.c.l.b16 %v1571
        %v2126 = vunpack.c.h.b16 %v1571
        %v2127 = vpack.c.b16 %v2123, %v1638
        %v2128 = vpack.c.b16 %v2124, %v1639
        %v2129 = vpack.c.b16 %v2125, %v1640
        %v2130 = vpack.c.b16 %v2126, %v1641
        %v2132 = vshrl.u32 %v2127, 16
        %v2134 = vshll.u32 %v2127, 16
        %v2136 = vrot.slane %v2134, 1
        %v2137 = vor.u32 %v2132, %v2136
        %v2139 = vshrl.u32 %v2128, 16
        %v2141 = vshll.u32 %v2128, 16
        %v2143 = vrot.slane %v2141, 1
        %v2144 = vor.u32 %v2139, %v2143
        %v2146 = vshrl.u32 %v2129, 16
        %v2148 = vshll.u32 %v2129, 16
        %v2150 = vrot.slane %v2148, 1
        %v2151 = vor.u32 %v2146, %v2150
        %v2153 = vshrl.u32 %v2130, 16
        %v2155 = vshll.u32 %v2130, 16
        %v2157 = vrot.slane %v2155, 1
        %v2158 = vor.u32 %v2153, %v2157
        %v2227 = vunpack.c.l.b16 %v2057
        %v2228 = vunpack.c.h.b16 %v2057
        %v2229 = vunpack.c.l.b16 %v2058
        %v2230 = vunpack.c.h.b16 %v2058
        %v2231 = vunpack.c.l.b16 %v2059
        %v2232 = vunpack.c.h.b16 %v2059
        %v2233 = vunpack.c.l.b16 %v2060
        %v2234 = vunpack.c.h.b16 %v2060
        %v2235 = vunpack.c.l.b16 %v2061
        %v2236 = vunpack.c.h.b16 %v2061
        %v2237 = vunpack.c.l.b16 %v2062
        %v2238 = vunpack.c.h.b16 %v2062
        %v2239 = vunpack.c.l.b16 %v2063
        %v2240 = vunpack.c.h.b16 %v2063
        %v2241 = vunpack.c.l.b16 %v2064
        %v2242 = vunpack.c.h.b16 %v2064
        %v2243 = vunpack.c.l.b16 %v2065
        %v2244 = vunpack.c.h.b16 %v2065
        %v2245 = vunpack.c.l.b16 %v2066
        %v2246 = vunpack.c.h.b16 %v2066
        %v2247 = vunpack.c.l.b16 %v2067
        %v2248 = vunpack.c.h.b16 %v2067
        %v2249 = vunpack.c.l.b16 %v2068
        %v2250 = vunpack.c.h.b16 %v2068
        %v2251 = vunpack.c.l.b16 %v2069
        %v2252 = vunpack.c.h.b16 %v2069
        %v2253 = vunpack.c.l.b16 %v2070
        %v2254 = vunpack.c.h.b16 %v2070
        %v2255 = vunpack.c.l.b16 %v2071
        %v2256 = vunpack.c.h.b16 %v2071
        %v2257 = vunpack.c.l.b16 %v2072
        %v2258 = vunpack.c.h.b16 %v2072
        %v2259 = vunpack.c.l.b16 %v2073
        %v2260 = vunpack.c.h.b16 %v2073
        %v2261 = vunpack.c.l.b16 %v2074
        %v2262 = vunpack.c.h.b16 %v2074
        %v2263 = vunpack.c.l.b16 %v2075
        %v2264 = vunpack.c.h.b16 %v2075
        %v2265 = vunpack.c.l.b16 %v2076
        %v2266 = vunpack.c.h.b16 %v2076
        %v2267 = vunpack.c.l.b16 %v2077
        %v2268 = vunpack.c.h.b16 %v2077
        %v2269 = vunpack.c.l.b16 %v2078
        %v2270 = vunpack.c.h.b16 %v2078
        %v2271 = vunpack.c.l.b16 %v2079
        %v2272 = vunpack.c.h.b16 %v2079
        %v2273 = vunpack.c.l.b16 %v2080
        %v2274 = vunpack.c.h.b16 %v2080
        %v2275 = vunpack.c.l.b16 %v2081
        %v2276 = vunpack.c.h.b16 %v2081
        %v2277 = vunpack.c.l.b16 %v2082
        %v2278 = vunpack.c.h.b16 %v2082
        %v2279 = vunpack.c.l.b16 %v2083
        %v2280 = vunpack.c.h.b16 %v2083
        %v2281 = vunpack.c.l.b16 %v2084
        %v2282 = vunpack.c.h.b16 %v2084
        %v2283 = vunpack.c.l.b16 %v2085
        %v2284 = vunpack.c.h.b16 %v2085
        %v2285 = vunpack.c.l.b16 %v2086
        %v2286 = vunpack.c.h.b16 %v2086
        %v2287 = vunpack.c.l.b16 %v2087
        %v2288 = vunpack.c.h.b16 %v2087
        %v2289 = vunpack.c.l.b16 %v2088
        %v2290 = vunpack.c.h.b16 %v2088
        %v2291 = vunpack.c.l.b16 %v2089
        %v2292 = vunpack.c.h.b16 %v2089
        %v2293 = vunpack.c.l.b16 %v2090
        %v2294 = vunpack.c.h.b16 %v2090
        %v2295 = vunpack.c.l.b16 %v2091
        %v2296 = vunpack.c.h.b16 %v2091
        %v2297 = vunpack.c.l.b16 %v2092
        %v2298 = vunpack.c.h.b16 %v2092
        %v2299 = vunpack.c.l.b16 %v2093
        %v2300 = vunpack.c.h.b16 %v2093
        %v2301 = vunpack.c.l.b16 %v2094
        %v2302 = vunpack.c.h.b16 %v2094
        %v2303 = vunpack.c.l.b16 %v2095
        %v2304 = vunpack.c.h.b16 %v2095
        %v2305 = vunpack.c.l.b16 %v2096
        %v2306 = vunpack.c.h.b16 %v2096
        %v2307 = vunpack.c.l.b16 %v2097
        %v2308 = vunpack.c.h.b16 %v2097
        %v2309 = vunpack.c.l.b16 %v2098
        %v2310 = vunpack.c.h.b16 %v2098
        %v2311 = vunpack.c.l.b16 %v2099
        %v2312 = vunpack.c.h.b16 %v2099
        %v2313 = vunpack.c.l.b16 %v2100
        %v2314 = vunpack.c.h.b16 %v2100
        %v2315 = vunpack.c.l.b16 %v2101
        %v2316 = vunpack.c.h.b16 %v2101
        %v2317 = vunpack.c.l.b16 %v2102
        %v2318 = vunpack.c.h.b16 %v2102
        %v2319 = vunpack.c.l.b16 %v2103
        %v2320 = vunpack.c.h.b16 %v2103
        %v2321 = vunpack.c.l.b16 %v2104
        %v2322 = vunpack.c.h.b16 %v2104
        %v2323 = vunpack.c.l.b16 %v2105
        %v2324 = vunpack.c.h.b16 %v2105
        %v2325 = vunpack.c.l.b16 %v2106
        %v2326 = vunpack.c.h.b16 %v2106
        %v2327 = vunpack.c.l.b16 %v2107
        %v2328 = vunpack.c.h.b16 %v2107
        %v2329 = vunpack.c.l.b16 %v2108
        %v2330 = vunpack.c.h.b16 %v2108
        %v2331 = vunpack.c.l.b16 %v2109
        %v2332 = vunpack.c.h.b16 %v2109
        %v2333 = vunpack.c.l.b16 %v2110
        %v2334 = vunpack.c.h.b16 %v2110
        %v2335 = vunpack.c.l.b16 %v2111
        %v2336 = vunpack.c.h.b16 %v2111
        %v2337 = vunpack.c.l.b16 %v2112
        %v2338 = vunpack.c.h.b16 %v2112
        %v2339 = vunpack.c.l.b16 %v2113
        %v2340 = vunpack.c.h.b16 %v2113
        %v2341 = vunpack.c.l.b16 %v2114
        %v2342 = vunpack.c.h.b16 %v2114
        %v2343 = vunpack.c.l.b16 %v2115
        %v2344 = vunpack.c.h.b16 %v2115
        %v2345 = vunpack.c.l.b16 %v2116
        %v2346 = vunpack.c.h.b16 %v2116
        %v2347 = vunpack.c.l.b16 %v2117
        %v2348 = vunpack.c.h.b16 %v2117
        %v2349 = vunpack.c.l.b16 %v2118
        %v2350 = vunpack.c.h.b16 %v2118
        %v2351 = vunpack.c.l.b16 %v2119
        %v2352 = vunpack.c.h.b16 %v2119
        %v2353 = vunpack.c.l.b16 %v2120
        %v2354 = vunpack.c.h.b16 %v2120
        %v2355 = vpack.c.b16 %v2229, %v2227
        %v2356 = vpack.c.b16 %v2230, %v2228
        %v2357 = vpack.c.b16 %v2233, %v2231
        %v2358 = vpack.c.b16 %v2234, %v2232
        %v2359 = vpack.c.b16 %v2237, %v2235
        %v2360 = vpack.c.b16 %v2238, %v2236
        %v2361 = vpack.c.b16 %v2241, %v2239
        %v2362 = vpack.c.b16 %v2242, %v2240
        %v2363 = vpack.c.b16 %v2245, %v2243
        %v2364 = vpack.c.b16 %v2246, %v2244
        %v2365 = vpack.c.b16 %v2249, %v2247
        %v2366 = vpack.c.b16 %v2250, %v2248
        %v2367 = vpack.c.b16 %v2253, %v2251
        %v2368 = vpack.c.b16 %v2254, %v2252
        %v2369 = vpack.c.b16 %v2257, %v2255
        %v2370 = vpack.c.b16 %v2258, %v2256
        %v2371 = vpack.c.b16 %v2261, %v2259
        %v2372 = vpack.c.b16 %v2262, %v2260
        %v2373 = vpack.c.b16 %v2265, %v2263
        %v2374 = vpack.c.b16 %v2266, %v2264
        %v2375 = vpack.c.b16 %v2269, %v2267
        %v2376 = vpack.c.b16 %v2270, %v2268
        %v2377 = vpack.c.b16 %v2273, %v2271
        %v2378 = vpack.c.b16 %v2274, %v2272
        %v2379 = vpack.c.b16 %v2277, %v2275
        %v2380 = vpack.c.b16 %v2278, %v2276
        %v2381 = vpack.c.b16 %v2281, %v2279
        %v2382 = vpack.c.b16 %v2282, %v2280
        %v2383 = vpack.c.b16 %v2285, %v2283
        %v2384 = vpack.c.b16 %v2286, %v2284
        %v2385 = vpack.c.b16 %v2289, %v2287
        %v2386 = vpack.c.b16 %v2290, %v2288
        %v2387 = vpack.c.b16 %v2293, %v2291
        %v2388 = vpack.c.b16 %v2294, %v2292
        %v2389 = vpack.c.b16 %v2297, %v2295
        %v2390 = vpack.c.b16 %v2298, %v2296
        %v2391 = vpack.c.b16 %v2301, %v2299
        %v2392 = vpack.c.b16 %v2302, %v2300
        %v2393 = vpack.c.b16 %v2305, %v2303
        %v2394 = vpack.c.b16 %v2306, %v2304
        %v2395 = vpack.c.b16 %v2309, %v2307
        %v2396 = vpack.c.b16 %v2310, %v2308
        %v2397 = vpack.c.b16 %v2313, %v2311
        %v2398 = vpack.c.b16 %v2314, %v2312
        %v2399 = vpack.c.b16 %v2317, %v2315
        %v2400 = vpack.c.b16 %v2318, %v2316
        %v2401 = vpack.c.b16 %v2321, %v2319
        %v2402 = vpack.c.b16 %v2322, %v2320
        %v2403 = vpack.c.b16 %v2325, %v2323
        %v2404 = vpack.c.b16 %v2326, %v2324
        %v2405 = vpack.c.b16 %v2329, %v2327
        %v2406 = vpack.c.b16 %v2330, %v2328
        %v2407 = vpack.c.b16 %v2333, %v2331
        %v2408 = vpack.c.b16 %v2334, %v2332
        %v2409 = vpack.c.b16 %v2337, %v2335
        %v2410 = vpack.c.b16 %v2338, %v2336
        %v2411 = vpack.c.b16 %v2341, %v2339
        %v2412 = vpack.c.b16 %v2342, %v2340
        %v2413 = vpack.c.b16 %v2345, %v2343
        %v2414 = vpack.c.b16 %v2346, %v2344
        %v2415 = vpack.c.b16 %v2349, %v2347
        %v2416 = vpack.c.b16 %v2350, %v2348
        %v2417 = vpack.c.b16 %v2353, %v2351
        %v2418 = vpack.c.b16 %v2354, %v2352
        %2483 = vmatprep.subr.bf16.mxu0 %v2356
        %2484 = vmatpush1.bf16.msra.mxu0 %v2355
        %2485 = vmatprep.subr.bf16.mxu0 %v2358
        %2486 = vmatpush1.bf16.msra.mxu0 %v2357
        %2487 = vmatprep.subr.bf16.mxu0 %v2360
        %2488 = vmatpush1.bf16.msra.mxu0 %v2359
        %2489 = vmatprep.subr.bf16.mxu0 %v2362
        %2490 = vmatpush1.bf16.msra.mxu0 %v2361
        %2491 = vmatprep.subr.bf16.mxu0 %v2364
        %2492 = vmatpush1.bf16.msra.mxu0 %v2363
        %2493 = vmatprep.subr.bf16.mxu0 %v2366
        %2494 = vmatpush1.bf16.msra.mxu0 %v2365
        %2495 = vmatprep.subr.bf16.mxu0 %v2368
        %2496 = vmatpush1.bf16.msra.mxu0 %v2367
        %2497 = vmatprep.subr.bf16.mxu0 %v2370
        %2498 = vmatpush1.bf16.msra.mxu0 %v2369
        %2499 = vmatprep.subr.bf16.mxu0 %v2372
        %2500 = vmatpush1.bf16.msra.mxu0 %v2371
        %2501 = vmatprep.subr.bf16.mxu0 %v2374
        %2502 = vmatpush1.bf16.msra.mxu0 %v2373
        %2503 = vmatprep.subr.bf16.mxu0 %v2376
        %2504 = vmatpush1.bf16.msra.mxu0 %v2375
        %2505 = vmatprep.subr.bf16.mxu0 %v2378
        %2506 = vmatpush1.bf16.msra.mxu0 %v2377
        %2507 = vmatprep.subr.bf16.mxu0 %v2380
        %2508 = vmatpush1.bf16.msra.mxu0 %v2379
        %2509 = vmatprep.subr.bf16.mxu0 %v2382
        %2510 = vmatpush1.bf16.msra.mxu0 %v2381
        %2511 = vmatprep.subr.bf16.mxu0 %v2384
        %2512 = vmatpush1.bf16.msra.mxu0 %v2383
        %2513 = vmatprep.subr.bf16.mxu0 %v2386
        %2514 = vmatpush1.bf16.msra.mxu0 %v2385
        %2515 = vmatprep.mubr.bf16.mxu0 %v2144
        %2516 = vmatmul.mubr.bf16.gmra.mrb[0].mxu0 %v2137
        %v2517 = vpop.f32.mrb[0].mxu0
        %v2518 = vadd.f32 0.0, %v2517
        %v2519 = vpop.f32.mrb[0].mxu0
        %v2520 = vadd.f32 0.0, %v2519
        %v2521 = vpop.f32.mrb[0].mxu0
        %v2522 = vpop.f32.mrb[0].mxu0
        %2523 = vdwg.mxu0
        %2524 = vmatprep.subr.bf16.mxu0 %v2388
        %2525 = vmatpush1.bf16.msra.mxu0 %v2387
        %2526 = vmatprep.subr.bf16.mxu0 %v2390
        %2527 = vmatpush1.bf16.msra.mxu0 %v2389
        %2528 = vmatprep.subr.bf16.mxu0 %v2392
        %2529 = vmatpush1.bf16.msra.mxu0 %v2391
        %2530 = vmatprep.subr.bf16.mxu0 %v2394
        %2531 = vmatpush1.bf16.msra.mxu0 %v2393
        %2532 = vmatprep.subr.bf16.mxu0 %v2396
        %2533 = vmatpush1.bf16.msra.mxu0 %v2395
        %2534 = vmatprep.subr.bf16.mxu0 %v2398
        %2535 = vmatpush1.bf16.msra.mxu0 %v2397
        %2536 = vmatprep.subr.bf16.mxu0 %v2400
        %2537 = vmatpush1.bf16.msra.mxu0 %v2399
        %2538 = vmatprep.subr.bf16.mxu0 %v2402
        %2539 = vmatpush1.bf16.msra.mxu0 %v2401
        %2540 = vmatprep.subr.bf16.mxu0 %v2404
        %2541 = vmatpush1.bf16.msra.mxu0 %v2403
        %2542 = vmatprep.subr.bf16.mxu0 %v2406
        %2543 = vmatpush1.bf16.msra.mxu0 %v2405
        %2544 = vmatprep.subr.bf16.mxu0 %v2408
        %2545 = vmatpush1.bf16.msra.mxu0 %v2407
        %2546 = vmatprep.subr.bf16.mxu0 %v2410
        %2547 = vmatpush1.bf16.msra.mxu0 %v2409
        %2548 = vmatprep.subr.bf16.mxu0 %v2412
        %2549 = vmatpush1.bf16.msra.mxu0 %v2411
        %2550 = vmatprep.subr.bf16.mxu0 %v2414
        %2551 = vmatpush1.bf16.msra.mxu0 %v2413
        %2552 = vmatprep.subr.bf16.mxu0 %v2416
        %2553 = vmatpush1.bf16.msra.mxu0 %v2415
        %2554 = vmatprep.subr.bf16.mxu0 %v2418
        %2555 = vmatpush1.bf16.msra.mxu0 %v2417
        %2556 = vmatprep.mubr.bf16.mxu0 %v2158
        %2557 = vmatmul.mubr.bf16.gmra.mrb[0].mxu0 %v2151
        %v2558 = vpop.f32.mrb[0].mxu0
        %v2559 = vadd.f32 %v2518, %v2558
        %v2560 = vpop.f32.mrb[0].mxu0
        %v2561 = vadd.f32 %v2520, %v2560
        %v2562 = vpop.f32.mrb[0].mxu0
        %v2563 = vpop.f32.mrb[0].mxu0
        %2564 = vdwg.mxu0
        %v2565 = vadd.f32 %v2054, %v2559
        %v2566 = vadd.f32 %v2055, %v2561
        %2567 = vst [vmem:[#allocation2] sm:$0xff] %v2565
        %2568 = vst [vmem:[#allocation2 + $0x8] sm:$0xff] %v2566
        %v2569 = vld [vmem:[#allocation2] sm:$0xff]
        %v2570 = vld [vmem:[#allocation2 + $0x8] sm:$0xff]
        %s2571 = scalar_lea.vmem %s1499, 1024 [#allocation3]
        %v2572 = vld [vmem:[%s2571] sm:$0xff]
        %v2573 = vld [vmem:[%s2571 + $0x8] sm:$0xff]
        %v2574 = vld [vmem:[%s2571 + $0x10] sm:$0xff]
        %v2575 = vld [vmem:[%s2571 + $0x18] sm:$0xff]
        %v2576 = vld [vmem:[%s2571 + $0x20] sm:$0xff]
        %v2577 = vld [vmem:[%s2571 + $0x28] sm:$0xff]
        %v2578 = vld [vmem:[%s2571 + $0x30] sm:$0xff]
        %v2579 = vld [vmem:[%s2571 + $0x38] sm:$0xff]
        %v2580 = vld [vmem:[%s2571 + $0x40] sm:$0xff]
        %v2581 = vld [vmem:[%s2571 + $0x48] sm:$0xff]
        %v2582 = vld [vmem:[%s2571 + $0x50] sm:$0xff]
        %v2583 = vld [vmem:[%s2571 + $0x58] sm:$0xff]
        %v2584 = vld [vmem:[%s2571 + $0x60] sm:$0xff]
        %v2585 = vld [vmem:[%s2571 + $0x68] sm:$0xff]
        %v2586 = vld [vmem:[%s2571 + $0x70] sm:$0xff]
        %v2587 = vld [vmem:[%s2571 + $0x78] sm:$0xff]
        %v2588 = vld [vmem:[%s2571 + $0x80] sm:$0xff]
        %v2589 = vld [vmem:[%s2571 + $0x88] sm:$0xff]
        %v2590 = vld [vmem:[%s2571 + $0x90] sm:$0xff]
        %v2591 = vld [vmem:[%s2571 + $0x98] sm:$0xff]
        %v2592 = vld [vmem:[%s2571 + $0xa0] sm:$0xff]
        %v2593 = vld [vmem:[%s2571 + $0xa8] sm:$0xff]
        %v2594 = vld [vmem:[%s2571 + $0xb0] sm:$0xff]
        %v2595 = vld [vmem:[%s2571 + $0xb8] sm:$0xff]
        %v2596 = vld [vmem:[%s2571 + $0xc0] sm:$0xff]
        %v2597 = vld [vmem:[%s2571 + $0xc8] sm:$0xff]
        %v2598 = vld [vmem:[%s2571 + $0xd0] sm:$0xff]
        %v2599 = vld [vmem:[%s2571 + $0xd8] sm:$0xff]
        %v2600 = vld [vmem:[%s2571 + $0xe0] sm:$0xff]
        %v2601 = vld [vmem:[%s2571 + $0xe8] sm:$0xff]
        %v2602 = vld [vmem:[%s2571 + $0xf0] sm:$0xff]
        %v2603 = vld [vmem:[%s2571 + $0xf8] sm:$0xff]
        %v2604 = vld [vmem:[%s2571 + $0x100] sm:$0xff]
        %v2605 = vld [vmem:[%s2571 + $0x108] sm:$0xff]
        %v2606 = vld [vmem:[%s2571 + $0x110] sm:$0xff]
        %v2607 = vld [vmem:[%s2571 + $0x118] sm:$0xff]
        %v2608 = vld [vmem:[%s2571 + $0x120] sm:$0xff]
        %v2609 = vld [vmem:[%s2571 + $0x128] sm:$0xff]
        %v2610 = vld [vmem:[%s2571 + $0x130] sm:$0xff]
        %v2611 = vld [vmem:[%s2571 + $0x138] sm:$0xff]
        %v2612 = vld [vmem:[%s2571 + $0x140] sm:$0xff]
        %v2613 = vld [vmem:[%s2571 + $0x148] sm:$0xff]
        %v2614 = vld [vmem:[%s2571 + $0x150] sm:$0xff]
        %v2615 = vld [vmem:[%s2571 + $0x158] sm:$0xff]
        %v2616 = vld [vmem:[%s2571 + $0x160] sm:$0xff]
        %v2617 = vld [vmem:[%s2571 + $0x168] sm:$0xff]
        %v2618 = vld [vmem:[%s2571 + $0x170] sm:$0xff]
        %v2619 = vld [vmem:[%s2571 + $0x178] sm:$0xff]
        %v2620 = vld [vmem:[%s2571 + $0x180] sm:$0xff]
        %v2621 = vld [vmem:[%s2571 + $0x188] sm:$0xff]
        %v2622 = vld [vmem:[%s2571 + $0x190] sm:$0xff]
        %v2623 = vld [vmem:[%s2571 + $0x198] sm:$0xff]
        %v2624 = vld [vmem:[%s2571 + $0x1a0] sm:$0xff]
        %v2625 = vld [vmem:[%s2571 + $0x1a8] sm:$0xff]
        %v2626 = vld [vmem:[%s2571 + $0x1b0] sm:$0xff]
        %v2627 = vld [vmem:[%s2571 + $0x1b8] sm:$0xff]
        %v2628 = vld [vmem:[%s2571 + $0x1c0] sm:$0xff]
        %v2629 = vld [vmem:[%s2571 + $0x1c8] sm:$0xff]
        %v2630 = vld [vmem:[%s2571 + $0x1d0] sm:$0xff]
        %v2631 = vld [vmem:[%s2571 + $0x1d8] sm:$0xff]
        %v2632 = vld [vmem:[%s2571 + $0x1e0] sm:$0xff]
        %v2633 = vld [vmem:[%s2571 + $0x1e8] sm:$0xff]
        %v2634 = vld [vmem:[%s2571 + $0x1f0] sm:$0xff]
        %v2635 = vld [vmem:[%s2571 + $0x1f8] sm:$0xff]
        %v2636 = vrot.slane %v2127, 1
        %v2637 = vrot.slane %v2128, 1
        %v2638 = vrot.slane %v2129, 1
        %v2639 = vrot.slane %v2130, 1
        %v2708 = vunpack.c.l.b16 %v2572
        %v2709 = vunpack.c.h.b16 %v2572
        %v2710 = vunpack.c.l.b16 %v2573
        %v2711 = vunpack.c.h.b16 %v2573
        %v2712 = vunpack.c.l.b16 %v2574
        %v2713 = vunpack.c.h.b16 %v2574
        %v2714 = vunpack.c.l.b16 %v2575
        %v2715 = vunpack.c.h.b16 %v2575
        %v2716 = vunpack.c.l.b16 %v2576
        %v2717 = vunpack.c.h.b16 %v2576
        %v2718 = vunpack.c.l.b16 %v2577
        %v2719 = vunpack.c.h.b16 %v2577
        %v2720 = vunpack.c.l.b16 %v2578
        %v2721 = vunpack.c.h.b16 %v2578
        %v2722 = vunpack.c.l.b16 %v2579
        %v2723 = vunpack.c.h.b16 %v2579
        %v2724 = vunpack.c.l.b16 %v2580
        %v2725 = vunpack.c.h.b16 %v2580
        %v2726 = vunpack.c.l.b16 %v2581
        %v2727 = vunpack.c.h.b16 %v2581
        %v2728 = vunpack.c.l.b16 %v2582
        %v2729 = vunpack.c.h.b16 %v2582
        %v2730 = vunpack.c.l.b16 %v2583
        %v2731 = vunpack.c.h.b16 %v2583
        %v2732 = vunpack.c.l.b16 %v2584
        %v2733 = vunpack.c.h.b16 %v2584
        %v2734 = vunpack.c.l.b16 %v2585
        %v2735 = vunpack.c.h.b16 %v2585
        %v2736 = vunpack.c.l.b16 %v2586
        %v2737 = vunpack.c.h.b16 %v2586
        %v2738 = vunpack.c.l.b16 %v2587
        %v2739 = vunpack.c.h.b16 %v2587
        %v2740 = vunpack.c.l.b16 %v2588
        %v2741 = vunpack.c.h.b16 %v2588
        %v2742 = vunpack.c.l.b16 %v2589
        %v2743 = vunpack.c.h.b16 %v2589
        %v2744 = vunpack.c.l.b16 %v2590
        %v2745 = vunpack.c.h.b16 %v2590
        %v2746 = vunpack.c.l.b16 %v2591
        %v2747 = vunpack.c.h.b16 %v2591
        %v2748 = vunpack.c.l.b16 %v2592
        %v2749 = vunpack.c.h.b16 %v2592
        %v2750 = vunpack.c.l.b16 %v2593
        %v2751 = vunpack.c.h.b16 %v2593
        %v2752 = vunpack.c.l.b16 %v2594
        %v2753 = vunpack.c.h.b16 %v2594
        %v2754 = vunpack.c.l.b16 %v2595
        %v2755 = vunpack.c.h.b16 %v2595
        %v2756 = vunpack.c.l.b16 %v2596
        %v2757 = vunpack.c.h.b16 %v2596
        %v2758 = vunpack.c.l.b16 %v2597
        %v2759 = vunpack.c.h.b16 %v2597
        %v2760 = vunpack.c.l.b16 %v2598
        %v2761 = vunpack.c.h.b16 %v2598
        %v2762 = vunpack.c.l.b16 %v2599
        %v2763 = vunpack.c.h.b16 %v2599
        %v2764 = vunpack.c.l.b16 %v2600
        %v2765 = vunpack.c.h.b16 %v2600
        %v2766 = vunpack.c.l.b16 %v2601
        %v2767 = vunpack.c.h.b16 %v2601
        %v2768 = vunpack.c.l.b16 %v2602
        %v2769 = vunpack.c.h.b16 %v2602
        %v2770 = vunpack.c.l.b16 %v2603
        %v2771 = vunpack.c.h.b16 %v2603
        %v2772 = vunpack.c.l.b16 %v2604
        %v2773 = vunpack.c.h.b16 %v2604
        %v2774 = vunpack.c.l.b16 %v2605
        %v2775 = vunpack.c.h.b16 %v2605
        %v2776 = vunpack.c.l.b16 %v2606
        %v2777 = vunpack.c.h.b16 %v2606
        %v2778 = vunpack.c.l.b16 %v2607
        %v2779 = vunpack.c.h.b16 %v2607
        %v2780 = vunpack.c.l.b16 %v2608
        %v2781 = vunpack.c.h.b16 %v2608
        %v2782 = vunpack.c.l.b16 %v2609
        %v2783 = vunpack.c.h.b16 %v2609
        %v2784 = vunpack.c.l.b16 %v2610
        %v2785 = vunpack.c.h.b16 %v2610
        %v2786 = vunpack.c.l.b16 %v2611
        %v2787 = vunpack.c.h.b16 %v2611
        %v2788 = vunpack.c.l.b16 %v2612
        %v2789 = vunpack.c.h.b16 %v2612
        %v2790 = vunpack.c.l.b16 %v2613
        %v2791 = vunpack.c.h.b16 %v2613
        %v2792 = vunpack.c.l.b16 %v2614
        %v2793 = vunpack.c.h.b16 %v2614
        %v2794 = vunpack.c.l.b16 %v2615
        %v2795 = vunpack.c.h.b16 %v2615
        %v2796 = vunpack.c.l.b16 %v2616
        %v2797 = vunpack.c.h.b16 %v2616
        %v2798 = vunpack.c.l.b16 %v2617
        %v2799 = vunpack.c.h.b16 %v2617
        %v2800 = vunpack.c.l.b16 %v2618
        %v2801 = vunpack.c.h.b16 %v2618
        %v2802 = vunpack.c.l.b16 %v2619
        %v2803 = vunpack.c.h.b16 %v2619
        %v2804 = vunpack.c.l.b16 %v2620
        %v2805 = vunpack.c.h.b16 %v2620
        %v2806 = vunpack.c.l.b16 %v2621
        %v2807 = vunpack.c.h.b16 %v2621
        %v2808 = vunpack.c.l.b16 %v2622
        %v2809 = vunpack.c.h.b16 %v2622
        %v2810 = vunpack.c.l.b16 %v2623
        %v2811 = vunpack.c.h.b16 %v2623
        %v2812 = vunpack.c.l.b16 %v2624
        %v2813 = vunpack.c.h.b16 %v2624
        %v2814 = vunpack.c.l.b16 %v2625
        %v2815 = vunpack.c.h.b16 %v2625
        %v2816 = vunpack.c.l.b16 %v2626
        %v2817 = vunpack.c.h.b16 %v2626
        %v2818 = vunpack.c.l.b16 %v2627
        %v2819 = vunpack.c.h.b16 %v2627
        %v2820 = vunpack.c.l.b16 %v2628
        %v2821 = vunpack.c.h.b16 %v2628
        %v2822 = vunpack.c.l.b16 %v2629
        %v2823 = vunpack.c.h.b16 %v2629
        %v2824 = vunpack.c.l.b16 %v2630
        %v2825 = vunpack.c.h.b16 %v2630
        %v2826 = vunpack.c.l.b16 %v2631
        %v2827 = vunpack.c.h.b16 %v2631
        %v2828 = vunpack.c.l.b16 %v2632
        %v2829 = vunpack.c.h.b16 %v2632
        %v2830 = vunpack.c.l.b16 %v2633
        %v2831 = vunpack.c.h.b16 %v2633
        %v2832 = vunpack.c.l.b16 %v2634
        %v2833 = vunpack.c.h.b16 %v2634
        %v2834 = vunpack.c.l.b16 %v2635
        %v2835 = vunpack.c.h.b16 %v2635
        %v2836 = vpack.c.b16 %v2710, %v2708
        %v2837 = vpack.c.b16 %v2711, %v2709
        %v2838 = vpack.c.b16 %v2714, %v2712
        %v2839 = vpack.c.b16 %v2715, %v2713
        %v2840 = vpack.c.b16 %v2718, %v2716
        %v2841 = vpack.c.b16 %v2719, %v2717
        %v2842 = vpack.c.b16 %v2722, %v2720
        %v2843 = vpack.c.b16 %v2723, %v2721
        %v2844 = vpack.c.b16 %v2726, %v2724
        %v2845 = vpack.c.b16 %v2727, %v2725
        %v2846 = vpack.c.b16 %v2730, %v2728
        %v2847 = vpack.c.b16 %v2731, %v2729
        %v2848 = vpack.c.b16 %v2734, %v2732
        %v2849 = vpack.c.b16 %v2735, %v2733
        %v2850 = vpack.c.b16 %v2738, %v2736
        %v2851 = vpack.c.b16 %v2739, %v2737
        %v2852 = vpack.c.b16 %v2742, %v2740
        %v2853 = vpack.c.b16 %v2743, %v2741
        %v2854 = vpack.c.b16 %v2746, %v2744
        %v2855 = vpack.c.b16 %v2747, %v2745
        %v2856 = vpack.c.b16 %v2750, %v2748
        %v2857 = vpack.c.b16 %v2751, %v2749
        %v2858 = vpack.c.b16 %v2754, %v2752
        %v2859 = vpack.c.b16 %v2755, %v2753
        %v2860 = vpack.c.b16 %v2758, %v2756
        %v2861 = vpack.c.b16 %v2759, %v2757
        %v2862 = vpack.c.b16 %v2762, %v2760
        %v2863 = vpack.c.b16 %v2763, %v2761
        %v2864 = vpack.c.b16 %v2766, %v2764
        %v2865 = vpack.c.b16 %v2767, %v2765
        %v2866 = vpack.c.b16 %v2770, %v2768
        %v2867 = vpack.c.b16 %v2771, %v2769
        %v2868 = vpack.c.b16 %v2774, %v2772
        %v2869 = vpack.c.b16 %v2775, %v2773
        %v2870 = vpack.c.b16 %v2778, %v2776
        %v2871 = vpack.c.b16 %v2779, %v2777
        %v2872 = vpack.c.b16 %v2782, %v2780
        %v2873 = vpack.c.b16 %v2783, %v2781
        %v2874 = vpack.c.b16 %v2786, %v2784
        %v2875 = vpack.c.b16 %v2787, %v2785
        %v2876 = vpack.c.b16 %v2790, %v2788
        %v2877 = vpack.c.b16 %v2791, %v2789
        %v2878 = vpack.c.b16 %v2794, %v2792
        %v2879 = vpack.c.b16 %v2795, %v2793
        %v2880 = vpack.c.b16 %v2798, %v2796
        %v2881 = vpack.c.b16 %v2799, %v2797
        %v2882 = vpack.c.b16 %v2802, %v2800
        %v2883 = vpack.c.b16 %v2803, %v2801
        %v2884 = vpack.c.b16 %v2806, %v2804
        %v2885 = vpack.c.b16 %v2807, %v2805
        %v2886 = vpack.c.b16 %v2810, %v2808
        %v2887 = vpack.c.b16 %v2811, %v2809
        %v2888 = vpack.c.b16 %v2814, %v2812
        %v2889 = vpack.c.b16 %v2815, %v2813
        %v2890 = vpack.c.b16 %v2818, %v2816
        %v2891 = vpack.c.b16 %v2819, %v2817
        %v2892 = vpack.c.b16 %v2822, %v2820
        %v2893 = vpack.c.b16 %v2823, %v2821
        %v2894 = vpack.c.b16 %v2826, %v2824
        %v2895 = vpack.c.b16 %v2827, %v2825
        %v2896 = vpack.c.b16 %v2830, %v2828
        %v2897 = vpack.c.b16 %v2831, %v2829
        %v2898 = vpack.c.b16 %v2834, %v2832
        %v2899 = vpack.c.b16 %v2835, %v2833
        %2964 = vmatprep.subr.bf16.mxu0 %v2837
        %2965 = vmatpush1.bf16.msra.mxu0 %v2836
        %2966 = vmatprep.subr.bf16.mxu0 %v2839
        %2967 = vmatpush1.bf16.msra.mxu0 %v2838
        %2968 = vmatprep.subr.bf16.mxu0 %v2841
        %2969 = vmatpush1.bf16.msra.mxu0 %v2840
        %2970 = vmatprep.subr.bf16.mxu0 %v2843
        %2971 = vmatpush1.bf16.msra.mxu0 %v2842
        %2972 = vmatprep.subr.bf16.mxu0 %v2845
        %2973 = vmatpush1.bf16.msra.mxu0 %v2844
        %2974 = vmatprep.subr.bf16.mxu0 %v2847
        %2975 = vmatpush1.bf16.msra.mxu0 %v2846
        %2976 = vmatprep.subr.bf16.mxu0 %v2849
        %2977 = vmatpush1.bf16.msra.mxu0 %v2848
        %2978 = vmatprep.subr.bf16.mxu0 %v2851
        %2979 = vmatpush1.bf16.msra.mxu0 %v2850
        %2980 = vmatprep.subr.bf16.mxu0 %v2853
        %2981 = vmatpush1.bf16.msra.mxu0 %v2852
        %2982 = vmatprep.subr.bf16.mxu0 %v2855
        %2983 = vmatpush1.bf16.msra.mxu0 %v2854
        %2984 = vmatprep.subr.bf16.mxu0 %v2857
        %2985 = vmatpush1.bf16.msra.mxu0 %v2856
        %2986 = vmatprep.subr.bf16.mxu0 %v2859
        %2987 = vmatpush1.bf16.msra.mxu0 %v2858
        %2988 = vmatprep.subr.bf16.mxu0 %v2861
        %2989 = vmatpush1.bf16.msra.mxu0 %v2860
        %2990 = vmatprep.subr.bf16.mxu0 %v2863
        %2991 = vmatpush1.bf16.msra.mxu0 %v2862
        %2992 = vmatprep.subr.bf16.mxu0 %v2865
        %2993 = vmatpush1.bf16.msra.mxu0 %v2864
        %2994 = vmatprep.subr.bf16.mxu0 %v2867
        %2995 = vmatpush1.bf16.msra.mxu0 %v2866
        %2996 = vmatprep.mubr.bf16.mxu0 %v2637
        %2997 = vmatmul.mubr.bf16.gmra.mrb[0].mxu0 %v2636
        %v2998 = vpop.f32.mrb[0].mxu0
        %v2999 = vadd.f32 0.0, %v2998
        %v3000 = vpop.f32.mrb[0].mxu0
        %v3001 = vadd.f32 0.0, %v3000
        %v3002 = vpop.f32.mrb[0].mxu0
        %v3003 = vpop.f32.mrb[0].mxu0
        %3004 = vdwg.mxu0
        %3005 = vmatprep.subr.bf16.mxu0 %v2869
        %3006 = vmatpush1.bf16.msra.mxu0 %v2868
        %3007 = vmatprep.subr.bf16.mxu0 %v2871
        %3008 = vmatpush1.bf16.msra.mxu0 %v2870
        %3009 = vmatprep.subr.bf16.mxu0 %v2873
        %3010 = vmatpush1.bf16.msra.mxu0 %v2872
        %3011 = vmatprep.subr.bf16.mxu0 %v2875
        %3012 = vmatpush1.bf16.msra.mxu0 %v2874
        %3013 = vmatprep.subr.bf16.mxu0 %v2877
        %3014 = vmatpush1.bf16.msra.mxu0 %v2876
        %3015 = vmatprep.subr.bf16.mxu0 %v2879
        %3016 = vmatpush1.bf16.msra.mxu0 %v2878
        %3017 = vmatprep.subr.bf16.mxu0 %v2881
        %3018 = vmatpush1.bf16.msra.mxu0 %v2880
        %3019 = vmatprep.subr.bf16.mxu0 %v2883
        %3020 = vmatpush1.bf16.msra.mxu0 %v2882
        %3021 = vmatprep.subr.bf16.mxu0 %v2885
        %3022 = vmatpush1.bf16.msra.mxu0 %v2884
        %3023 = vmatprep.subr.bf16.mxu0 %v2887
        %3024 = vmatpush1.bf16.msra.mxu0 %v2886
        %3025 = vmatprep.subr.bf16.mxu0 %v2889
        %3026 = vmatpush1.bf16.msra.mxu0 %v2888
        %3027 = vmatprep.subr.bf16.mxu0 %v2891
        %3028 = vmatpush1.bf16.msra.mxu0 %v2890
        %3029 = vmatprep.subr.bf16.mxu0 %v2893
        %3030 = vmatpush1.bf16.msra.mxu0 %v2892
        %3031 = vmatprep.subr.bf16.mxu0 %v2895
        %3032 = vmatpush1.bf16.msra.mxu0 %v2894
        %3033 = vmatprep.subr.bf16.mxu0 %v2897
        %3034 = vmatpush1.bf16.msra.mxu0 %v2896
        %3035 = vmatprep.subr.bf16.mxu0 %v2899
        %3036 = vmatpush1.bf16.msra.mxu0 %v2898
        %3037 = vmatprep.mubr.bf16.mxu0 %v2639
        %3038 = vmatmul.mubr.bf16.gmra.mrb[0].mxu0 %v2638
        %v3039 = vpop.f32.mrb[0].mxu0
        %v3040 = vadd.f32 %v2999, %v3039
        %v3041 = vpop.f32.mrb[0].mxu0
        %v3042 = vadd.f32 %v3001, %v3041
        %v3043 = vpop.f32.mrb[0].mxu0
        %v3044 = vpop.f32.mrb[0].mxu0
        %3045 = vdwg.mxu0
        %v3046 = vadd.f32 %v2569, %v3040
        %v3047 = vadd.f32 %v2570, %v3042
        %3048 = vst [vmem:[#allocation2] sm:$0xff] %v3046
        %3049 = vst [vmem:[#allocation2 + $0x8] sm:$0xff] %v3047
        %v3050 = vld [vmem:[#allocation2] sm:$0xff]
        %v3051 = vld [vmem:[#allocation2 + $0x8] sm:$0xff]
        %s3052 = scalar_lea.vmem %s1499, 1536 [#allocation3]
        %v3053 = vld [vmem:[%s3052] sm:$0xff]
        %v3054 = vld [vmem:[%s3052 + $0x8] sm:$0xff]
        %v3055 = vld [vmem:[%s3052 + $0x10] sm:$0xff]
        %v3056 = vld [vmem:[%s3052 + $0x18] sm:$0xff]
        %v3057 = vld [vmem:[%s3052 + $0x20] sm:$0xff]
        %v3058 = vld [vmem:[%s3052 + $0x28] sm:$0xff]
        %v3059 = vld [vmem:[%s3052 + $0x30] sm:$0xff]
        %v3060 = vld [vmem:[%s3052 + $0x38] sm:$0xff]
        %v3061 = vld [vmem:[%s3052 + $0x40] sm:$0xff]
        %v3062 = vld [vmem:[%s3052 + $0x48] sm:$0xff]
        %v3063 = vld [vmem:[%s3052 + $0x50] sm:$0xff]
        %v3064 = vld [vmem:[%s3052 + $0x58] sm:$0xff]
        %v3065 = vld [vmem:[%s3052 + $0x60] sm:$0xff]
        %v3066 = vld [vmem:[%s3052 + $0x68] sm:$0xff]
        %v3067 = vld [vmem:[%s3052 + $0x70] sm:$0xff]
        %v3068 = vld [vmem:[%s3052 + $0x78] sm:$0xff]
        %v3069 = vld [vmem:[%s3052 + $0x80] sm:$0xff]
        %v3070 = vld [vmem:[%s3052 + $0x88] sm:$0xff]
        %v3071 = vld [vmem:[%s3052 + $0x90] sm:$0xff]
        %v3072 = vld [vmem:[%s3052 + $0x98] sm:$0xff]
        %v3073 = vld [vmem:[%s3052 + $0xa0] sm:$0xff]
        %v3074 = vld [vmem:[%s3052 + $0xa8] sm:$0xff]
        %v3075 = vld [vmem:[%s3052 + $0xb0] sm:$0xff]
        %v3076 = vld [vmem:[%s3052 + $0xb8] sm:$0xff]
        %v3077 = vld [vmem:[%s3052 + $0xc0] sm:$0xff]
        %v3078 = vld [vmem:[%s3052 + $0xc8] sm:$0xff]
        %v3079 = vld [vmem:[%s3052 + $0xd0] sm:$0xff]
        %v3080 = vld [vmem:[%s3052 + $0xd8] sm:$0xff]
        %v3081 = vld [vmem:[%s3052 + $0xe0] sm:$0xff]
        %v3082 = vld [vmem:[%s3052 + $0xe8] sm:$0xff]
        %v3083 = vld [vmem:[%s3052 + $0xf0] sm:$0xff]
        %v3084 = vld [vmem:[%s3052 + $0xf8] sm:$0xff]
        %v3085 = vld [vmem:[%s3052 + $0x100] sm:$0xff]
        %v3086 = vld [vmem:[%s3052 + $0x108] sm:$0xff]
        %v3087 = vld [vmem:[%s3052 + $0x110] sm:$0xff]
        %v3088 = vld [vmem:[%s3052 + $0x118] sm:$0xff]
        %v3089 = vld [vmem:[%s3052 + $0x120] sm:$0xff]
        %v3090 = vld [vmem:[%s3052 + $0x128] sm:$0xff]
        %v3091 = vld [vmem:[%s3052 + $0x130] sm:$0xff]
        %v3092 = vld [vmem:[%s3052 + $0x138] sm:$0xff]
        %v3093 = vld [vmem:[%s3052 + $0x140] sm:$0xff]
        %v3094 = vld [vmem:[%s3052 + $0x148] sm:$0xff]
        %v3095 = vld [vmem:[%s3052 + $0x150] sm:$0xff]
        %v3096 = vld [vmem:[%s3052 + $0x158] sm:$0xff]
        %v3097 = vld [vmem:[%s3052 + $0x160] sm:$0xff]
        %v3098 = vld [vmem:[%s3052 + $0x168] sm:$0xff]
        %v3099 = vld [vmem:[%s3052 + $0x170] sm:$0xff]
        %v3100 = vld [vmem:[%s3052 + $0x178] sm:$0xff]
        %v3101 = vld [vmem:[%s3052 + $0x180] sm:$0xff]
        %v3102 = vld [vmem:[%s3052 + $0x188] sm:$0xff]
        %v3103 = vld [vmem:[%s3052 + $0x190] sm:$0xff]
        %v3104 = vld [vmem:[%s3052 + $0x198] sm:$0xff]
        %v3105 = vld [vmem:[%s3052 + $0x1a0] sm:$0xff]
        %v3106 = vld [vmem:[%s3052 + $0x1a8] sm:$0xff]
        %v3107 = vld [vmem:[%s3052 + $0x1b0] sm:$0xff]
        %v3108 = vld [vmem:[%s3052 + $0x1b8] sm:$0xff]
        %v3109 = vld [vmem:[%s3052 + $0x1c0] sm:$0xff]
        %v3110 = vld [vmem:[%s3052 + $0x1c8] sm:$0xff]
        %v3111 = vld [vmem:[%s3052 + $0x1d0] sm:$0xff]
        %v3112 = vld [vmem:[%s3052 + $0x1d8] sm:$0xff]
        %v3113 = vld [vmem:[%s3052 + $0x1e0] sm:$0xff]
        %v3114 = vld [vmem:[%s3052 + $0x1e8] sm:$0xff]
        %v3115 = vld [vmem:[%s3052 + $0x1f0] sm:$0xff]
        %v3116 = vld [vmem:[%s3052 + $0x1f8] sm:$0xff]
        %v3117 = vrot.slane %v2132, 1
        %v3118 = vrot.slane %v2134, 2
        %v3119 = vor.u32 %v3117, %v3118
        %v3120 = vrot.slane %v2139, 1
        %v3121 = vrot.slane %v2141, 2
        %v3122 = vor.u32 %v3120, %v3121
        %v3123 = vrot.slane %v2146, 1
        %v3124 = vrot.slane %v2148, 2
        %v3125 = vor.u32 %v3123, %v3124
        %v3126 = vrot.slane %v2153, 1
        %v3127 = vrot.slane %v2155, 2
        %v3128 = vor.u32 %v3126, %v3127
        %v3197 = vunpack.c.l.b16 %v3053
        %v3198 = vunpack.c.h.b16 %v3053
        %v3199 = vunpack.c.l.b16 %v3054
        %v3200 = vunpack.c.h.b16 %v3054
        %v3201 = vunpack.c.l.b16 %v3055
        %v3202 = vunpack.c.h.b16 %v3055
        %v3203 = vunpack.c.l.b16 %v3056
        %v3204 = vunpack.c.h.b16 %v3056
        %v3205 = vunpack.c.l.b16 %v3057
        %v3206 = vunpack.c.h.b16 %v3057
        %v3207 = vunpack.c.l.b16 %v3058
        %v3208 = vunpack.c.h.b16 %v3058
        %v3209 = vunpack.c.l.b16 %v3059
        %v3210 = vunpack.c.h.b16 %v3059
        %v3211 = vunpack.c.l.b16 %v3060
        %v3212 = vunpack.c.h.b16 %v3060
        %v3213 = vunpack.c.l.b16 %v3061
        %v3214 = vunpack.c.h.b16 %v3061
        %v3215 = vunpack.c.l.b16 %v3062
        %v3216 = vunpack.c.h.b16 %v3062
        %v3217 = vunpack.c.l.b16 %v3063
        %v3218 = vunpack.c.h.b16 %v3063
        %v3219 = vunpack.c.l.b16 %v3064
        %v3220 = vunpack.c.h.b16 %v3064
        %v3221 = vunpack.c.l.b16 %v3065
        %v3222 = vunpack.c.h.b16 %v3065
        %v3223 = vunpack.c.l.b16 %v3066
        %v3224 = vunpack.c.h.b16 %v3066
        %v3225 = vunpack.c.l.b16 %v3067
        %v3226 = vunpack.c.h.b16 %v3067
        %v3227 = vunpack.c.l.b16 %v3068
        %v3228 = vunpack.c.h.b16 %v3068
        %v3229 = vunpack.c.l.b16 %v3069
        %v3230 = vunpack.c.h.b16 %v3069
        %v3231 = vunpack.c.l.b16 %v3070
        %v3232 = vunpack.c.h.b16 %v3070
        %v3233 = vunpack.c.l.b16 %v3071
        %v3234 = vunpack.c.h.b16 %v3071
        %v3235 = vunpack.c.l.b16 %v3072
        %v3236 = vunpack.c.h.b16 %v3072
        %v3237 = vunpack.c.l.b16 %v3073
        %v3238 = vunpack.c.h.b16 %v3073
        %v3239 = vunpack.c.l.b16 %v3074
        %v3240 = vunpack.c.h.b16 %v3074
        %v3241 = vunpack.c.l.b16 %v3075
        %v3242 = vunpack.c.h.b16 %v3075
        %v3243 = vunpack.c.l.b16 %v3076
        %v3244 = vunpack.c.h.b16 %v3076
        %v3245 = vunpack.c.l.b16 %v3077
        %v3246 = vunpack.c.h.b16 %v3077
        %v3247 = vunpack.c.l.b16 %v3078
        %v3248 = vunpack.c.h.b16 %v3078
        %v3249 = vunpack.c.l.b16 %v3079
        %v3250 = vunpack.c.h.b16 %v3079
        %v3251 = vunpack.c.l.b16 %v3080
        %v3252 = vunpack.c.h.b16 %v3080
        %v3253 = vunpack.c.l.b16 %v3081
        %v3254 = vunpack.c.h.b16 %v3081
        %v3255 = vunpack.c.l.b16 %v3082
        %v3256 = vunpack.c.h.b16 %v3082
        %v3257 = vunpack.c.l.b16 %v3083
        %v3258 = vunpack.c.h.b16 %v3083
        %v3259 = vunpack.c.l.b16 %v3084
        %v3260 = vunpack.c.h.b16 %v3084
        %v3261 = vunpack.c.l.b16 %v3085
        %v3262 = vunpack.c.h.b16 %v3085
        %v3263 = vunpack.c.l.b16 %v3086
        %v3264 = vunpack.c.h.b16 %v3086
        %v3265 = vunpack.c.l.b16 %v3087
        %v3266 = vunpack.c.h.b16 %v3087
        %v3267 = vunpack.c.l.b16 %v3088
        %v3268 = vunpack.c.h.b16 %v3088
        %v3269 = vunpack.c.l.b16 %v3089
        %v3270 = vunpack.c.h.b16 %v3089
        %v3271 = vunpack.c.l.b16 %v3090
        %v3272 = vunpack.c.h.b16 %v3090
        %v3273 = vunpack.c.l.b16 %v3091
        %v3274 = vunpack.c.h.b16 %v3091
        %v3275 = vunpack.c.l.b16 %v3092
        %v3276 = vunpack.c.h.b16 %v3092
        %v3277 = vunpack.c.l.b16 %v3093
        %v3278 = vunpack.c.h.b16 %v3093
        %v3279 = vunpack.c.l.b16 %v3094
        %v3280 = vunpack.c.h.b16 %v3094
        %v3281 = vunpack.c.l.b16 %v3095
        %v3282 = vunpack.c.h.b16 %v3095
        %v3283 = vunpack.c.l.b16 %v3096
        %v3284 = vunpack.c.h.b16 %v3096
        %v3285 = vunpack.c.l.b16 %v3097
        %v3286 = vunpack.c.h.b16 %v3097
        %v3287 = vunpack.c.l.b16 %v3098
        %v3288 = vunpack.c.h.b16 %v3098
        %v3289 = vunpack.c.l.b16 %v3099
        %v3290 = vunpack.c.h.b16 %v3099
        %v3291 = vunpack.c.l.b16 %v3100
        %v3292 = vunpack.c.h.b16 %v3100
        %v3293 = vunpack.c.l.b16 %v3101
        %v3294 = vunpack.c.h.b16 %v3101
        %v3295 = vunpack.c.l.b16 %v3102
        %v3296 = vunpack.c.h.b16 %v3102
        %v3297 = vunpack.c.l.b16 %v3103
        %v3298 = vunpack.c.h.b16 %v3103
        %v3299 = vunpack.c.l.b16 %v3104
        %v3300 = vunpack.c.h.b16 %v3104
        %v3301 = vunpack.c.l.b16 %v3105
        %v3302 = vunpack.c.h.b16 %v3105
        %v3303 = vunpack.c.l.b16 %v3106
        %v3304 = vunpack.c.h.b16 %v3106
        %v3305 = vunpack.c.l.b16 %v3107
        %v3306 = vunpack.c.h.b16 %v3107
        %v3307 = vunpack.c.l.b16 %v3108
        %v3308 = vunpack.c.h.b16 %v3108
        %v3309 = vunpack.c.l.b16 %v3109
        %v3310 = vunpack.c.h.b16 %v3109
        %v3311 = vunpack.c.l.b16 %v3110
        %v3312 = vunpack.c.h.b16 %v3110
        %v3313 = vunpack.c.l.b16 %v3111
        %v3314 = vunpack.c.h.b16 %v3111
        %v3315 = vunpack.c.l.b16 %v3112
        %v3316 = vunpack.c.h.b16 %v3112
        %v3317 = vunpack.c.l.b16 %v3113
        %v3318 = vunpack.c.h.b16 %v3113
        %v3319 = vunpack.c.l.b16 %v3114
        %v3320 = vunpack.c.h.b16 %v3114
        %v3321 = vunpack.c.l.b16 %v3115
        %v3322 = vunpack.c.h.b16 %v3115
        %v3323 = vunpack.c.l.b16 %v3116
        %v3324 = vunpack.c.h.b16 %v3116
        %v3325 = vpack.c.b16 %v3199, %v3197
        %v3326 = vpack.c.b16 %v3200, %v3198
        %v3327 = vpack.c.b16 %v3203, %v3201
        %v3328 = vpack.c.b16 %v3204, %v3202
        %v3329 = vpack.c.b16 %v3207, %v3205
        %v3330 = vpack.c.b16 %v3208, %v3206
        %v3331 = vpack.c.b16 %v3211, %v3209
        %v3332 = vpack.c.b16 %v3212, %v3210
        %v3333 = vpack.c.b16 %v3215, %v3213
        %v3334 = vpack.c.b16 %v3216, %v3214
        %v3335 = vpack.c.b16 %v3219, %v3217
        %v3336 = vpack.c.b16 %v3220, %v3218
        %v3337 = vpack.c.b16 %v3223, %v3221
        %v3338 = vpack.c.b16 %v3224, %v3222
        %v3339 = vpack.c.b16 %v3227, %v3225
        %v3340 = vpack.c.b16 %v3228, %v3226
        %v3341 = vpack.c.b16 %v3231, %v3229
        %v3342 = vpack.c.b16 %v3232, %v3230
        %v3343 = vpack.c.b16 %v3235, %v3233
        %v3344 = vpack.c.b16 %v3236, %v3234
        %v3345 = vpack.c.b16 %v3239, %v3237
        %v3346 = vpack.c.b16 %v3240, %v3238
        %v3347 = vpack.c.b16 %v3243, %v3241
        %v3348 = vpack.c.b16 %v3244, %v3242
        %v3349 = vpack.c.b16 %v3247, %v3245
        %v3350 = vpack.c.b16 %v3248, %v3246
        %v3351 = vpack.c.b16 %v3251, %v3249
        %v3352 = vpack.c.b16 %v3252, %v3250
        %v3353 = vpack.c.b16 %v3255, %v3253
        %v3354 = vpack.c.b16 %v3256, %v3254
        %v3355 = vpack.c.b16 %v3259, %v3257
        %v3356 = vpack.c.b16 %v3260, %v3258
        %v3357 = vpack.c.b16 %v3263, %v3261
        %v3358 = vpack.c.b16 %v3264, %v3262
        %v3359 = vpack.c.b16 %v3267, %v3265
        %v3360 = vpack.c.b16 %v3268, %v3266
        %v3361 = vpack.c.b16 %v3271, %v3269
        %v3362 = vpack.c.b16 %v3272, %v3270
        %v3363 = vpack.c.b16 %v3275, %v3273
        %v3364 = vpack.c.b16 %v3276, %v3274
        %v3365 = vpack.c.b16 %v3279, %v3277
        %v3366 = vpack.c.b16 %v3280, %v3278
        %v3367 = vpack.c.b16 %v3283, %v3281
        %v3368 = vpack.c.b16 %v3284, %v3282
        %v3369 = vpack.c.b16 %v3287, %v3285
        %v3370 = vpack.c.b16 %v3288, %v3286
        %v3371 = vpack.c.b16 %v3291, %v3289
        %v3372 = vpack.c.b16 %v3292, %v3290
        %v3373 = vpack.c.b16 %v3295, %v3293
        %v3374 = vpack.c.b16 %v3296, %v3294
        %v3375 = vpack.c.b16 %v3299, %v3297
        %v3376 = vpack.c.b16 %v3300, %v3298
        %v3377 = vpack.c.b16 %v3303, %v3301
        %v3378 = vpack.c.b16 %v3304, %v3302
        %v3379 = vpack.c.b16 %v3307, %v3305
        %v3380 = vpack.c.b16 %v3308, %v3306
        %v3381 = vpack.c.b16 %v3311, %v3309
        %v3382 = vpack.c.b16 %v3312, %v3310
        %v3383 = vpack.c.b16 %v3315, %v3313
        %v3384 = vpack.c.b16 %v3316, %v3314
        %v3385 = vpack.c.b16 %v3319, %v3317
        %v3386 = vpack.c.b16 %v3320, %v3318
        %v3387 = vpack.c.b16 %v3323, %v3321
        %v3388 = vpack.c.b16 %v3324, %v3322
        %3453 = vmatprep.subr.bf16.mxu0 %v3326
        %3454 = vmatpush1.bf16.msra.mxu0 %v3325
        %3455 = vmatprep.subr.bf16.mxu0 %v3328
        %3456 = vmatpush1.bf16.msra.mxu0 %v3327
        %3457 = vmatprep.subr.bf16.mxu0 %v3330
        %3458 = vmatpush1.bf16.msra.mxu0 %v3329
        %3459 = vmatprep.subr.bf16.mxu0 %v3332
        %3460 = vmatpush1.bf16.msra.mxu0 %v3331
        %3461 = vmatprep.subr.bf16.mxu0 %v3334
        %3462 = vmatpush1.bf16.msra.mxu0 %v3333
        %3463 = vmatprep.subr.bf16.mxu0 %v3336
        %3464 = vmatpush1.bf16.msra.mxu0 %v3335
        %3465 = vmatprep.subr.bf16.mxu0 %v3338
        %3466 = vmatpush1.bf16.msra.mxu0 %v3337
        %3467 = vmatprep.subr.bf16.mxu0 %v3340
        %3468 = vmatpush1.bf16.msra.mxu0 %v3339
        %3469 = vmatprep.subr.bf16.mxu0 %v3342
        %3470 = vmatpush1.bf16.msra.mxu0 %v3341
        %3471 = vmatprep.subr.bf16.mxu0 %v3344
        %3472 = vmatpush1.bf16.msra.mxu0 %v3343
        %3473 = vmatprep.subr.bf16.mxu0 %v3346
        %3474 = vmatpush1.bf16.msra.mxu0 %v3345
        %3475 = vmatprep.subr.bf16.mxu0 %v3348
        %3476 = vmatpush1.bf16.msra.mxu0 %v3347
        %3477 = vmatprep.subr.bf16.mxu0 %v3350
        %3478 = vmatpush1.bf16.msra.mxu0 %v3349
        %3479 = vmatprep.subr.bf16.mxu0 %v3352
        %3480 = vmatpush1.bf16.msra.mxu0 %v3351
        %3481 = vmatprep.subr.bf16.mxu0 %v3354
        %3482 = vmatpush1.bf16.msra.mxu0 %v3353
        %3483 = vmatprep.subr.bf16.mxu0 %v3356
        %3484 = vmatpush1.bf16.msra.mxu0 %v3355
        %3485 = vmatprep.mubr.bf16.mxu0 %v3122
        %3486 = vmatmul.mubr.bf16.gmra.mrb[0].mxu0 %v3119
        %v3487 = vpop.f32.mrb[0].mxu0
        %v3488 = vadd.f32 0.0, %v3487
        %v3489 = vpop.f32.mrb[0].mxu0
        %v3490 = vadd.f32 0.0, %v3489
        %v3491 = vpop.f32.mrb[0].mxu0
        %v3492 = vpop.f32.mrb[0].mxu0
        %3493 = vdwg.mxu0
        %3494 = vmatprep.subr.bf16.mxu0 %v3358
        %3495 = vmatpush1.bf16.msra.mxu0 %v3357
        %3496 = vmatprep.subr.bf16.mxu0 %v3360
        %3497 = vmatpush1.bf16.msra.mxu0 %v3359
        %3498 = vmatprep.subr.bf16.mxu0 %v3362
        %3499 = vmatpush1.bf16.msra.mxu0 %v3361
        %3500 = vmatprep.subr.bf16.mxu0 %v3364
        %3501 = vmatpush1.bf16.msra.mxu0 %v3363
        %3502 = vmatprep.subr.bf16.mxu0 %v3366
        %3503 = vmatpush1.bf16.msra.mxu0 %v3365
        %3504 = vmatprep.subr.bf16.mxu0 %v3368
        %3505 = vmatpush1.bf16.msra.mxu0 %v3367
        %3506 = vmatprep.subr.bf16.mxu0 %v3370
        %3507 = vmatpush1.bf16.msra.mxu0 %v3369
        %3508 = vmatprep.subr.bf16.mxu0 %v3372
        %3509 = vmatpush1.bf16.msra.mxu0 %v3371
        %3510 = vmatprep.subr.bf16.mxu0 %v3374
        %3511 = vmatpush1.bf16.msra.mxu0 %v3373
        %3512 = vmatprep.subr.bf16.mxu0 %v3376
        %3513 = vmatpush1.bf16.msra.mxu0 %v3375
        %3514 = vmatprep.subr.bf16.mxu0 %v3378
        %3515 = vmatpush1.bf16.msra.mxu0 %v3377
        %3516 = vmatprep.subr.bf16.mxu0 %v3380
        %3517 = vmatpush1.bf16.msra.mxu0 %v3379
        %3518 = vmatprep.subr.bf16.mxu0 %v3382
        %3519 = vmatpush1.bf16.msra.mxu0 %v3381
        %3520 = vmatprep.subr.bf16.mxu0 %v3384
        %3521 = vmatpush1.bf16.msra.mxu0 %v3383
        %3522 = vmatprep.subr.bf16.mxu0 %v3386
        %3523 = vmatpush1.bf16.msra.mxu0 %v3385
        %3524 = vmatprep.subr.bf16.mxu0 %v3388
        %3525 = vmatpush1.bf16.msra.mxu0 %v3387
        %3526 = vmatprep.mubr.bf16.mxu0 %v3128
        %3527 = vmatmul.mubr.bf16.gmra.mrb[0].mxu0 %v3125
        %v3528 = vpop.f32.mrb[0].mxu0
        %v3529 = vadd.f32 %v3488, %v3528
        %v3530 = vpop.f32.mrb[0].mxu0
        %v3531 = vadd.f32 %v3490, %v3530
        %v3532 = vpop.f32.mrb[0].mxu0
        %v3533 = vpop.f32.mrb[0].mxu0
        %3534 = vdwg.mxu0
        %v3535 = vadd.f32 %v3050, %v3529
        %v3536 = vadd.f32 %v3051, %v3531
        %3537 = vst [vmem:[#allocation2] sm:$0xff] %v3535
        %3538 = vst [vmem:[#allocation2 + $0x8] sm:$0xff] %v3536
        %v3539 = vld [vmem:[#allocation2] sm:$0xff]
        %v3540 = vld [vmem:[#allocation2 + $0x8] sm:$0xff]
        %s3541 = scalar_lea.vmem %s1499, 2048 [#allocation3]
        %v3542 = vld [vmem:[%s3541] sm:$0xff]
        %v3543 = vld [vmem:[%s3541 + $0x8] sm:$0xff]
        %v3544 = vld [vmem:[%s3541 + $0x10] sm:$0xff]
        %v3545 = vld [vmem:[%s3541 + $0x18] sm:$0xff]
        %v3546 = vld [vmem:[%s3541 + $0x20] sm:$0xff]
        %v3547 = vld [vmem:[%s3541 + $0x28] sm:$0xff]
        %v3548 = vld [vmem:[%s3541 + $0x30] sm:$0xff]
        %v3549 = vld [vmem:[%s3541 + $0x38] sm:$0xff]
        %v3550 = vld [vmem:[%s3541 + $0x40] sm:$0xff]
        %v3551 = vld [vmem:[%s3541 + $0x48] sm:$0xff]
        %v3552 = vld [vmem:[%s3541 + $0x50] sm:$0xff]
        %v3553 = vld [vmem:[%s3541 + $0x58] sm:$0xff]
        %v3554 = vld [vmem:[%s3541 + $0x60] sm:$0xff]
        %v3555 = vld [vmem:[%s3541 + $0x68] sm:$0xff]
        %v3556 = vld [vmem:[%s3541 + $0x70] sm:$0xff]
        %v3557 = vld [vmem:[%s3541 + $0x78] sm:$0xff]
        %v3558 = vld [vmem:[%s3541 + $0x80] sm:$0xff]
        %v3559 = vld [vmem:[%s3541 + $0x88] sm:$0xff]
        %v3560 = vld [vmem:[%s3541 + $0x90] sm:$0xff]
        %v3561 = vld [vmem:[%s3541 + $0x98] sm:$0xff]
        %v3562 = vld [vmem:[%s3541 + $0xa0] sm:$0xff]
        %v3563 = vld [vmem:[%s3541 + $0xa8] sm:$0xff]
        %v3564 = vld [vmem:[%s3541 + $0xb0] sm:$0xff]
        %v3565 = vld [vmem:[%s3541 + $0xb8] sm:$0xff]
        %v3566 = vld [vmem:[%s3541 + $0xc0] sm:$0xff]
        %v3567 = vld [vmem:[%s3541 + $0xc8] sm:$0xff]
        %v3568 = vld [vmem:[%s3541 + $0xd0] sm:$0xff]
        %v3569 = vld [vmem:[%s3541 + $0xd8] sm:$0xff]
        %v3570 = vld [vmem:[%s3541 + $0xe0] sm:$0xff]
        %v3571 = vld [vmem:[%s3541 + $0xe8] sm:$0xff]
        %v3572 = vld [vmem:[%s3541 + $0xf0] sm:$0xff]
        %v3573 = vld [vmem:[%s3541 + $0xf8] sm:$0xff]
        %v3574 = vld [vmem:[%s3541 + $0x100] sm:$0xff]
        %v3575 = vld [vmem:[%s3541 + $0x108] sm:$0xff]
        %v3576 = vld [vmem:[%s3541 + $0x110] sm:$0xff]
        %v3577 = vld [vmem:[%s3541 + $0x118] sm:$0xff]
        %v3578 = vld [vmem:[%s3541 + $0x120] sm:$0xff]
        %v3579 = vld [vmem:[%s3541 + $0x128] sm:$0xff]
        %v3580 = vld [vmem:[%s3541 + $0x130] sm:$0xff]
        %v3581 = vld [vmem:[%s3541 + $0x138] sm:$0xff]
        %v3582 = vld [vmem:[%s3541 + $0x140] sm:$0xff]
        %v3583 = vld [vmem:[%s3541 + $0x148] sm:$0xff]
        %v3584 = vld [vmem:[%s3541 + $0x150] sm:$0xff]
        %v3585 = vld [vmem:[%s3541 + $0x158] sm:$0xff]
        %v3586 = vld [vmem:[%s3541 + $0x160] sm:$0xff]
        %v3587 = vld [vmem:[%s3541 + $0x168] sm:$0xff]
        %v3588 = vld [vmem:[%s3541 + $0x170] sm:$0xff]
        %v3589 = vld [vmem:[%s3541 + $0x178] sm:$0xff]
        %v3590 = vld [vmem:[%s3541 + $0x180] sm:$0xff]
        %v3591 = vld [vmem:[%s3541 + $0x188] sm:$0xff]
        %v3592 = vld [vmem:[%s3541 + $0x190] sm:$0xff]
        %v3593 = vld [vmem:[%s3541 + $0x198] sm:$0xff]
        %v3594 = vld [vmem:[%s3541 + $0x1a0] sm:$0xff]
        %v3595 = vld [vmem:[%s3541 + $0x1a8] sm:$0xff]
        %v3596 = vld [vmem:[%s3541 + $0x1b0] sm:$0xff]
        %v3597 = vld [vmem:[%s3541 + $0x1b8] sm:$0xff]
        %v3598 = vld [vmem:[%s3541 + $0x1c0] sm:$0xff]
        %v3599 = vld [vmem:[%s3541 + $0x1c8] sm:$0xff]
        %v3600 = vld [vmem:[%s3541 + $0x1d0] sm:$0xff]
        %v3601 = vld [vmem:[%s3541 + $0x1d8] sm:$0xff]
        %v3602 = vld [vmem:[%s3541 + $0x1e0] sm:$0xff]
        %v3603 = vld [vmem:[%s3541 + $0x1e8] sm:$0xff]
        %v3604 = vld [vmem:[%s3541 + $0x1f0] sm:$0xff]
        %v3605 = vld [vmem:[%s3541 + $0x1f8] sm:$0xff]
        %v3606 = vrot.slane %v2127, 2
        %v3607 = vrot.slane %v2128, 2
        %v3608 = vrot.slane %v2129, 2
        %v3609 = vrot.slane %v2130, 2
        %v3678 = vunpack.c.l.b16 %v3542
        %v3679 = vunpack.c.h.b16 %v3542
        %v3680 = vunpack.c.l.b16 %v3543
        %v3681 = vunpack.c.h.b16 %v3543
        %v3682 = vunpack.c.l.b16 %v3544
        %v3683 = vunpack.c.h.b16 %v3544
        %v3684 = vunpack.c.l.b16 %v3545
        %v3685 = vunpack.c.h.b16 %v3545
        %v3686 = vunpack.c.l.b16 %v3546
        %v3687 = vunpack.c.h.b16 %v3546
        %v3688 = vunpack.c.l.b16 %v3547
        %v3689 = vunpack.c.h.b16 %v3547
        %v3690 = vunpack.c.l.b16 %v3548
        %v3691 = vunpack.c.h.b16 %v3548
        %v3692 = vunpack.c.l.b16 %v3549
        %v3693 = vunpack.c.h.b16 %v3549
        %v3694 = vunpack.c.l.b16 %v3550
        %v3695 = vunpack.c.h.b16 %v3550
        %v3696 = vunpack.c.l.b16 %v3551
        %v3697 = vunpack.c.h.b16 %v3551
        %v3698 = vunpack.c.l.b16 %v3552
        %v3699 = vunpack.c.h.b16 %v3552
        %v3700 = vunpack.c.l.b16 %v3553
        %v3701 = vunpack.c.h.b16 %v3553
        %v3702 = vunpack.c.l.b16 %v3554
        %v3703 = vunpack.c.h.b16 %v3554
        %v3704 = vunpack.c.l.b16 %v3555
        %v3705 = vunpack.c.h.b16 %v3555
        %v3706 = vunpack.c.l.b16 %v3556
        %v3707 = vunpack.c.h.b16 %v3556
        %v3708 = vunpack.c.l.b16 %v3557
        %v3709 = vunpack.c.h.b16 %v3557
        %v3710 = vunpack.c.l.b16 %v3558
        %v3711 = vunpack.c.h.b16 %v3558
        %v3712 = vunpack.c.l.b16 %v3559
        %v3713 = vunpack.c.h.b16 %v3559
        %v3714 = vunpack.c.l.b16 %v3560
        %v3715 = vunpack.c.h.b16 %v3560
        %v3716 = vunpack.c.l.b16 %v3561
        %v3717 = vunpack.c.h.b16 %v3561
        %v3718 = vunpack.c.l.b16 %v3562
        %v3719 = vunpack.c.h.b16 %v3562
        %v3720 = vunpack.c.l.b16 %v3563
        %v3721 = vunpack.c.h.b16 %v3563
        %v3722 = vunpack.c.l.b16 %v3564
        %v3723 = vunpack.c.h.b16 %v3564
        %v3724 = vunpack.c.l.b16 %v3565
        %v3725 = vunpack.c.h.b16 %v3565
        %v3726 = vunpack.c.l.b16 %v3566
        %v3727 = vunpack.c.h.b16 %v3566
        %v3728 = vunpack.c.l.b16 %v3567
        %v3729 = vunpack.c.h.b16 %v3567
        %v3730 = vunpack.c.l.b16 %v3568
        %v3731 = vunpack.c.h.b16 %v3568
        %v3732 = vunpack.c.l.b16 %v3569
        %v3733 = vunpack.c.h.b16 %v3569
        %v3734 = vunpack.c.l.b16 %v3570
        %v3735 = vunpack.c.h.b16 %v3570
        %v3736 = vunpack.c.l.b16 %v3571
        %v3737 = vunpack.c.h.b16 %v3571
        %v3738 = vunpack.c.l.b16 %v3572
        %v3739 = vunpack.c.h.b16 %v3572
        %v3740 = vunpack.c.l.b16 %v3573
        %v3741 = vunpack.c.h.b16 %v3573
        %v3742 = vunpack.c.l.b16 %v3574
        %v3743 = vunpack.c.h.b16 %v3574
        %v3744 = vunpack.c.l.b16 %v3575
        %v3745 = vunpack.c.h.b16 %v3575
        %v3746 = vunpack.c.l.b16 %v3576
        %v3747 = vunpack.c.h.b16 %v3576
        %v3748 = vunpack.c.l.b16 %v3577
        %v3749 = vunpack.c.h.b16 %v3577
        %v3750 = vunpack.c.l.b16 %v3578
        %v3751 = vunpack.c.h.b16 %v3578
        %v3752 = vunpack.c.l.b16 %v3579
        %v3753 = vunpack.c.h.b16 %v3579
        %v3754 = vunpack.c.l.b16 %v3580
        %v3755 = vunpack.c.h.b16 %v3580
        %v3756 = vunpack.c.l.b16 %v3581
        %v3757 = vunpack.c.h.b16 %v3581
        %v3758 = vunpack.c.l.b16 %v3582
        %v3759 = vunpack.c.h.b16 %v3582
        %v3760 = vunpack.c.l.b16 %v3583
        %v3761 = vunpack.c.h.b16 %v3583
        %v3762 = vunpack.c.l.b16 %v3584
        %v3763 = vunpack.c.h.b16 %v3584
        %v3764 = vunpack.c.l.b16 %v3585
        %v3765 = vunpack.c.h.b16 %v3585
        %v3766 = vunpack.c.l.b16 %v3586
        %v3767 = vunpack.c.h.b16 %v3586
        %v3768 = vunpack.c.l.b16 %v3587
        %v3769 = vunpack.c.h.b16 %v3587
        %v3770 = vunpack.c.l.b16 %v3588
        %v3771 = vunpack.c.h.b16 %v3588
        %v3772 = vunpack.c.l.b16 %v3589
        %v3773 = vunpack.c.h.b16 %v3589
        %v3774 = vunpack.c.l.b16 %v3590
        %v3775 = vunpack.c.h.b16 %v3590
        %v3776 = vunpack.c.l.b16 %v3591
        %v3777 = vunpack.c.h.b16 %v3591
        %v3778 = vunpack.c.l.b16 %v3592
        %v3779 = vunpack.c.h.b16 %v3592
        %v3780 = vunpack.c.l.b16 %v3593
        %v3781 = vunpack.c.h.b16 %v3593
        %v3782 = vunpack.c.l.b16 %v3594
        %v3783 = vunpack.c.h.b16 %v3594
        %v3784 = vunpack.c.l.b16 %v3595
        %v3785 = vunpack.c.h.b16 %v3595
        %v3786 = vunpack.c.l.b16 %v3596
        %v3787 = vunpack.c.h.b16 %v3596
        %v3788 = vunpack.c.l.b16 %v3597
        %v3789 = vunpack.c.h.b16 %v3597
        %v3790 = vunpack.c.l.b16 %v3598
        %v3791 = vunpack.c.h.b16 %v3598
        %v3792 = vunpack.c.l.b16 %v3599
        %v3793 = vunpack.c.h.b16 %v3599
        %v3794 = vunpack.c.l.b16 %v3600
        %v3795 = vunpack.c.h.b16 %v3600
        %v3796 = vunpack.c.l.b16 %v3601
        %v3797 = vunpack.c.h.b16 %v3601
        %v3798 = vunpack.c.l.b16 %v3602
        %v3799 = vunpack.c.h.b16 %v3602
        %v3800 = vunpack.c.l.b16 %v3603
        %v3801 = vunpack.c.h.b16 %v3603
        %v3802 = vunpack.c.l.b16 %v3604
        %v3803 = vunpack.c.h.b16 %v3604
        %v3804 = vunpack.c.l.b16 %v3605
        %v3805 = vunpack.c.h.b16 %v3605
        %v3806 = vpack.c.b16 %v3680, %v3678
        %v3807 = vpack.c.b16 %v3681, %v3679
        %v3808 = vpack.c.b16 %v3684, %v3682
        %v3809 = vpack.c.b16 %v3685, %v3683
        %v3810 = vpack.c.b16 %v3688, %v3686
        %v3811 = vpack.c.b16 %v3689, %v3687
        %v3812 = vpack.c.b16 %v3692, %v3690
        %v3813 = vpack.c.b16 %v3693, %v3691
        %v3814 = vpack.c.b16 %v3696, %v3694
        %v3815 = vpack.c.b16 %v3697, %v3695
        %v3816 = vpack.c.b16 %v3700, %v3698
        %v3817 = vpack.c.b16 %v3701, %v3699
        %v3818 = vpack.c.b16 %v3704, %v3702
        %v3819 = vpack.c.b16 %v3705, %v3703
        %v3820 = vpack.c.b16 %v3708, %v3706
        %v3821 = vpack.c.b16 %v3709, %v3707
        %v3822 = vpack.c.b16 %v3712, %v3710
        %v3823 = vpack.c.b16 %v3713, %v3711
        %v3824 = vpack.c.b16 %v3716, %v3714
        %v3825 = vpack.c.b16 %v3717, %v3715
        %v3826 = vpack.c.b16 %v3720, %v3718
        %v3827 = vpack.c.b16 %v3721, %v3719
        %v3828 = vpack.c.b16 %v3724, %v3722
        %v3829 = vpack.c.b16 %v3725, %v3723
        %v3830 = vpack.c.b16 %v3728, %v3726
        %v3831 = vpack.c.b16 %v3729, %v3727
        %v3832 = vpack.c.b16 %v3732, %v3730
        %v3833 = vpack.c.b16 %v3733, %v3731
        %v3834 = vpack.c.b16 %v3736, %v3734
        %v3835 = vpack.c.b16 %v3737, %v3735
        %v3836 = vpack.c.b16 %v3740, %v3738
        %v3837 = vpack.c.b16 %v3741, %v3739
        %v3838 = vpack.c.b16 %v3744, %v3742
        %v3839 = vpack.c.b16 %v3745, %v3743
        %v3840 = vpack.c.b16 %v3748, %v3746
        %v3841 = vpack.c.b16 %v3749, %v3747
        %v3842 = vpack.c.b16 %v3752, %v3750
        %v3843 = vpack.c.b16 %v3753, %v3751
        %v3844 = vpack.c.b16 %v3756, %v3754
        %v3845 = vpack.c.b16 %v3757, %v3755
        %v3846 = vpack.c.b16 %v3760, %v3758
        %v3847 = vpack.c.b16 %v3761, %v3759
        %v3848 = vpack.c.b16 %v3764, %v3762
        %v3849 = vpack.c.b16 %v3765, %v3763
        %v3850 = vpack.c.b16 %v3768, %v3766
        %v3851 = vpack.c.b16 %v3769, %v3767
        %v3852 = vpack.c.b16 %v3772, %v3770
        %v3853 = vpack.c.b16 %v3773, %v3771
        %v3854 = vpack.c.b16 %v3776, %v3774
        %v3855 = vpack.c.b16 %v3777, %v3775
        %v3856 = vpack.c.b16 %v3780, %v3778
        %v3857 = vpack.c.b16 %v3781, %v3779
        %v3858 = vpack.c.b16 %v3784, %v3782
        %v3859 = vpack.c.b16 %v3785, %v3783
        %v3860 = vpack.c.b16 %v3788, %v3786
        %v3861 = vpack.c.b16 %v3789, %v3787
        %v3862 = vpack.c.b16 %v3792, %v3790
        %v3863 = vpack.c.b16 %v3793, %v3791
        %v3864 = vpack.c.b16 %v3796, %v3794
        %v3865 = vpack.c.b16 %v3797, %v3795
        %v3866 = vpack.c.b16 %v3800, %v3798
        %v3867 = vpack.c.b16 %v3801, %v3799
        %v3868 = vpack.c.b16 %v3804, %v3802
        %v3869 = vpack.c.b16 %v3805, %v3803
        %3934 = vmatprep.subr.bf16.mxu0 %v3807
        %3935 = vmatpush1.bf16.msra.mxu0 %v3806
        %3936 = vmatprep.subr.bf16.mxu0 %v3809
        %3937 = vmatpush1.bf16.msra.mxu0 %v3808
        %3938 = vmatprep.subr.bf16.mxu0 %v3811
        %3939 = vmatpush1.bf16.msra.mxu0 %v3810
        %3940 = vmatprep.subr.bf16.mxu0 %v3813
        %3941 = vmatpush1.bf16.msra.mxu0 %v3812
        %3942 = vmatprep.subr.bf16.mxu0 %v3815
        %3943 = vmatpush1.bf16.msra.mxu0 %v3814
        %3944 = vmatprep.subr.bf16.mxu0 %v3817
        %3945 = vmatpush1.bf16.msra.mxu0 %v3816
        %3946 = vmatprep.subr.bf16.mxu0 %v3819
        %3947 = vmatpush1.bf16.msra.mxu0 %v3818
        %3948 = vmatprep.subr.bf16.mxu0 %v3821
        %3949 = vmatpush1.bf16.msra.mxu0 %v3820
        %3950 = vmatprep.subr.bf16.mxu0 %v3823
        %3951 = vmatpush1.bf16.msra.mxu0 %v3822
        %3952 = vmatprep.subr.bf16.mxu0 %v3825
        %3953 = vmatpush1.bf16.msra.mxu0 %v3824
        %3954 = vmatprep.subr.bf16.mxu0 %v3827
        %3955 = vmatpush1.bf16.msra.mxu0 %v3826
        %3956 = vmatprep.subr.bf16.mxu0 %v3829
        %3957 = vmatpush1.bf16.msra.mxu0 %v3828
        %3958 = vmatprep.subr.bf16.mxu0 %v3831
        %3959 = vmatpush1.bf16.msra.mxu0 %v3830
        %3960 = vmatprep.subr.bf16.mxu0 %v3833
        %3961 = vmatpush1.bf16.msra.mxu0 %v3832
        %3962 = vmatprep.subr.bf16.mxu0 %v3835
        %3963 = vmatpush1.bf16.msra.mxu0 %v3834
        %3964 = vmatprep.subr.bf16.mxu0 %v3837
        %3965 = vmatpush1.bf16.msra.mxu0 %v3836
        %3966 = vmatprep.mubr.bf16.mxu0 %v3607
        %3967 = vmatmul.mubr.bf16.gmra.mrb[0].mxu0 %v3606
        %v3968 = vpop.f32.mrb[0].mxu0
        %v3969 = vadd.f32 0.0, %v3968
        %v3970 = vpop.f32.mrb[0].mxu0
        %v3971 = vadd.f32 0.0, %v3970
        %v3972 = vpop.f32.mrb[0].mxu0
        %v3973 = vpop.f32.mrb[0].mxu0
        %3974 = vdwg.mxu0
        %3975 = vmatprep.subr.bf16.mxu0 %v3839
        %3976 = vmatpush1.bf16.msra.mxu0 %v3838
        %3977 = vmatprep.subr.bf16.mxu0 %v3841
        %3978 = vmatpush1.bf16.msra.mxu0 %v3840
        %3979 = vmatprep.subr.bf16.mxu0 %v3843
        %3980 = vmatpush1.bf16.msra.mxu0 %v3842
        %3981 = vmatprep.subr.bf16.mxu0 %v3845
        %3982 = vmatpush1.bf16.msra.mxu0 %v3844
        %3983 = vmatprep.subr.bf16.mxu0 %v3847
        %3984 = vmatpush1.bf16.msra.mxu0 %v3846
        %3985 = vmatprep.subr.bf16.mxu0 %v3849
        %3986 = vmatpush1.bf16.msra.mxu0 %v3848
        %3987 = vmatprep.subr.bf16.mxu0 %v3851
        %3988 = vmatpush1.bf16.msra.mxu0 %v3850
        %3989 = vmatprep.subr.bf16.mxu0 %v3853
        %3990 = vmatpush1.bf16.msra.mxu0 %v3852
        %3991 = vmatprep.subr.bf16.mxu0 %v3855
        %3992 = vmatpush1.bf16.msra.mxu0 %v3854
        %3993 = vmatprep.subr.bf16.mxu0 %v3857
        %3994 = vmatpush1.bf16.msra.mxu0 %v3856
        %3995 = vmatprep.subr.bf16.mxu0 %v3859
        %3996 = vmatpush1.bf16.msra.mxu0 %v3858
        %3997 = vmatprep.subr.bf16.mxu0 %v3861
        %3998 = vmatpush1.bf16.msra.mxu0 %v3860
        %3999 = vmatprep.subr.bf16.mxu0 %v3863
        %4000 = vmatpush1.bf16.msra.mxu0 %v3862
        %4001 = vmatprep.subr.bf16.mxu0 %v3865
        %4002 = vmatpush1.bf16.msra.mxu0 %v3864
        %4003 = vmatprep.subr.bf16.mxu0 %v3867
        %4004 = vmatpush1.bf16.msra.mxu0 %v3866
        %4005 = vmatprep.subr.bf16.mxu0 %v3869
        %4006 = vmatpush1.bf16.msra.mxu0 %v3868
        %4007 = vmatprep.mubr.bf16.mxu0 %v3609
        %4008 = vmatmul.mubr.bf16.gmra.mrb[0].mxu0 %v3608
        %v4009 = vpop.f32.mrb[0].mxu0
        %v4010 = vadd.f32 %v3969, %v4009
        %v4011 = vpop.f32.mrb[0].mxu0
        %v4012 = vadd.f32 %v3971, %v4011
        %v4013 = vpop.f32.mrb[0].mxu0
        %v4014 = vpop.f32.mrb[0].mxu0
        %4015 = vdwg.mxu0
        %v4016 = vadd.f32 %v3539, %v4010
        %v4017 = vadd.f32 %v3540, %v4012
        %4018 = vst [vmem:[#allocation2] sm:$0xff] %v4016
        %4019 = vst [vmem:[#allocation2 + $0x8] sm:$0xff] %v4017
        %v4020 = vld [vmem:[#allocation2] sm:$0xff]
        %v4021 = vld [vmem:[#allocation2 + $0x8] sm:$0xff]
        %v4022 = vld [vmem:[%s1546] sm:$0x3]
        %v4024 = vlaneseq
        %v4025 = vshrl.u32 %v4024, 7
        %v4026 = vsub.s32 0, %v4025
        %v4027 = vrot.slane %v4022, %v4026
        %v4028 = vlaneseq
        %v4029 = vshrl.u32 %v4028, 7
        %v4030 = vsub.s32 1, %v4029
        %v4031 = vrot.slane %v4022, %v4030
        %v4034 = vadd.f32 %v4020, %v4027
        %v4035 = vadd.f32 %v4021, %v4031
        %v4036 = vmax.f32 %v4034, 0.0
        %v4037 = vmax.f32 %v4035, 0.0
        %v4038 = vpack.c.bf16 %v4036, %v4036
        %v4039 = vpack.c.bf16 %v4037, %v4037
        %v4042 = vunpack.c.l.b16 %v4038
        %v4043 = vunpack.c.l.b16 %v4039
        %v4044 = vpack.c.b16 %v4043, %v4042
        %4046 = vst [vmem:[%s1560] sm:$0xff] %v4044
        %s4047 = smul.u32 2, %s20
        %p4048 = scmp.lt.s32.totalorder %s19, 1
        %s4049 = scalar_select %p4048, %s19, 1
        %p4050 = scmp.lt.s32.totalorder %s21, 0
        %s4051 = scalar_select %p4050, %s21, 0
        %p4052 = scmp.lt.s32.totalorder %s4047, 3
        %s4053 = scalar_select %p4052, %s4047, 3
        %s4054 = smul.addr %s4051, 4
        %s4055 = sadd.s32 %s4053, %s4054
        %s4056 = smul.addr %s4049, 4
        %s4057 = sadd.s32 %s4055, %s4056
        %s4058 = smul.addr %s4057, 4
        %s4059 = scalar_lea.vmem %s3, %s4058
        // Predicated region
        $region71: #{encoder_forward.9} parent=65 // pred_check
          %p4060 = pneg %p133
        $region72: #{encoder_forward.9} parent=65 // pred_check_branch
          %4062 = sbr.rel (%p4060) target = $region74
        $region73: #{encoder_forward.9} parent=65 // pred_region
          %s4063 = smul.u32 2, %s20
        $region74: #{encoder_forward.9} parent=65 // pred_fallthru
          _
      $region66: #{encoder_forward.9} parent=5 // pred_fallthru
        _
      %p4064 = scmp.le.s32.totalorder 2, %s9
      // Predicated region
      $region75: #{encoder_forward.9} parent=5 // pred_check
        %p4065 = pneg %p4064
      $region76: #{encoder_forward.9} parent=5 // pred_check_branch
        %4067 = sbr.rel (%p4065) target = $region78
      $region77: #{encoder_forward.9} parent=5 // pred_region
        %s4068 = ssub.s32 %s9, 2
        // Predicated region
        $region79: #{encoder_forward.9} parent=77 // pred_check
          %p4069 = pneg %p139
        $region80: #{encoder_forward.9} parent=77 // pred_check_branch
          %4071 = sbr.rel (%p4069) target = $region82
        $region81: #{encoder_forward.9} parent=77 // pred_region
          %s4072 = smul.u32 2, %s23
          %p4073 = scmp.lt.s32.totalorder %s22, 1
          %s4074 = scalar_select %p4073, %s22, 1
          %p4075 = scmp.lt.s32.totalorder %s24, 0
          %s4076 = scalar_select %p4075, %s24, 0
          %p4077 = scmp.lt.s32.totalorder %s4072, 3
          %s4078 = scalar_select %p4077, %s4072, 3
          %s4079 = smul.addr %s4076, 4
          %s4080 = sadd.s32 %s4078, %s4079
          %s4081 = smul.addr %s4074, 4
          %s4082 = sadd.s32 %s4080, %s4081
          %s4083 = smul.addr %s4082, 4
          %s4084 = scalar_lea.vmem %s3, %s4083
        $region82: #{encoder_forward.9} parent=77 // pred_fallthru
          _
      $region78: #{encoder_forward.9} parent=5 // pred_fallthru
        _
    $region6: #{encoder_forward.9} parent=1 // loop_footer
      %s13 = sadd.s32 1, %s9
    $region7: #{encoder_forward.9} parent=1 // loop_footer_branch
      %8 = sbr.rel target = $region3
    $region8: #{encoder_forward.9} parent=1 // loop_exit
      _

// kernel: encoder_forward.11
$region0: #{encoder_forward.11}
  #allocation0 [shape = 'u32[]', space=smem, size = 0x4, offset = 0x4, fixed_abs, tag = 'smem constant byte address 0x4 - core index']
  #allocation1 [shape = 'u32[144,128]{1,0:T(1,128)}', space=vmem, size = 0x12000, scoped, tag = 'internal scratch']
  #allocation2 [shape = 'f32[2,64]{1,0:T(2,128)}', space=vmem, size = 0x400, scoped, tag = 'scratch operand']
  #allocation3 [shape = 'f32[2,64]{1,0:T(2,128)}', space=vmem, size = 0x400, scoped, tag = 'scratch operand']
  %s0 = inlined_call_operand.vmem [shape: f32[8,2,256], index: 0, kind: input, shape index: {}, may-alias: {0,1}]
  %s1 = inlined_call_operand.vmem [shape: f32[8,2,256], index: 1, kind: input, shape index: {}, may-alias: {0,1}]
  %s2 = inlined_call_operand.vmem [shape: bf16[64,256], index: 2, kind: input, shape index: {}]
  %s3 = inlined_call_operand.vmem [shape: f32[8,2,32], index: 3, kind: output, shape index: {0}]
  %s4 = inlined_call_operand.vmem [shape: f32[8,2,32], index: 4, kind: output, shape index: {1}]
  %5 = xla_tuple %s3, %s4
  %s6 = sld [smem:[#allocation0]]
  $region34: #{encoder_forward.11} parent=0
    _
  %s8 = ssub.s32 1, %s6
  %s9 = scalar_select 0, %s8, %s6
  // Predicated region
  $region2: #{encoder_forward.11} parent=0 // pred_check
    _
  $region3: #{encoder_forward.11} parent=0 // pred_check_branch
    %11 = sbr.rel (0) target = $region5
  $region4: #{encoder_forward.11} parent=0 // pred_region
    _
  $region5: #{encoder_forward.11} parent=0 // pred_fallthru
    _
  // Predicated region
  $region6: #{encoder_forward.11} parent=0 // pred_check
    _
  $region7: #{encoder_forward.11} parent=0 // pred_check_branch
    %13 = sbr.rel (0) target = $region9
  $region8: #{encoder_forward.11} parent=0 // pred_region
    %s14 = ssub.s32 0, 0
    %s15 = smul.u32 8, %s14
    %p16 = scmp.lt.s32.totalorder %s15, 7
    %s17 = scalar_select %p16, %s15, 7
    %s18 = smul.addr %s17, 2
    %s19 = smul.addr %s18, 2
    %s20 = scalar_lea.vmem %s1, %s19
    %s21 = ssub.s32 0, 0
    %s22 = smul.u32 8, %s21
  $region9: #{encoder_forward.11} parent=0 // pred_fallthru
    _
  // Predicated region
  $region10: #{encoder_forward.11} parent=0 // pred_check
    _
  $region11: #{encoder_forward.11} parent=0 // pred_check_branch
    %24 = sbr.rel (0) target = $region13
  $region12: #{encoder_forward.11} parent=0 // pred_region
    _
  $region13: #{encoder_forward.11} parent=0 // pred_fallthru
    _
  %s25 = ssub.s32 0, 0
  %s26 = smul.u32 8, %s25
  %p27 = scmp.lt.s32.totalorder %s26, 7
  %s28 = scalar_select %p27, %s26, 7
  %s29 = smul.addr %s28, 2
  %s30 = smul.addr %s29, 2
  %s31 = scalar_lea.vmem %s1, %s30
  %s32 = ssub.s32 0, 0
  %s33 = smul.u32 8, %s32
  %p34 = scmp.lt.s32.totalorder %s33, 7
  %s35 = scalar_select %p34, %s33, 7
  %s36 = smul.addr %s35, 2
  %s37 = scalar_lea.vmem %s4, %s36
  %s38 = ssub.s32 0, 0
  %s39 = smul.u32 8, %s38
  %p40 = scmp.lt.s32.totalorder %s39, 7
  %s41 = scalar_select %p40, %s39, 7
  %s42 = smul.addr %s41, 2
  %s43 = smul.addr %s42, 2
  %s44 = scalar_lea.vmem %s1, %s43
  %s45 = ssub.s32 0, 0
  %s46 = smul.u32 8, %s45
  %s47 = ssub.s32 0, 0
  %s48 = smul.u32 8, %s47
  %p49 = scmp.lt.s32.totalorder %s48, 7
  %s50 = scalar_select %p49, %s48, 7
  %s51 = smul.addr %s50, 2
  %s52 = scalar_lea.vmem %s4, %s51
  %s53 = ssub.s32 0, 0
  %s54 = smul.u32 8, %s53
  %p56 = scmp.eq.s32.totalorder 0, 0
  // Predicated region
  $region14: #{encoder_forward.11} parent=0 // pred_check
    %p57 = pneg %p56
  $region15: #{encoder_forward.11} parent=0 // pred_check_branch
    %59 = sbr.rel (%p57) target = $region17
  $region16: #{encoder_forward.11} parent=0 // pred_region
    %vm60 = vcmask 517120
    %61 = vst.msk [vmem:[#allocation2] sm:$0x3] %vm60, 0.0
    %62 = vst.msk [vmem:[#allocation3] sm:$0x3] %vm60, 0.0
  $region17: #{encoder_forward.11} parent=0 // pred_fallthru
    _
  %v63 = vld [vmem:[%s2] sm:$0xff]
  %v64 = vld [vmem:[%s2 + $0x8] sm:$0xff]
  %v65 = vld [vmem:[%s2 + $0x10] sm:$0xff]
  %v66 = vld [vmem:[%s2 + $0x18] sm:$0xff]
  %v67 = vld [vmem:[%s2 + $0x20] sm:$0xff]
  %v68 = vld [vmem:[%s2 + $0x28] sm:$0xff]
  %v69 = vld [vmem:[%s2 + $0x30] sm:$0xff]
  %v70 = vld [vmem:[%s2 + $0x38] sm:$0xff]
  %v71 = vlaneseq
  %v72 = vand.u32 %v71, 127
  %v73 = vadd.s32 %v72, 128
  %vm74 = vcmp.lt.s32.totalorder %v72, 0
  %v75 = vsub.s32 0, %v72
  %v76 = vsel %vm74, %v75, %v72
  %v77 = vshrl.u32 %v76, 6
  %v78 = vand.u32 %v76, 63
  %v79 = vsub.s32 0, %v78
  %v80 = vsel %vm74, %v79, %v78
  %vm81 = vcmp.lt.s32.totalorder %v73, 0
  %v82 = vsub.s32 0, %v73
  %v83 = vsel %vm81, %v82, %v73
  %v84 = vshrl.u32 %v83, 6
  %v85 = vand.u32 %v83, 63
  %v86 = vsub.s32 0, %v85
  %v87 = vsel %vm81, %v86, %v85
  %vm88 = vcmp.ne.s32.totalorder %v80, 0
  %vm89 = vcmp.ne.s32.totalorder %v87, 0
  %vm90 = vcmp.lt.s32.totalorder %v80, 0
  %vm91 = vcmp.lt.s32.totalorder %v87, 0
  %vm92 = vmand %vm90, %vm88
  %vm93 = vmand %vm91, %vm89
  %v94 = vadd.s32 %v80, 64
  %v95 = vadd.s32 %v87, 64
  %v96 = vsel %vm92, %v94, %v80
  %v97 = vsel %vm93, %v95, %v87
  %vm98 = vcmp.lt.s32.totalorder %v96, 32
  %vm99 = vcmp.lt.s32.totalorder %v97, 32
  %v100 = vld [vmem:[#allocation2] sm:$0x3]
  %v101 = vld [vmem:[#allocation3] sm:$0x3]
  %v102 = vld [vmem:[%s0] sm:$0xf]
  %s103 = scalar_lea.vmem %s44, 28
  %v104 = vld [vmem:[%s103] sm:$0xf]
  %v107 = vunpack.c.l.s4 1983009808
  %v108 = vunpack.c.0.s8 %v107
  %v109 = vlaneseq
  %v110 = vshrl.u32 %v109, 7
  %v111 = vsub.s32 %v108, %v110
  %v112 = vrot.slane %v102, %v111
  %v113 = vcombine.high %v112, %v112
  %v118 = vunpack.c.l.s4 1983009808
  %v119 = vunpack.c.0.s8 %v118
  %v120 = vlaneseq
  %v121 = vshrl.u32 %v120, 7
  %v122 = vsub.s32 %v119, %v121
  %v123 = vrot.slane %v104, %v122
  %v124 = vcombine.high %v123, %v123
  %v127 = vsel %vm98, %v112, %v123
  %v128 = vsel %vm99, %v113, %v124
  %v129 = vpack.c.bf16 %v100, %v100
  %v138 = vunpack.c.l.b16 %v63
  %v139 = vunpack.c.h.b16 %v63
  %v140 = vunpack.c.l.b16 %v64
  %v141 = vunpack.c.h.b16 %v64
  %v142 = vunpack.c.l.b16 %v65
  %v143 = vunpack.c.h.b16 %v65
  %v144 = vunpack.c.l.b16 %v66
  %v145 = vunpack.c.h.b16 %v66
  %v146 = vunpack.c.l.b16 %v67
  %v147 = vunpack.c.h.b16 %v67
  %v148 = vunpack.c.l.b16 %v68
  %v149 = vunpack.c.h.b16 %v68
  %v150 = vunpack.c.l.b16 %v69
  %v151 = vunpack.c.h.b16 %v69
  %v152 = vunpack.c.l.b16 %v70
  %v153 = vunpack.c.h.b16 %v70
  %v154 = vpack.c.b16 %v140, %v138
  %v155 = vpack.c.b16 %v141, %v139
  %v156 = vpack.c.b16 %v144, %v142
  %v157 = vpack.c.b16 %v145, %v143
  %v158 = vpack.c.b16 %v148, %v146
  %v159 = vpack.c.b16 %v149, %v147
  %v160 = vpack.c.b16 %v152, %v150
  %v161 = vpack.c.b16 %v153, %v151
  %vm170 = vcmask 523264
  %v172 = vsel %vm170, %v129, 0
  %174 = vmatprep.subr.bf16.mxu0 %v155
  %175 = vmatpush1.bf16.msra.mxu0 %v154
  %176 = vmatprep.subr.bf16.mxu0 %v157
  %177 = vmatpush1.bf16.msra.mxu0 %v156
  %178 = vmatprep.subr.bf16.mxu0 %v159
  %179 = vmatpush1.bf16.msra.mxu0 %v158
  %180 = vmatprep.subr.bf16.mxu0 %v161
  %181 = vmatpush1.bf16.msra.mxu0 %v160
  %182 = vmatprep.subr.bf16.mxu0 0
  %183 = vmatpush1.bf16.msra.mxu0 0
  %184 = vmatprep.subr.bf16.mxu0 0
  %185 = vmatpush1.bf16.msra.mxu0 0
  %186 = vmatprep.subr.bf16.mxu0 0
  %187 = vmatpush1.bf16.msra.mxu0 0
  %188 = vmatprep.subr.bf16.mxu0 0
  %189 = vmatpush1.bf16.msra.mxu0 0
  %190 = vmatprep.subr.bf16.mxu0 0
  %191 = vmatpush1.bf16.msra.mxu0 0
  %192 = vmatprep.subr.bf16.mxu0 0
  %193 = vmatpush1.bf16.msra.mxu0 0
  %194 = vmatprep.subr.bf16.mxu0 0
  %195 = vmatpush1.bf16.msra.mxu0 0
  %196 = vmatprep.subr.bf16.mxu0 0
  %197 = vmatpush1.bf16.msra.mxu0 0
  %198 = vmatprep.subr.bf16.mxu0 0
  %199 = vmatpush1.bf16.msra.mxu0 0
  %200 = vmatprep.subr.bf16.mxu0 0
  %201 = vmatpush1.bf16.msra.mxu0 0
  %202 = vmatprep.subr.bf16.mxu0 0
  %203 = vmatpush1.bf16.msra.mxu0 0
  %204 = vmatprep.subr.bf16.mxu0 0
  %205 = vmatpush1.bf16.msra.mxu0 0
  %206 = vmatprep.mubr.bf16.mxu0 0
  %207 = vmatmul.mubr.bf16.gmra.mrb[0].mxu0 %v172
  %v208 = vpop.f32.mrb[0].mxu0
  %v209 = vadd.f32 0.0, %v208
  %v210 = vpop.f32.mrb[0].mxu0
  %v211 = vadd.f32 0.0, %v210
  %v212 = vpop.f32.mrb[0].mxu0
  %v213 = vpop.f32.mrb[0].mxu0
  %214 = vdwg.mxu0
  %v215 = vadd.f32 %v127, %v209
  %v216 = vadd.f32 %v128, %v211
  %v217 = vxor.u32 %v215, 2147483648
  %v218 = vxor.u32 %v216, 2147483648
  %v219 = vmul.f32 %v217, 1.442695
  %v220 = vpow.pop %v219
  %v221 = vmul.f32 %v218, 1.442695
  %v222 = vpow.pop %v221
  %v223 = vadd.f32 %v220, 1.0
  %v224 = vadd.f32 %v222, 1.0
  %v225 = vrcp.pop %v223
  %v226 = vmul.f32 1.0, %v225
  %v227 = vrcp.pop %v224
  %v228 = vmul.f32 1.0, %v227
  %v229 = vtanh.pop %v216
  %231 = vrot.lane.b32.xlu0 %v101, 64
  %v232 = vpop.permute.xlu0 %231
  %v234 = vmul.f32 %v226, %v232
  %236 = vrot.lane.b32.xlu0 %v229, 64
  %v237 = vpop.permute.xlu0 %236
  %v239 = vmul.f32 %v226, %v237
  %241 = vrot.lane.b32.xlu0 %v239, 64
  %v242 = vpop.permute.xlu0 %241
  %v244 = vadd.f32 %v234, %v242
  %v245 = vtanh.pop %v244
  %247 = vrot.lane.b32.xlu0 %v245, 64
  %v248 = vpop.permute.xlu0 %247
  %v250 = vmul.f32 %v228, %v248
  %vm251 = vcmask 254976
  %252 = vst.msk [vmem:[%s3] sm:$0x3] %vm251, %v250
  %254 = vrot.lane.b32.xlu0 %v250, 96
  %v255 = vpop.permute.xlu0 %254
  %s257 = scalar_lea.vmem %s52, 14
  %258 = vst.msk [vmem:[%s257] sm:$0x3] %vm251, %v255
  %s259 = scalar_lea.vmem %s0, 4
  %v260 = vld [vmem:[%s259] sm:$0xf]
  %s261 = scalar_lea.vmem %s44, 24
  %v262 = vld [vmem:[%s261] sm:$0xf]
  %v265 = vunpack.c.l.s4 1983009808
  %v266 = vunpack.c.0.s8 %v265
  %v267 = vlaneseq
  %v268 = vshrl.u32 %v267, 7
  %v269 = vsub.s32 %v266, %v268
  %v270 = vrot.slane %v260, %v269
  %v271 = vcombine.high %v270, %v270
  %v276 = vunpack.c.l.s4 1983009808
  %v277 = vunpack.c.0.s8 %v276
  %v278 = vlaneseq
  %v279 = vshrl.u32 %v278, 7
  %v280 = vsub.s32 %v277, %v279
  %v281 = vrot.slane %v262, %v280
  %v282 = vcombine.high %v281, %v281
  %v285 = vsel %vm98, %v270, %v281
  %v286 = vsel %vm99, %v271, %v282
  %v287 = vpack.c.bf16 %v250, %v250
  %v289 = vsel %vm170, %v287, 0
  %291 = vmatprep.subr.bf16.mxu0 %v155
  %292 = vmatpush1.bf16.msra.mxu0 %v154
  %293 = vmatprep.subr.bf16.mxu0 %v157
  %294 = vmatpush1.bf16.msra.mxu0 %v156
  %295 = vmatprep.subr.bf16.mxu0 %v159
  %296 = vmatpush1.bf16.msra.mxu0 %v158
  %297 = vmatprep.subr.bf16.mxu0 %v161
  %298 = vmatpush1.bf16.msra.mxu0 %v160
  %299 = vmatprep.subr.bf16.mxu0 0
  %300 = vmatpush1.bf16.msra.mxu0 0
  %301 = vmatprep.subr.bf16.mxu0 0
  %302 = vmatpush1.bf16.msra.mxu0 0
  %303 = vmatprep.subr.bf16.mxu0 0
  %304 = vmatpush1.bf16.msra.mxu0 0
  %305 = vmatprep.subr.bf16.mxu0 0
  %306 = vmatpush1.bf16.msra.mxu0 0
  %307 = vmatprep.subr.bf16.mxu0 0
  %308 = vmatpush1.bf16.msra.mxu0 0
  %309 = vmatprep.subr.bf16.mxu0 0
  %310 = vmatpush1.bf16.msra.mxu0 0
  %311 = vmatprep.subr.bf16.mxu0 0
  %312 = vmatpush1.bf16.msra.mxu0 0
  %313 = vmatprep.subr.bf16.mxu0 0
  %314 = vmatpush1.bf16.msra.mxu0 0
  %315 = vmatprep.subr.bf16.mxu0 0
  %316 = vmatpush1.bf16.msra.mxu0 0
  %317 = vmatprep.subr.bf16.mxu0 0
  %318 = vmatpush1.bf16.msra.mxu0 0
  %319 = vmatprep.subr.bf16.mxu0 0
  %320 = vmatpush1.bf16.msra.mxu0 0
  %321 = vmatprep.subr.bf16.mxu0 0
  %322 = vmatpush1.bf16.msra.mxu0 0
  %323 = vmatprep.mubr.bf16.mxu0 0
  %324 = vmatmul.mubr.bf16.gmra.mrb[0].mxu0 %v289
  %v325 = vpop.f32.mrb[0].mxu0
  %v326 = vadd.f32 0.0, %v325
  %v327 = vpop.f32.mrb[0].mxu0
  %v328 = vadd.f32 0.0, %v327
  %v329 = vpop.f32.mrb[0].mxu0
  %v330 = vpop.f32.mrb[0].mxu0
  %331 = vdwg.mxu0
  %v332 = vadd.f32 %v285, %v326
  %v333 = vadd.f32 %v286, %v328
  %v334 = vxor.u32 %v332, 2147483648
  %v335 = vxor.u32 %v333, 2147483648
  %v336 = vmul.f32 %v334, 1.442695
  %v337 = vpow.pop %v336
  %v338 = vmul.f32 %v335, 1.442695
  %v339 = vpow.pop %v338
  %v340 = vadd.f32 %v337, 1.0
  %v341 = vadd.f32 %v339, 1.0
  %v342 = vrcp.pop %v340
  %v343 = vmul.f32 1.0, %v342
  %v344 = vrcp.pop %v341
  %v345 = vmul.f32 1.0, %v344
  %v346 = vtanh.pop %v333
  %v347 = vmul.f32 %v343, %v244
  %349 = vrot.lane.b32.xlu0 %v346, 64
  %v350 = vpop.permute.xlu0 %349
  %v352 = vmul.f32 %v343, %v350
  %354 = vrot.lane.b32.xlu0 %v352, 64
  %v355 = vpop.permute.xlu0 %354
  %v357 = vadd.f32 %v347, %v355
  %v358 = vtanh.pop %v357
  %360 = vrot.lane.b32.xlu0 %v358, 64
  %v361 = vpop.permute.xlu0 %360
  %v363 = vmul.f32 %v345, %v361
  %s364 = scalar_lea.vmem %s3, 2
  %365 = vst.msk [vmem:[%s364] sm:$0x3] %vm251, %v363
  %367 = vrot.lane.b32.xlu0 %v363, 96
  %v368 = vpop.permute.xlu0 %367
  %s370 = scalar_lea.vmem %s52, 12
  %371 = vst.msk [vmem:[%s370] sm:$0x3] %vm251, %v368
  %s372 = scalar_lea.vmem %s0, 8
  %v373 = vld [vmem:[%s372] sm:$0xf]
  %s374 = scalar_lea.vmem %s44, 20
  %v375 = vld [vmem:[%s374] sm:$0xf]
  %v378 = vunpack.c.l.s4 1983009808
  %v379 = vunpack.c.0.s8 %v378
  %v380 = vlaneseq
  %v381 = vshrl.u32 %v380, 7
  %v382 = vsub.s32 %v379, %v381
  %v383 = vrot.slane %v373, %v382
  %v384 = vcombine.high %v383, %v383
  %v389 = vunpack.c.l.s4 1983009808
  %v390 = vunpack.c.0.s8 %v389
  %v391 = vlaneseq
  %v392 = vshrl.u32 %v391, 7
  %v393 = vsub.s32 %v390, %v392
  %v394 = vrot.slane %v375, %v393
  %v395 = vcombine.high %v394, %v394
  %v398 = vsel %vm98, %v383, %v394
  %v399 = vsel %vm99, %v384, %v395
  %v400 = vpack.c.bf16 %v363, %v363
  %v402 = vsel %vm170, %v400, 0
  %404 = vmatprep.subr.bf16.mxu0 %v155
  %405 = vmatpush1.bf16.msra.mxu0 %v154
  %406 = vmatprep.subr.bf16.mxu0 %v157
  %407 = vmatpush1.bf16.msra.mxu0 %v156
  %408 = vmatprep.subr.bf16.mxu0 %v159
  %409 = vmatpush1.bf16.msra.mxu0 %v158
  %410 = vmatprep.subr.bf16.mxu0 %v161
  %411 = vmatpush1.bf16.msra.mxu0 %v160
  %412 = vmatprep.subr.bf16.mxu0 0
  %413 = vmatpush1.bf16.msra.mxu0 0
  %414 = vmatprep.subr.bf16.mxu0 0
  %415 = vmatpush1.bf16.msra.mxu0 0
  %416 = vmatprep.subr.bf16.mxu0 0
  %417 = vmatpush1.bf16.msra.mxu0 0
  %418 = vmatprep.subr.bf16.mxu0 0
  %419 = vmatpush1.bf16.msra.mxu0 0
  %420 = vmatprep.subr.bf16.mxu0 0
  %421 = vmatpush1.bf16.msra.mxu0 0
  %422 = vmatprep.subr.bf16.mxu0 0
  %423 = vmatpush1.bf16.msra.mxu0 0
  %424 = vmatprep.subr.bf16.mxu0 0
  %425 = vmatpush1.bf16.msra.mxu0 0
  %426 = vmatprep.subr.bf16.mxu0 0
  %427 = vmatpush1.bf16.msra.mxu0 0
  %428 = vmatprep.subr.bf16.mxu0 0
  %429 = vmatpush1.bf16.msra.mxu0 0
  %430 = vmatprep.subr.bf16.mxu0 0
  %431 = vmatpush1.bf16.msra.mxu0 0
  %432 = vmatprep.subr.bf16.mxu0 0
  %433 = vmatpush1.bf16.msra.mxu0 0
  %434 = vmatprep.subr.bf16.mxu0 0
  %435 = vmatpush1.bf16.msra.mxu0 0
  %436 = vmatprep.mubr.bf16.mxu0 0
  %437 = vmatmul.mubr.bf16.gmra.mrb[0].mxu0 %v402
  %v438 = vpop.f32.mrb[0].mxu0
  %v439 = vadd.f32 0.0, %v438
  %v440 = vpop.f32.mrb[0].mxu0
  %v441 = vadd.f32 0.0, %v440
  %v442 = vpop.f32.mrb[0].mxu0
  %v443 = vpop.f32.mrb[0].mxu0
  %444 = vdwg.mxu0
  %v445 = vadd.f32 %v398, %v439
  %v446 = vadd.f32 %v399, %v441
  %v447 = vxor.u32 %v445, 2147483648
  %v448 = vxor.u32 %v446, 2147483648
  %v449 = vmul.f32 %v447, 1.442695
  %v450 = vpow.pop %v449
  %v451 = vmul.f32 %v448, 1.442695
  %v452 = vpow.pop %v451
  %v453 = vadd.f32 %v450, 1.0
  %v454 = vadd.f32 %v452, 1.0
  %v455 = vrcp.pop %v453
  %v456 = vmul.f32 1.0, %v455
  %v457 = vrcp.pop %v454
  %v458 = vmul.f32 1.0, %v457
  %v459 = vtanh.pop %v446
  %v460 = vmul.f32 %v456, %v357
  %462 = vrot.lane.b32.xlu0 %v459, 64
  %v463 = vpop.permute.xlu0 %462
  %v465 = vmul.f32 %v456, %v463
  %467 = vrot.lane.b32.xlu0 %v465, 64
  %v468 = vpop.permute.xlu0 %467
  %v470 = vadd.f32 %v460, %v468
  %v471 = vtanh.pop %v470
  %473 = vrot.lane.b32.xlu0 %v471, 64
  %v474 = vpop.permute.xlu0 %473
  %v476 = vmul.f32 %v458, %v474
  %s477 = scalar_lea.vmem %s3, 4
  %478 = vst.msk [vmem:[%s477] sm:$0x3] %vm251, %v476
  %480 = vrot.lane.b32.xlu0 %v476, 96
  %v481 = vpop.permute.xlu0 %480
  %s483 = scalar_lea.vmem %s52, 10
  %484 = vst.msk [vmem:[%s483] sm:$0x3] %vm251, %v481
  %s485 = scalar_lea.vmem %s0, 12
  %v486 = vld [vmem:[%s485] sm:$0xf]
  %s487 = scalar_lea.vmem %s44, 16
  %v488 = vld [vmem:[%s487] sm:$0xf]
  %v491 = vunpack.c.l.s4 1983009808
  %v492 = vunpack.c.0.s8 %v491
  %v493 = vlaneseq
  %v494 = vshrl.u32 %v493, 7
  %v495 = vsub.s32 %v492, %v494
  %v496 = vrot.slane %v486, %v495
  %v497 = vcombine.high %v496, %v496
  %v502 = vunpack.c.l.s4 1983009808
  %v503 = vunpack.c.0.s8 %v502
  %v504 = vlaneseq
  %v505 = vshrl.u32 %v504, 7
  %v506 = vsub.s32 %v503, %v505
  %v507 = vrot.slane %v488, %v506
  %v508 = vcombine.high %v507, %v507
  %v511 = vsel %vm98, %v496, %v507
  %v512 = vsel %vm99, %v497, %v508
  %v513 = vpack.c.bf16 %v476, %v476
  %v515 = vsel %vm170, %v513, 0
  %517 = vmatprep.subr.bf16.mxu0 %v155
  %518 = vmatpush1.bf16.msra.mxu0 %v154
  %519 = vmatprep.subr.bf16.mxu0 %v157
  %520 = vmatpush1.bf16.msra.mxu0 %v156
  %521 = vmatprep.subr.bf16.mxu0 %v159
  %522 = vmatpush1.bf16.msra.mxu0 %v158
  %523 = vmatprep.subr.bf16.mxu0 %v161
  %524 = vmatpush1.bf16.msra.mxu0 %v160
  %525 = vmatprep.subr.bf16.mxu0 0
  %526 = vmatpush1.bf16.msra.mxu0 0
  %527 = vmatprep.subr.bf16.mxu0 0
  %528 = vmatpush1.bf16.msra.mxu0 0
  %529 = vmatprep.subr.bf16.mxu0 0
  %530 = vmatpush1.bf16.msra.mxu0 0
  %531 = vmatprep.subr.bf16.mxu0 0
  %532 = vmatpush1.bf16.msra.mxu0 0
  %533 = vmatprep.subr.bf16.mxu0 0
  %534 = vmatpush1.bf16.msra.mxu0 0
  %535 = vmatprep.subr.bf16.mxu0 0
  %536 = vmatpush1.bf16.msra.mxu0 0
  %537 = vmatprep.subr.bf16.mxu0 0
  %538 = vmatpush1.bf16.msra.mxu0 0
  %539 = vmatprep.subr.bf16.mxu0 0
  %540 = vmatpush1.bf16.msra.mxu0 0
  %541 = vmatprep.subr.bf16.mxu0 0
  %542 = vmatpush1.bf16.msra.mxu0 0
  %543 = vmatprep.subr.bf16.mxu0 0
  %544 = vmatpush1.bf16.msra.mxu0 0
  %545 = vmatprep.subr.bf16.mxu0 0
  %546 = vmatpush1.bf16.msra.mxu0 0
  %547 = vmatprep.subr.bf16.mxu0 0
  %548 = vmatpush1.bf16.msra.mxu0 0
  %549 = vmatprep.mubr.bf16.mxu0 0
  %550 = vmatmul.mubr.bf16.gmra.mrb[0].mxu0 %v515
  %v551 = vpop.f32.mrb[0].mxu0
  %v552 = vadd.f32 0.0, %v551
  %v553 = vpop.f32.mrb[0].mxu0
  %v554 = vadd.f32 0.0, %v553
  %v555 = vpop.f32.mrb[0].mxu0
  %v556 = vpop.f32.mrb[0].mxu0
  %557 = vdwg.mxu0
  %v558 = vadd.f32 %v511, %v552
  %v559 = vadd.f32 %v512, %v554
  %v560 = vxor.u32 %v558, 2147483648
  %v561 = vxor.u32 %v559, 2147483648
  %v562 = vmul.f32 %v560, 1.442695
  %v563 = vpow.pop %v562
  %v564 = vmul.f32 %v561, 1.442695
  %v565 = vpow.pop %v564
  %v566 = vadd.f32 %v563, 1.0
  %v567 = vadd.f32 %v565, 1.0
  %v568 = vrcp.pop %v566
  %v569 = vmul.f32 1.0, %v568
  %v570 = vrcp.pop %v567
  %v571 = vmul.f32 1.0, %v570
  %v572 = vtanh.pop %v559
  %v573 = vmul.f32 %v569, %v470
  %575 = vrot.lane.b32.xlu0 %v572, 64
  %v576 = vpop.permute.xlu0 %575
  %v578 = vmul.f32 %v569, %v576
  %580 = vrot.lane.b32.xlu0 %v578, 64
  %v581 = vpop.permute.xlu0 %580
  %v583 = vadd.f32 %v573, %v581
  %v584 = vtanh.pop %v583
  %586 = vrot.lane.b32.xlu0 %v584, 64
  %v587 = vpop.permute.xlu0 %586
  %v589 = vmul.f32 %v571, %v587
  %s590 = scalar_lea.vmem %s3, 6
  %591 = vst.msk [vmem:[%s590] sm:$0x3] %vm251, %v589
  %593 = vrot.lane.b32.xlu0 %v589, 96
  %v594 = vpop.permute.xlu0 %593
  %s596 = scalar_lea.vmem %s52, 8
  %597 = vst.msk [vmem:[%s596] sm:$0x3] %vm251, %v594
  %s598 = scalar_lea.vmem %s0, 16
  %v599 = vld [vmem:[%s598] sm:$0xf]
  %s600 = scalar_lea.vmem %s44, 12
  %v601 = vld [vmem:[%s600] sm:$0xf]
  %v604 = vunpack.c.l.s4 1983009808
  %v605 = vunpack.c.0.s8 %v604
  %v606 = vlaneseq
  %v607 = vshrl.u32 %v606, 7
  %v608 = vsub.s32 %v605, %v607
  %v609 = vrot.slane %v599, %v608
  %v610 = vcombine.high %v609, %v609
  %v615 = vunpack.c.l.s4 1983009808
  %v616 = vunpack.c.0.s8 %v615
  %v617 = vlaneseq
  %v618 = vshrl.u32 %v617, 7
  %v619 = vsub.s32 %v616, %v618
  %v620 = vrot.slane %v601, %v619
  %v621 = vcombine.high %v620, %v620
  %v624 = vsel %vm98, %v609, %v620
  %v625 = vsel %vm99, %v610, %v621
  %v626 = vpack.c.bf16 %v589, %v589
  %v628 = vsel %vm170, %v626, 0
  %630 = vmatprep.subr.bf16.mxu0 %v155
  %631 = vmatpush1.bf16.msra.mxu0 %v154
  %632 = vmatprep.subr.bf16.mxu0 %v157
  %633 = vmatpush1.bf16.msra.mxu0 %v156
  %634 = vmatprep.subr.bf16.mxu0 %v159
  %635 = vmatpush1.bf16.msra.mxu0 %v158
  %636 = vmatprep.subr.bf16.mxu0 %v161
  %637 = vmatpush1.bf16.msra.mxu0 %v160
  %638 = vmatprep.subr.bf16.mxu0 0
  %639 = vmatpush1.bf16.msra.mxu0 0
  %640 = vmatprep.subr.bf16.mxu0 0
  %641 = vmatpush1.bf16.msra.mxu0 0
  %642 = vmatprep.subr.bf16.mxu0 0
  %643 = vmatpush1.bf16.msra.mxu0 0
  %644 = vmatprep.subr.bf16.mxu0 0
  %645 = vmatpush1.bf16.msra.mxu0 0
  %646 = vmatprep.subr.bf16.mxu0 0
  %647 = vmatpush1.bf16.msra.mxu0 0
  %648 = vmatprep.subr.bf16.mxu0 0
  %649 = vmatpush1.bf16.msra.mxu0 0
  %650 = vmatprep.subr.bf16.mxu0 0
  %651 = vmatpush1.bf16.msra.mxu0 0
  %652 = vmatprep.subr.bf16.mxu0 0
  %653 = vmatpush1.bf16.msra.mxu0 0
  %654 = vmatprep.subr.bf16.mxu0 0
  %655 = vmatpush1.bf16.msra.mxu0 0
  %656 = vmatprep.subr.bf16.mxu0 0
  %657 = vmatpush1.bf16.msra.mxu0 0
  %658 = vmatprep.subr.bf16.mxu0 0
  %659 = vmatpush1.bf16.msra.mxu0 0
  %660 = vmatprep.subr.bf16.mxu0 0
  %661 = vmatpush1.bf16.msra.mxu0 0
  %662 = vmatprep.mubr.bf16.mxu0 0
  %663 = vmatmul.mubr.bf16.gmra.mrb[0].mxu0 %v628
  %v664 = vpop.f32.mrb[0].mxu0
  %v665 = vadd.f32 0.0, %v664
  %v666 = vpop.f32.mrb[0].mxu0
  %v667 = vadd.f32 0.0, %v666
  %v668 = vpop.f32.mrb[0].mxu0
  %v669 = vpop.f32.mrb[0].mxu0
  %670 = vdwg.mxu0
  %v671 = vadd.f32 %v624, %v665
  %v672 = vadd.f32 %v625, %v667
  %v673 = vxor.u32 %v671, 2147483648
  %v674 = vxor.u32 %v672, 2147483648
  %v675 = vmul.f32 %v673, 1.442695
  %v676 = vpow.pop %v675
  %v677 = vmul.f32 %v674, 1.442695
  %v678 = vpow.pop %v677
  %v679 = vadd.f32 %v676, 1.0
  %v680 = vadd.f32 %v678, 1.0
  %v681 = vrcp.pop %v679
  %v682 = vmul.f32 1.0, %v681
  %v683 = vrcp.pop %v680
  %v684 = vmul.f32 1.0, %v683
  %v685 = vtanh.pop %v672
  %v686 = vmul.f32 %v682, %v583
  %688 = vrot.lane.b32.xlu0 %v685, 64
  %v689 = vpop.permute.xlu0 %688
  %v691 = vmul.f32 %v682, %v689
  %693 = vrot.lane.b32.xlu0 %v691, 64
  %v694 = vpop.permute.xlu0 %693
  %v696 = vadd.f32 %v686, %v694
  %v697 = vtanh.pop %v696
  %699 = vrot.lane.b32.xlu0 %v697, 64
  %v700 = vpop.permute.xlu0 %699
  %v702 = vmul.f32 %v684, %v700
  %s703 = scalar_lea.vmem %s3, 8
  %704 = vst.msk [vmem:[%s703] sm:$0x3] %vm251, %v702
  %706 = vrot.lane.b32.xlu0 %v702, 96
  %v707 = vpop.permute.xlu0 %706
  %s709 = scalar_lea.vmem %s52, 6
  %710 = vst.msk [vmem:[%s709] sm:$0x3] %vm251, %v707
  %s711 = scalar_lea.vmem %s0, 20
  %v712 = vld [vmem:[%s711] sm:$0xf]
  %s713 = scalar_lea.vmem %s44, 8
  %v714 = vld [vmem:[%s713] sm:$0xf]
  %v717 = vunpack.c.l.s4 1983009808
  %v718 = vunpack.c.0.s8 %v717
  %v719 = vlaneseq
  %v720 = vshrl.u32 %v719, 7
  %v721 = vsub.s32 %v718, %v720
  %v722 = vrot.slane %v712, %v721
  %v723 = vcombine.high %v722, %v722
  %v728 = vunpack.c.l.s4 1983009808
  %v729 = vunpack.c.0.s8 %v728
  %v730 = vlaneseq
  %v731 = vshrl.u32 %v730, 7
  %v732 = vsub.s32 %v729, %v731
  %v733 = vrot.slane %v714, %v732
  %v734 = vcombine.high %v733, %v733
  %v737 = vsel %vm98, %v722, %v733
  %v738 = vsel %vm99, %v723, %v734
  %v739 = vpack.c.bf16 %v702, %v702
  %v741 = vsel %vm170, %v739, 0
  %743 = vmatprep.subr.bf16.mxu0 %v155
  %744 = vmatpush1.bf16.msra.mxu0 %v154
  %745 = vmatprep.subr.bf16.mxu0 %v157
  %746 = vmatpush1.bf16.msra.mxu0 %v156
  %747 = vmatprep.subr.bf16.mxu0 %v159
  %748 = vmatpush1.bf16.msra.mxu0 %v158
  %749 = vmatprep.subr.bf16.mxu0 %v161
  %750 = vmatpush1.bf16.msra.mxu0 %v160
  %751 = vmatprep.subr.bf16.mxu0 0
  %752 = vmatpush1.bf16.msra.mxu0 0
  %753 = vmatprep.subr.bf16.mxu0 0
  %754 = vmatpush1.bf16.msra.mxu0 0
  %755 = vmatprep.subr.bf16.mxu0 0
  %756 = vmatpush1.bf16.msra.mxu0 0
  %757 = vmatprep.subr.bf16.mxu0 0
  %758 = vmatpush1.bf16.msra.mxu0 0
  %759 = vmatprep.subr.bf16.mxu0 0
  %760 = vmatpush1.bf16.msra.mxu0 0
  %761 = vmatprep.subr.bf16.mxu0 0
  %762 = vmatpush1.bf16.msra.mxu0 0
  %763 = vmatprep.subr.bf16.mxu0 0
  %764 = vmatpush1.bf16.msra.mxu0 0
  %765 = vmatprep.subr.bf16.mxu0 0
  %766 = vmatpush1.bf16.msra.mxu0 0
  %767 = vmatprep.subr.bf16.mxu0 0
  %768 = vmatpush1.bf16.msra.mxu0 0
  %769 = vmatprep.subr.bf16.mxu0 0
  %770 = vmatpush1.bf16.msra.mxu0 0
  %771 = vmatprep.subr.bf16.mxu0 0
  %772 = vmatpush1.bf16.msra.mxu0 0
  %773 = vmatprep.subr.bf16.mxu0 0
  %774 = vmatpush1.bf16.msra.mxu0 0
  %775 = vmatprep.mubr.bf16.mxu0 0
  %776 = vmatmul.mubr.bf16.gmra.mrb[0].mxu0 %v741
  %v777 = vpop.f32.mrb[0].mxu0
  %v778 = vadd.f32 0.0, %v777
  %v779 = vpop.f32.mrb[0].mxu0
  %v780 = vadd.f32 0.0, %v779
  %v781 = vpop.f32.mrb[0].mxu0
  %v782 = vpop.f32.mrb[0].mxu0
  %783 = vdwg.mxu0
  %v784 = vadd.f32 %v737, %v778
  %v785 = vadd.f32 %v738, %v780
  %v786 = vxor.u32 %v784, 2147483648
  %v787 = vxor.u32 %v785, 2147483648
  %v788 = vmul.f32 %v786, 1.442695
  %v789 = vpow.pop %v788
  %v790 = vmul.f32 %v787, 1.442695
  %v791 = vpow.pop %v790
  %v792 = vadd.f32 %v789, 1.0
  %v793 = vadd.f32 %v791, 1.0
  %v794 = vrcp.pop %v792
  %v795 = vmul.f32 1.0, %v794
  %v796 = vrcp.pop %v793
  %v797 = vmul.f32 1.0, %v796
  %v798 = vtanh.pop %v785
  %v799 = vmul.f32 %v795, %v696
  %801 = vrot.lane.b32.xlu0 %v798, 64
  %v802 = vpop.permute.xlu0 %801
  %v804 = vmul.f32 %v795, %v802
  %806 = vrot.lane.b32.xlu0 %v804, 64
  %v807 = vpop.permute.xlu0 %806
  %v809 = vadd.f32 %v799, %v807
  %v810 = vtanh.pop %v809
  %812 = vrot.lane.b32.xlu0 %v810, 64
  %v813 = vpop.permute.xlu0 %812
  %v815 = vmul.f32 %v797, %v813
  %s816 = scalar_lea.vmem %s3, 10
  %817 = vst.msk [vmem:[%s816] sm:$0x3] %vm251, %v815
  %819 = vrot.lane.b32.xlu0 %v815, 96
  %v820 = vpop.permute.xlu0 %819
  %s822 = scalar_lea.vmem %s52, 4
  %823 = vst.msk [vmem:[%s822] sm:$0x3] %vm251, %v820
  %s824 = scalar_lea.vmem %s0, 24
  %v825 = vld [vmem:[%s824] sm:$0xf]
  %s826 = scalar_lea.vmem %s44, 4
  %v827 = vld [vmem:[%s826] sm:$0xf]
  %v830 = vunpack.c.l.s4 1983009808
  %v831 = vunpack.c.0.s8 %v830
  %v832 = vlaneseq
  %v833 = vshrl.u32 %v832, 7
  %v834 = vsub.s32 %v831, %v833
  %v835 = vrot.slane %v825, %v834
  %v836 = vcombine.high %v835, %v835
  %v841 = vunpack.c.l.s4 1983009808
  %v842 = vunpack.c.0.s8 %v841
  %v843 = vlaneseq
  %v844 = vshrl.u32 %v843, 7
  %v845 = vsub.s32 %v842, %v844
  %v846 = vrot.slane %v827, %v845
  %v847 = vcombine.high %v846, %v846
  %v850 = vsel %vm98, %v835, %v846
  %v851 = vsel %vm99, %v836, %v847
  %v852 = vpack.c.bf16 %v815, %v815
  %v854 = vsel %vm170, %v852, 0
  %856 = vmatprep.subr.bf16.mxu0 %v155
  %857 = vmatpush1.bf16.msra.mxu0 %v154
  %858 = vmatprep.subr.bf16.mxu0 %v157
  %859 = vmatpush1.bf16.msra.mxu0 %v156
  %860 = vmatprep.subr.bf16.mxu0 %v159
  %861 = vmatpush1.bf16.msra.mxu0 %v158
  %862 = vmatprep.subr.bf16.mxu0 %v161
  %863 = vmatpush1.bf16.msra.mxu0 %v160
  %864 = vmatprep.subr.bf16.mxu0 0
  %865 = vmatpush1.bf16.msra.mxu0 0
  %866 = vmatprep.subr.bf16.mxu0 0
  %867 = vmatpush1.bf16.msra.mxu0 0
  %868 = vmatprep.subr.bf16.mxu0 0
  %869 = vmatpush1.bf16.msra.mxu0 0
  %870 = vmatprep.subr.bf16.mxu0 0
  %871 = vmatpush1.bf16.msra.mxu0 0
  %872 = vmatprep.subr.bf16.mxu0 0
  %873 = vmatpush1.bf16.msra.mxu0 0
  %874 = vmatprep.subr.bf16.mxu0 0
  %875 = vmatpush1.bf16.msra.mxu0 0
  %876 = vmatprep.subr.bf16.mxu0 0
  %877 = vmatpush1.bf16.msra.mxu0 0
  %878 = vmatprep.subr.bf16.mxu0 0
  %879 = vmatpush1.bf16.msra.mxu0 0
  %880 = vmatprep.subr.bf16.mxu0 0
  %881 = vmatpush1.bf16.msra.mxu0 0
  %882 = vmatprep.subr.bf16.mxu0 0
  %883 = vmatpush1.bf16.msra.mxu0 0
  %884 = vmatprep.subr.bf16.mxu0 0
  %885 = vmatpush1.bf16.msra.mxu0 0
  %886 = vmatprep.subr.bf16.mxu0 0
  %887 = vmatpush1.bf16.msra.mxu0 0
  %888 = vmatprep.mubr.bf16.mxu0 0
  %889 = vmatmul.mubr.bf16.gmra.mrb[0].mxu0 %v854
  %v890 = vpop.f32.mrb[0].mxu0
  %v891 = vadd.f32 0.0, %v890
  %v892 = vpop.f32.mrb[0].mxu0
  %v893 = vadd.f32 0.0, %v892
  %v894 = vpop.f32.mrb[0].mxu0
  %v895 = vpop.f32.mrb[0].mxu0
  %896 = vdwg.mxu0
  %v897 = vadd.f32 %v850, %v891
  %v898 = vadd.f32 %v851, %v893
  %v899 = vxor.u32 %v897, 2147483648
  %v900 = vxor.u32 %v898, 2147483648
  %v901 = vmul.f32 %v899, 1.442695
  %v902 = vpow.pop %v901
  %v903 = vmul.f32 %v900, 1.442695
  %v904 = vpow.pop %v903
  %v905 = vadd.f32 %v902, 1.0
  %v906 = vadd.f32 %v904, 1.0
  %v907 = vrcp.pop %v905
  %v908 = vmul.f32 1.0, %v907
  %v909 = vrcp.pop %v906
  %v910 = vmul.f32 1.0, %v909
  %v911 = vtanh.pop %v898
  %v912 = vmul.f32 %v908, %v809
  %914 = vrot.lane.b32.xlu0 %v911, 64
  %v915 = vpop.permute.xlu0 %914
  %v917 = vmul.f32 %v908, %v915
  %919 = vrot.lane.b32.xlu0 %v917, 64
  %v920 = vpop.permute.xlu0 %919
  %v922 = vadd.f32 %v912, %v920
  %v923 = vtanh.pop %v922
  %925 = vrot.lane.b32.xlu0 %v923, 64
  %v926 = vpop.permute.xlu0 %925
  %v928 = vmul.f32 %v910, %v926
  %s929 = scalar_lea.vmem %s3, 12
  %930 = vst.msk [vmem:[%s929] sm:$0x3] %vm251, %v928
  %932 = vrot.lane.b32.xlu0 %v928, 96
  %v933 = vpop.permute.xlu0 %932
  %s935 = scalar_lea.vmem %s52, 2
  %936 = vst.msk [vmem:[%s935] sm:$0x3] %vm251, %v933
  %s937 = scalar_lea.vmem %s0, 28
  %v938 = vld [vmem:[%s937] sm:$0xf]
  %v939 = vld [vmem:[%s44] sm:$0xf]
  %v942 = vunpack.c.l.s4 1983009808
  %v943 = vunpack.c.0.s8 %v942
  %v944 = vlaneseq
  %v945 = vshrl.u32 %v944, 7
  %v946 = vsub.s32 %v943, %v945
  %v947 = vrot.slane %v938, %v946
  %v948 = vcombine.high %v947, %v947
  %v953 = vunpack.c.l.s4 1983009808
  %v954 = vunpack.c.0.s8 %v953
  %v955 = vlaneseq
  %v956 = vshrl.u32 %v955, 7
  %v957 = vsub.s32 %v954, %v956
  %v958 = vrot.slane %v939, %v957
  %v959 = vcombine.high %v958, %v958
  %v962 = vsel %vm98, %v947, %v958
  %v963 = vsel %vm99, %v948, %v959
  %v964 = vpack.c.bf16 %v928, %v928
  %v966 = vsel %vm170, %v964, 0
  %968 = vmatprep.subr.bf16.mxu0 %v155
  %969 = vmatpush1.bf16.msra.mxu0 %v154
  %970 = vmatprep.subr.bf16.mxu0 %v157
  %971 = vmatpush1.bf16.msra.mxu0 %v156
  %972 = vmatprep.subr.bf16.mxu0 %v159
  %973 = vmatpush1.bf16.msra.mxu0 %v158
  %974 = vmatprep.subr.bf16.mxu0 %v161
  %975 = vmatpush1.bf16.msra.mxu0 %v160
  %976 = vmatprep.subr.bf16.mxu0 0
  %977 = vmatpush1.bf16.msra.mxu0 0
  %978 = vmatprep.subr.bf16.mxu0 0
  %979 = vmatpush1.bf16.msra.mxu0 0
  %980 = vmatprep.subr.bf16.mxu0 0
  %981 = vmatpush1.bf16.msra.mxu0 0
  %982 = vmatprep.subr.bf16.mxu0 0
  %983 = vmatpush1.bf16.msra.mxu0 0
  %984 = vmatprep.subr.bf16.mxu0 0
  %985 = vmatpush1.bf16.msra.mxu0 0
  %986 = vmatprep.subr.bf16.mxu0 0
  %987 = vmatpush1.bf16.msra.mxu0 0
  %988 = vmatprep.subr.bf16.mxu0 0
  %989 = vmatpush1.bf16.msra.mxu0 0
  %990 = vmatprep.subr.bf16.mxu0 0
  %991 = vmatpush1.bf16.msra.mxu0 0
  %992 = vmatprep.subr.bf16.mxu0 0
  %993 = vmatpush1.bf16.msra.mxu0 0
  %994 = vmatprep.subr.bf16.mxu0 0
  %995 = vmatpush1.bf16.msra.mxu0 0
  %996 = vmatprep.subr.bf16.mxu0 0
  %997 = vmatpush1.bf16.msra.mxu0 0
  %998 = vmatprep.subr.bf16.mxu0 0
  %999 = vmatpush1.bf16.msra.mxu0 0
  %1000 = vmatprep.mubr.bf16.mxu0 0
  %1001 = vmatmul.mubr.bf16.gmra.mrb[0].mxu0 %v966
  %v1002 = vpop.f32.mrb[0].mxu0
  %v1003 = vadd.f32 0.0, %v1002
  %v1004 = vpop.f32.mrb[0].mxu0
  %v1005 = vadd.f32 0.0, %v1004
  %v1006 = vpop.f32.mrb[0].mxu0
  %v1007 = vpop.f32.mrb[0].mxu0
  %1008 = vdwg.mxu0
  %v1009 = vadd.f32 %v962, %v1003
  %v1010 = vadd.f32 %v963, %v1005
  %v1011 = vxor.u32 %v1009, 2147483648
  %v1012 = vxor.u32 %v1010, 2147483648
  %v1013 = vmul.f32 %v1011, 1.442695
  %v1014 = vpow.pop %v1013
  %v1015 = vmul.f32 %v1012, 1.442695
  %v1016 = vpow.pop %v1015
  %v1017 = vadd.f32 %v1014, 1.0
  %v1018 = vadd.f32 %v1016, 1.0
  %v1019 = vrcp.pop %v1017
  %v1020 = vmul.f32 1.0, %v1019
  %v1021 = vrcp.pop %v1018
  %v1022 = vmul.f32 1.0, %v1021
  %v1023 = vtanh.pop %v1010
  %v1024 = vmul.f32 %v1020, %v922
  %1026 = vrot.lane.b32.xlu0 %v1023, 64
  %v1027 = vpop.permute.xlu0 %1026
  %v1029 = vmul.f32 %v1020, %v1027
  %1031 = vrot.lane.b32.xlu0 %v1029, 64
  %v1032 = vpop.permute.xlu0 %1031
  %v1034 = vadd.f32 %v1024, %v1032
  %v1035 = vtanh.pop %v1034
  %1037 = vrot.lane.b32.xlu0 %v1035, 64
  %v1038 = vpop.permute.xlu0 %1037
  %v1040 = vmul.f32 %v1022, %v1038
  %s1041 = scalar_lea.vmem %s3, 14
  %1042 = vst.msk [vmem:[%s1041] sm:$0x3] %vm251, %v1040
  %1044 = vrot.lane.b32.xlu0 %v1040, 96
  %v1045 = vpop.permute.xlu0 %1044
  %1047 = vst.msk [vmem:[%s52] sm:$0x3] %vm251, %v1045
  %vm1048 = vcmask 517120
  %1049 = vst.msk [vmem:[#allocation2] sm:$0x3] %vm1048, %v1040
  %1051 = vrot.lane.b32.xlu0 %v1034, 64
  %v1052 = vpop.permute.xlu0 %1051
  %1054 = vst.msk [vmem:[#allocation3] sm:$0x3] %vm1048, %v1052
  %s1055 = ssub.s32 0, 0
  %s1056 = smul.u32 8, %s1055
  %p1057 = scmp.lt.s32.totalorder %s1056, 7
  %s1058 = scalar_select %p1057, %s1056, 7
  %s1059 = smul.addr %s1058, 2
  %s1060 = scalar_lea.vmem %s4, %s1059
  // Predicated region
  $region18: #{encoder_forward.11} parent=0 // pred_check
    _
  $region19: #{encoder_forward.11} parent=0 // pred_check_branch
    %1062 = sbr.rel (0) target = $region21
  $region20: #{encoder_forward.11} parent=0 // pred_region
    _
  $region21: #{encoder_forward.11} parent=0 // pred_fallthru
    _
  // Predicated region
  $region22: #{encoder_forward.11} parent=0 // pred_check
    _
  $region23: #{encoder_forward.11} parent=0 // pred_check_branch
    %1064 = sbr.rel (0) target = $region25
  $region24: #{encoder_forward.11} parent=0 // pred_region
    %s1065 = ssub.s32 0, 0
    %s1066 = smul.u32 8, %s1065
  $region25: #{encoder_forward.11} parent=0 // pred_fallthru
    _
  // Predicated region
  $region26: #{encoder_forward.11} parent=0 // pred_check
    _
  $region27: #{encoder_forward.11} parent=0 // pred_check_branch
    %1068 = sbr.rel (0) target = $region29
  $region28: #{encoder_forward.11} parent=0 // pred_region
    _
  $region29: #{encoder_forward.11} parent=0 // pred_fallthru
    _
  // Predicated region
  $region30: #{encoder_forward.11} parent=0 // pred_check
    _
  $region31: #{encoder_forward.11} parent=0 // pred_check_branch
    %1070 = sbr.rel (0) target = $region33
  $region32: #{encoder_forward.11} parent=0 // pred_region
    %s1071 = ssub.s32 0, 0
    %s1072 = smul.u32 8, %s1071
    %p1073 = scmp.lt.s32.totalorder %s1072, 7
    %s1074 = scalar_select %p1073, %s1072, 7
    %s1075 = smul.addr %s1074, 2
    %s1076 = scalar_lea.vmem %s4, %s1075
  $region33: #{encoder_forward.11} parent=0 // pred_fallthru
    _

</llo_original>
